<compile_context>
chip_gen: v7x
topology: tpu7x:2x2x1
jax: 0.10.0
libtpu: 0.0.40
codegen_flags: <defaults>
</compile_context>

<pallas_src>
import jax
import jax.numpy as jnp
from jax.experimental import pallas as pl
from jax.experimental.pallas import tpu as pltpu

DIM = 3          # point dimension
Z_DIM = 128      # latent z (fc_z exists in __init__ but is unused in forward)
C_DIM = 128      # conditioning code dimension
HIDDEN = 128     # hidden size
OUT_SIZE = 1     # scalar occupancy output
N_BLOCKS = 5     # number of ResnetBlockFC blocks


def _cdiv(a, b):
    return -(-a // b)


def _decoder_kernel(p_ref, bias_ref,
                    fpw_ref,                 # fc_p weight (HIDDEN, DIM) f32
                    bw0_ref, bb0_ref,        # ResnetBlockFC fc_0 (stacked), bf16 / f32
                    bw1_ref, bb1_ref,        # ResnetBlockFC fc_1 (stacked), bf16 / f32
                    fow_ref, fob_ref,        # fc_out (HIDDEN, 1) f32, (1, 1) f32
                    out_ref):
    # p tile: (1, DIM, tile_t) -> (DIM, tile_t); point axis on lanes.
    p = p_ref[0]
    w_p = fpw_ref[...]                       # (HIDDEN, DIM)

    # fc_p + (fc_p.bias + fc_c(c)) on the VPU: K=3 is a waste of the MXU, so do
    # three rank-1 broadcast multiply-adds.  Result: (HIDDEN, tile_t) f32.
    net = (bias_ref[0]                                   # (HIDDEN, 1) column bias
           + w_p[:, 0:1] * p[0:1, :]
           + w_p[:, 1:2] * p[1:2, :]
           + w_p[:, 2:3] * p[2:3, :])

    # 5 x ResnetBlockFC (identity shortcut): net += fc_1(relu(fc_0(relu(net))))
    # Matmul operands bf16 (MXU), accumulation + elementwise in f32.
    for i in range(N_BLOCKS):
        h = jnp.maximum(net, 0.0).astype(jnp.bfloat16)
        h0 = jnp.dot(bw0_ref[i], h, preferred_element_type=jnp.float32) + bb0_ref[i]
        h1 = jnp.maximum(h0, 0.0).astype(jnp.bfloat16)
        dx = jnp.dot(bw1_ref[i], h1, preferred_element_type=jnp.float32) + bb1_ref[i]
        net = net + dx

    # fc_out OFF the MXU: an M=1 matmul streams the whole tile for 1/128th of
    # the output.  VPU multiply against a weight column + cross-sublane sum.
    h = jnp.maximum(net, 0.0)                               # (HIDDEN, tile_t) f32
    out = jnp.sum(h * fow_ref[...], axis=0, keepdims=True) + fob_ref[...]
    out_ref[0] = out.astype(out_ref.dtype)                  # (1, tile_t) unmasked store


def decoder_forward(p, c, params, *, tile_t=2048):
    """p: (B, T, DIM) f32, c: (B, C_DIM) f32 -> (B, T) f32."""
    B, T, D = p.shape
    assert D == DIM

    # --- Tile selection (lane axis): multiple of 128, clamped to padded T, and
    # split so the grid has >= 2 parallel steps when B == 1 (keeps v7x's second
    # TensorCore busy; v5e/v6e are single-core and unaffected).
    t_pad128 = _cdiv(T, 128) * 128
    tile = min(tile_t, t_pad128)
    if B == 1 and t_pad128 >= 256:
        tile = min(tile, _cdiv(t_pad128 // 2, 128) * 128)
    tile = max(128, (tile // 128) * 128)
    T_pad = _cdiv(T, tile) * tile

    # Lane-dense point layout for the kernel DMA: (B, DIM, T_pad).
    p_t = jnp.swapaxes(p, 1, 2)
    if T_pad != T:
        p_t = jnp.pad(p_t, ((0, 0), (0, 0), (0, T_pad - T)))

    # Hoist fc_c out of the kernel: one small XLA matmul over all B, folded with
    # fc_p.bias into a per-batch column bias (B, HIDDEN, 1).
    bias = (params["fc_p_b"][None, :]
            + c @ params["fc_c_w"].T + params["fc_c_b"][None, :])
    bias = bias.reshape(B, HIDDEN, 1).astype(jnp.float32)

    # Block matmul weights in bf16 (PyTorch (out, in) layout); biases f32 columns.
    blk_w0 = params["blk_w0"].astype(jnp.bfloat16)
    blk_w1 = params["blk_w1"].astype(jnp.bfloat16)
    blk_b0 = params["blk_b0"].reshape(N_BLOCKS, HIDDEN, 1)
    blk_b1 = params["blk_b1"].reshape(N_BLOCKS, HIDDEN, 1)
    # fc_out stays f32 (it is no longer an MXU operand): (HIDDEN, 1) column.
    fc_out_w = params["fc_out_w"].reshape(OUT_SIZE, HIDDEN).T.astype(jnp.float32)
    fc_out_b = params["fc_out_b"].reshape(1, 1)

    # Constant-index weights/biases: single-buffered (they never change across
    # grid steps, no need for double-buffer bookkeeping or 2x VMEM).
    def const_spec(shape):
        return pl.BlockSpec(shape, lambda b, t: (0,) * len(shape),
                            pipeline_mode=pl.Buffered(1))

    grid = (B, T_pad // tile)

    # Right-sized VMEM budget: f32/bf16 intermediates over (HIDDEN, tile), the
    # double-buffered p/out tiles, and the (single-buffered) weights.
    inter_bytes = HIDDEN * tile * (3 * 4 + 2 * 2)          # net/h0/dx f32 + h/h1 bf16
    io_bytes = 2 * (DIM + 1) * tile * 4                    # p + out tiles, 2 buffers
    w_bytes = 2 * N_BLOCKS * HIDDEN * HIDDEN * 2 + 64 * 1024
    vmem_limit = int(max(16 << 20, min(48 << 20, 2 * (inter_bytes + io_bytes + w_bytes))))

    out = pl.pallas_call(
        _decoder_kernel,
        out_shape=jax.ShapeDtypeStruct((B, 1, T_pad), jnp.float32),
        grid_spec=pltpu.PrefetchScalarGridSpec(
            num_scalar_prefetch=0,
            grid=grid,
            in_specs=[
                pl.BlockSpec((1, DIM, tile), lambda b, t: (b, 0, t)),     # p^T tile
                pl.BlockSpec((1, HIDDEN, 1), lambda b, t: (b, 0, 0)),     # per-batch bias
                const_spec((HIDDEN, DIM)),                                # fc_p W
                const_spec((N_BLOCKS, HIDDEN, HIDDEN)),                   # block fc_0 W
                const_spec((N_BLOCKS, HIDDEN, 1)),                        # block fc_0 b
                const_spec((N_BLOCKS, HIDDEN, HIDDEN)),                   # block fc_1 W
                const_spec((N_BLOCKS, HIDDEN, 1)),                        # block fc_1 b
                const_spec((HIDDEN, OUT_SIZE)),                           # fc_out W column
                const_spec((OUT_SIZE, 1)),                                # fc_out b
            ],
            out_specs=pl.BlockSpec((1, 1, tile), lambda b, t: (b, 0, t)),
        ),
        compiler_params=pltpu.CompilerParams(
            dimension_semantics=("parallel", "parallel"),
            vmem_limit_bytes=vmem_limit),
    )(p_t, bias,
      params["fc_p_w"],
      blk_w0, blk_b0,
      blk_w1, blk_b1,
      fc_out_w, fc_out_b)

    return out.reshape(B, T_pad)[:, :T]


def init_params(key):
    """Deterministic synthetic parameters, PyTorch (out, in) weight layout.

    NOTE: the original ResnetBlockFC zero-initializes fc_1; here we use small
    random values so the residual path is actually exercised.  fc_z exists in
    the module's __init__ but is never used in forward, so it is omitted.
    """
    ks = jax.random.split(key, 12)
    u = lambda k, shape, s=0.05: jax.random.uniform(k, shape, jnp.float32, -s, s)
    return {
        "fc_p_w": u(ks[0], (HIDDEN, DIM), 0.3),
        "fc_p_b": u(ks[1], (HIDDEN,)),
        "fc_c_w": u(ks[2], (HIDDEN, C_DIM)),
        "fc_c_b": u(ks[3], (HIDDEN,)),
        "blk_w0": u(ks[4], (N_BLOCKS, HIDDEN, HIDDEN)),
        "blk_b0": u(ks[5], (N_BLOCKS, HIDDEN)),
        "blk_w1": u(ks[6], (N_BLOCKS, HIDDEN, HIDDEN)),
        "blk_b1": u(ks[7], (N_BLOCKS, HIDDEN)),
        "fc_out_w": u(ks[8], (OUT_SIZE, HIDDEN)),
        "fc_out_b": u(ks[9], (OUT_SIZE,)),
    }


def decoder_reference(p, c, params):
    """Pure-JAX f32 reference mirroring the PyTorch forward."""
    net = p @ params["fc_p_w"].T + params["fc_p_b"]
    net = net + (c @ params["fc_c_w"].T + params["fc_c_b"])[:, None, :]
    for i in range(N_BLOCKS):
        h = jnp.maximum(net, 0.0) @ params["blk_w0"][i].T + params["blk_b0"][i]
        dx = jnp.maximum(h, 0.0) @ params["blk_w1"][i].T + params["blk_b1"][i]
        net = net + dx
    out = jnp.maximum(net, 0.0) @ params["fc_out_w"].T + params["fc_out_b"]
    return out[..., 0]


if __name__ == "__main__":
    key = jax.random.PRNGKey(0)
    kp, kc, kw, kp2, kc2 = jax.random.split(key, 5)
    params = init_params(kw)

    # Main check: B=2, T=1024 (exact tile fit).
    B, T = 2, 1024
    p = jax.random.normal(kp, (B, T, DIM), jnp.float32)
    c = jax.random.normal(kc, (B, C_DIM), jnp.float32)
    out = jax.block_until_ready(decoder_forward(p, c, params))
    ref = decoder_reference(p, c, params)
    assert out.shape == (B, T), out.shape
    max_err = float(jnp.max(jnp.abs(out - ref)))
    assert jnp.allclose(out, ref, rtol=2e-2, atol=5e-3), max_err

    # Secondary check: B=1 (forces >=2 grid steps for v7x) with point-axis padding.
    B2, T2 = 1, 384
    p2 = jax.random.normal(kp2, (B2, T2, DIM), jnp.float32)
    c2 = jax.random.normal(kc2, (B2, C_DIM), jnp.float32)
    out2 = jax.block_until_ready(decoder_forward(p2, c2, params))
    ref2 = decoder_reference(p2, c2, params)
    assert out2.shape == (B2, T2), out2.shape
    max_err2 = float(jnp.max(jnp.abs(out2 - ref2)))
    assert jnp.allclose(out2, ref2, rtol=2e-2, atol=5e-3), max_err2

    print("KERNEL_OK")
</pallas_src>

<mosaic_0001>
module attributes {stable_mosaic.version = 11 : i64} {
  func.func @_decoder_kernel(%arg0: i32, %arg1: i32, %arg2: memref<1x3x1024xf32, #tpu.memory_space<vmem>>, %arg3: memref<1x128x1xf32, #tpu.memory_space<vmem>>, %arg4: memref<128x3xf32, #tpu.memory_space<vmem>>, %arg5: memref<5x128x128xbf16, #tpu.memory_space<vmem>>, %arg6: memref<5x128x1xf32, #tpu.memory_space<vmem>>, %arg7: memref<5x128x128xbf16, #tpu.memory_space<vmem>>, %arg8: memref<5x128x1xf32, #tpu.memory_space<vmem>>, %arg9: memref<128x1xf32, #tpu.memory_space<vmem>>, %arg10: memref<1x1xf32, #tpu.memory_space<vmem>>, %arg11: memref<1x1x1024xf32, #tpu.memory_space<vmem>>) attributes {dimension_semantics = [#tpu.dimension_semantics<parallel>, #tpu.dimension_semantics<parallel>], iteration_bounds = array<i64: 2, 1>, scalar_prefetch = 0 : i64, scratch_operands = 0 : i64, tpu.core_type = #tpu.core_type<tc>, window_params = [{transform_indices = @transform_0, window_bounds = array<i64: 1, 3, 1024>}, {transform_indices = @transform_1, window_bounds = array<i64: 1, 128, 1>}, {pipeline_mode = #tpu.pipeline_mode<synchronous>, transform_indices = @transform_2, window_bounds = array<i64: 128, 3>}, {pipeline_mode = #tpu.pipeline_mode<synchronous>, transform_indices = @transform_3, window_bounds = array<i64: 5, 128, 128>}, {pipeline_mode = #tpu.pipeline_mode<synchronous>, transform_indices = @transform_4, window_bounds = array<i64: 5, 128, 1>}, {pipeline_mode = #tpu.pipeline_mode<synchronous>, transform_indices = @transform_5, window_bounds = array<i64: 5, 128, 128>}, {pipeline_mode = #tpu.pipeline_mode<synchronous>, transform_indices = @transform_6, window_bounds = array<i64: 5, 128, 1>}, {pipeline_mode = #tpu.pipeline_mode<synchronous>, transform_indices = @transform_7, window_bounds = array<i64: 128, 1>}, {pipeline_mode = #tpu.pipeline_mode<synchronous>, transform_indices = @transform_8, window_bounds = array<i64: 1, 1>}, {transform_indices = @transform_9, window_bounds = array<i64: 1, 1, 1024>}]} {
    %c0 = arith.constant 0 : index
    %c0_0 = arith.constant 0 : index
    %c0_1 = arith.constant 0 : index
    %0 = vector.load %arg2[%c0, %c0_0, %c0_1] : memref<1x3x1024xf32, #tpu.memory_space<vmem>>, vector<1x3x1024xf32>
    %1 = vector.shape_cast %0 : vector<1x3x1024xf32> to vector<3x1024xf32>
    %c0_2 = arith.constant 0 : index
    %c0_3 = arith.constant 0 : index
    %2 = vector.load %arg4[%c0_2, %c0_3] : memref<128x3xf32, #tpu.memory_space<vmem>>, vector<128x3xf32>
    %c0_4 = arith.constant 0 : index
    %c0_5 = arith.constant 0 : index
    %c0_6 = arith.constant 0 : index
    %3 = vector.load %arg3[%c0_4, %c0_5, %c0_6] : memref<1x128x1xf32, #tpu.memory_space<vmem>>, vector<1x128x1xf32>
    %4 = vector.shape_cast %3 : vector<1x128x1xf32> to vector<128x1xf32>
    %5 = vector.extract_strided_slice %2 {offsets = [0, 0], sizes = [128, 1], strides = [1, 1]} : vector<128x3xf32> to vector<128x1xf32>
    %6 = vector.extract_strided_slice %1 {offsets = [0, 0], sizes = [1, 1024], strides = [1, 1]} : vector<3x1024xf32> to vector<1x1024xf32>
    %7 = vector.broadcast %5 : vector<128x1xf32> to vector<128x1024xf32>
    %8 = vector.broadcast %6 : vector<1x1024xf32> to vector<128x1024xf32>
    %9 = arith.mulf %7, %8 : vector<128x1024xf32>
    %10 = vector.broadcast %4 : vector<128x1xf32> to vector<128x1024xf32>
    %11 = arith.addf %10, %9 : vector<128x1024xf32>
    %12 = vector.extract_strided_slice %2 {offsets = [0, 1], sizes = [128, 1], strides = [1, 1]} : vector<128x3xf32> to vector<128x1xf32>
    %13 = vector.extract_strided_slice %1 {offsets = [1, 0], sizes = [1, 1024], strides = [1, 1]} : vector<3x1024xf32> to vector<1x1024xf32>
    %14 = vector.broadcast %12 : vector<128x1xf32> to vector<128x1024xf32>
    %15 = vector.broadcast %13 : vector<1x1024xf32> to vector<128x1024xf32>
    %16 = arith.mulf %14, %15 : vector<128x1024xf32>
    %17 = arith.addf %11, %16 : vector<128x1024xf32>
    %18 = vector.extract_strided_slice %2 {offsets = [0, 2], sizes = [128, 1], strides = [1, 1]} : vector<128x3xf32> to vector<128x1xf32>
    %19 = vector.extract_strided_slice %1 {offsets = [2, 0], sizes = [1, 1024], strides = [1, 1]} : vector<3x1024xf32> to vector<1x1024xf32>
    %20 = vector.broadcast %18 : vector<128x1xf32> to vector<128x1024xf32>
    %21 = vector.broadcast %19 : vector<1x1024xf32> to vector<128x1024xf32>
    %22 = arith.mulf %20, %21 : vector<128x1024xf32>
    %23 = arith.addf %17, %22 : vector<128x1024xf32>
    %cst = arith.constant 0.000000e+00 : f32
    %24 = vector.broadcast %cst : f32 to vector<128x1024xf32>
    %25 = arith.maximumf %23, %24 : vector<128x1024xf32>
    %26 = arith.truncf %25 : vector<128x1024xf32> to vector<128x1024xbf16>
    %c0_7 = arith.constant 0 : index
    %c0_8 = arith.constant 0 : index
    %c0_9 = arith.constant 0 : index
    %27 = vector.load %arg5[%c0_7, %c0_8, %c0_9] : memref<5x128x128xbf16, #tpu.memory_space<vmem>>, vector<1x128x128xbf16>
    %28 = vector.shape_cast %27 : vector<1x128x128xbf16> to vector<128x128xbf16>
    %cst_10 = arith.constant dense<0.000000e+00> : vector<128x1024xf32>
    %29 = tpu.matmul %28, %26, %cst_10 {dimension_numbers = #tpu.dot_dimension_numbers<[1], [0], [0], [1], [0, 0, 1, 1], [], []>} : vector<128x128xbf16>, vector<128x1024xbf16>, vector<128x1024xf32> -> vector<128x1024xf32>
    %c0_11 = arith.constant 0 : index
    %c0_12 = arith.constant 0 : index
    %c0_13 = arith.constant 0 : index
    %30 = vector.load %arg6[%c0_11, %c0_12, %c0_13] : memref<5x128x1xf32, #tpu.memory_space<vmem>>, vector<1x128x1xf32>
    %31 = vector.shape_cast %30 : vector<1x128x1xf32> to vector<128x1xf32>
    %32 = vector.broadcast %31 : vector<128x1xf32> to vector<128x1024xf32>
    %33 = arith.addf %29, %32 : vector<128x1024xf32>
    %cst_14 = arith.constant 0.000000e+00 : f32
    %34 = vector.broadcast %cst_14 : f32 to vector<128x1024xf32>
    %35 = arith.maximumf %33, %34 : vector<128x1024xf32>
    %36 = arith.truncf %35 : vector<128x1024xf32> to vector<128x1024xbf16>
    %c0_15 = arith.constant 0 : index
    %c0_16 = arith.constant 0 : index
    %c0_17 = arith.constant 0 : index
    %37 = vector.load %arg7[%c0_15, %c0_16, %c0_17] : memref<5x128x128xbf16, #tpu.memory_space<vmem>>, vector<1x128x128xbf16>
    %38 = vector.shape_cast %37 : vector<1x128x128xbf16> to vector<128x128xbf16>
    %cst_18 = arith.constant dense<0.000000e+00> : vector<128x1024xf32>
    %39 = tpu.matmul %38, %36, %cst_18 {dimension_numbers = #tpu.dot_dimension_numbers<[1], [0], [0], [1], [0, 0, 1, 1], [], []>} : vector<128x128xbf16>, vector<128x1024xbf16>, vector<128x1024xf32> -> vector<128x1024xf32>
    %c0_19 = arith.constant 0 : index
    %c0_20 = arith.constant 0 : index
    %c0_21 = arith.constant 0 : index
    %40 = vector.load %arg8[%c0_19, %c0_20, %c0_21] : memref<5x128x1xf32, #tpu.memory_space<vmem>>, vector<1x128x1xf32>
    %41 = vector.shape_cast %40 : vector<1x128x1xf32> to vector<128x1xf32>
    %42 = vector.broadcast %41 : vector<128x1xf32> to vector<128x1024xf32>
    %43 = arith.addf %39, %42 : vector<128x1024xf32>
    %44 = arith.addf %23, %43 : vector<128x1024xf32>
    %cst_22 = arith.constant 0.000000e+00 : f32
    %45 = vector.broadcast %cst_22 : f32 to vector<128x1024xf32>
    %46 = arith.maximumf %44, %45 : vector<128x1024xf32>
    %47 = arith.truncf %46 : vector<128x1024xf32> to vector<128x1024xbf16>
    %c1 = arith.constant 1 : index
    %c0_23 = arith.constant 0 : index
    %c0_24 = arith.constant 0 : index
    %48 = vector.load %arg5[%c1, %c0_23, %c0_24] : memref<5x128x128xbf16, #tpu.memory_space<vmem>>, vector<1x128x128xbf16>
    %49 = vector.shape_cast %48 : vector<1x128x128xbf16> to vector<128x128xbf16>
    %cst_25 = arith.constant dense<0.000000e+00> : vector<128x1024xf32>
    %50 = tpu.matmul %49, %47, %cst_25 {dimension_numbers = #tpu.dot_dimension_numbers<[1], [0], [0], [1], [0, 0, 1, 1], [], []>} : vector<128x128xbf16>, vector<128x1024xbf16>, vector<128x1024xf32> -> vector<128x1024xf32>
    %c1_26 = arith.constant 1 : index
    %c0_27 = arith.constant 0 : index
    %c0_28 = arith.constant 0 : index
    %51 = vector.load %arg6[%c1_26, %c0_27, %c0_28] : memref<5x128x1xf32, #tpu.memory_space<vmem>>, vector<1x128x1xf32>
    %52 = vector.shape_cast %51 : vector<1x128x1xf32> to vector<128x1xf32>
    %53 = vector.broadcast %52 : vector<128x1xf32> to vector<128x1024xf32>
    %54 = arith.addf %50, %53 : vector<128x1024xf32>
    %cst_29 = arith.constant 0.000000e+00 : f32
    %55 = vector.broadcast %cst_29 : f32 to vector<128x1024xf32>
    %56 = arith.maximumf %54, %55 : vector<128x1024xf32>
    %57 = arith.truncf %56 : vector<128x1024xf32> to vector<128x1024xbf16>
    %c1_30 = arith.constant 1 : index
    %c0_31 = arith.constant 0 : index
    %c0_32 = arith.constant 0 : index
    %58 = vector.load %arg7[%c1_30, %c0_31, %c0_32] : memref<5x128x128xbf16, #tpu.memory_space<vmem>>, vector<1x128x128xbf16>
    %59 = vector.shape_cast %58 : vector<1x128x128xbf16> to vector<128x128xbf16>
    %cst_33 = arith.constant dense<0.000000e+00> : vector<128x1024xf32>
    %60 = tpu.matmul %59, %57, %cst_33 {dimension_numbers = #tpu.dot_dimension_numbers<[1], [0], [0], [1], [0, 0, 1, 1], [], []>} : vector<128x128xbf16>, vector<128x1024xbf16>, vector<128x1024xf32> -> vector<128x1024xf32>
    %c1_34 = arith.constant 1 : index
    %c0_35 = arith.constant 0 : index
    %c0_36 = arith.constant 0 : index
    %61 = vector.load %arg8[%c1_34, %c0_35, %c0_36] : memref<5x128x1xf32, #tpu.memory_space<vmem>>, vector<1x128x1xf32>
    %62 = vector.shape_cast %61 : vector<1x128x1xf32> to vector<128x1xf32>
    %63 = vector.broadcast %62 : vector<128x1xf32> to vector<128x1024xf32>
    %64 = arith.addf %60, %63 : vector<128x1024xf32>
    %65 = arith.addf %44, %64 : vector<128x1024xf32>
    %cst_37 = arith.constant 0.000000e+00 : f32
    %66 = vector.broadcast %cst_37 : f32 to vector<128x1024xf32>
    %67 = arith.maximumf %65, %66 : vector<128x1024xf32>
    %68 = arith.truncf %67 : vector<128x1024xf32> to vector<128x1024xbf16>
    %c2 = arith.constant 2 : index
    %c0_38 = arith.constant 0 : index
    %c0_39 = arith.constant 0 : index
    %69 = vector.load %arg5[%c2, %c0_38, %c0_39] : memref<5x128x128xbf16, #tpu.memory_space<vmem>>, vector<1x128x128xbf16>
    %70 = vector.shape_cast %69 : vector<1x128x128xbf16> to vector<128x128xbf16>
    %cst_40 = arith.constant dense<0.000000e+00> : vector<128x1024xf32>
    %71 = tpu.matmul %70, %68, %cst_40 {dimension_numbers = #tpu.dot_dimension_numbers<[1], [0], [0], [1], [0, 0, 1, 1], [], []>} : vector<128x128xbf16>, vector<128x1024xbf16>, vector<128x1024xf32> -> vector<128x1024xf32>
    %c2_41 = arith.constant 2 : index
    %c0_42 = arith.constant 0 : index
    %c0_43 = arith.constant 0 : index
    %72 = vector.load %arg6[%c2_41, %c0_42, %c0_43] : memref<5x128x1xf32, #tpu.memory_space<vmem>>, vector<1x128x1xf32>
    %73 = vector.shape_cast %72 : vector<1x128x1xf32> to vector<128x1xf32>
    %74 = vector.broadcast %73 : vector<128x1xf32> to vector<128x1024xf32>
    %75 = arith.addf %71, %74 : vector<128x1024xf32>
    %cst_44 = arith.constant 0.000000e+00 : f32
    %76 = vector.broadcast %cst_44 : f32 to vector<128x1024xf32>
    %77 = arith.maximumf %75, %76 : vector<128x1024xf32>
    %78 = arith.truncf %77 : vector<128x1024xf32> to vector<128x1024xbf16>
    %c2_45 = arith.constant 2 : index
    %c0_46 = arith.constant 0 : index
    %c0_47 = arith.constant 0 : index
    %79 = vector.load %arg7[%c2_45, %c0_46, %c0_47] : memref<5x128x128xbf16, #tpu.memory_space<vmem>>, vector<1x128x128xbf16>
    %80 = vector.shape_cast %79 : vector<1x128x128xbf16> to vector<128x128xbf16>
    %cst_48 = arith.constant dense<0.000000e+00> : vector<128x1024xf32>
    %81 = tpu.matmul %80, %78, %cst_48 {dimension_numbers = #tpu.dot_dimension_numbers<[1], [0], [0], [1], [0, 0, 1, 1], [], []>} : vector<128x128xbf16>, vector<128x1024xbf16>, vector<128x1024xf32> -> vector<128x1024xf32>
    %c2_49 = arith.constant 2 : index
    %c0_50 = arith.constant 0 : index
    %c0_51 = arith.constant 0 : index
    %82 = vector.load %arg8[%c2_49, %c0_50, %c0_51] : memref<5x128x1xf32, #tpu.memory_space<vmem>>, vector<1x128x1xf32>
    %83 = vector.shape_cast %82 : vector<1x128x1xf32> to vector<128x1xf32>
    %84 = vector.broadcast %83 : vector<128x1xf32> to vector<128x1024xf32>
    %85 = arith.addf %81, %84 : vector<128x1024xf32>
    %86 = arith.addf %65, %85 : vector<128x1024xf32>
    %cst_52 = arith.constant 0.000000e+00 : f32
    %87 = vector.broadcast %cst_52 : f32 to vector<128x1024xf32>
    %88 = arith.maximumf %86, %87 : vector<128x1024xf32>
    %89 = arith.truncf %88 : vector<128x1024xf32> to vector<128x1024xbf16>
    %c3 = arith.constant 3 : index
    %c0_53 = arith.constant 0 : index
    %c0_54 = arith.constant 0 : index
    %90 = vector.load %arg5[%c3, %c0_53, %c0_54] : memref<5x128x128xbf16, #tpu.memory_space<vmem>>, vector<1x128x128xbf16>
    %91 = vector.shape_cast %90 : vector<1x128x128xbf16> to vector<128x128xbf16>
    %cst_55 = arith.constant dense<0.000000e+00> : vector<128x1024xf32>
    %92 = tpu.matmul %91, %89, %cst_55 {dimension_numbers = #tpu.dot_dimension_numbers<[1], [0], [0], [1], [0, 0, 1, 1], [], []>} : vector<128x128xbf16>, vector<128x1024xbf16>, vector<128x1024xf32> -> vector<128x1024xf32>
    %c3_56 = arith.constant 3 : index
    %c0_57 = arith.constant 0 : index
    %c0_58 = arith.constant 0 : index
    %93 = vector.load %arg6[%c3_56, %c0_57, %c0_58] : memref<5x128x1xf32, #tpu.memory_space<vmem>>, vector<1x128x1xf32>
    %94 = vector.shape_cast %93 : vector<1x128x1xf32> to vector<128x1xf32>
    %95 = vector.broadcast %94 : vector<128x1xf32> to vector<128x1024xf32>
    %96 = arith.addf %92, %95 : vector<128x1024xf32>
    %cst_59 = arith.constant 0.000000e+00 : f32
    %97 = vector.broadcast %cst_59 : f32 to vector<128x1024xf32>
    %98 = arith.maximumf %96, %97 : vector<128x1024xf32>
    %99 = arith.truncf %98 : vector<128x1024xf32> to vector<128x1024xbf16>
    %c3_60 = arith.constant 3 : index
    %c0_61 = arith.constant 0 : index
    %c0_62 = arith.constant 0 : index
    %100 = vector.load %arg7[%c3_60, %c0_61, %c0_62] : memref<5x128x128xbf16, #tpu.memory_space<vmem>>, vector<1x128x128xbf16>
    %101 = vector.shape_cast %100 : vector<1x128x128xbf16> to vector<128x128xbf16>
    %cst_63 = arith.constant dense<0.000000e+00> : vector<128x1024xf32>
    %102 = tpu.matmul %101, %99, %cst_63 {dimension_numbers = #tpu.dot_dimension_numbers<[1], [0], [0], [1], [0, 0, 1, 1], [], []>} : vector<128x128xbf16>, vector<128x1024xbf16>, vector<128x1024xf32> -> vector<128x1024xf32>
    %c3_64 = arith.constant 3 : index
    %c0_65 = arith.constant 0 : index
    %c0_66 = arith.constant 0 : index
    %103 = vector.load %arg8[%c3_64, %c0_65, %c0_66] : memref<5x128x1xf32, #tpu.memory_space<vmem>>, vector<1x128x1xf32>
    %104 = vector.shape_cast %103 : vector<1x128x1xf32> to vector<128x1xf32>
    %105 = vector.broadcast %104 : vector<128x1xf32> to vector<128x1024xf32>
    %106 = arith.addf %102, %105 : vector<128x1024xf32>
    %107 = arith.addf %86, %106 : vector<128x1024xf32>
    %cst_67 = arith.constant 0.000000e+00 : f32
    %108 = vector.broadcast %cst_67 : f32 to vector<128x1024xf32>
    %109 = arith.maximumf %107, %108 : vector<128x1024xf32>
    %110 = arith.truncf %109 : vector<128x1024xf32> to vector<128x1024xbf16>
    %c4 = arith.constant 4 : index
    %c0_68 = arith.constant 0 : index
    %c0_69 = arith.constant 0 : index
    %111 = vector.load %arg5[%c4, %c0_68, %c0_69] : memref<5x128x128xbf16, #tpu.memory_space<vmem>>, vector<1x128x128xbf16>
    %112 = vector.shape_cast %111 : vector<1x128x128xbf16> to vector<128x128xbf16>
    %cst_70 = arith.constant dense<0.000000e+00> : vector<128x1024xf32>
    %113 = tpu.matmul %112, %110, %cst_70 {dimension_numbers = #tpu.dot_dimension_numbers<[1], [0], [0], [1], [0, 0, 1, 1], [], []>} : vector<128x128xbf16>, vector<128x1024xbf16>, vector<128x1024xf32> -> vector<128x1024xf32>
    %c4_71 = arith.constant 4 : index
    %c0_72 = arith.constant 0 : index
    %c0_73 = arith.constant 0 : index
    %114 = vector.load %arg6[%c4_71, %c0_72, %c0_73] : memref<5x128x1xf32, #tpu.memory_space<vmem>>, vector<1x128x1xf32>
    %115 = vector.shape_cast %114 : vector<1x128x1xf32> to vector<128x1xf32>
    %116 = vector.broadcast %115 : vector<128x1xf32> to vector<128x1024xf32>
    %117 = arith.addf %113, %116 : vector<128x1024xf32>
    %cst_74 = arith.constant 0.000000e+00 : f32
    %118 = vector.broadcast %cst_74 : f32 to vector<128x1024xf32>
    %119 = arith.maximumf %117, %118 : vector<128x1024xf32>
    %120 = arith.truncf %119 : vector<128x1024xf32> to vector<128x1024xbf16>
    %c4_75 = arith.constant 4 : index
    %c0_76 = arith.constant 0 : index
    %c0_77 = arith.constant 0 : index
    %121 = vector.load %arg7[%c4_75, %c0_76, %c0_77] : memref<5x128x128xbf16, #tpu.memory_space<vmem>>, vector<1x128x128xbf16>
    %122 = vector.shape_cast %121 : vector<1x128x128xbf16> to vector<128x128xbf16>
    %cst_78 = arith.constant dense<0.000000e+00> : vector<128x1024xf32>
    %123 = tpu.matmul %122, %120, %cst_78 {dimension_numbers = #tpu.dot_dimension_numbers<[1], [0], [0], [1], [0, 0, 1, 1], [], []>} : vector<128x128xbf16>, vector<128x1024xbf16>, vector<128x1024xf32> -> vector<128x1024xf32>
    %c4_79 = arith.constant 4 : index
    %c0_80 = arith.constant 0 : index
    %c0_81 = arith.constant 0 : index
    %124 = vector.load %arg8[%c4_79, %c0_80, %c0_81] : memref<5x128x1xf32, #tpu.memory_space<vmem>>, vector<1x128x1xf32>
    %125 = vector.shape_cast %124 : vector<1x128x1xf32> to vector<128x1xf32>
    %126 = vector.broadcast %125 : vector<128x1xf32> to vector<128x1024xf32>
    %127 = arith.addf %123, %126 : vector<128x1024xf32>
    %128 = arith.addf %107, %127 : vector<128x1024xf32>
    %cst_82 = arith.constant 0.000000e+00 : f32
    %129 = vector.broadcast %cst_82 : f32 to vector<128x1024xf32>
    %130 = arith.maximumf %128, %129 : vector<128x1024xf32>
    %c0_83 = arith.constant 0 : index
    %c0_84 = arith.constant 0 : index
    %131 = vector.load %arg9[%c0_83, %c0_84] : memref<128x1xf32, #tpu.memory_space<vmem>>, vector<128x1xf32>
    %132 = vector.broadcast %131 : vector<128x1xf32> to vector<128x1024xf32>
    %133 = arith.mulf %130, %132 : vector<128x1024xf32>
    %cst_85 = arith.constant dense<0.000000e+00> : vector<1024xf32>
    %134 = vector.multi_reduction <add>, %133, %cst_85 [0] : vector<128x1024xf32> to vector<1024xf32>
    %135 = vector.shape_cast %134 : vector<1024xf32> to vector<1x1024xf32>
    %c0_86 = arith.constant 0 : index
    %c0_87 = arith.constant 0 : index
    %136 = vector.load %arg10[%c0_86, %c0_87] : memref<1x1xf32, #tpu.memory_space<vmem>>, vector<1x1xf32>
    %137 = vector.broadcast %136 : vector<1x1xf32> to vector<1x1024xf32>
    %138 = arith.addf %135, %137 : vector<1x1024xf32>
    %c0_88 = arith.constant 0 : index
    %c0_89 = arith.constant 0 : index
    %c0_90 = arith.constant 0 : index
    %139 = vector.load %arg11[%c0_88, %c0_89, %c0_90] : memref<1x1x1024xf32, #tpu.memory_space<vmem>>, vector<1x1x1024xf32>
    %140 = vector.shape_cast %139 : vector<1x1x1024xf32> to vector<1x1024xf32>
    %141 = vector.shape_cast %138 : vector<1x1024xf32> to vector<1x1x1024xf32>
    tpu.vector_store %arg11[%c0_88, %c0_89, %c0_90], %141 {strides = array<i32>} : memref<1x1x1024xf32, #tpu.memory_space<vmem>>, vector<1x1x1024xf32>,
    return
  }
  func.func @transform_0(%arg0: i32, %arg1: i32) -> (i32, i32, i32) {
    %c0_i32 = arith.constant 0 : i32
    %c0_i32_0 = arith.constant 0 : i32
    return %arg0, %c0_i32, %arg1 : i32, i32, i32
  }
  func.func @transform_1(%arg0: i32, %arg1: i32) -> (i32, i32, i32) {
    %c0_i32 = arith.constant 0 : i32
    %c0_i32_0 = arith.constant 0 : i32
    %c0_i32_1 = arith.constant 0 : i32
    return %arg0, %c0_i32, %c0_i32_0 : i32, i32, i32
  }
  func.func @transform_2(%arg0: i32, %arg1: i32) -> (i32, i32) {
    %c0_i32 = arith.constant 0 : i32
    %c0_i32_0 = arith.constant 0 : i32
    %c0_i32_1 = arith.constant 0 : i32
    return %c0_i32, %c0_i32_0 : i32, i32
  }
  func.func @transform_3(%arg0: i32, %arg1: i32) -> (i32, i32, i32) {
    %c0_i32 = arith.constant 0 : i32
    %c0_i32_0 = arith.constant 0 : i32
    %c0_i32_1 = arith.constant 0 : i32
    %c0_i32_2 = arith.constant 0 : i32
    return %c0_i32, %c0_i32_0, %c0_i32_1 : i32, i32, i32
  }
  func.func @transform_4(%arg0: i32, %arg1: i32) -> (i32, i32, i32) {
    %c0_i32 = arith.constant 0 : i32
    %c0_i32_0 = arith.constant 0 : i32
    %c0_i32_1 = arith.constant 0 : i32
    %c0_i32_2 = arith.constant 0 : i32
    return %c0_i32, %c0_i32_0, %c0_i32_1 : i32, i32, i32
  }
  func.func @transform_5(%arg0: i32, %arg1: i32) -> (i32, i32, i32) {
    %c0_i32 = arith.constant 0 : i32
    %c0_i32_0 = arith.constant 0 : i32
    %c0_i32_1 = arith.constant 0 : i32
    %c0_i32_2 = arith.constant 0 : i32
    return %c0_i32, %c0_i32_0, %c0_i32_1 : i32, i32, i32
  }
  func.func @transform_6(%arg0: i32, %arg1: i32) -> (i32, i32, i32) {
    %c0_i32 = arith.constant 0 : i32
    %c0_i32_0 = arith.constant 0 : i32
    %c0_i32_1 = arith.constant 0 : i32
    %c0_i32_2 = arith.constant 0 : i32
    return %c0_i32, %c0_i32_0, %c0_i32_1 : i32, i32, i32
  }
  func.func @transform_7(%arg0: i32, %arg1: i32) -> (i32, i32) {
    %c0_i32 = arith.constant 0 : i32
    %c0_i32_0 = arith.constant 0 : i32
    %c0_i32_1 = arith.constant 0 : i32
    return %c0_i32, %c0_i32_0 : i32, i32
  }
  func.func @transform_8(%arg0: i32, %arg1: i32) -> (i32, i32) {
    %c0_i32 = arith.constant 0 : i32
    %c0_i32_0 = arith.constant 0 : i32
    %c0_i32_1 = arith.constant 0 : i32
    return %c0_i32, %c0_i32_0 : i32, i32
  }
  func.func @transform_9(%arg0: i32, %arg1: i32) -> (i32, i32, i32) {
    %c0_i32 = arith.constant 0 : i32
    %c0_i32_0 = arith.constant 0 : i32
    return %arg0, %c0_i32, %arg1 : i32, i32, i32
  }
}

</mosaic_0001>

<llo_original>
// kernel: tpu_custom_call.1
$region0: #{tpu_custom_call.1}
  #allocation0 [shape = 'u32[]', space=smem, size = 0x4, offset = 0x4, fixed_abs, tag = 'smem constant byte address 0x4 - core index']
  #allocation1 [shape = 'u32[144,128]{1,0:T(1,128)}', space=vmem, size = 0x12000, scoped, tag = 'internal scratch']
  #allocation2 [shape = 'f32[1,1]{1,0:T(1,128)S(1)}', space=vmem, size = 0x200, scoped, tag = 'scoped memory for tpu_custom_call.1']
  %s0 = inlined_call_operand.vmem [shape: f32[2,3,1024], index: 0, kind: input, shape index: {}]
  %s1 = inlined_call_operand.vmem [shape: f32[2,128,1], index: 1, kind: input, shape index: {}]
  %s2 = inlined_call_operand.vmem [shape: f32[128,3], index: 2, kind: input, shape index: {}]
  %s3 = inlined_call_operand.vmem [shape: bf16[5,128,128], index: 3, kind: input, shape index: {}]
  %s4 = inlined_call_operand.vmem [shape: f32[5,128,1], index: 4, kind: input, shape index: {}]
  %s5 = inlined_call_operand.vmem [shape: bf16[5,128,128], index: 5, kind: input, shape index: {}]
  %s6 = inlined_call_operand.vmem [shape: f32[5,128,1], index: 6, kind: input, shape index: {}]
  %s7 = inlined_call_operand.vmem [shape: f32[128,1], index: 7, kind: input, shape index: {}]
  %s8 = inlined_call_operand.<no memory space> [shape: f32[1,1], index: 8, kind: input, shape index: {}]
  %s9 = inlined_call_operand.hbm [shape: f32[2,1,1024], index: 9, kind: output, shape index: {}]
  %s10 = sld [smem:[#allocation0]]
  $region69: #{tpu_custom_call.1} parent=0
    _
  %s12 = ssub.s32 1, %s10
  %s13 = scalar_select 0, %s12, %s10
  %v14 = vstv %s8
  %15 = vst [vmem:[#allocation2] sm:$0x1] %v14
  $region1: #{tpu_custom_call.1} parent=0
    #allocation3 [shape = 'u8[8192]{0}', space=vmem, size = 0x2000, scoped, tag = 'output window, operand 0']
    #allocation4 [shape = 's32[2]{0}', space=sflag, size = 0x8, scoped, tag = 'scoped memory for tpu_custom_call.1']
    %16 = vsyncpa [#allocation4], 0
    %s17 = scalar_lea.sflag [#allocation4], 1
    %18 = vsyncpa %s17, 0
    loop: start=0, step=1, limit=4
    $region2: #{tpu_custom_call.1} parent=1 // loop_pre_header
      _
    $region3: #{tpu_custom_call.1} parent=1 // loop_header
      %s20 = sphi 0, %s24
      %p21 = scmp.ge.s32.totalorder %s20, 4
      %s27 = sphi 0, %s39
      %s28 = sphi 0, %s35
      %s29 = sphi 0, %s27
      %s30 = sphi 0, %s28
      %s31 = sphi 0, %s29
      %s32 = sphi 0, %s30
      %s44 = sphi 0, %s46
      %s47 = sphi 0, %s44
      %s48 = sphi 0, %s47
      %s64 = sphi 0, %s48
      %s70 = sphi 0, %s72
      %s73 = sphi 0, %s70
      %s74 = sphi 0, %s73
      %s90 = sphi 0, %s74
      %s94 = sphi 0, %s94
      %s96 = sphi 0, %s94
      %s97 = sphi 0, %s96
      %s111 = sphi 0, %s97
      %s115 = sphi 0, %s115
      %s117 = sphi 0, %s115
      %s118 = sphi 0, %s117
      %s132 = sphi 0, %s118
      %s136 = sphi 0, %s136
      %s138 = sphi 0, %s136
      %s139 = sphi 0, %s138
      %s153 = sphi 0, %s139
      %s157 = sphi 0, %s157
      %s159 = sphi 0, %s157
      %s160 = sphi 0, %s159
      %s174 = sphi 0, %s160
      %s178 = sphi 0, %s178
      %s180 = sphi 0, %s178
      %s181 = sphi 0, %s180
      %s195 = sphi 0, %s181
      %s199 = sphi 0, %s199
      %s201 = sphi 0, %s199
      %s202 = sphi 0, %s201
      %s216 = sphi 0, %s202
      %s220 = sphi 0, %s220
      %s222 = sphi 0, %s220
      %s223 = sphi 0, %s222
      %s237 = sphi 0, %s223
      %s245 = sphi 0, %s247
      %s248 = sphi 0, %s245
      %s249 = sphi 0, %s248
      %s265 = sphi 0, %s249
    $region4: #{tpu_custom_call.1} parent=1 // loop_header_branch
      %23 = sbr.rel (%p21) target = $region8
    $region5: #{tpu_custom_call.1} parent=1 // loop_body
      %s25 = ssub.s32 %s20, 1
      %s26 = ssub.s32 %s20, 2
      %s33 = sadd.s32 1, %s28
      %p34 = scmp.ge.s32.totalorder %s33, 1
      %s35 = scalar_select %p34, 0, %s33
      %s36 = sadd.s32 1, %s27
      %s37 = scalar_select %p34, %s36, %s27
      %p38 = scmp.ge.s32.totalorder %s37, 2
      %s39 = scalar_select %p38, 0, %s37
      %s40 = ssub.s32 %s27, %s39
      %s41 = ssub.s32 %s28, %s35
      %s42 = sor.u32 %s40, %s41
      %p43 = scmp.eq.s32.totalorder %s42, 0
      %s45 = sadd.s32 %s44, 1
      %s46 = scalar_select %p43, %s44, %s45
      %p49 = pneg %p43
      %p50 = scmp.eq.s32.totalorder %s20, 1
      %p51 = por %p49, %p50
      %p52 = scmp.ne.s32.totalorder %s44, %s47
      %p53 = scmp.eq.s32.totalorder %s20, 0
      %p54 = por %p52, %p53
      %p55 = scmp.ne.s32.totalorder %s44, %s47
      %p56 = scmp.eq.s32.totalorder %s25, 1
      %p57 = por %p55, %p56
      %p58 = scmp.ne.s32.totalorder %s47, %s48
      %p59 = scmp.eq.s32.totalorder %s25, 0
      %p60 = por %p58, %p59
      %p61 = scmp.ne.s32.totalorder %s47, %s48
      %p62 = scmp.eq.s32.totalorder %s26, 1
      %p63 = por %p61, %p62
      %p65 = scmp.ne.s32.totalorder %s48, %s64
      %p66 = scmp.eq.s32.totalorder %s26, 0
      %p67 = por %p65, %p66
      %s68 = ssub.s32 %s27, %s39
      %p69 = scmp.eq.s32.totalorder %s68, 0
      %s71 = sadd.s32 %s70, 1
      %s72 = scalar_select %p69, %s70, %s71
      %p75 = pneg %p69
      %p76 = scmp.eq.s32.totalorder %s20, 1
      %p77 = por %p75, %p76
      %p78 = scmp.ne.s32.totalorder %s70, %s73
      %p79 = scmp.eq.s32.totalorder %s20, 0
      %p80 = por %p78, %p79
      %p81 = scmp.ne.s32.totalorder %s70, %s73
      %p82 = scmp.eq.s32.totalorder %s25, 1
      %p83 = por %p81, %p82
      %p84 = scmp.ne.s32.totalorder %s73, %s74
      %p85 = scmp.eq.s32.totalorder %s25, 0
      %p86 = por %p84, %p85
      %p87 = scmp.ne.s32.totalorder %s73, %s74
      %p88 = scmp.eq.s32.totalorder %s26, 1
      %p89 = por %p87, %p88
      %p91 = scmp.ne.s32.totalorder %s74, %s90
      %p92 = scmp.eq.s32.totalorder %s26, 0
      %p93 = por %p91, %p92
      %s95 = sadd.s32 %s94, 1
      %p98 = scmp.eq.s32.totalorder %s20, 1
      %p99 = scmp.ne.s32.totalorder %s94, %s96
      %p100 = scmp.eq.s32.totalorder %s20, 0
      %p101 = por %p99, %p100
      %p102 = scmp.ne.s32.totalorder %s94, %s96
      %p103 = scmp.eq.s32.totalorder %s25, 1
      %p104 = por %p102, %p103
      %p105 = scmp.ne.s32.totalorder %s96, %s97
      %p106 = scmp.eq.s32.totalorder %s25, 0
      %p107 = por %p105, %p106
      %p108 = scmp.ne.s32.totalorder %s96, %s97
      %p109 = scmp.eq.s32.totalorder %s26, 1
      %p110 = por %p108, %p109
      %p112 = scmp.ne.s32.totalorder %s97, %s111
      %p113 = scmp.eq.s32.totalorder %s26, 0
      %p114 = por %p112, %p113
      %s116 = sadd.s32 %s115, 1
      %p119 = scmp.eq.s32.totalorder %s20, 1
      %p120 = scmp.ne.s32.totalorder %s115, %s117
      %p121 = scmp.eq.s32.totalorder %s20, 0
      %p122 = por %p120, %p121
      %p123 = scmp.ne.s32.totalorder %s115, %s117
      %p124 = scmp.eq.s32.totalorder %s25, 1
      %p125 = por %p123, %p124
      %p126 = scmp.ne.s32.totalorder %s117, %s118
      %p127 = scmp.eq.s32.totalorder %s25, 0
      %p128 = por %p126, %p127
      %p129 = scmp.ne.s32.totalorder %s117, %s118
      %p130 = scmp.eq.s32.totalorder %s26, 1
      %p131 = por %p129, %p130
      %p133 = scmp.ne.s32.totalorder %s118, %s132
      %p134 = scmp.eq.s32.totalorder %s26, 0
      %p135 = por %p133, %p134
      %s137 = sadd.s32 %s136, 1
      %p140 = scmp.eq.s32.totalorder %s20, 1
      %p141 = scmp.ne.s32.totalorder %s136, %s138
      %p142 = scmp.eq.s32.totalorder %s20, 0
      %p143 = por %p141, %p142
      %p144 = scmp.ne.s32.totalorder %s136, %s138
      %p145 = scmp.eq.s32.totalorder %s25, 1
      %p146 = por %p144, %p145
      %p147 = scmp.ne.s32.totalorder %s138, %s139
      %p148 = scmp.eq.s32.totalorder %s25, 0
      %p149 = por %p147, %p148
      %p150 = scmp.ne.s32.totalorder %s138, %s139
      %p151 = scmp.eq.s32.totalorder %s26, 1
      %p152 = por %p150, %p151
      %p154 = scmp.ne.s32.totalorder %s139, %s153
      %p155 = scmp.eq.s32.totalorder %s26, 0
      %p156 = por %p154, %p155
      %s158 = sadd.s32 %s157, 1
      %p161 = scmp.eq.s32.totalorder %s20, 1
      %p162 = scmp.ne.s32.totalorder %s157, %s159
      %p163 = scmp.eq.s32.totalorder %s20, 0
      %p164 = por %p162, %p163
      %p165 = scmp.ne.s32.totalorder %s157, %s159
      %p166 = scmp.eq.s32.totalorder %s25, 1
      %p167 = por %p165, %p166
      %p168 = scmp.ne.s32.totalorder %s159, %s160
      %p169 = scmp.eq.s32.totalorder %s25, 0
      %p170 = por %p168, %p169
      %p171 = scmp.ne.s32.totalorder %s159, %s160
      %p172 = scmp.eq.s32.totalorder %s26, 1
      %p173 = por %p171, %p172
      %p175 = scmp.ne.s32.totalorder %s160, %s174
      %p176 = scmp.eq.s32.totalorder %s26, 0
      %p177 = por %p175, %p176
      %s179 = sadd.s32 %s178, 1
      %p182 = scmp.eq.s32.totalorder %s20, 1
      %p183 = scmp.ne.s32.totalorder %s178, %s180
      %p184 = scmp.eq.s32.totalorder %s20, 0
      %p185 = por %p183, %p184
      %p186 = scmp.ne.s32.totalorder %s178, %s180
      %p187 = scmp.eq.s32.totalorder %s25, 1
      %p188 = por %p186, %p187
      %p189 = scmp.ne.s32.totalorder %s180, %s181
      %p190 = scmp.eq.s32.totalorder %s25, 0
      %p191 = por %p189, %p190
      %p192 = scmp.ne.s32.totalorder %s180, %s181
      %p193 = scmp.eq.s32.totalorder %s26, 1
      %p194 = por %p192, %p193
      %p196 = scmp.ne.s32.totalorder %s181, %s195
      %p197 = scmp.eq.s32.totalorder %s26, 0
      %p198 = por %p196, %p197
      %s200 = sadd.s32 %s199, 1
      %p203 = scmp.eq.s32.totalorder %s20, 1
      %p204 = scmp.ne.s32.totalorder %s199, %s201
      %p205 = scmp.eq.s32.totalorder %s20, 0
      %p206 = por %p204, %p205
      %p207 = scmp.ne.s32.totalorder %s199, %s201
      %p208 = scmp.eq.s32.totalorder %s25, 1
      %p209 = por %p207, %p208
      %p210 = scmp.ne.s32.totalorder %s201, %s202
      %p211 = scmp.eq.s32.totalorder %s25, 0
      %p212 = por %p210, %p211
      %p213 = scmp.ne.s32.totalorder %s201, %s202
      %p214 = scmp.eq.s32.totalorder %s26, 1
      %p215 = por %p213, %p214
      %p217 = scmp.ne.s32.totalorder %s202, %s216
      %p218 = scmp.eq.s32.totalorder %s26, 0
      %p219 = por %p217, %p218
      %s221 = sadd.s32 %s220, 1
      %p224 = scmp.eq.s32.totalorder %s20, 1
      %p225 = scmp.ne.s32.totalorder %s220, %s222
      %p226 = scmp.eq.s32.totalorder %s20, 0
      %p227 = por %p225, %p226
      %p228 = scmp.ne.s32.totalorder %s220, %s222
      %p229 = scmp.eq.s32.totalorder %s25, 1
      %p230 = por %p228, %p229
      %p231 = scmp.ne.s32.totalorder %s222, %s223
      %p232 = scmp.eq.s32.totalorder %s25, 0
      %p233 = por %p231, %p232
      %p234 = scmp.ne.s32.totalorder %s222, %s223
      %p235 = scmp.eq.s32.totalorder %s26, 1
      %p236 = por %p234, %p235
      %p238 = scmp.ne.s32.totalorder %s223, %s237
      %p239 = scmp.eq.s32.totalorder %s26, 0
      %p240 = por %p238, %p239
      %s241 = ssub.s32 %s27, %s39
      %s242 = ssub.s32 %s28, %s35
      %s243 = sor.u32 %s241, %s242
      %p244 = scmp.eq.s32.totalorder %s243, 0
      %s246 = sadd.s32 %s245, 1
      %s247 = scalar_select %p244, %s245, %s246
      %p250 = pneg %p244
      %p251 = scmp.eq.s32.totalorder %s20, 1
      %p252 = por %p250, %p251
      %p253 = scmp.ne.s32.totalorder %s245, %s248
      %p254 = scmp.eq.s32.totalorder %s20, 0
      %p255 = por %p253, %p254
      %p256 = scmp.ne.s32.totalorder %s245, %s248
      %p257 = scmp.eq.s32.totalorder %s25, 1
      %p258 = por %p256, %p257
      %p259 = scmp.ne.s32.totalorder %s248, %s249
      %p260 = scmp.eq.s32.totalorder %s25, 0
      %p261 = por %p259, %p260
      %p262 = scmp.ne.s32.totalorder %s248, %s249
      %p263 = scmp.eq.s32.totalorder %s26, 1
      %p264 = por %p262, %p263
      %p266 = scmp.ne.s32.totalorder %s249, %s265
      %p267 = scmp.eq.s32.totalorder %s26, 0
      %p268 = por %p266, %p267
      %p269 = scmp.le.s32.totalorder 1, %s20
      %p270 = scmp.lt.s32.totalorder %s20, 3
      %p271 = pnand %p269, %p270
      %p272 = pneg %p271
      // Predicated region
      $region9: #{tpu_custom_call.1} parent=5 // pred_check
        _
      $region10: #{tpu_custom_call.1} parent=5 // pred_check_branch
        %274 = sbr.rel (%p271) target = $region12
      $region11: #{tpu_custom_call.1} parent=5 // pred_region
        %s275 = ssub.s32 %s20, 1
        // Predicated region
        $region13: #{tpu_custom_call.1} parent=11 // pred_check
          %p276 = pneg %p107
        $region14: #{tpu_custom_call.1} parent=11 // pred_check_branch
          %278 = sbr.rel (%p276) target = $region16
        $region15: #{tpu_custom_call.1} parent=11 // pred_region
          _
        $region16: #{tpu_custom_call.1} parent=11 // pred_fallthru
          _
        // Predicated region
        $region17: #{tpu_custom_call.1} parent=11 // pred_check
          %p279 = pneg %p128
        $region18: #{tpu_custom_call.1} parent=11 // pred_check_branch
          %281 = sbr.rel (%p279) target = $region20
        $region19: #{tpu_custom_call.1} parent=11 // pred_region
          _
        $region20: #{tpu_custom_call.1} parent=11 // pred_fallthru
          _
        // Predicated region
        $region21: #{tpu_custom_call.1} parent=11 // pred_check
          %p282 = pneg %p149
        $region22: #{tpu_custom_call.1} parent=11 // pred_check_branch
          %284 = sbr.rel (%p282) target = $region24
        $region23: #{tpu_custom_call.1} parent=11 // pred_region
          _
        $region24: #{tpu_custom_call.1} parent=11 // pred_fallthru
          _
        // Predicated region
        $region25: #{tpu_custom_call.1} parent=11 // pred_check
          %p285 = pneg %p170
        $region26: #{tpu_custom_call.1} parent=11 // pred_check_branch
          %287 = sbr.rel (%p285) target = $region28
        $region27: #{tpu_custom_call.1} parent=11 // pred_region
          _
        $region28: #{tpu_custom_call.1} parent=11 // pred_fallthru
          _
        // Predicated region
        $region29: #{tpu_custom_call.1} parent=11 // pred_check
          %p288 = pneg %p191
        $region30: #{tpu_custom_call.1} parent=11 // pred_check_branch
          %290 = sbr.rel (%p288) target = $region32
        $region31: #{tpu_custom_call.1} parent=11 // pred_region
          _
        $region32: #{tpu_custom_call.1} parent=11 // pred_fallthru
          _
        // Predicated region
        $region33: #{tpu_custom_call.1} parent=11 // pred_check
          %p291 = pneg %p212
        $region34: #{tpu_custom_call.1} parent=11 // pred_check_branch
          %293 = sbr.rel (%p291) target = $region36
        $region35: #{tpu_custom_call.1} parent=11 // pred_region
          _
        $region36: #{tpu_custom_call.1} parent=11 // pred_fallthru
          _
        // Predicated region
        $region37: #{tpu_custom_call.1} parent=11 // pred_check
          %p294 = pneg %p233
        $region38: #{tpu_custom_call.1} parent=11 // pred_check_branch
          %296 = sbr.rel (%p294) target = $region40
        $region39: #{tpu_custom_call.1} parent=11 // pred_region
          _
        $region40: #{tpu_custom_call.1} parent=11 // pred_fallthru
          _
      $region12: #{tpu_custom_call.1} parent=5 // pred_fallthru
        _
      %p297 = scmp.lt.s32.totalorder %s20, 2
      // Predicated region
      $region41: #{tpu_custom_call.1} parent=5 // pred_check
        %p298 = pneg %p297
      $region42: #{tpu_custom_call.1} parent=5 // pred_check_branch
        %300 = sbr.rel (%p298) target = $region44
      $region43: #{tpu_custom_call.1} parent=5 // pred_region
        // Predicated region
        $region45: #{tpu_custom_call.1} parent=43 // pred_check
          %p301 = pneg %p54
        $region46: #{tpu_custom_call.1} parent=43 // pred_check_branch
          %303 = sbr.rel (%p301) target = $region48
        $region47: #{tpu_custom_call.1} parent=43 // pred_region
          %s304 = smul.u32 8, %s28
          %p305 = scmp.lt.s32.totalorder %s27, 1
          %s306 = scalar_select %p305, %s27, 1
          %p307 = scmp.lt.s32.totalorder %s304, 7
          %s308 = scalar_select %p307, %s304, 7
          %s309 = smul.addr %s306, 8
          %s310 = sadd.s32 %s308, %s309
          %s311 = smul.addr %s310, 4
          %s312 = scalar_lea.vmem %s0, %s311
          %s313 = smul.u32 8, %s28
        $region48: #{tpu_custom_call.1} parent=43 // pred_fallthru
          _
        // Predicated region
        $region49: #{tpu_custom_call.1} parent=43 // pred_check
          %p314 = pneg %p80
        $region50: #{tpu_custom_call.1} parent=43 // pred_check_branch
          %316 = sbr.rel (%p314) target = $region52
        $region51: #{tpu_custom_call.1} parent=43 // pred_region
          %p317 = scmp.lt.s32.totalorder %s27, 1
          %s318 = scalar_select %p317, %s27, 1
          %s319 = smul.addr %s318, 16
          %s320 = smul.addr %s319, 8
          %s321 = scalar_lea.vmem %s1, %s320
        $region52: #{tpu_custom_call.1} parent=43 // pred_fallthru
          _
      $region44: #{tpu_custom_call.1} parent=5 // pred_fallthru
        _
      %p322 = scmp.le.s32.totalorder 1, %s20
      %p323 = scmp.lt.s32.totalorder %s20, 3
      %p324 = pnand %p322, %p323
      %p325 = pneg %p324
      // Predicated region
      $region53: #{tpu_custom_call.1} parent=5 // pred_check
        _
      $region54: #{tpu_custom_call.1} parent=5 // pred_check_branch
        %327 = sbr.rel (%p324) target = $region56
      $region55: #{tpu_custom_call.1} parent=5 // pred_region
        %s328 = ssub.s32 %s20, 1
        %s329 = smul.u32 8, %s30
        %p330 = scmp.lt.s32.totalorder %s29, 1
        %s331 = scalar_select %p330, %s29, 1
        %p332 = scmp.lt.s32.totalorder %s329, 7
        %s333 = scalar_select %p332, %s329, 7
        %s334 = smul.addr %s331, 8
        %s335 = sadd.s32 %s333, %s334
        %s336 = smul.addr %s335, 4
        %s337 = scalar_lea.vmem %s0, %s336
        %p338 = pneg %p60
        %p339 = pneg %p57
        %p340 = scmp.lt.s32.totalorder %s29, 1
        %s341 = scalar_select %p340, %s29, 1
        %s342 = smul.addr %s341, 16
        %s343 = smul.addr %s342, 8
        %s344 = scalar_lea.vmem %s1, %s343
        %p345 = pneg %p86
        %p346 = pneg %p83
        %p347 = pneg %p107
        %p348 = pneg %p104
        %p349 = pneg %p128
        %p350 = pneg %p125
        %p351 = pneg %p149
        %p352 = pneg %p146
        %p353 = pneg %p170
        %p354 = pneg %p167
        %p355 = pneg %p191
        %p356 = pneg %p188
        %p357 = pneg %p212
        %p358 = pneg %p209
        %p359 = pneg %p233
        %p360 = pneg %p230
        %p361 = pneg %p261
        %p362 = pneg %p258
        %s363 = sand.u32 %s248, 1
        %s364 = scalar_lea.sflag [#allocation4], %s363
        %s365 = sand.u32 %s248, 1
        %s366 = smul.addr %s365, 8
        %s367 = scalar_lea.vmem [#allocation3], %s366
        %s368 = smul.u32 8, %s30
        %p369 = scmp.lt.s32.totalorder %s29, 1
        %s370 = scalar_select %p369, %s29, 1
        %p371 = scmp.lt.s32.totalorder %s368, 7
        %s372 = scalar_select %p371, %s368, 7
        %s373 = smul.addr %s370, 8
        %s374 = sadd.s32 %s372, %s373
        %s375 = smul.addr %s374, 4
        %s376 = scalar_lea.vmem %s0, %s375
        %s377 = smul.u32 8, %s30
        %p378 = scmp.lt.s32.totalorder %s29, 1
        %s379 = scalar_select %p378, %s29, 1
        %s380 = smul.addr %s379, 16
        %s381 = smul.addr %s380, 8
        %s382 = scalar_lea.vmem %s1, %s381
        %s383 = smul.u32 8, %s30
        %v385 = vld [vmem:[%s376] sm:$0x77]
        %v386 = vld [vmem:[%s376 + $0x8] sm:$0x77]
        %v387 = vld [vmem:[%s376 + $0x10] sm:$0x77]
        %v388 = vld [vmem:[%s376 + $0x18] sm:$0x77]
        %v389 = vld [vmem:[%s2] sm:$0xff]
        %v390 = vld [vmem:[%s2 + $0x8] sm:$0xff]
        %v391 = vld [vmem:[%s2 + $0x10] sm:$0xff]
        %v392 = vld [vmem:[%s2 + $0x18] sm:$0xff]
        %v393 = vld [vmem:[%s2 + $0x20] sm:$0xff]
        %v394 = vld [vmem:[%s2 + $0x28] sm:$0xff]
        %v395 = vld [vmem:[%s2 + $0x30] sm:$0xff]
        %v396 = vld [vmem:[%s2 + $0x38] sm:$0xff]
        %v397 = vld [vmem:[%s2 + $0x40] sm:$0xff]
        %v398 = vld [vmem:[%s2 + $0x48] sm:$0xff]
        %v399 = vld [vmem:[%s2 + $0x50] sm:$0xff]
        %v400 = vld [vmem:[%s2 + $0x58] sm:$0xff]
        %v401 = vld [vmem:[%s2 + $0x60] sm:$0xff]
        %v402 = vld [vmem:[%s2 + $0x68] sm:$0xff]
        %v403 = vld [vmem:[%s2 + $0x70] sm:$0xff]
        %v404 = vld [vmem:[%s2 + $0x78] sm:$0xff]
        %v405 = vld [vmem:[%s382] sm:$0xff]
        %v406 = vld [vmem:[%s382 + $0x8] sm:$0xff]
        %v407 = vld [vmem:[%s382 + $0x10] sm:$0xff]
        %v408 = vld [vmem:[%s382 + $0x18] sm:$0xff]
        %v409 = vld [vmem:[%s382 + $0x20] sm:$0xff]
        %v410 = vld [vmem:[%s382 + $0x28] sm:$0xff]
        %v411 = vld [vmem:[%s382 + $0x30] sm:$0xff]
        %v412 = vld [vmem:[%s382 + $0x38] sm:$0xff]
        %v413 = vld [vmem:[%s382 + $0x40] sm:$0xff]
        %v414 = vld [vmem:[%s382 + $0x48] sm:$0xff]
        %v415 = vld [vmem:[%s382 + $0x50] sm:$0xff]
        %v416 = vld [vmem:[%s382 + $0x58] sm:$0xff]
        %v417 = vld [vmem:[%s382 + $0x60] sm:$0xff]
        %v418 = vld [vmem:[%s382 + $0x68] sm:$0xff]
        %v419 = vld [vmem:[%s382 + $0x70] sm:$0xff]
        %v420 = vld [vmem:[%s382 + $0x78] sm:$0xff]
        %422 = vset.pattern.permute.xlu0 0
        %423 = vperm.xlu0 %422, %v389
        %v424 = vpop.permute.xlu0 %423
        %427 = vset.pattern.permute.xlu0 0
        %428 = vperm.xlu0 %427, %v390
        %v429 = vpop.permute.xlu0 %428
        %432 = vset.pattern.permute.xlu0 0
        %433 = vperm.xlu0 %432, %v391
        %v434 = vpop.permute.xlu0 %433
        %437 = vset.pattern.permute.xlu0 0
        %438 = vperm.xlu0 %437, %v392
        %v439 = vpop.permute.xlu0 %438
        %442 = vset.pattern.permute.xlu0 0
        %443 = vperm.xlu0 %442, %v393
        %v444 = vpop.permute.xlu0 %443
        %447 = vset.pattern.permute.xlu0 0
        %448 = vperm.xlu0 %447, %v394
        %v449 = vpop.permute.xlu0 %448
        %452 = vset.pattern.permute.xlu0 0
        %453 = vperm.xlu0 %452, %v395
        %v454 = vpop.permute.xlu0 %453
        %457 = vset.pattern.permute.xlu0 0
        %458 = vperm.xlu0 %457, %v396
        %v459 = vpop.permute.xlu0 %458
        %462 = vset.pattern.permute.xlu0 0
        %463 = vperm.xlu0 %462, %v397
        %v464 = vpop.permute.xlu0 %463
        %467 = vset.pattern.permute.xlu0 0
        %468 = vperm.xlu0 %467, %v398
        %v469 = vpop.permute.xlu0 %468
        %472 = vset.pattern.permute.xlu0 0
        %473 = vperm.xlu0 %472, %v399
        %v474 = vpop.permute.xlu0 %473
        %477 = vset.pattern.permute.xlu0 0
        %478 = vperm.xlu0 %477, %v400
        %v479 = vpop.permute.xlu0 %478
        %482 = vset.pattern.permute.xlu0 0
        %483 = vperm.xlu0 %482, %v401
        %v484 = vpop.permute.xlu0 %483
        %487 = vset.pattern.permute.xlu0 0
        %488 = vperm.xlu0 %487, %v402
        %v489 = vpop.permute.xlu0 %488
        %492 = vset.pattern.permute.xlu0 0
        %493 = vperm.xlu0 %492, %v403
        %v494 = vpop.permute.xlu0 %493
        %497 = vset.pattern.permute.xlu0 0
        %498 = vperm.xlu0 %497, %v404
        %v499 = vpop.permute.xlu0 %498
        %v505 = vlaneseq
        %v506 = vshrl.u32 %v505, 7
        %v507 = vsub.s32 0, %v506
        %v508 = vrot.slane %v385, %v507
        %v509 = vlaneseq
        %v510 = vshrl.u32 %v509, 7
        %v511 = vsub.s32 4, %v510
        %v512 = vrot.slane %v385, %v511
        %v513 = vlaneseq
        %v514 = vshrl.u32 %v513, 7
        %v515 = vsub.s32 0, %v514
        %v516 = vrot.slane %v386, %v515
        %v517 = vlaneseq
        %v518 = vshrl.u32 %v517, 7
        %v519 = vsub.s32 4, %v518
        %v520 = vrot.slane %v386, %v519
        %v521 = vlaneseq
        %v522 = vshrl.u32 %v521, 7
        %v523 = vsub.s32 0, %v522
        %v524 = vrot.slane %v387, %v523
        %v525 = vlaneseq
        %v526 = vshrl.u32 %v525, 7
        %v527 = vsub.s32 4, %v526
        %v528 = vrot.slane %v387, %v527
        %v529 = vlaneseq
        %v530 = vshrl.u32 %v529, 7
        %v531 = vsub.s32 0, %v530
        %v532 = vrot.slane %v388, %v531
        %v533 = vlaneseq
        %v534 = vshrl.u32 %v533, 7
        %v535 = vsub.s32 4, %v534
        %v536 = vrot.slane %v388, %v535
        %v545 = vlaneseq
        %v546 = vshrl.u32 %v545, 7
        %v547 = vsub.s32 0, %v546
        %v548 = vrot.slane %v508, %v547
        %v549 = vlaneseq
        %v550 = vshrl.u32 %v549, 7
        %v551 = vsub.s32 0, %v550
        %v552 = vrot.slane %v512, %v551
        %v553 = vlaneseq
        %v554 = vshrl.u32 %v553, 7
        %v555 = vsub.s32 0, %v554
        %v556 = vrot.slane %v516, %v555
        %v557 = vlaneseq
        %v558 = vshrl.u32 %v557, 7
        %v559 = vsub.s32 0, %v558
        %v560 = vrot.slane %v520, %v559
        %v561 = vlaneseq
        %v562 = vshrl.u32 %v561, 7
        %v563 = vsub.s32 0, %v562
        %v564 = vrot.slane %v524, %v563
        %v565 = vlaneseq
        %v566 = vshrl.u32 %v565, 7
        %v567 = vsub.s32 0, %v566
        %v568 = vrot.slane %v528, %v567
        %v569 = vlaneseq
        %v570 = vshrl.u32 %v569, 7
        %v571 = vsub.s32 0, %v570
        %v572 = vrot.slane %v532, %v571
        %v573 = vlaneseq
        %v574 = vshrl.u32 %v573, 7
        %v575 = vsub.s32 0, %v574
        %v576 = vrot.slane %v536, %v575
        %v577 = vmul.f32 %v424, %v548
        %v578 = vmul.f32 %v424, %v552
        %v579 = vmul.f32 %v424, %v556
        %v580 = vmul.f32 %v424, %v560
        %v581 = vmul.f32 %v424, %v564
        %v582 = vmul.f32 %v424, %v568
        %v583 = vmul.f32 %v424, %v572
        %v584 = vmul.f32 %v424, %v576
        %v585 = vmul.f32 %v429, %v548
        %v586 = vmul.f32 %v429, %v552
        %v587 = vmul.f32 %v429, %v556
        %v588 = vmul.f32 %v429, %v560
        %v589 = vmul.f32 %v429, %v564
        %v590 = vmul.f32 %v429, %v568
        %v591 = vmul.f32 %v429, %v572
        %v592 = vmul.f32 %v429, %v576
        %v593 = vmul.f32 %v434, %v548
        %v594 = vmul.f32 %v434, %v552
        %v595 = vmul.f32 %v434, %v556
        %v596 = vmul.f32 %v434, %v560
        %v597 = vmul.f32 %v434, %v564
        %v598 = vmul.f32 %v434, %v568
        %v599 = vmul.f32 %v434, %v572
        %v600 = vmul.f32 %v434, %v576
        %v601 = vmul.f32 %v439, %v548
        %v602 = vmul.f32 %v439, %v552
        %v603 = vmul.f32 %v439, %v556
        %v604 = vmul.f32 %v439, %v560
        %v605 = vmul.f32 %v439, %v564
        %v606 = vmul.f32 %v439, %v568
        %v607 = vmul.f32 %v439, %v572
        %v608 = vmul.f32 %v439, %v576
        %v609 = vmul.f32 %v444, %v548
        %v610 = vmul.f32 %v444, %v552
        %v611 = vmul.f32 %v444, %v556
        %v612 = vmul.f32 %v444, %v560
        %v613 = vmul.f32 %v444, %v564
        %v614 = vmul.f32 %v444, %v568
        %v615 = vmul.f32 %v444, %v572
        %v616 = vmul.f32 %v444, %v576
        %v617 = vmul.f32 %v449, %v548
        %v618 = vmul.f32 %v449, %v552
        %v619 = vmul.f32 %v449, %v556
        %v620 = vmul.f32 %v449, %v560
        %v621 = vmul.f32 %v449, %v564
        %v622 = vmul.f32 %v449, %v568
        %v623 = vmul.f32 %v449, %v572
        %v624 = vmul.f32 %v449, %v576
        %v625 = vmul.f32 %v454, %v548
        %v626 = vmul.f32 %v454, %v552
        %v627 = vmul.f32 %v454, %v556
        %v628 = vmul.f32 %v454, %v560
        %v629 = vmul.f32 %v454, %v564
        %v630 = vmul.f32 %v454, %v568
        %v631 = vmul.f32 %v454, %v572
        %v632 = vmul.f32 %v454, %v576
        %v633 = vmul.f32 %v459, %v548
        %v634 = vmul.f32 %v459, %v552
        %v635 = vmul.f32 %v459, %v556
        %v636 = vmul.f32 %v459, %v560
        %v637 = vmul.f32 %v459, %v564
        %v638 = vmul.f32 %v459, %v568
        %v639 = vmul.f32 %v459, %v572
        %v640 = vmul.f32 %v459, %v576
        %v641 = vmul.f32 %v464, %v548
        %v642 = vmul.f32 %v464, %v552
        %v643 = vmul.f32 %v464, %v556
        %v644 = vmul.f32 %v464, %v560
        %v645 = vmul.f32 %v464, %v564
        %v646 = vmul.f32 %v464, %v568
        %v647 = vmul.f32 %v464, %v572
        %v648 = vmul.f32 %v464, %v576
        %v649 = vmul.f32 %v469, %v548
        %v650 = vmul.f32 %v469, %v552
        %v651 = vmul.f32 %v469, %v556
        %v652 = vmul.f32 %v469, %v560
        %v653 = vmul.f32 %v469, %v564
        %v654 = vmul.f32 %v469, %v568
        %v655 = vmul.f32 %v469, %v572
        %v656 = vmul.f32 %v469, %v576
        %v657 = vmul.f32 %v474, %v548
        %v658 = vmul.f32 %v474, %v552
        %v659 = vmul.f32 %v474, %v556
        %v660 = vmul.f32 %v474, %v560
        %v661 = vmul.f32 %v474, %v564
        %v662 = vmul.f32 %v474, %v568
        %v663 = vmul.f32 %v474, %v572
        %v664 = vmul.f32 %v474, %v576
        %v665 = vmul.f32 %v479, %v548
        %v666 = vmul.f32 %v479, %v552
        %v667 = vmul.f32 %v479, %v556
        %v668 = vmul.f32 %v479, %v560
        %v669 = vmul.f32 %v479, %v564
        %v670 = vmul.f32 %v479, %v568
        %v671 = vmul.f32 %v479, %v572
        %v672 = vmul.f32 %v479, %v576
        %v673 = vmul.f32 %v484, %v548
        %v674 = vmul.f32 %v484, %v552
        %v675 = vmul.f32 %v484, %v556
        %v676 = vmul.f32 %v484, %v560
        %v677 = vmul.f32 %v484, %v564
        %v678 = vmul.f32 %v484, %v568
        %v679 = vmul.f32 %v484, %v572
        %v680 = vmul.f32 %v484, %v576
        %v681 = vmul.f32 %v489, %v548
        %v682 = vmul.f32 %v489, %v552
        %v683 = vmul.f32 %v489, %v556
        %v684 = vmul.f32 %v489, %v560
        %v685 = vmul.f32 %v489, %v564
        %v686 = vmul.f32 %v489, %v568
        %v687 = vmul.f32 %v489, %v572
        %v688 = vmul.f32 %v489, %v576
        %v689 = vmul.f32 %v494, %v548
        %v690 = vmul.f32 %v494, %v552
        %v691 = vmul.f32 %v494, %v556
        %v692 = vmul.f32 %v494, %v560
        %v693 = vmul.f32 %v494, %v564
        %v694 = vmul.f32 %v494, %v568
        %v695 = vmul.f32 %v494, %v572
        %v696 = vmul.f32 %v494, %v576
        %v697 = vmul.f32 %v499, %v548
        %v698 = vmul.f32 %v499, %v552
        %v699 = vmul.f32 %v499, %v556
        %v700 = vmul.f32 %v499, %v560
        %v701 = vmul.f32 %v499, %v564
        %v702 = vmul.f32 %v499, %v568
        %v703 = vmul.f32 %v499, %v572
        %v704 = vmul.f32 %v499, %v576
        %706 = vset.pattern.permute.xlu0 0
        %707 = vperm.xlu0 %706, %v405
        %v708 = vpop.permute.xlu0 %707
        %711 = vset.pattern.permute.xlu0 0
        %712 = vperm.xlu0 %711, %v406
        %v713 = vpop.permute.xlu0 %712
        %716 = vset.pattern.permute.xlu0 0
        %717 = vperm.xlu0 %716, %v407
        %v718 = vpop.permute.xlu0 %717
        %721 = vset.pattern.permute.xlu0 0
        %722 = vperm.xlu0 %721, %v408
        %v723 = vpop.permute.xlu0 %722
        %726 = vset.pattern.permute.xlu0 0
        %727 = vperm.xlu0 %726, %v409
        %v728 = vpop.permute.xlu0 %727
        %731 = vset.pattern.permute.xlu0 0
        %732 = vperm.xlu0 %731, %v410
        %v733 = vpop.permute.xlu0 %732
        %736 = vset.pattern.permute.xlu0 0
        %737 = vperm.xlu0 %736, %v411
        %v738 = vpop.permute.xlu0 %737
        %741 = vset.pattern.permute.xlu0 0
        %742 = vperm.xlu0 %741, %v412
        %v743 = vpop.permute.xlu0 %742
        %746 = vset.pattern.permute.xlu0 0
        %747 = vperm.xlu0 %746, %v413
        %v748 = vpop.permute.xlu0 %747
        %751 = vset.pattern.permute.xlu0 0
        %752 = vperm.xlu0 %751, %v414
        %v753 = vpop.permute.xlu0 %752
        %756 = vset.pattern.permute.xlu0 0
        %757 = vperm.xlu0 %756, %v415
        %v758 = vpop.permute.xlu0 %757
        %761 = vset.pattern.permute.xlu0 0
        %762 = vperm.xlu0 %761, %v416
        %v763 = vpop.permute.xlu0 %762
        %766 = vset.pattern.permute.xlu0 0
        %767 = vperm.xlu0 %766, %v417
        %v768 = vpop.permute.xlu0 %767
        %771 = vset.pattern.permute.xlu0 0
        %772 = vperm.xlu0 %771, %v418
        %v773 = vpop.permute.xlu0 %772
        %776 = vset.pattern.permute.xlu0 0
        %777 = vperm.xlu0 %776, %v419
        %v778 = vpop.permute.xlu0 %777
        %781 = vset.pattern.permute.xlu0 0
        %782 = vperm.xlu0 %781, %v420
        %v783 = vpop.permute.xlu0 %782
        %v785 = vadd.f32 %v708, %v577
        %v786 = vadd.f32 %v708, %v578
        %v787 = vadd.f32 %v708, %v579
        %v788 = vadd.f32 %v708, %v580
        %v789 = vadd.f32 %v708, %v581
        %v790 = vadd.f32 %v708, %v582
        %v791 = vadd.f32 %v708, %v583
        %v792 = vadd.f32 %v708, %v584
        %v793 = vadd.f32 %v713, %v585
        %v794 = vadd.f32 %v713, %v586
        %v795 = vadd.f32 %v713, %v587
        %v796 = vadd.f32 %v713, %v588
        %v797 = vadd.f32 %v713, %v589
        %v798 = vadd.f32 %v713, %v590
        %v799 = vadd.f32 %v713, %v591
        %v800 = vadd.f32 %v713, %v592
        %v801 = vadd.f32 %v718, %v593
        %v802 = vadd.f32 %v718, %v594
        %v803 = vadd.f32 %v718, %v595
        %v804 = vadd.f32 %v718, %v596
        %v805 = vadd.f32 %v718, %v597
        %v806 = vadd.f32 %v718, %v598
        %v807 = vadd.f32 %v718, %v599
        %v808 = vadd.f32 %v718, %v600
        %v809 = vadd.f32 %v723, %v601
        %v810 = vadd.f32 %v723, %v602
        %v811 = vadd.f32 %v723, %v603
        %v812 = vadd.f32 %v723, %v604
        %v813 = vadd.f32 %v723, %v605
        %v814 = vadd.f32 %v723, %v606
        %v815 = vadd.f32 %v723, %v607
        %v816 = vadd.f32 %v723, %v608
        %v817 = vadd.f32 %v728, %v609
        %v818 = vadd.f32 %v728, %v610
        %v819 = vadd.f32 %v728, %v611
        %v820 = vadd.f32 %v728, %v612
        %v821 = vadd.f32 %v728, %v613
        %v822 = vadd.f32 %v728, %v614
        %v823 = vadd.f32 %v728, %v615
        %v824 = vadd.f32 %v728, %v616
        %v825 = vadd.f32 %v733, %v617
        %v826 = vadd.f32 %v733, %v618
        %v827 = vadd.f32 %v733, %v619
        %v828 = vadd.f32 %v733, %v620
        %v829 = vadd.f32 %v733, %v621
        %v830 = vadd.f32 %v733, %v622
        %v831 = vadd.f32 %v733, %v623
        %v832 = vadd.f32 %v733, %v624
        %v833 = vadd.f32 %v738, %v625
        %v834 = vadd.f32 %v738, %v626
        %v835 = vadd.f32 %v738, %v627
        %v836 = vadd.f32 %v738, %v628
        %v837 = vadd.f32 %v738, %v629
        %v838 = vadd.f32 %v738, %v630
        %v839 = vadd.f32 %v738, %v631
        %v840 = vadd.f32 %v738, %v632
        %v841 = vadd.f32 %v743, %v633
        %v842 = vadd.f32 %v743, %v634
        %v843 = vadd.f32 %v743, %v635
        %v844 = vadd.f32 %v743, %v636
        %v845 = vadd.f32 %v743, %v637
        %v846 = vadd.f32 %v743, %v638
        %v847 = vadd.f32 %v743, %v639
        %v848 = vadd.f32 %v743, %v640
        %v849 = vadd.f32 %v748, %v641
        %v850 = vadd.f32 %v748, %v642
        %v851 = vadd.f32 %v748, %v643
        %v852 = vadd.f32 %v748, %v644
        %v853 = vadd.f32 %v748, %v645
        %v854 = vadd.f32 %v748, %v646
        %v855 = vadd.f32 %v748, %v647
        %v856 = vadd.f32 %v748, %v648
        %v857 = vadd.f32 %v753, %v649
        %v858 = vadd.f32 %v753, %v650
        %v859 = vadd.f32 %v753, %v651
        %v860 = vadd.f32 %v753, %v652
        %v861 = vadd.f32 %v753, %v653
        %v862 = vadd.f32 %v753, %v654
        %v863 = vadd.f32 %v753, %v655
        %v864 = vadd.f32 %v753, %v656
        %v865 = vadd.f32 %v758, %v657
        %v866 = vadd.f32 %v758, %v658
        %v867 = vadd.f32 %v758, %v659
        %v868 = vadd.f32 %v758, %v660
        %v869 = vadd.f32 %v758, %v661
        %v870 = vadd.f32 %v758, %v662
        %v871 = vadd.f32 %v758, %v663
        %v872 = vadd.f32 %v758, %v664
        %v873 = vadd.f32 %v763, %v665
        %v874 = vadd.f32 %v763, %v666
        %v875 = vadd.f32 %v763, %v667
        %v876 = vadd.f32 %v763, %v668
        %v877 = vadd.f32 %v763, %v669
        %v878 = vadd.f32 %v763, %v670
        %v879 = vadd.f32 %v763, %v671
        %v880 = vadd.f32 %v763, %v672
        %v881 = vadd.f32 %v768, %v673
        %v882 = vadd.f32 %v768, %v674
        %v883 = vadd.f32 %v768, %v675
        %v884 = vadd.f32 %v768, %v676
        %v885 = vadd.f32 %v768, %v677
        %v886 = vadd.f32 %v768, %v678
        %v887 = vadd.f32 %v768, %v679
        %v888 = vadd.f32 %v768, %v680
        %v889 = vadd.f32 %v773, %v681
        %v890 = vadd.f32 %v773, %v682
        %v891 = vadd.f32 %v773, %v683
        %v892 = vadd.f32 %v773, %v684
        %v893 = vadd.f32 %v773, %v685
        %v894 = vadd.f32 %v773, %v686
        %v895 = vadd.f32 %v773, %v687
        %v896 = vadd.f32 %v773, %v688
        %v897 = vadd.f32 %v778, %v689
        %v898 = vadd.f32 %v778, %v690
        %v899 = vadd.f32 %v778, %v691
        %v900 = vadd.f32 %v778, %v692
        %v901 = vadd.f32 %v778, %v693
        %v902 = vadd.f32 %v778, %v694
        %v903 = vadd.f32 %v778, %v695
        %v904 = vadd.f32 %v778, %v696
        %v905 = vadd.f32 %v783, %v697
        %v906 = vadd.f32 %v783, %v698
        %v907 = vadd.f32 %v783, %v699
        %v908 = vadd.f32 %v783, %v700
        %v909 = vadd.f32 %v783, %v701
        %v910 = vadd.f32 %v783, %v702
        %v911 = vadd.f32 %v783, %v703
        %v912 = vadd.f32 %v783, %v704
        %913 = vset.pattern.permute.xlu0 1
        %914 = vperm.xlu0 %913, %v389
        %v915 = vpop.permute.xlu0 %914
        %917 = vset.pattern.permute.xlu0 1
        %918 = vperm.xlu0 %917, %v390
        %v919 = vpop.permute.xlu0 %918
        %921 = vset.pattern.permute.xlu0 1
        %922 = vperm.xlu0 %921, %v391
        %v923 = vpop.permute.xlu0 %922
        %925 = vset.pattern.permute.xlu0 1
        %926 = vperm.xlu0 %925, %v392
        %v927 = vpop.permute.xlu0 %926
        %929 = vset.pattern.permute.xlu0 1
        %930 = vperm.xlu0 %929, %v393
        %v931 = vpop.permute.xlu0 %930
        %933 = vset.pattern.permute.xlu0 1
        %934 = vperm.xlu0 %933, %v394
        %v935 = vpop.permute.xlu0 %934
        %937 = vset.pattern.permute.xlu0 1
        %938 = vperm.xlu0 %937, %v395
        %v939 = vpop.permute.xlu0 %938
        %941 = vset.pattern.permute.xlu0 1
        %942 = vperm.xlu0 %941, %v396
        %v943 = vpop.permute.xlu0 %942
        %945 = vset.pattern.permute.xlu0 1
        %946 = vperm.xlu0 %945, %v397
        %v947 = vpop.permute.xlu0 %946
        %949 = vset.pattern.permute.xlu0 1
        %950 = vperm.xlu0 %949, %v398
        %v951 = vpop.permute.xlu0 %950
        %953 = vset.pattern.permute.xlu0 1
        %954 = vperm.xlu0 %953, %v399
        %v955 = vpop.permute.xlu0 %954
        %957 = vset.pattern.permute.xlu0 1
        %958 = vperm.xlu0 %957, %v400
        %v959 = vpop.permute.xlu0 %958
        %961 = vset.pattern.permute.xlu0 1
        %962 = vperm.xlu0 %961, %v401
        %v963 = vpop.permute.xlu0 %962
        %965 = vset.pattern.permute.xlu0 1
        %966 = vperm.xlu0 %965, %v402
        %v967 = vpop.permute.xlu0 %966
        %969 = vset.pattern.permute.xlu0 1
        %970 = vperm.xlu0 %969, %v403
        %v971 = vpop.permute.xlu0 %970
        %973 = vset.pattern.permute.xlu0 1
        %974 = vperm.xlu0 %973, %v404
        %v975 = vpop.permute.xlu0 %974
        %v977 = vlaneseq
        %v978 = vshrl.u32 %v977, 7
        %v979 = vsub.s32 1, %v978
        %v980 = vrot.slane %v385, %v979
        %v981 = vlaneseq
        %v982 = vshrl.u32 %v981, 7
        %v983 = vsub.s32 5, %v982
        %v984 = vrot.slane %v385, %v983
        %v985 = vlaneseq
        %v986 = vshrl.u32 %v985, 7
        %v987 = vsub.s32 1, %v986
        %v988 = vrot.slane %v386, %v987
        %v989 = vlaneseq
        %v990 = vshrl.u32 %v989, 7
        %v991 = vsub.s32 5, %v990
        %v992 = vrot.slane %v386, %v991
        %v993 = vlaneseq
        %v994 = vshrl.u32 %v993, 7
        %v995 = vsub.s32 1, %v994
        %v996 = vrot.slane %v387, %v995
        %v997 = vlaneseq
        %v998 = vshrl.u32 %v997, 7
        %v999 = vsub.s32 5, %v998
        %v1000 = vrot.slane %v387, %v999
        %v1001 = vlaneseq
        %v1002 = vshrl.u32 %v1001, 7
        %v1003 = vsub.s32 1, %v1002
        %v1004 = vrot.slane %v388, %v1003
        %v1005 = vlaneseq
        %v1006 = vshrl.u32 %v1005, 7
        %v1007 = vsub.s32 5, %v1006
        %v1008 = vrot.slane %v388, %v1007
        %v1017 = vlaneseq
        %v1018 = vshrl.u32 %v1017, 7
        %v1019 = vsub.s32 1, %v1018
        %v1020 = vrot.slane %v980, %v1019
        %v1021 = vlaneseq
        %v1022 = vshrl.u32 %v1021, 7
        %v1023 = vsub.s32 1, %v1022
        %v1024 = vrot.slane %v984, %v1023
        %v1025 = vlaneseq
        %v1026 = vshrl.u32 %v1025, 7
        %v1027 = vsub.s32 1, %v1026
        %v1028 = vrot.slane %v988, %v1027
        %v1029 = vlaneseq
        %v1030 = vshrl.u32 %v1029, 7
        %v1031 = vsub.s32 1, %v1030
        %v1032 = vrot.slane %v992, %v1031
        %v1033 = vlaneseq
        %v1034 = vshrl.u32 %v1033, 7
        %v1035 = vsub.s32 1, %v1034
        %v1036 = vrot.slane %v996, %v1035
        %v1037 = vlaneseq
        %v1038 = vshrl.u32 %v1037, 7
        %v1039 = vsub.s32 1, %v1038
        %v1040 = vrot.slane %v1000, %v1039
        %v1041 = vlaneseq
        %v1042 = vshrl.u32 %v1041, 7
        %v1043 = vsub.s32 1, %v1042
        %v1044 = vrot.slane %v1004, %v1043
        %v1045 = vlaneseq
        %v1046 = vshrl.u32 %v1045, 7
        %v1047 = vsub.s32 1, %v1046
        %v1048 = vrot.slane %v1008, %v1047
        %v1049 = vmul.f32 %v915, %v1020
        %v1050 = vmul.f32 %v915, %v1024
        %v1051 = vmul.f32 %v915, %v1028
        %v1052 = vmul.f32 %v915, %v1032
        %v1053 = vmul.f32 %v915, %v1036
        %v1054 = vmul.f32 %v915, %v1040
        %v1055 = vmul.f32 %v915, %v1044
        %v1056 = vmul.f32 %v915, %v1048
        %v1057 = vmul.f32 %v919, %v1020
        %v1058 = vmul.f32 %v919, %v1024
        %v1059 = vmul.f32 %v919, %v1028
        %v1060 = vmul.f32 %v919, %v1032
        %v1061 = vmul.f32 %v919, %v1036
        %v1062 = vmul.f32 %v919, %v1040
        %v1063 = vmul.f32 %v919, %v1044
        %v1064 = vmul.f32 %v919, %v1048
        %v1065 = vmul.f32 %v923, %v1020
        %v1066 = vmul.f32 %v923, %v1024
        %v1067 = vmul.f32 %v923, %v1028
        %v1068 = vmul.f32 %v923, %v1032
        %v1069 = vmul.f32 %v923, %v1036
        %v1070 = vmul.f32 %v923, %v1040
        %v1071 = vmul.f32 %v923, %v1044
        %v1072 = vmul.f32 %v923, %v1048
        %v1073 = vmul.f32 %v927, %v1020
        %v1074 = vmul.f32 %v927, %v1024
        %v1075 = vmul.f32 %v927, %v1028
        %v1076 = vmul.f32 %v927, %v1032
        %v1077 = vmul.f32 %v927, %v1036
        %v1078 = vmul.f32 %v927, %v1040
        %v1079 = vmul.f32 %v927, %v1044
        %v1080 = vmul.f32 %v927, %v1048
        %v1081 = vmul.f32 %v931, %v1020
        %v1082 = vmul.f32 %v931, %v1024
        %v1083 = vmul.f32 %v931, %v1028
        %v1084 = vmul.f32 %v931, %v1032
        %v1085 = vmul.f32 %v931, %v1036
        %v1086 = vmul.f32 %v931, %v1040
        %v1087 = vmul.f32 %v931, %v1044
        %v1088 = vmul.f32 %v931, %v1048
        %v1089 = vmul.f32 %v935, %v1020
        %v1090 = vmul.f32 %v935, %v1024
        %v1091 = vmul.f32 %v935, %v1028
        %v1092 = vmul.f32 %v935, %v1032
        %v1093 = vmul.f32 %v935, %v1036
        %v1094 = vmul.f32 %v935, %v1040
        %v1095 = vmul.f32 %v935, %v1044
        %v1096 = vmul.f32 %v935, %v1048
        %v1097 = vmul.f32 %v939, %v1020
        %v1098 = vmul.f32 %v939, %v1024
        %v1099 = vmul.f32 %v939, %v1028
        %v1100 = vmul.f32 %v939, %v1032
        %v1101 = vmul.f32 %v939, %v1036
        %v1102 = vmul.f32 %v939, %v1040
        %v1103 = vmul.f32 %v939, %v1044
        %v1104 = vmul.f32 %v939, %v1048
        %v1105 = vmul.f32 %v943, %v1020
        %v1106 = vmul.f32 %v943, %v1024
        %v1107 = vmul.f32 %v943, %v1028
        %v1108 = vmul.f32 %v943, %v1032
        %v1109 = vmul.f32 %v943, %v1036
        %v1110 = vmul.f32 %v943, %v1040
        %v1111 = vmul.f32 %v943, %v1044
        %v1112 = vmul.f32 %v943, %v1048
        %v1113 = vmul.f32 %v947, %v1020
        %v1114 = vmul.f32 %v947, %v1024
        %v1115 = vmul.f32 %v947, %v1028
        %v1116 = vmul.f32 %v947, %v1032
        %v1117 = vmul.f32 %v947, %v1036
        %v1118 = vmul.f32 %v947, %v1040
        %v1119 = vmul.f32 %v947, %v1044
        %v1120 = vmul.f32 %v947, %v1048
        %v1121 = vmul.f32 %v951, %v1020
        %v1122 = vmul.f32 %v951, %v1024
        %v1123 = vmul.f32 %v951, %v1028
        %v1124 = vmul.f32 %v951, %v1032
        %v1125 = vmul.f32 %v951, %v1036
        %v1126 = vmul.f32 %v951, %v1040
        %v1127 = vmul.f32 %v951, %v1044
        %v1128 = vmul.f32 %v951, %v1048
        %v1129 = vmul.f32 %v955, %v1020
        %v1130 = vmul.f32 %v955, %v1024
        %v1131 = vmul.f32 %v955, %v1028
        %v1132 = vmul.f32 %v955, %v1032
        %v1133 = vmul.f32 %v955, %v1036
        %v1134 = vmul.f32 %v955, %v1040
        %v1135 = vmul.f32 %v955, %v1044
        %v1136 = vmul.f32 %v955, %v1048
        %v1137 = vmul.f32 %v959, %v1020
        %v1138 = vmul.f32 %v959, %v1024
        %v1139 = vmul.f32 %v959, %v1028
        %v1140 = vmul.f32 %v959, %v1032
        %v1141 = vmul.f32 %v959, %v1036
        %v1142 = vmul.f32 %v959, %v1040
        %v1143 = vmul.f32 %v959, %v1044
        %v1144 = vmul.f32 %v959, %v1048
        %v1145 = vmul.f32 %v963, %v1020
        %v1146 = vmul.f32 %v963, %v1024
        %v1147 = vmul.f32 %v963, %v1028
        %v1148 = vmul.f32 %v963, %v1032
        %v1149 = vmul.f32 %v963, %v1036
        %v1150 = vmul.f32 %v963, %v1040
        %v1151 = vmul.f32 %v963, %v1044
        %v1152 = vmul.f32 %v963, %v1048
        %v1153 = vmul.f32 %v967, %v1020
        %v1154 = vmul.f32 %v967, %v1024
        %v1155 = vmul.f32 %v967, %v1028
        %v1156 = vmul.f32 %v967, %v1032
        %v1157 = vmul.f32 %v967, %v1036
        %v1158 = vmul.f32 %v967, %v1040
        %v1159 = vmul.f32 %v967, %v1044
        %v1160 = vmul.f32 %v967, %v1048
        %v1161 = vmul.f32 %v971, %v1020
        %v1162 = vmul.f32 %v971, %v1024
        %v1163 = vmul.f32 %v971, %v1028
        %v1164 = vmul.f32 %v971, %v1032
        %v1165 = vmul.f32 %v971, %v1036
        %v1166 = vmul.f32 %v971, %v1040
        %v1167 = vmul.f32 %v971, %v1044
        %v1168 = vmul.f32 %v971, %v1048
        %v1169 = vmul.f32 %v975, %v1020
        %v1170 = vmul.f32 %v975, %v1024
        %v1171 = vmul.f32 %v975, %v1028
        %v1172 = vmul.f32 %v975, %v1032
        %v1173 = vmul.f32 %v975, %v1036
        %v1174 = vmul.f32 %v975, %v1040
        %v1175 = vmul.f32 %v975, %v1044
        %v1176 = vmul.f32 %v975, %v1048
        %v1177 = vadd.f32 %v785, %v1049
        %v1178 = vadd.f32 %v786, %v1050
        %v1179 = vadd.f32 %v787, %v1051
        %v1180 = vadd.f32 %v788, %v1052
        %v1181 = vadd.f32 %v789, %v1053
        %v1182 = vadd.f32 %v790, %v1054
        %v1183 = vadd.f32 %v791, %v1055
        %v1184 = vadd.f32 %v792, %v1056
        %v1185 = vadd.f32 %v793, %v1057
        %v1186 = vadd.f32 %v794, %v1058
        %v1187 = vadd.f32 %v795, %v1059
        %v1188 = vadd.f32 %v796, %v1060
        %v1189 = vadd.f32 %v797, %v1061
        %v1190 = vadd.f32 %v798, %v1062
        %v1191 = vadd.f32 %v799, %v1063
        %v1192 = vadd.f32 %v800, %v1064
        %v1193 = vadd.f32 %v801, %v1065
        %v1194 = vadd.f32 %v802, %v1066
        %v1195 = vadd.f32 %v803, %v1067
        %v1196 = vadd.f32 %v804, %v1068
        %v1197 = vadd.f32 %v805, %v1069
        %v1198 = vadd.f32 %v806, %v1070
        %v1199 = vadd.f32 %v807, %v1071
        %v1200 = vadd.f32 %v808, %v1072
        %v1201 = vadd.f32 %v809, %v1073
        %v1202 = vadd.f32 %v810, %v1074
        %v1203 = vadd.f32 %v811, %v1075
        %v1204 = vadd.f32 %v812, %v1076
        %v1205 = vadd.f32 %v813, %v1077
        %v1206 = vadd.f32 %v814, %v1078
        %v1207 = vadd.f32 %v815, %v1079
        %v1208 = vadd.f32 %v816, %v1080
        %v1209 = vadd.f32 %v817, %v1081
        %v1210 = vadd.f32 %v818, %v1082
        %v1211 = vadd.f32 %v819, %v1083
        %v1212 = vadd.f32 %v820, %v1084
        %v1213 = vadd.f32 %v821, %v1085
        %v1214 = vadd.f32 %v822, %v1086
        %v1215 = vadd.f32 %v823, %v1087
        %v1216 = vadd.f32 %v824, %v1088
        %v1217 = vadd.f32 %v825, %v1089
        %v1218 = vadd.f32 %v826, %v1090
        %v1219 = vadd.f32 %v827, %v1091
        %v1220 = vadd.f32 %v828, %v1092
        %v1221 = vadd.f32 %v829, %v1093
        %v1222 = vadd.f32 %v830, %v1094
        %v1223 = vadd.f32 %v831, %v1095
        %v1224 = vadd.f32 %v832, %v1096
        %v1225 = vadd.f32 %v833, %v1097
        %v1226 = vadd.f32 %v834, %v1098
        %v1227 = vadd.f32 %v835, %v1099
        %v1228 = vadd.f32 %v836, %v1100
        %v1229 = vadd.f32 %v837, %v1101
        %v1230 = vadd.f32 %v838, %v1102
        %v1231 = vadd.f32 %v839, %v1103
        %v1232 = vadd.f32 %v840, %v1104
        %v1233 = vadd.f32 %v841, %v1105
        %v1234 = vadd.f32 %v842, %v1106
        %v1235 = vadd.f32 %v843, %v1107
        %v1236 = vadd.f32 %v844, %v1108
        %v1237 = vadd.f32 %v845, %v1109
        %v1238 = vadd.f32 %v846, %v1110
        %v1239 = vadd.f32 %v847, %v1111
        %v1240 = vadd.f32 %v848, %v1112
        %v1241 = vadd.f32 %v849, %v1113
        %v1242 = vadd.f32 %v850, %v1114
        %v1243 = vadd.f32 %v851, %v1115
        %v1244 = vadd.f32 %v852, %v1116
        %v1245 = vadd.f32 %v853, %v1117
        %v1246 = vadd.f32 %v854, %v1118
        %v1247 = vadd.f32 %v855, %v1119
        %v1248 = vadd.f32 %v856, %v1120
        %v1249 = vadd.f32 %v857, %v1121
        %v1250 = vadd.f32 %v858, %v1122
        %v1251 = vadd.f32 %v859, %v1123
        %v1252 = vadd.f32 %v860, %v1124
        %v1253 = vadd.f32 %v861, %v1125
        %v1254 = vadd.f32 %v862, %v1126
        %v1255 = vadd.f32 %v863, %v1127
        %v1256 = vadd.f32 %v864, %v1128
        %v1257 = vadd.f32 %v865, %v1129
        %v1258 = vadd.f32 %v866, %v1130
        %v1259 = vadd.f32 %v867, %v1131
        %v1260 = vadd.f32 %v868, %v1132
        %v1261 = vadd.f32 %v869, %v1133
        %v1262 = vadd.f32 %v870, %v1134
        %v1263 = vadd.f32 %v871, %v1135
        %v1264 = vadd.f32 %v872, %v1136
        %v1265 = vadd.f32 %v873, %v1137
        %v1266 = vadd.f32 %v874, %v1138
        %v1267 = vadd.f32 %v875, %v1139
        %v1268 = vadd.f32 %v876, %v1140
        %v1269 = vadd.f32 %v877, %v1141
        %v1270 = vadd.f32 %v878, %v1142
        %v1271 = vadd.f32 %v879, %v1143
        %v1272 = vadd.f32 %v880, %v1144
        %v1273 = vadd.f32 %v881, %v1145
        %v1274 = vadd.f32 %v882, %v1146
        %v1275 = vadd.f32 %v883, %v1147
        %v1276 = vadd.f32 %v884, %v1148
        %v1277 = vadd.f32 %v885, %v1149
        %v1278 = vadd.f32 %v886, %v1150
        %v1279 = vadd.f32 %v887, %v1151
        %v1280 = vadd.f32 %v888, %v1152
        %v1281 = vadd.f32 %v889, %v1153
        %v1282 = vadd.f32 %v890, %v1154
        %v1283 = vadd.f32 %v891, %v1155
        %v1284 = vadd.f32 %v892, %v1156
        %v1285 = vadd.f32 %v893, %v1157
        %v1286 = vadd.f32 %v894, %v1158
        %v1287 = vadd.f32 %v895, %v1159
        %v1288 = vadd.f32 %v896, %v1160
        %v1289 = vadd.f32 %v897, %v1161
        %v1290 = vadd.f32 %v898, %v1162
        %v1291 = vadd.f32 %v899, %v1163
        %v1292 = vadd.f32 %v900, %v1164
        %v1293 = vadd.f32 %v901, %v1165
        %v1294 = vadd.f32 %v902, %v1166
        %v1295 = vadd.f32 %v903, %v1167
        %v1296 = vadd.f32 %v904, %v1168
        %v1297 = vadd.f32 %v905, %v1169
        %v1298 = vadd.f32 %v906, %v1170
        %v1299 = vadd.f32 %v907, %v1171
        %v1300 = vadd.f32 %v908, %v1172
        %v1301 = vadd.f32 %v909, %v1173
        %v1302 = vadd.f32 %v910, %v1174
        %v1303 = vadd.f32 %v911, %v1175
        %v1304 = vadd.f32 %v912, %v1176
        %1305 = vset.pattern.permute.xlu0 2
        %1306 = vperm.xlu0 %1305, %v389
        %v1307 = vpop.permute.xlu0 %1306
        %1309 = vset.pattern.permute.xlu0 2
        %1310 = vperm.xlu0 %1309, %v390
        %v1311 = vpop.permute.xlu0 %1310
        %1313 = vset.pattern.permute.xlu0 2
        %1314 = vperm.xlu0 %1313, %v391
        %v1315 = vpop.permute.xlu0 %1314
        %1317 = vset.pattern.permute.xlu0 2
        %1318 = vperm.xlu0 %1317, %v392
        %v1319 = vpop.permute.xlu0 %1318
        %1321 = vset.pattern.permute.xlu0 2
        %1322 = vperm.xlu0 %1321, %v393
        %v1323 = vpop.permute.xlu0 %1322
        %1325 = vset.pattern.permute.xlu0 2
        %1326 = vperm.xlu0 %1325, %v394
        %v1327 = vpop.permute.xlu0 %1326
        %1329 = vset.pattern.permute.xlu0 2
        %1330 = vperm.xlu0 %1329, %v395
        %v1331 = vpop.permute.xlu0 %1330
        %1333 = vset.pattern.permute.xlu0 2
        %1334 = vperm.xlu0 %1333, %v396
        %v1335 = vpop.permute.xlu0 %1334
        %1337 = vset.pattern.permute.xlu0 2
        %1338 = vperm.xlu0 %1337, %v397
        %v1339 = vpop.permute.xlu0 %1338
        %1341 = vset.pattern.permute.xlu0 2
        %1342 = vperm.xlu0 %1341, %v398
        %v1343 = vpop.permute.xlu0 %1342
        %1345 = vset.pattern.permute.xlu0 2
        %1346 = vperm.xlu0 %1345, %v399
        %v1347 = vpop.permute.xlu0 %1346
        %1349 = vset.pattern.permute.xlu0 2
        %1350 = vperm.xlu0 %1349, %v400
        %v1351 = vpop.permute.xlu0 %1350
        %1353 = vset.pattern.permute.xlu0 2
        %1354 = vperm.xlu0 %1353, %v401
        %v1355 = vpop.permute.xlu0 %1354
        %1357 = vset.pattern.permute.xlu0 2
        %1358 = vperm.xlu0 %1357, %v402
        %v1359 = vpop.permute.xlu0 %1358
        %1361 = vset.pattern.permute.xlu0 2
        %1362 = vperm.xlu0 %1361, %v403
        %v1363 = vpop.permute.xlu0 %1362
        %1365 = vset.pattern.permute.xlu0 2
        %1366 = vperm.xlu0 %1365, %v404
        %v1367 = vpop.permute.xlu0 %1366
        %v1369 = vlaneseq
        %v1370 = vshrl.u32 %v1369, 7
        %v1371 = vsub.s32 2, %v1370
        %v1372 = vrot.slane %v385, %v1371
        %v1373 = vlaneseq
        %v1374 = vshrl.u32 %v1373, 7
        %v1375 = vsub.s32 6, %v1374
        %v1376 = vrot.slane %v385, %v1375
        %v1377 = vlaneseq
        %v1378 = vshrl.u32 %v1377, 7
        %v1379 = vsub.s32 2, %v1378
        %v1380 = vrot.slane %v386, %v1379
        %v1381 = vlaneseq
        %v1382 = vshrl.u32 %v1381, 7
        %v1383 = vsub.s32 6, %v1382
        %v1384 = vrot.slane %v386, %v1383
        %v1385 = vlaneseq
        %v1386 = vshrl.u32 %v1385, 7
        %v1387 = vsub.s32 2, %v1386
        %v1388 = vrot.slane %v387, %v1387
        %v1389 = vlaneseq
        %v1390 = vshrl.u32 %v1389, 7
        %v1391 = vsub.s32 6, %v1390
        %v1392 = vrot.slane %v387, %v1391
        %v1393 = vlaneseq
        %v1394 = vshrl.u32 %v1393, 7
        %v1395 = vsub.s32 2, %v1394
        %v1396 = vrot.slane %v388, %v1395
        %v1397 = vlaneseq
        %v1398 = vshrl.u32 %v1397, 7
        %v1399 = vsub.s32 6, %v1398
        %v1400 = vrot.slane %v388, %v1399
        %v1409 = vlaneseq
        %v1410 = vshrl.u32 %v1409, 7
        %v1411 = vsub.s32 2, %v1410
        %v1412 = vrot.slane %v1372, %v1411
        %v1413 = vlaneseq
        %v1414 = vshrl.u32 %v1413, 7
        %v1415 = vsub.s32 2, %v1414
        %v1416 = vrot.slane %v1376, %v1415
        %v1417 = vlaneseq
        %v1418 = vshrl.u32 %v1417, 7
        %v1419 = vsub.s32 2, %v1418
        %v1420 = vrot.slane %v1380, %v1419
        %v1421 = vlaneseq
        %v1422 = vshrl.u32 %v1421, 7
        %v1423 = vsub.s32 2, %v1422
        %v1424 = vrot.slane %v1384, %v1423
        %v1425 = vlaneseq
        %v1426 = vshrl.u32 %v1425, 7
        %v1427 = vsub.s32 2, %v1426
        %v1428 = vrot.slane %v1388, %v1427
        %v1429 = vlaneseq
        %v1430 = vshrl.u32 %v1429, 7
        %v1431 = vsub.s32 2, %v1430
        %v1432 = vrot.slane %v1392, %v1431
        %v1433 = vlaneseq
        %v1434 = vshrl.u32 %v1433, 7
        %v1435 = vsub.s32 2, %v1434
        %v1436 = vrot.slane %v1396, %v1435
        %v1437 = vlaneseq
        %v1438 = vshrl.u32 %v1437, 7
        %v1439 = vsub.s32 2, %v1438
        %v1440 = vrot.slane %v1400, %v1439
        %v1441 = vmul.f32 %v1307, %v1412
        %v1442 = vmul.f32 %v1307, %v1416
        %v1443 = vmul.f32 %v1307, %v1420
        %v1444 = vmul.f32 %v1307, %v1424
        %v1445 = vmul.f32 %v1307, %v1428
        %v1446 = vmul.f32 %v1307, %v1432
        %v1447 = vmul.f32 %v1307, %v1436
        %v1448 = vmul.f32 %v1307, %v1440
        %v1449 = vmul.f32 %v1311, %v1412
        %v1450 = vmul.f32 %v1311, %v1416
        %v1451 = vmul.f32 %v1311, %v1420
        %v1452 = vmul.f32 %v1311, %v1424
        %v1453 = vmul.f32 %v1311, %v1428
        %v1454 = vmul.f32 %v1311, %v1432
        %v1455 = vmul.f32 %v1311, %v1436
        %v1456 = vmul.f32 %v1311, %v1440
        %v1457 = vmul.f32 %v1315, %v1412
        %v1458 = vmul.f32 %v1315, %v1416
        %v1459 = vmul.f32 %v1315, %v1420
        %v1460 = vmul.f32 %v1315, %v1424
        %v1461 = vmul.f32 %v1315, %v1428
        %v1462 = vmul.f32 %v1315, %v1432
        %v1463 = vmul.f32 %v1315, %v1436
        %v1464 = vmul.f32 %v1315, %v1440
        %v1465 = vmul.f32 %v1319, %v1412
        %v1466 = vmul.f32 %v1319, %v1416
        %v1467 = vmul.f32 %v1319, %v1420
        %v1468 = vmul.f32 %v1319, %v1424
        %v1469 = vmul.f32 %v1319, %v1428
        %v1470 = vmul.f32 %v1319, %v1432
        %v1471 = vmul.f32 %v1319, %v1436
        %v1472 = vmul.f32 %v1319, %v1440
        %v1473 = vmul.f32 %v1323, %v1412
        %v1474 = vmul.f32 %v1323, %v1416
        %v1475 = vmul.f32 %v1323, %v1420
        %v1476 = vmul.f32 %v1323, %v1424
        %v1477 = vmul.f32 %v1323, %v1428
        %v1478 = vmul.f32 %v1323, %v1432
        %v1479 = vmul.f32 %v1323, %v1436
        %v1480 = vmul.f32 %v1323, %v1440
        %v1481 = vmul.f32 %v1327, %v1412
        %v1482 = vmul.f32 %v1327, %v1416
        %v1483 = vmul.f32 %v1327, %v1420
        %v1484 = vmul.f32 %v1327, %v1424
        %v1485 = vmul.f32 %v1327, %v1428
        %v1486 = vmul.f32 %v1327, %v1432
        %v1487 = vmul.f32 %v1327, %v1436
        %v1488 = vmul.f32 %v1327, %v1440
        %v1489 = vmul.f32 %v1331, %v1412
        %v1490 = vmul.f32 %v1331, %v1416
        %v1491 = vmul.f32 %v1331, %v1420
        %v1492 = vmul.f32 %v1331, %v1424
        %v1493 = vmul.f32 %v1331, %v1428
        %v1494 = vmul.f32 %v1331, %v1432
        %v1495 = vmul.f32 %v1331, %v1436
        %v1496 = vmul.f32 %v1331, %v1440
        %v1497 = vmul.f32 %v1335, %v1412
        %v1498 = vmul.f32 %v1335, %v1416
        %v1499 = vmul.f32 %v1335, %v1420
        %v1500 = vmul.f32 %v1335, %v1424
        %v1501 = vmul.f32 %v1335, %v1428
        %v1502 = vmul.f32 %v1335, %v1432
        %v1503 = vmul.f32 %v1335, %v1436
        %v1504 = vmul.f32 %v1335, %v1440
        %v1505 = vmul.f32 %v1339, %v1412
        %v1506 = vmul.f32 %v1339, %v1416
        %v1507 = vmul.f32 %v1339, %v1420
        %v1508 = vmul.f32 %v1339, %v1424
        %v1509 = vmul.f32 %v1339, %v1428
        %v1510 = vmul.f32 %v1339, %v1432
        %v1511 = vmul.f32 %v1339, %v1436
        %v1512 = vmul.f32 %v1339, %v1440
        %v1513 = vmul.f32 %v1343, %v1412
        %v1514 = vmul.f32 %v1343, %v1416
        %v1515 = vmul.f32 %v1343, %v1420
        %v1516 = vmul.f32 %v1343, %v1424
        %v1517 = vmul.f32 %v1343, %v1428
        %v1518 = vmul.f32 %v1343, %v1432
        %v1519 = vmul.f32 %v1343, %v1436
        %v1520 = vmul.f32 %v1343, %v1440
        %v1521 = vmul.f32 %v1347, %v1412
        %v1522 = vmul.f32 %v1347, %v1416
        %v1523 = vmul.f32 %v1347, %v1420
        %v1524 = vmul.f32 %v1347, %v1424
        %v1525 = vmul.f32 %v1347, %v1428
        %v1526 = vmul.f32 %v1347, %v1432
        %v1527 = vmul.f32 %v1347, %v1436
        %v1528 = vmul.f32 %v1347, %v1440
        %v1529 = vmul.f32 %v1351, %v1412
        %v1530 = vmul.f32 %v1351, %v1416
        %v1531 = vmul.f32 %v1351, %v1420
        %v1532 = vmul.f32 %v1351, %v1424
        %v1533 = vmul.f32 %v1351, %v1428
        %v1534 = vmul.f32 %v1351, %v1432
        %v1535 = vmul.f32 %v1351, %v1436
        %v1536 = vmul.f32 %v1351, %v1440
        %v1537 = vmul.f32 %v1355, %v1412
        %v1538 = vmul.f32 %v1355, %v1416
        %v1539 = vmul.f32 %v1355, %v1420
        %v1540 = vmul.f32 %v1355, %v1424
        %v1541 = vmul.f32 %v1355, %v1428
        %v1542 = vmul.f32 %v1355, %v1432
        %v1543 = vmul.f32 %v1355, %v1436
        %v1544 = vmul.f32 %v1355, %v1440
        %v1545 = vmul.f32 %v1359, %v1412
        %v1546 = vmul.f32 %v1359, %v1416
        %v1547 = vmul.f32 %v1359, %v1420
        %v1548 = vmul.f32 %v1359, %v1424
        %v1549 = vmul.f32 %v1359, %v1428
        %v1550 = vmul.f32 %v1359, %v1432
        %v1551 = vmul.f32 %v1359, %v1436
        %v1552 = vmul.f32 %v1359, %v1440
        %v1553 = vmul.f32 %v1363, %v1412
        %v1554 = vmul.f32 %v1363, %v1416
        %v1555 = vmul.f32 %v1363, %v1420
        %v1556 = vmul.f32 %v1363, %v1424
        %v1557 = vmul.f32 %v1363, %v1428
        %v1558 = vmul.f32 %v1363, %v1432
        %v1559 = vmul.f32 %v1363, %v1436
        %v1560 = vmul.f32 %v1363, %v1440
        %v1561 = vmul.f32 %v1367, %v1412
        %v1562 = vmul.f32 %v1367, %v1416
        %v1563 = vmul.f32 %v1367, %v1420
        %v1564 = vmul.f32 %v1367, %v1424
        %v1565 = vmul.f32 %v1367, %v1428
        %v1566 = vmul.f32 %v1367, %v1432
        %v1567 = vmul.f32 %v1367, %v1436
        %v1568 = vmul.f32 %v1367, %v1440
        %v1569 = vadd.f32 %v1177, %v1441
        %v1570 = vadd.f32 %v1178, %v1442
        %v1571 = vadd.f32 %v1179, %v1443
        %v1572 = vadd.f32 %v1180, %v1444
        %v1573 = vadd.f32 %v1181, %v1445
        %v1574 = vadd.f32 %v1182, %v1446
        %v1575 = vadd.f32 %v1183, %v1447
        %v1576 = vadd.f32 %v1184, %v1448
        %v1577 = vadd.f32 %v1185, %v1449
        %v1578 = vadd.f32 %v1186, %v1450
        %v1579 = vadd.f32 %v1187, %v1451
        %v1580 = vadd.f32 %v1188, %v1452
        %v1581 = vadd.f32 %v1189, %v1453
        %v1582 = vadd.f32 %v1190, %v1454
        %v1583 = vadd.f32 %v1191, %v1455
        %v1584 = vadd.f32 %v1192, %v1456
        %v1585 = vadd.f32 %v1193, %v1457
        %v1586 = vadd.f32 %v1194, %v1458
        %v1587 = vadd.f32 %v1195, %v1459
        %v1588 = vadd.f32 %v1196, %v1460
        %v1589 = vadd.f32 %v1197, %v1461
        %v1590 = vadd.f32 %v1198, %v1462
        %v1591 = vadd.f32 %v1199, %v1463
        %v1592 = vadd.f32 %v1200, %v1464
        %v1593 = vadd.f32 %v1201, %v1465
        %v1594 = vadd.f32 %v1202, %v1466
        %v1595 = vadd.f32 %v1203, %v1467
        %v1596 = vadd.f32 %v1204, %v1468
        %v1597 = vadd.f32 %v1205, %v1469
        %v1598 = vadd.f32 %v1206, %v1470
        %v1599 = vadd.f32 %v1207, %v1471
        %v1600 = vadd.f32 %v1208, %v1472
        %v1601 = vadd.f32 %v1209, %v1473
        %v1602 = vadd.f32 %v1210, %v1474
        %v1603 = vadd.f32 %v1211, %v1475
        %v1604 = vadd.f32 %v1212, %v1476
        %v1605 = vadd.f32 %v1213, %v1477
        %v1606 = vadd.f32 %v1214, %v1478
        %v1607 = vadd.f32 %v1215, %v1479
        %v1608 = vadd.f32 %v1216, %v1480
        %v1609 = vadd.f32 %v1217, %v1481
        %v1610 = vadd.f32 %v1218, %v1482
        %v1611 = vadd.f32 %v1219, %v1483
        %v1612 = vadd.f32 %v1220, %v1484
        %v1613 = vadd.f32 %v1221, %v1485
        %v1614 = vadd.f32 %v1222, %v1486
        %v1615 = vadd.f32 %v1223, %v1487
        %v1616 = vadd.f32 %v1224, %v1488
        %v1617 = vadd.f32 %v1225, %v1489
        %v1618 = vadd.f32 %v1226, %v1490
        %v1619 = vadd.f32 %v1227, %v1491
        %v1620 = vadd.f32 %v1228, %v1492
        %v1621 = vadd.f32 %v1229, %v1493
        %v1622 = vadd.f32 %v1230, %v1494
        %v1623 = vadd.f32 %v1231, %v1495
        %v1624 = vadd.f32 %v1232, %v1496
        %v1625 = vadd.f32 %v1233, %v1497
        %v1626 = vadd.f32 %v1234, %v1498
        %v1627 = vadd.f32 %v1235, %v1499
        %v1628 = vadd.f32 %v1236, %v1500
        %v1629 = vadd.f32 %v1237, %v1501
        %v1630 = vadd.f32 %v1238, %v1502
        %v1631 = vadd.f32 %v1239, %v1503
        %v1632 = vadd.f32 %v1240, %v1504
        %v1633 = vadd.f32 %v1241, %v1505
        %v1634 = vadd.f32 %v1242, %v1506
        %v1635 = vadd.f32 %v1243, %v1507
        %v1636 = vadd.f32 %v1244, %v1508
        %v1637 = vadd.f32 %v1245, %v1509
        %v1638 = vadd.f32 %v1246, %v1510
        %v1639 = vadd.f32 %v1247, %v1511
        %v1640 = vadd.f32 %v1248, %v1512
        %v1641 = vadd.f32 %v1249, %v1513
        %v1642 = vadd.f32 %v1250, %v1514
        %v1643 = vadd.f32 %v1251, %v1515
        %v1644 = vadd.f32 %v1252, %v1516
        %v1645 = vadd.f32 %v1253, %v1517
        %v1646 = vadd.f32 %v1254, %v1518
        %v1647 = vadd.f32 %v1255, %v1519
        %v1648 = vadd.f32 %v1256, %v1520
        %v1649 = vadd.f32 %v1257, %v1521
        %v1650 = vadd.f32 %v1258, %v1522
        %v1651 = vadd.f32 %v1259, %v1523
        %v1652 = vadd.f32 %v1260, %v1524
        %v1653 = vadd.f32 %v1261, %v1525
        %v1654 = vadd.f32 %v1262, %v1526
        %v1655 = vadd.f32 %v1263, %v1527
        %v1656 = vadd.f32 %v1264, %v1528
        %v1657 = vadd.f32 %v1265, %v1529
        %v1658 = vadd.f32 %v1266, %v1530
        %v1659 = vadd.f32 %v1267, %v1531
        %v1660 = vadd.f32 %v1268, %v1532
        %v1661 = vadd.f32 %v1269, %v1533
        %v1662 = vadd.f32 %v1270, %v1534
        %v1663 = vadd.f32 %v1271, %v1535
        %v1664 = vadd.f32 %v1272, %v1536
        %v1665 = vadd.f32 %v1273, %v1537
        %v1666 = vadd.f32 %v1274, %v1538
        %v1667 = vadd.f32 %v1275, %v1539
        %v1668 = vadd.f32 %v1276, %v1540
        %v1669 = vadd.f32 %v1277, %v1541
        %v1670 = vadd.f32 %v1278, %v1542
        %v1671 = vadd.f32 %v1279, %v1543
        %v1672 = vadd.f32 %v1280, %v1544
        %v1673 = vadd.f32 %v1281, %v1545
        %v1674 = vadd.f32 %v1282, %v1546
        %v1675 = vadd.f32 %v1283, %v1547
        %v1676 = vadd.f32 %v1284, %v1548
        %v1677 = vadd.f32 %v1285, %v1549
        %v1678 = vadd.f32 %v1286, %v1550
        %v1679 = vadd.f32 %v1287, %v1551
        %v1680 = vadd.f32 %v1288, %v1552
        %v1681 = vadd.f32 %v1289, %v1553
        %v1682 = vadd.f32 %v1290, %v1554
        %v1683 = vadd.f32 %v1291, %v1555
        %v1684 = vadd.f32 %v1292, %v1556
        %v1685 = vadd.f32 %v1293, %v1557
        %v1686 = vadd.f32 %v1294, %v1558
        %v1687 = vadd.f32 %v1295, %v1559
        %v1688 = vadd.f32 %v1296, %v1560
        %v1689 = vadd.f32 %v1297, %v1561
        %v1690 = vadd.f32 %v1298, %v1562
        %v1691 = vadd.f32 %v1299, %v1563
        %v1692 = vadd.f32 %v1300, %v1564
        %v1693 = vadd.f32 %v1301, %v1565
        %v1694 = vadd.f32 %v1302, %v1566
        %v1695 = vadd.f32 %v1303, %v1567
        %v1696 = vadd.f32 %v1304, %v1568
        %v1697 = vmax.f32 %v1569, 0.0
        %v1698 = vmax.f32 %v1570, 0.0
        %v1699 = vmax.f32 %v1571, 0.0
        %v1700 = vmax.f32 %v1572, 0.0
        %v1701 = vmax.f32 %v1573, 0.0
        %v1702 = vmax.f32 %v1574, 0.0
        %v1703 = vmax.f32 %v1575, 0.0
        %v1704 = vmax.f32 %v1576, 0.0
        %v1705 = vmax.f32 %v1577, 0.0
        %v1706 = vmax.f32 %v1578, 0.0
        %v1707 = vmax.f32 %v1579, 0.0
        %v1708 = vmax.f32 %v1580, 0.0
        %v1709 = vmax.f32 %v1581, 0.0
        %v1710 = vmax.f32 %v1582, 0.0
        %v1711 = vmax.f32 %v1583, 0.0
        %v1712 = vmax.f32 %v1584, 0.0
        %v1713 = vmax.f32 %v1585, 0.0
        %v1714 = vmax.f32 %v1586, 0.0
        %v1715 = vmax.f32 %v1587, 0.0
        %v1716 = vmax.f32 %v1588, 0.0
        %v1717 = vmax.f32 %v1589, 0.0
        %v1718 = vmax.f32 %v1590, 0.0
        %v1719 = vmax.f32 %v1591, 0.0
        %v1720 = vmax.f32 %v1592, 0.0
        %v1721 = vmax.f32 %v1593, 0.0
        %v1722 = vmax.f32 %v1594, 0.0
        %v1723 = vmax.f32 %v1595, 0.0
        %v1724 = vmax.f32 %v1596, 0.0
        %v1725 = vmax.f32 %v1597, 0.0
        %v1726 = vmax.f32 %v1598, 0.0
        %v1727 = vmax.f32 %v1599, 0.0
        %v1728 = vmax.f32 %v1600, 0.0
        %v1729 = vmax.f32 %v1601, 0.0
        %v1730 = vmax.f32 %v1602, 0.0
        %v1731 = vmax.f32 %v1603, 0.0
        %v1732 = vmax.f32 %v1604, 0.0
        %v1733 = vmax.f32 %v1605, 0.0
        %v1734 = vmax.f32 %v1606, 0.0
        %v1735 = vmax.f32 %v1607, 0.0
        %v1736 = vmax.f32 %v1608, 0.0
        %v1737 = vmax.f32 %v1609, 0.0
        %v1738 = vmax.f32 %v1610, 0.0
        %v1739 = vmax.f32 %v1611, 0.0
        %v1740 = vmax.f32 %v1612, 0.0
        %v1741 = vmax.f32 %v1613, 0.0
        %v1742 = vmax.f32 %v1614, 0.0
        %v1743 = vmax.f32 %v1615, 0.0
        %v1744 = vmax.f32 %v1616, 0.0
        %v1745 = vmax.f32 %v1617, 0.0
        %v1746 = vmax.f32 %v1618, 0.0
        %v1747 = vmax.f32 %v1619, 0.0
        %v1748 = vmax.f32 %v1620, 0.0
        %v1749 = vmax.f32 %v1621, 0.0
        %v1750 = vmax.f32 %v1622, 0.0
        %v1751 = vmax.f32 %v1623, 0.0
        %v1752 = vmax.f32 %v1624, 0.0
        %v1753 = vmax.f32 %v1625, 0.0
        %v1754 = vmax.f32 %v1626, 0.0
        %v1755 = vmax.f32 %v1627, 0.0
        %v1756 = vmax.f32 %v1628, 0.0
        %v1757 = vmax.f32 %v1629, 0.0
        %v1758 = vmax.f32 %v1630, 0.0
        %v1759 = vmax.f32 %v1631, 0.0
        %v1760 = vmax.f32 %v1632, 0.0
        %v1761 = vmax.f32 %v1633, 0.0
        %v1762 = vmax.f32 %v1634, 0.0
        %v1763 = vmax.f32 %v1635, 0.0
        %v1764 = vmax.f32 %v1636, 0.0
        %v1765 = vmax.f32 %v1637, 0.0
        %v1766 = vmax.f32 %v1638, 0.0
        %v1767 = vmax.f32 %v1639, 0.0
        %v1768 = vmax.f32 %v1640, 0.0
        %v1769 = vmax.f32 %v1641, 0.0
        %v1770 = vmax.f32 %v1642, 0.0
        %v1771 = vmax.f32 %v1643, 0.0
        %v1772 = vmax.f32 %v1644, 0.0
        %v1773 = vmax.f32 %v1645, 0.0
        %v1774 = vmax.f32 %v1646, 0.0
        %v1775 = vmax.f32 %v1647, 0.0
        %v1776 = vmax.f32 %v1648, 0.0
        %v1777 = vmax.f32 %v1649, 0.0
        %v1778 = vmax.f32 %v1650, 0.0
        %v1779 = vmax.f32 %v1651, 0.0
        %v1780 = vmax.f32 %v1652, 0.0
        %v1781 = vmax.f32 %v1653, 0.0
        %v1782 = vmax.f32 %v1654, 0.0
        %v1783 = vmax.f32 %v1655, 0.0
        %v1784 = vmax.f32 %v1656, 0.0
        %v1785 = vmax.f32 %v1657, 0.0
        %v1786 = vmax.f32 %v1658, 0.0
        %v1787 = vmax.f32 %v1659, 0.0
        %v1788 = vmax.f32 %v1660, 0.0
        %v1789 = vmax.f32 %v1661, 0.0
        %v1790 = vmax.f32 %v1662, 0.0
        %v1791 = vmax.f32 %v1663, 0.0
        %v1792 = vmax.f32 %v1664, 0.0
        %v1793 = vmax.f32 %v1665, 0.0
        %v1794 = vmax.f32 %v1666, 0.0
        %v1795 = vmax.f32 %v1667, 0.0
        %v1796 = vmax.f32 %v1668, 0.0
        %v1797 = vmax.f32 %v1669, 0.0
        %v1798 = vmax.f32 %v1670, 0.0
        %v1799 = vmax.f32 %v1671, 0.0
        %v1800 = vmax.f32 %v1672, 0.0
        %v1801 = vmax.f32 %v1673, 0.0
        %v1802 = vmax.f32 %v1674, 0.0
        %v1803 = vmax.f32 %v1675, 0.0
        %v1804 = vmax.f32 %v1676, 0.0
        %v1805 = vmax.f32 %v1677, 0.0
        %v1806 = vmax.f32 %v1678, 0.0
        %v1807 = vmax.f32 %v1679, 0.0
        %v1808 = vmax.f32 %v1680, 0.0
        %v1809 = vmax.f32 %v1681, 0.0
        %v1810 = vmax.f32 %v1682, 0.0
        %v1811 = vmax.f32 %v1683, 0.0
        %v1812 = vmax.f32 %v1684, 0.0
        %v1813 = vmax.f32 %v1685, 0.0
        %v1814 = vmax.f32 %v1686, 0.0
        %v1815 = vmax.f32 %v1687, 0.0
        %v1816 = vmax.f32 %v1688, 0.0
        %v1817 = vmax.f32 %v1689, 0.0
        %v1818 = vmax.f32 %v1690, 0.0
        %v1819 = vmax.f32 %v1691, 0.0
        %v1820 = vmax.f32 %v1692, 0.0
        %v1821 = vmax.f32 %v1693, 0.0
        %v1822 = vmax.f32 %v1694, 0.0
        %v1823 = vmax.f32 %v1695, 0.0
        %v1824 = vmax.f32 %v1696, 0.0
        %v1825 = vpack.c.bf16 %v1705, %v1697
        %v1826 = vpack.c.bf16 %v1706, %v1698
        %v1827 = vpack.c.bf16 %v1707, %v1699
        %v1828 = vpack.c.bf16 %v1708, %v1700
        %v1829 = vpack.c.bf16 %v1709, %v1701
        %v1830 = vpack.c.bf16 %v1710, %v1702
        %v1831 = vpack.c.bf16 %v1711, %v1703
        %v1832 = vpack.c.bf16 %v1712, %v1704
        %v1833 = vpack.c.bf16 %v1721, %v1713
        %v1834 = vpack.c.bf16 %v1722, %v1714
        %v1835 = vpack.c.bf16 %v1723, %v1715
        %v1836 = vpack.c.bf16 %v1724, %v1716
        %v1837 = vpack.c.bf16 %v1725, %v1717
        %v1838 = vpack.c.bf16 %v1726, %v1718
        %v1839 = vpack.c.bf16 %v1727, %v1719
        %v1840 = vpack.c.bf16 %v1728, %v1720
        %v1841 = vpack.c.bf16 %v1737, %v1729
        %v1842 = vpack.c.bf16 %v1738, %v1730
        %v1843 = vpack.c.bf16 %v1739, %v1731
        %v1844 = vpack.c.bf16 %v1740, %v1732
        %v1845 = vpack.c.bf16 %v1741, %v1733
        %v1846 = vpack.c.bf16 %v1742, %v1734
        %v1847 = vpack.c.bf16 %v1743, %v1735
        %v1848 = vpack.c.bf16 %v1744, %v1736
        %v1849 = vpack.c.bf16 %v1753, %v1745
        %v1850 = vpack.c.bf16 %v1754, %v1746
        %v1851 = vpack.c.bf16 %v1755, %v1747
        %v1852 = vpack.c.bf16 %v1756, %v1748
        %v1853 = vpack.c.bf16 %v1757, %v1749
        %v1854 = vpack.c.bf16 %v1758, %v1750
        %v1855 = vpack.c.bf16 %v1759, %v1751
        %v1856 = vpack.c.bf16 %v1760, %v1752
        %v1857 = vpack.c.bf16 %v1769, %v1761
        %v1858 = vpack.c.bf16 %v1770, %v1762
        %v1859 = vpack.c.bf16 %v1771, %v1763
        %v1860 = vpack.c.bf16 %v1772, %v1764
        %v1861 = vpack.c.bf16 %v1773, %v1765
        %v1862 = vpack.c.bf16 %v1774, %v1766
        %v1863 = vpack.c.bf16 %v1775, %v1767
        %v1864 = vpack.c.bf16 %v1776, %v1768
        %v1865 = vpack.c.bf16 %v1785, %v1777
        %v1866 = vpack.c.bf16 %v1786, %v1778
        %v1867 = vpack.c.bf16 %v1787, %v1779
        %v1868 = vpack.c.bf16 %v1788, %v1780
        %v1869 = vpack.c.bf16 %v1789, %v1781
        %v1870 = vpack.c.bf16 %v1790, %v1782
        %v1871 = vpack.c.bf16 %v1791, %v1783
        %v1872 = vpack.c.bf16 %v1792, %v1784
        %v1873 = vpack.c.bf16 %v1801, %v1793
        %v1874 = vpack.c.bf16 %v1802, %v1794
        %v1875 = vpack.c.bf16 %v1803, %v1795
        %v1876 = vpack.c.bf16 %v1804, %v1796
        %v1877 = vpack.c.bf16 %v1805, %v1797
        %v1878 = vpack.c.bf16 %v1806, %v1798
        %v1879 = vpack.c.bf16 %v1807, %v1799
        %v1880 = vpack.c.bf16 %v1808, %v1800
        %v1881 = vpack.c.bf16 %v1817, %v1809
        %v1882 = vpack.c.bf16 %v1818, %v1810
        %v1883 = vpack.c.bf16 %v1819, %v1811
        %v1884 = vpack.c.bf16 %v1820, %v1812
        %v1885 = vpack.c.bf16 %v1821, %v1813
        %v1886 = vpack.c.bf16 %v1822, %v1814
        %v1887 = vpack.c.bf16 %v1823, %v1815
        %v1888 = vpack.c.bf16 %v1824, %v1816
        %v1889 = vld [vmem:[%s3] sm:$0xf]
        %v1890 = vld [vmem:[%s3 + $0x4] sm:$0xf]
        %v1891 = vld [vmem:[%s3 + $0x8] sm:$0xf]
        %v1892 = vld [vmem:[%s3 + $0xc] sm:$0xf]
        %v1893 = vld [vmem:[%s3 + $0x10] sm:$0xf]
        %v1894 = vld [vmem:[%s3 + $0x14] sm:$0xf]
        %v1895 = vld [vmem:[%s3 + $0x18] sm:$0xf]
        %v1896 = vld [vmem:[%s3 + $0x1c] sm:$0xf]
        %v1897 = vld [vmem:[%s3 + $0x20] sm:$0xf]
        %v1898 = vld [vmem:[%s3 + $0x24] sm:$0xf]
        %v1899 = vld [vmem:[%s3 + $0x28] sm:$0xf]
        %v1900 = vld [vmem:[%s3 + $0x2c] sm:$0xf]
        %v1901 = vld [vmem:[%s3 + $0x30] sm:$0xf]
        %v1902 = vld [vmem:[%s3 + $0x34] sm:$0xf]
        %v1903 = vld [vmem:[%s3 + $0x38] sm:$0xf]
        %v1904 = vld [vmem:[%s3 + $0x3c] sm:$0xf]
        %v1905 = vld [vmem:[%s4] sm:$0xff]
        %v1906 = vld [vmem:[%s4 + $0x8] sm:$0xff]
        %v1907 = vld [vmem:[%s4 + $0x10] sm:$0xff]
        %v1908 = vld [vmem:[%s4 + $0x18] sm:$0xff]
        %v1909 = vld [vmem:[%s4 + $0x20] sm:$0xff]
        %v1910 = vld [vmem:[%s4 + $0x28] sm:$0xff]
        %v1911 = vld [vmem:[%s4 + $0x30] sm:$0xff]
        %v1912 = vld [vmem:[%s4 + $0x38] sm:$0xff]
        %v1913 = vld [vmem:[%s4 + $0x40] sm:$0xff]
        %v1914 = vld [vmem:[%s4 + $0x48] sm:$0xff]
        %v1915 = vld [vmem:[%s4 + $0x50] sm:$0xff]
        %v1916 = vld [vmem:[%s4 + $0x58] sm:$0xff]
        %v1917 = vld [vmem:[%s4 + $0x60] sm:$0xff]
        %v1918 = vld [vmem:[%s4 + $0x68] sm:$0xff]
        %v1919 = vld [vmem:[%s4 + $0x70] sm:$0xff]
        %v1920 = vld [vmem:[%s4 + $0x78] sm:$0xff]
        %1922 = vset.pattern.permute.xlu0 0
        %1923 = vperm.xlu0 %1922, %v1905
        %v1924 = vpop.permute.xlu0 %1923
        %1927 = vset.pattern.permute.xlu0 0
        %1928 = vperm.xlu0 %1927, %v1906
        %v1929 = vpop.permute.xlu0 %1928
        %1932 = vset.pattern.permute.xlu0 0
        %1933 = vperm.xlu0 %1932, %v1907
        %v1934 = vpop.permute.xlu0 %1933
        %1937 = vset.pattern.permute.xlu0 0
        %1938 = vperm.xlu0 %1937, %v1908
        %v1939 = vpop.permute.xlu0 %1938
        %1942 = vset.pattern.permute.xlu0 0
        %1943 = vperm.xlu0 %1942, %v1909
        %v1944 = vpop.permute.xlu0 %1943
        %1947 = vset.pattern.permute.xlu0 0
        %1948 = vperm.xlu0 %1947, %v1910
        %v1949 = vpop.permute.xlu0 %1948
        %1952 = vset.pattern.permute.xlu0 0
        %1953 = vperm.xlu0 %1952, %v1911
        %v1954 = vpop.permute.xlu0 %1953
        %1957 = vset.pattern.permute.xlu0 0
        %1958 = vperm.xlu0 %1957, %v1912
        %v1959 = vpop.permute.xlu0 %1958
        %1962 = vset.pattern.permute.xlu0 0
        %1963 = vperm.xlu0 %1962, %v1913
        %v1964 = vpop.permute.xlu0 %1963
        %1967 = vset.pattern.permute.xlu0 0
        %1968 = vperm.xlu0 %1967, %v1914
        %v1969 = vpop.permute.xlu0 %1968
        %1972 = vset.pattern.permute.xlu0 0
        %1973 = vperm.xlu0 %1972, %v1915
        %v1974 = vpop.permute.xlu0 %1973
        %1977 = vset.pattern.permute.xlu0 0
        %1978 = vperm.xlu0 %1977, %v1916
        %v1979 = vpop.permute.xlu0 %1978
        %1982 = vset.pattern.permute.xlu0 0
        %1983 = vperm.xlu0 %1982, %v1917
        %v1984 = vpop.permute.xlu0 %1983
        %1987 = vset.pattern.permute.xlu0 0
        %1988 = vperm.xlu0 %1987, %v1918
        %v1989 = vpop.permute.xlu0 %1988
        %1992 = vset.pattern.permute.xlu0 0
        %1993 = vperm.xlu0 %1992, %v1919
        %v1994 = vpop.permute.xlu0 %1993
        %1997 = vset.pattern.permute.xlu0 0
        %1998 = vperm.xlu0 %1997, %v1920
        %v1999 = vpop.permute.xlu0 %1998
        %v2017 = vunpack.c.l.b16 %v1889
        %v2018 = vunpack.c.l.b16 %v1890
        %v2019 = vunpack.c.l.b16 %v1891
        %v2020 = vunpack.c.l.b16 %v1892
        %v2021 = vunpack.c.l.b16 %v1893
        %v2022 = vunpack.c.l.b16 %v1894
        %v2023 = vunpack.c.l.b16 %v1895
        %v2024 = vunpack.c.l.b16 %v1896
        %v2025 = vunpack.c.l.b16 %v1897
        %v2026 = vunpack.c.l.b16 %v1898
        %v2027 = vunpack.c.l.b16 %v1899
        %v2028 = vunpack.c.l.b16 %v1900
        %v2029 = vunpack.c.l.b16 %v1901
        %v2030 = vunpack.c.l.b16 %v1902
        %v2031 = vunpack.c.l.b16 %v1903
        %v2032 = vunpack.c.l.b16 %v1904
        %v2033 = vpack.c.b16 %v2018, %v2017
        %v2034 = vpack.c.b16 %v2020, %v2019
        %v2035 = vpack.c.b16 %v2022, %v2021
        %v2036 = vpack.c.b16 %v2024, %v2023
        %v2037 = vpack.c.b16 %v2026, %v2025
        %v2038 = vpack.c.b16 %v2028, %v2027
        %v2039 = vpack.c.b16 %v2030, %v2029
        %v2040 = vpack.c.b16 %v2032, %v2031
        %2049 = vmatprep.subr.bf16.mxu0 %v1826
        %2050 = vmatpush1.bf16.msra.mxu0 %v1825
        %2051 = vmatprep.subr.bf16.mxu0 %v1834
        %2052 = vmatpush1.bf16.msra.mxu0 %v1833
        %2053 = vmatprep.subr.bf16.mxu0 %v1842
        %2054 = vmatpush1.bf16.msra.mxu0 %v1841
        %2055 = vmatprep.subr.bf16.mxu0 %v1850
        %2056 = vmatpush1.bf16.msra.mxu0 %v1849
        %2057 = vmatprep.subr.bf16.mxu0 %v1858
        %2058 = vmatpush1.bf16.msra.mxu0 %v1857
        %2059 = vmatprep.subr.bf16.mxu0 %v1866
        %2060 = vmatpush1.bf16.msra.mxu0 %v1865
        %2061 = vmatprep.subr.bf16.mxu0 %v1874
        %2062 = vmatpush1.bf16.msra.mxu0 %v1873
        %2063 = vmatprep.subr.bf16.mxu0 %v1882
        %2064 = vmatpush1.bf16.msra.mxu0 %v1881
        %2065 = vmatprep.subr.bf16.mxu0 0
        %2066 = vmatpush1.bf16.msra.mxu0 0
        %2067 = vmatprep.subr.bf16.mxu0 0
        %2068 = vmatpush1.bf16.msra.mxu0 0
        %2069 = vmatprep.subr.bf16.mxu0 0
        %2070 = vmatpush1.bf16.msra.mxu0 0
        %2071 = vmatprep.subr.bf16.mxu0 0
        %2072 = vmatpush1.bf16.msra.mxu0 0
        %2073 = vmatprep.subr.bf16.mxu0 0
        %2074 = vmatpush1.bf16.msra.mxu0 0
        %2075 = vmatprep.subr.bf16.mxu0 0
        %2076 = vmatpush1.bf16.msra.mxu0 0
        %2077 = vmatprep.subr.bf16.mxu0 0
        %2078 = vmatpush1.bf16.msra.mxu0 0
        %2079 = vmatprep.subr.bf16.mxu0 0
        %2080 = vmatpush1.bf16.msra.mxu0 0
        %2081 = vmatprep.mubr.bf16.mxu0 0
        %2082 = vmatmul.mubr.bf16.gmra.mrb[0].mxu0 %v2033
        %v2083 = vpop.f32.mrb[0].mxu0
        %v2084 = vadd.f32 %v1924, %v2083
        %v2085 = vpop.f32.mrb[0].mxu0
        %v2086 = vadd.f32 %v1924, %v2085
        %v2087 = vpop.f32.mrb[0].mxu0
        %v2088 = vadd.f32 %v1929, %v2087
        %v2089 = vpop.f32.mrb[0].mxu0
        %v2090 = vadd.f32 %v1929, %v2089
        %2091 = vmatprep.mubr.bf16.mxu0 0
        %2092 = vmatmul.mubr.bf16.gmra.mrb[0].mxu0 %v2034
        %v2093 = vpop.f32.mrb[0].mxu0
        %v2094 = vadd.f32 %v1934, %v2093
        %v2095 = vpop.f32.mrb[0].mxu0
        %v2096 = vadd.f32 %v1934, %v2095
        %v2097 = vpop.f32.mrb[0].mxu0
        %v2098 = vadd.f32 %v1939, %v2097
        %v2099 = vpop.f32.mrb[0].mxu0
        %v2100 = vadd.f32 %v1939, %v2099
        %2101 = vmatprep.mubr.bf16.mxu0 0
        %2102 = vmatmul.mubr.bf16.gmra.mrb[0].mxu0 %v2035
        %v2103 = vpop.f32.mrb[0].mxu0
        %v2104 = vadd.f32 %v1944, %v2103
        %v2105 = vpop.f32.mrb[0].mxu0
        %v2106 = vadd.f32 %v1944, %v2105
        %v2107 = vpop.f32.mrb[0].mxu0
        %v2108 = vadd.f32 %v1949, %v2107
        %v2109 = vpop.f32.mrb[0].mxu0
        %v2110 = vadd.f32 %v1949, %v2109
        %2111 = vmatprep.mubr.bf16.mxu0 0
        %2112 = vmatmul.mubr.bf16.gmra.mrb[0].mxu0 %v2036
        %v2113 = vpop.f32.mrb[0].mxu0
        %v2114 = vadd.f32 %v1954, %v2113
        %v2115 = vpop.f32.mrb[0].mxu0
        %v2116 = vadd.f32 %v1954, %v2115
        %v2117 = vpop.f32.mrb[0].mxu0
        %v2118 = vadd.f32 %v1959, %v2117
        %v2119 = vpop.f32.mrb[0].mxu0
        %v2120 = vadd.f32 %v1959, %v2119
        %2121 = vmatprep.mubr.bf16.mxu0 0
        %2122 = vmatmul.mubr.bf16.gmra.mrb[0].mxu0 %v2037
        %v2123 = vpop.f32.mrb[0].mxu0
        %v2124 = vadd.f32 %v1964, %v2123
        %v2125 = vpop.f32.mrb[0].mxu0
        %v2126 = vadd.f32 %v1964, %v2125
        %v2127 = vpop.f32.mrb[0].mxu0
        %v2128 = vadd.f32 %v1969, %v2127
        %v2129 = vpop.f32.mrb[0].mxu0
        %v2130 = vadd.f32 %v1969, %v2129
        %2131 = vmatprep.mubr.bf16.mxu0 0
        %2132 = vmatmul.mubr.bf16.gmra.mrb[0].mxu0 %v2038
        %v2133 = vpop.f32.mrb[0].mxu0
        %v2134 = vadd.f32 %v1974, %v2133
        %v2135 = vpop.f32.mrb[0].mxu0
        %v2136 = vadd.f32 %v1974, %v2135
        %v2137 = vpop.f32.mrb[0].mxu0
        %v2138 = vadd.f32 %v1979, %v2137
        %v2139 = vpop.f32.mrb[0].mxu0
        %v2140 = vadd.f32 %v1979, %v2139
        %2141 = vmatprep.mubr.bf16.mxu0 0
        %2142 = vmatmul.mubr.bf16.gmra.mrb[0].mxu0 %v2039
        %v2143 = vpop.f32.mrb[0].mxu0
        %v2144 = vadd.f32 %v1984, %v2143
        %v2145 = vpop.f32.mrb[0].mxu0
        %v2146 = vadd.f32 %v1984, %v2145
        %v2147 = vpop.f32.mrb[0].mxu0
        %v2148 = vadd.f32 %v1989, %v2147
        %v2149 = vpop.f32.mrb[0].mxu0
        %v2150 = vadd.f32 %v1989, %v2149
        %2151 = vmatprep.mubr.bf16.mxu0 0
        %2152 = vmatmul.mubr.bf16.gmra.mrb[0].mxu0 %v2040
        %v2153 = vpop.f32.mrb[0].mxu0
        %v2154 = vadd.f32 %v1994, %v2153
        %v2155 = vpop.f32.mrb[0].mxu0
        %v2156 = vadd.f32 %v1994, %v2155
        %v2157 = vpop.f32.mrb[0].mxu0
        %v2158 = vadd.f32 %v1999, %v2157
        %v2159 = vpop.f32.mrb[0].mxu0
        %v2160 = vadd.f32 %v1999, %v2159
        %2161 = vdwg.mxu0
        %2162 = vmatprep.subr.bf16.mxu0 %v1828
        %2163 = vmatpush1.bf16.msra.mxu0 %v1827
        %2164 = vmatprep.subr.bf16.mxu0 %v1836
        %2165 = vmatpush1.bf16.msra.mxu0 %v1835
        %2166 = vmatprep.subr.bf16.mxu0 %v1844
        %2167 = vmatpush1.bf16.msra.mxu0 %v1843
        %2168 = vmatprep.subr.bf16.mxu0 %v1852
        %2169 = vmatpush1.bf16.msra.mxu0 %v1851
        %2170 = vmatprep.subr.bf16.mxu0 %v1860
        %2171 = vmatpush1.bf16.msra.mxu0 %v1859
        %2172 = vmatprep.subr.bf16.mxu0 %v1868
        %2173 = vmatpush1.bf16.msra.mxu0 %v1867
        %2174 = vmatprep.subr.bf16.mxu0 %v1876
        %2175 = vmatpush1.bf16.msra.mxu0 %v1875
        %2176 = vmatprep.subr.bf16.mxu0 %v1884
        %2177 = vmatpush1.bf16.msra.mxu0 %v1883
        %2178 = vmatprep.subr.bf16.mxu0 0
        %2179 = vmatpush1.bf16.msra.mxu0 0
        %2180 = vmatprep.subr.bf16.mxu0 0
        %2181 = vmatpush1.bf16.msra.mxu0 0
        %2182 = vmatprep.subr.bf16.mxu0 0
        %2183 = vmatpush1.bf16.msra.mxu0 0
        %2184 = vmatprep.subr.bf16.mxu0 0
        %2185 = vmatpush1.bf16.msra.mxu0 0
        %2186 = vmatprep.subr.bf16.mxu0 0
        %2187 = vmatpush1.bf16.msra.mxu0 0
        %2188 = vmatprep.subr.bf16.mxu0 0
        %2189 = vmatpush1.bf16.msra.mxu0 0
        %2190 = vmatprep.subr.bf16.mxu0 0
        %2191 = vmatpush1.bf16.msra.mxu0 0
        %2192 = vmatprep.subr.bf16.mxu0 0
        %2193 = vmatpush1.bf16.msra.mxu0 0
        %2194 = vmatprep.mubr.bf16.mxu0 0
        %2195 = vmatmul.mubr.bf16.gmra.mrb[0].mxu0 %v2033
        %v2196 = vpop.f32.mrb[0].mxu0
        %v2197 = vadd.f32 %v1924, %v2196
        %v2198 = vpop.f32.mrb[0].mxu0
        %v2199 = vadd.f32 %v1924, %v2198
        %v2200 = vpop.f32.mrb[0].mxu0
        %v2201 = vadd.f32 %v1929, %v2200
        %v2202 = vpop.f32.mrb[0].mxu0
        %v2203 = vadd.f32 %v1929, %v2202
        %2204 = vmatprep.mubr.bf16.mxu0 0
        %2205 = vmatmul.mubr.bf16.gmra.mrb[0].mxu0 %v2034
        %v2206 = vpop.f32.mrb[0].mxu0
        %v2207 = vadd.f32 %v1934, %v2206
        %v2208 = vpop.f32.mrb[0].mxu0
        %v2209 = vadd.f32 %v1934, %v2208
        %v2210 = vpop.f32.mrb[0].mxu0
        %v2211 = vadd.f32 %v1939, %v2210
        %v2212 = vpop.f32.mrb[0].mxu0
        %v2213 = vadd.f32 %v1939, %v2212
        %2214 = vmatprep.mubr.bf16.mxu0 0
        %2215 = vmatmul.mubr.bf16.gmra.mrb[0].mxu0 %v2035
        %v2216 = vpop.f32.mrb[0].mxu0
        %v2217 = vadd.f32 %v1944, %v2216
        %v2218 = vpop.f32.mrb[0].mxu0
        %v2219 = vadd.f32 %v1944, %v2218
        %v2220 = vpop.f32.mrb[0].mxu0
        %v2221 = vadd.f32 %v1949, %v2220
        %v2222 = vpop.f32.mrb[0].mxu0
        %v2223 = vadd.f32 %v1949, %v2222
        %2224 = vmatprep.mubr.bf16.mxu0 0
        %2225 = vmatmul.mubr.bf16.gmra.mrb[0].mxu0 %v2036
        %v2226 = vpop.f32.mrb[0].mxu0
        %v2227 = vadd.f32 %v1954, %v2226
        %v2228 = vpop.f32.mrb[0].mxu0
        %v2229 = vadd.f32 %v1954, %v2228
        %v2230 = vpop.f32.mrb[0].mxu0
        %v2231 = vadd.f32 %v1959, %v2230
        %v2232 = vpop.f32.mrb[0].mxu0
        %v2233 = vadd.f32 %v1959, %v2232
        %2234 = vmatprep.mubr.bf16.mxu0 0
        %2235 = vmatmul.mubr.bf16.gmra.mrb[0].mxu0 %v2037
        %v2236 = vpop.f32.mrb[0].mxu0
        %v2237 = vadd.f32 %v1964, %v2236
        %v2238 = vpop.f32.mrb[0].mxu0
        %v2239 = vadd.f32 %v1964, %v2238
        %v2240 = vpop.f32.mrb[0].mxu0
        %v2241 = vadd.f32 %v1969, %v2240
        %v2242 = vpop.f32.mrb[0].mxu0
        %v2243 = vadd.f32 %v1969, %v2242
        %2244 = vmatprep.mubr.bf16.mxu0 0
        %2245 = vmatmul.mubr.bf16.gmra.mrb[0].mxu0 %v2038
        %v2246 = vpop.f32.mrb[0].mxu0
        %v2247 = vadd.f32 %v1974, %v2246
        %v2248 = vpop.f32.mrb[0].mxu0
        %v2249 = vadd.f32 %v1974, %v2248
        %v2250 = vpop.f32.mrb[0].mxu0
        %v2251 = vadd.f32 %v1979, %v2250
        %v2252 = vpop.f32.mrb[0].mxu0
        %v2253 = vadd.f32 %v1979, %v2252
        %2254 = vmatprep.mubr.bf16.mxu0 0
        %2255 = vmatmul.mubr.bf16.gmra.mrb[0].mxu0 %v2039
        %v2256 = vpop.f32.mrb[0].mxu0
        %v2257 = vadd.f32 %v1984, %v2256
        %v2258 = vpop.f32.mrb[0].mxu0
        %v2259 = vadd.f32 %v1984, %v2258
        %v2260 = vpop.f32.mrb[0].mxu0
        %v2261 = vadd.f32 %v1989, %v2260
        %v2262 = vpop.f32.mrb[0].mxu0
        %v2263 = vadd.f32 %v1989, %v2262
        %2264 = vmatprep.mubr.bf16.mxu0 0
        %2265 = vmatmul.mubr.bf16.gmra.mrb[0].mxu0 %v2040
        %v2266 = vpop.f32.mrb[0].mxu0
        %v2267 = vadd.f32 %v1994, %v2266
        %v2268 = vpop.f32.mrb[0].mxu0
        %v2269 = vadd.f32 %v1994, %v2268
        %v2270 = vpop.f32.mrb[0].mxu0
        %v2271 = vadd.f32 %v1999, %v2270
        %v2272 = vpop.f32.mrb[0].mxu0
        %v2273 = vadd.f32 %v1999, %v2272
        %2274 = vdwg.mxu0
        %2275 = vmatprep.subr.bf16.mxu0 %v1830
        %2276 = vmatpush1.bf16.msra.mxu0 %v1829
        %2277 = vmatprep.subr.bf16.mxu0 %v1838
        %2278 = vmatpush1.bf16.msra.mxu0 %v1837
        %2279 = vmatprep.subr.bf16.mxu0 %v1846
        %2280 = vmatpush1.bf16.msra.mxu0 %v1845
        %2281 = vmatprep.subr.bf16.mxu0 %v1854
        %2282 = vmatpush1.bf16.msra.mxu0 %v1853
        %2283 = vmatprep.subr.bf16.mxu0 %v1862
        %2284 = vmatpush1.bf16.msra.mxu0 %v1861
        %2285 = vmatprep.subr.bf16.mxu0 %v1870
        %2286 = vmatpush1.bf16.msra.mxu0 %v1869
        %2287 = vmatprep.subr.bf16.mxu0 %v1878
        %2288 = vmatpush1.bf16.msra.mxu0 %v1877
        %2289 = vmatprep.subr.bf16.mxu0 %v1886
        %2290 = vmatpush1.bf16.msra.mxu0 %v1885
        %2291 = vmatprep.subr.bf16.mxu0 0
        %2292 = vmatpush1.bf16.msra.mxu0 0
        %2293 = vmatprep.subr.bf16.mxu0 0
        %2294 = vmatpush1.bf16.msra.mxu0 0
        %2295 = vmatprep.subr.bf16.mxu0 0
        %2296 = vmatpush1.bf16.msra.mxu0 0
        %2297 = vmatprep.subr.bf16.mxu0 0
        %2298 = vmatpush1.bf16.msra.mxu0 0
        %2299 = vmatprep.subr.bf16.mxu0 0
        %2300 = vmatpush1.bf16.msra.mxu0 0
        %2301 = vmatprep.subr.bf16.mxu0 0
        %2302 = vmatpush1.bf16.msra.mxu0 0
        %2303 = vmatprep.subr.bf16.mxu0 0
        %2304 = vmatpush1.bf16.msra.mxu0 0
        %2305 = vmatprep.subr.bf16.mxu0 0
        %2306 = vmatpush1.bf16.msra.mxu0 0
        %2307 = vmatprep.mubr.bf16.mxu0 0
        %2308 = vmatmul.mubr.bf16.gmra.mrb[0].mxu0 %v2033
        %v2309 = vpop.f32.mrb[0].mxu0
        %v2310 = vadd.f32 %v1924, %v2309
        %v2311 = vpop.f32.mrb[0].mxu0
        %v2312 = vadd.f32 %v1924, %v2311
        %v2313 = vpop.f32.mrb[0].mxu0
        %v2314 = vadd.f32 %v1929, %v2313
        %v2315 = vpop.f32.mrb[0].mxu0
        %v2316 = vadd.f32 %v1929, %v2315
        %2317 = vmatprep.mubr.bf16.mxu0 0
        %2318 = vmatmul.mubr.bf16.gmra.mrb[0].mxu0 %v2034
        %v2319 = vpop.f32.mrb[0].mxu0
        %v2320 = vadd.f32 %v1934, %v2319
        %v2321 = vpop.f32.mrb[0].mxu0
        %v2322 = vadd.f32 %v1934, %v2321
        %v2323 = vpop.f32.mrb[0].mxu0
        %v2324 = vadd.f32 %v1939, %v2323
        %v2325 = vpop.f32.mrb[0].mxu0
        %v2326 = vadd.f32 %v1939, %v2325
        %2327 = vmatprep.mubr.bf16.mxu0 0
        %2328 = vmatmul.mubr.bf16.gmra.mrb[0].mxu0 %v2035
        %v2329 = vpop.f32.mrb[0].mxu0
        %v2330 = vadd.f32 %v1944, %v2329
        %v2331 = vpop.f32.mrb[0].mxu0
        %v2332 = vadd.f32 %v1944, %v2331
        %v2333 = vpop.f32.mrb[0].mxu0
        %v2334 = vadd.f32 %v1949, %v2333
        %v2335 = vpop.f32.mrb[0].mxu0
        %v2336 = vadd.f32 %v1949, %v2335
        %2337 = vmatprep.mubr.bf16.mxu0 0
        %2338 = vmatmul.mubr.bf16.gmra.mrb[0].mxu0 %v2036
        %v2339 = vpop.f32.mrb[0].mxu0
        %v2340 = vadd.f32 %v1954, %v2339
        %v2341 = vpop.f32.mrb[0].mxu0
        %v2342 = vadd.f32 %v1954, %v2341
        %v2343 = vpop.f32.mrb[0].mxu0
        %v2344 = vadd.f32 %v1959, %v2343
        %v2345 = vpop.f32.mrb[0].mxu0
        %v2346 = vadd.f32 %v1959, %v2345
        %2347 = vmatprep.mubr.bf16.mxu0 0
        %2348 = vmatmul.mubr.bf16.gmra.mrb[0].mxu0 %v2037
        %v2349 = vpop.f32.mrb[0].mxu0
        %v2350 = vadd.f32 %v1964, %v2349
        %v2351 = vpop.f32.mrb[0].mxu0
        %v2352 = vadd.f32 %v1964, %v2351
        %v2353 = vpop.f32.mrb[0].mxu0
        %v2354 = vadd.f32 %v1969, %v2353
        %v2355 = vpop.f32.mrb[0].mxu0
        %v2356 = vadd.f32 %v1969, %v2355
        %2357 = vmatprep.mubr.bf16.mxu0 0
        %2358 = vmatmul.mubr.bf16.gmra.mrb[0].mxu0 %v2038
        %v2359 = vpop.f32.mrb[0].mxu0
        %v2360 = vadd.f32 %v1974, %v2359
        %v2361 = vpop.f32.mrb[0].mxu0
        %v2362 = vadd.f32 %v1974, %v2361
        %v2363 = vpop.f32.mrb[0].mxu0
        %v2364 = vadd.f32 %v1979, %v2363
        %v2365 = vpop.f32.mrb[0].mxu0
        %v2366 = vadd.f32 %v1979, %v2365
        %2367 = vmatprep.mubr.bf16.mxu0 0
        %2368 = vmatmul.mubr.bf16.gmra.mrb[0].mxu0 %v2039
        %v2369 = vpop.f32.mrb[0].mxu0
        %v2370 = vadd.f32 %v1984, %v2369
        %v2371 = vpop.f32.mrb[0].mxu0
        %v2372 = vadd.f32 %v1984, %v2371
        %v2373 = vpop.f32.mrb[0].mxu0
        %v2374 = vadd.f32 %v1989, %v2373
        %v2375 = vpop.f32.mrb[0].mxu0
        %v2376 = vadd.f32 %v1989, %v2375
        %2377 = vmatprep.mubr.bf16.mxu0 0
        %2378 = vmatmul.mubr.bf16.gmra.mrb[0].mxu0 %v2040
        %v2379 = vpop.f32.mrb[0].mxu0
        %v2380 = vadd.f32 %v1994, %v2379
        %v2381 = vpop.f32.mrb[0].mxu0
        %v2382 = vadd.f32 %v1994, %v2381
        %v2383 = vpop.f32.mrb[0].mxu0
        %v2384 = vadd.f32 %v1999, %v2383
        %v2385 = vpop.f32.mrb[0].mxu0
        %v2386 = vadd.f32 %v1999, %v2385
        %2387 = vdwg.mxu0
        %2388 = vmatprep.subr.bf16.mxu0 %v1832
        %2389 = vmatpush1.bf16.msra.mxu0 %v1831
        %2390 = vmatprep.subr.bf16.mxu0 %v1840
        %2391 = vmatpush1.bf16.msra.mxu0 %v1839
        %2392 = vmatprep.subr.bf16.mxu0 %v1848
        %2393 = vmatpush1.bf16.msra.mxu0 %v1847
        %2394 = vmatprep.subr.bf16.mxu0 %v1856
        %2395 = vmatpush1.bf16.msra.mxu0 %v1855
        %2396 = vmatprep.subr.bf16.mxu0 %v1864
        %2397 = vmatpush1.bf16.msra.mxu0 %v1863
        %2398 = vmatprep.subr.bf16.mxu0 %v1872
        %2399 = vmatpush1.bf16.msra.mxu0 %v1871
        %2400 = vmatprep.subr.bf16.mxu0 %v1880
        %2401 = vmatpush1.bf16.msra.mxu0 %v1879
        %2402 = vmatprep.subr.bf16.mxu0 %v1888
        %2403 = vmatpush1.bf16.msra.mxu0 %v1887
        %2404 = vmatprep.subr.bf16.mxu0 0
        %2405 = vmatpush1.bf16.msra.mxu0 0
        %2406 = vmatprep.subr.bf16.mxu0 0
        %2407 = vmatpush1.bf16.msra.mxu0 0
        %2408 = vmatprep.subr.bf16.mxu0 0
        %2409 = vmatpush1.bf16.msra.mxu0 0
        %2410 = vmatprep.subr.bf16.mxu0 0
        %2411 = vmatpush1.bf16.msra.mxu0 0
        %2412 = vmatprep.subr.bf16.mxu0 0
        %2413 = vmatpush1.bf16.msra.mxu0 0
        %2414 = vmatprep.subr.bf16.mxu0 0
        %2415 = vmatpush1.bf16.msra.mxu0 0
        %2416 = vmatprep.subr.bf16.mxu0 0
        %2417 = vmatpush1.bf16.msra.mxu0 0
        %2418 = vmatprep.subr.bf16.mxu0 0
        %2419 = vmatpush1.bf16.msra.mxu0 0
        %2420 = vmatprep.mubr.bf16.mxu0 0
        %2421 = vmatmul.mubr.bf16.gmra.mrb[0].mxu0 %v2033
        %v2422 = vpop.f32.mrb[0].mxu0
        %v2423 = vadd.f32 %v1924, %v2422
        %v2424 = vpop.f32.mrb[0].mxu0
        %v2425 = vadd.f32 %v1924, %v2424
        %v2426 = vpop.f32.mrb[0].mxu0
        %v2427 = vadd.f32 %v1929, %v2426
        %v2428 = vpop.f32.mrb[0].mxu0
        %v2429 = vadd.f32 %v1929, %v2428
        %2430 = vmatprep.mubr.bf16.mxu0 0
        %2431 = vmatmul.mubr.bf16.gmra.mrb[0].mxu0 %v2034
        %v2432 = vpop.f32.mrb[0].mxu0
        %v2433 = vadd.f32 %v1934, %v2432
        %v2434 = vpop.f32.mrb[0].mxu0
        %v2435 = vadd.f32 %v1934, %v2434
        %v2436 = vpop.f32.mrb[0].mxu0
        %v2437 = vadd.f32 %v1939, %v2436
        %v2438 = vpop.f32.mrb[0].mxu0
        %v2439 = vadd.f32 %v1939, %v2438
        %2440 = vmatprep.mubr.bf16.mxu0 0
        %2441 = vmatmul.mubr.bf16.gmra.mrb[0].mxu0 %v2035
        %v2442 = vpop.f32.mrb[0].mxu0
        %v2443 = vadd.f32 %v1944, %v2442
        %v2444 = vpop.f32.mrb[0].mxu0
        %v2445 = vadd.f32 %v1944, %v2444
        %v2446 = vpop.f32.mrb[0].mxu0
        %v2447 = vadd.f32 %v1949, %v2446
        %v2448 = vpop.f32.mrb[0].mxu0
        %v2449 = vadd.f32 %v1949, %v2448
        %2450 = vmatprep.mubr.bf16.mxu0 0
        %2451 = vmatmul.mubr.bf16.gmra.mrb[0].mxu0 %v2036
        %v2452 = vpop.f32.mrb[0].mxu0
        %v2453 = vadd.f32 %v1954, %v2452
        %v2454 = vpop.f32.mrb[0].mxu0
        %v2455 = vadd.f32 %v1954, %v2454
        %v2456 = vpop.f32.mrb[0].mxu0
        %v2457 = vadd.f32 %v1959, %v2456
        %v2458 = vpop.f32.mrb[0].mxu0
        %v2459 = vadd.f32 %v1959, %v2458
        %2460 = vmatprep.mubr.bf16.mxu0 0
        %2461 = vmatmul.mubr.bf16.gmra.mrb[0].mxu0 %v2037
        %v2462 = vpop.f32.mrb[0].mxu0
        %v2463 = vadd.f32 %v1964, %v2462
        %v2464 = vpop.f32.mrb[0].mxu0
        %v2465 = vadd.f32 %v1964, %v2464
        %v2466 = vpop.f32.mrb[0].mxu0
        %v2467 = vadd.f32 %v1969, %v2466
        %v2468 = vpop.f32.mrb[0].mxu0
        %v2469 = vadd.f32 %v1969, %v2468
        %2470 = vmatprep.mubr.bf16.mxu0 0
        %2471 = vmatmul.mubr.bf16.gmra.mrb[0].mxu0 %v2038
        %v2472 = vpop.f32.mrb[0].mxu0
        %v2473 = vadd.f32 %v1974, %v2472
        %v2474 = vpop.f32.mrb[0].mxu0
        %v2475 = vadd.f32 %v1974, %v2474
        %v2476 = vpop.f32.mrb[0].mxu0
        %v2477 = vadd.f32 %v1979, %v2476
        %v2478 = vpop.f32.mrb[0].mxu0
        %v2479 = vadd.f32 %v1979, %v2478
        %2480 = vmatprep.mubr.bf16.mxu0 0
        %2481 = vmatmul.mubr.bf16.gmra.mrb[0].mxu0 %v2039
        %v2482 = vpop.f32.mrb[0].mxu0
        %v2483 = vadd.f32 %v1984, %v2482
        %v2484 = vpop.f32.mrb[0].mxu0
        %v2485 = vadd.f32 %v1984, %v2484
        %v2486 = vpop.f32.mrb[0].mxu0
        %v2487 = vadd.f32 %v1989, %v2486
        %v2488 = vpop.f32.mrb[0].mxu0
        %v2489 = vadd.f32 %v1989, %v2488
        %2490 = vmatprep.mubr.bf16.mxu0 0
        %2491 = vmatmul.mubr.bf16.gmra.mrb[0].mxu0 %v2040
        %v2492 = vpop.f32.mrb[0].mxu0
        %v2493 = vadd.f32 %v1994, %v2492
        %v2494 = vpop.f32.mrb[0].mxu0
        %v2495 = vadd.f32 %v1994, %v2494
        %v2496 = vpop.f32.mrb[0].mxu0
        %v2497 = vadd.f32 %v1999, %v2496
        %v2498 = vpop.f32.mrb[0].mxu0
        %v2499 = vadd.f32 %v1999, %v2498
        %2500 = vdwg.mxu0
        %v2501 = vmax.f32 %v2084, 0.0
        %v2502 = vmax.f32 %v2086, 0.0
        %v2503 = vmax.f32 %v2197, 0.0
        %v2504 = vmax.f32 %v2199, 0.0
        %v2505 = vmax.f32 %v2310, 0.0
        %v2506 = vmax.f32 %v2312, 0.0
        %v2507 = vmax.f32 %v2423, 0.0
        %v2508 = vmax.f32 %v2425, 0.0
        %v2509 = vmax.f32 %v2088, 0.0
        %v2510 = vmax.f32 %v2090, 0.0
        %v2511 = vmax.f32 %v2201, 0.0
        %v2512 = vmax.f32 %v2203, 0.0
        %v2513 = vmax.f32 %v2314, 0.0
        %v2514 = vmax.f32 %v2316, 0.0
        %v2515 = vmax.f32 %v2427, 0.0
        %v2516 = vmax.f32 %v2429, 0.0
        %v2517 = vmax.f32 %v2094, 0.0
        %v2518 = vmax.f32 %v2096, 0.0
        %v2519 = vmax.f32 %v2207, 0.0
        %v2520 = vmax.f32 %v2209, 0.0
        %v2521 = vmax.f32 %v2320, 0.0
        %v2522 = vmax.f32 %v2322, 0.0
        %v2523 = vmax.f32 %v2433, 0.0
        %v2524 = vmax.f32 %v2435, 0.0
        %v2525 = vmax.f32 %v2098, 0.0
        %v2526 = vmax.f32 %v2100, 0.0
        %v2527 = vmax.f32 %v2211, 0.0
        %v2528 = vmax.f32 %v2213, 0.0
        %v2529 = vmax.f32 %v2324, 0.0
        %v2530 = vmax.f32 %v2326, 0.0
        %v2531 = vmax.f32 %v2437, 0.0
        %v2532 = vmax.f32 %v2439, 0.0
        %v2533 = vmax.f32 %v2104, 0.0
        %v2534 = vmax.f32 %v2106, 0.0
        %v2535 = vmax.f32 %v2217, 0.0
        %v2536 = vmax.f32 %v2219, 0.0
        %v2537 = vmax.f32 %v2330, 0.0
        %v2538 = vmax.f32 %v2332, 0.0
        %v2539 = vmax.f32 %v2443, 0.0
        %v2540 = vmax.f32 %v2445, 0.0
        %v2541 = vmax.f32 %v2108, 0.0
        %v2542 = vmax.f32 %v2110, 0.0
        %v2543 = vmax.f32 %v2221, 0.0
        %v2544 = vmax.f32 %v2223, 0.0
        %v2545 = vmax.f32 %v2334, 0.0
        %v2546 = vmax.f32 %v2336, 0.0
        %v2547 = vmax.f32 %v2447, 0.0
        %v2548 = vmax.f32 %v2449, 0.0
        %v2549 = vmax.f32 %v2114, 0.0
        %v2550 = vmax.f32 %v2116, 0.0
        %v2551 = vmax.f32 %v2227, 0.0
        %v2552 = vmax.f32 %v2229, 0.0
        %v2553 = vmax.f32 %v2340, 0.0
        %v2554 = vmax.f32 %v2342, 0.0
        %v2555 = vmax.f32 %v2453, 0.0
        %v2556 = vmax.f32 %v2455, 0.0
        %v2557 = vmax.f32 %v2118, 0.0
        %v2558 = vmax.f32 %v2120, 0.0
        %v2559 = vmax.f32 %v2231, 0.0
        %v2560 = vmax.f32 %v2233, 0.0
        %v2561 = vmax.f32 %v2344, 0.0
        %v2562 = vmax.f32 %v2346, 0.0
        %v2563 = vmax.f32 %v2457, 0.0
        %v2564 = vmax.f32 %v2459, 0.0
        %v2565 = vmax.f32 %v2124, 0.0
        %v2566 = vmax.f32 %v2126, 0.0
        %v2567 = vmax.f32 %v2237, 0.0
        %v2568 = vmax.f32 %v2239, 0.0
        %v2569 = vmax.f32 %v2350, 0.0
        %v2570 = vmax.f32 %v2352, 0.0
        %v2571 = vmax.f32 %v2463, 0.0
        %v2572 = vmax.f32 %v2465, 0.0
        %v2573 = vmax.f32 %v2128, 0.0
        %v2574 = vmax.f32 %v2130, 0.0
        %v2575 = vmax.f32 %v2241, 0.0
        %v2576 = vmax.f32 %v2243, 0.0
        %v2577 = vmax.f32 %v2354, 0.0
        %v2578 = vmax.f32 %v2356, 0.0
        %v2579 = vmax.f32 %v2467, 0.0
        %v2580 = vmax.f32 %v2469, 0.0
        %v2581 = vmax.f32 %v2134, 0.0
        %v2582 = vmax.f32 %v2136, 0.0
        %v2583 = vmax.f32 %v2247, 0.0
        %v2584 = vmax.f32 %v2249, 0.0
        %v2585 = vmax.f32 %v2360, 0.0
        %v2586 = vmax.f32 %v2362, 0.0
        %v2587 = vmax.f32 %v2473, 0.0
        %v2588 = vmax.f32 %v2475, 0.0
        %v2589 = vmax.f32 %v2138, 0.0
        %v2590 = vmax.f32 %v2140, 0.0
        %v2591 = vmax.f32 %v2251, 0.0
        %v2592 = vmax.f32 %v2253, 0.0
        %v2593 = vmax.f32 %v2364, 0.0
        %v2594 = vmax.f32 %v2366, 0.0
        %v2595 = vmax.f32 %v2477, 0.0
        %v2596 = vmax.f32 %v2479, 0.0
        %v2597 = vmax.f32 %v2144, 0.0
        %v2598 = vmax.f32 %v2146, 0.0
        %v2599 = vmax.f32 %v2257, 0.0
        %v2600 = vmax.f32 %v2259, 0.0
        %v2601 = vmax.f32 %v2370, 0.0
        %v2602 = vmax.f32 %v2372, 0.0
        %v2603 = vmax.f32 %v2483, 0.0
        %v2604 = vmax.f32 %v2485, 0.0
        %v2605 = vmax.f32 %v2148, 0.0
        %v2606 = vmax.f32 %v2150, 0.0
        %v2607 = vmax.f32 %v2261, 0.0
        %v2608 = vmax.f32 %v2263, 0.0
        %v2609 = vmax.f32 %v2374, 0.0
        %v2610 = vmax.f32 %v2376, 0.0
        %v2611 = vmax.f32 %v2487, 0.0
        %v2612 = vmax.f32 %v2489, 0.0
        %v2613 = vmax.f32 %v2154, 0.0
        %v2614 = vmax.f32 %v2156, 0.0
        %v2615 = vmax.f32 %v2267, 0.0
        %v2616 = vmax.f32 %v2269, 0.0
        %v2617 = vmax.f32 %v2380, 0.0
        %v2618 = vmax.f32 %v2382, 0.0
        %v2619 = vmax.f32 %v2493, 0.0
        %v2620 = vmax.f32 %v2495, 0.0
        %v2621 = vmax.f32 %v2158, 0.0
        %v2622 = vmax.f32 %v2160, 0.0
        %v2623 = vmax.f32 %v2271, 0.0
        %v2624 = vmax.f32 %v2273, 0.0
        %v2625 = vmax.f32 %v2384, 0.0
        %v2626 = vmax.f32 %v2386, 0.0
        %v2627 = vmax.f32 %v2497, 0.0
        %v2628 = vmax.f32 %v2499, 0.0
        %v2629 = vpack.c.bf16 %v2509, %v2501
        %v2630 = vpack.c.bf16 %v2510, %v2502
        %v2631 = vpack.c.bf16 %v2511, %v2503
        %v2632 = vpack.c.bf16 %v2512, %v2504
        %v2633 = vpack.c.bf16 %v2513, %v2505
        %v2634 = vpack.c.bf16 %v2514, %v2506
        %v2635 = vpack.c.bf16 %v2515, %v2507
        %v2636 = vpack.c.bf16 %v2516, %v2508
        %v2637 = vpack.c.bf16 %v2525, %v2517
        %v2638 = vpack.c.bf16 %v2526, %v2518
        %v2639 = vpack.c.bf16 %v2527, %v2519
        %v2640 = vpack.c.bf16 %v2528, %v2520
        %v2641 = vpack.c.bf16 %v2529, %v2521
        %v2642 = vpack.c.bf16 %v2530, %v2522
        %v2643 = vpack.c.bf16 %v2531, %v2523
        %v2644 = vpack.c.bf16 %v2532, %v2524
        %v2645 = vpack.c.bf16 %v2541, %v2533
        %v2646 = vpack.c.bf16 %v2542, %v2534
        %v2647 = vpack.c.bf16 %v2543, %v2535
        %v2648 = vpack.c.bf16 %v2544, %v2536
        %v2649 = vpack.c.bf16 %v2545, %v2537
        %v2650 = vpack.c.bf16 %v2546, %v2538
        %v2651 = vpack.c.bf16 %v2547, %v2539
        %v2652 = vpack.c.bf16 %v2548, %v2540
        %v2653 = vpack.c.bf16 %v2557, %v2549
        %v2654 = vpack.c.bf16 %v2558, %v2550
        %v2655 = vpack.c.bf16 %v2559, %v2551
        %v2656 = vpack.c.bf16 %v2560, %v2552
        %v2657 = vpack.c.bf16 %v2561, %v2553
        %v2658 = vpack.c.bf16 %v2562, %v2554
        %v2659 = vpack.c.bf16 %v2563, %v2555
        %v2660 = vpack.c.bf16 %v2564, %v2556
        %v2661 = vpack.c.bf16 %v2573, %v2565
        %v2662 = vpack.c.bf16 %v2574, %v2566
        %v2663 = vpack.c.bf16 %v2575, %v2567
        %v2664 = vpack.c.bf16 %v2576, %v2568
        %v2665 = vpack.c.bf16 %v2577, %v2569
        %v2666 = vpack.c.bf16 %v2578, %v2570
        %v2667 = vpack.c.bf16 %v2579, %v2571
        %v2668 = vpack.c.bf16 %v2580, %v2572
        %v2669 = vpack.c.bf16 %v2589, %v2581
        %v2670 = vpack.c.bf16 %v2590, %v2582
        %v2671 = vpack.c.bf16 %v2591, %v2583
        %v2672 = vpack.c.bf16 %v2592, %v2584
        %v2673 = vpack.c.bf16 %v2593, %v2585
        %v2674 = vpack.c.bf16 %v2594, %v2586
        %v2675 = vpack.c.bf16 %v2595, %v2587
        %v2676 = vpack.c.bf16 %v2596, %v2588
        %v2677 = vpack.c.bf16 %v2605, %v2597
        %v2678 = vpack.c.bf16 %v2606, %v2598
        %v2679 = vpack.c.bf16 %v2607, %v2599
        %v2680 = vpack.c.bf16 %v2608, %v2600
        %v2681 = vpack.c.bf16 %v2609, %v2601
        %v2682 = vpack.c.bf16 %v2610, %v2602
        %v2683 = vpack.c.bf16 %v2611, %v2603
        %v2684 = vpack.c.bf16 %v2612, %v2604
        %v2685 = vpack.c.bf16 %v2621, %v2613
        %v2686 = vpack.c.bf16 %v2622, %v2614
        %v2687 = vpack.c.bf16 %v2623, %v2615
        %v2688 = vpack.c.bf16 %v2624, %v2616
        %v2689 = vpack.c.bf16 %v2625, %v2617
        %v2690 = vpack.c.bf16 %v2626, %v2618
        %v2691 = vpack.c.bf16 %v2627, %v2619
        %v2692 = vpack.c.bf16 %v2628, %v2620
        %v2693 = vld [vmem:[%s5] sm:$0xf]
        %v2694 = vld [vmem:[%s5 + $0x4] sm:$0xf]
        %v2695 = vld [vmem:[%s5 + $0x8] sm:$0xf]
        %v2696 = vld [vmem:[%s5 + $0xc] sm:$0xf]
        %v2697 = vld [vmem:[%s5 + $0x10] sm:$0xf]
        %v2698 = vld [vmem:[%s5 + $0x14] sm:$0xf]
        %v2699 = vld [vmem:[%s5 + $0x18] sm:$0xf]
        %v2700 = vld [vmem:[%s5 + $0x1c] sm:$0xf]
        %v2701 = vld [vmem:[%s5 + $0x20] sm:$0xf]
        %v2702 = vld [vmem:[%s5 + $0x24] sm:$0xf]
        %v2703 = vld [vmem:[%s5 + $0x28] sm:$0xf]
        %v2704 = vld [vmem:[%s5 + $0x2c] sm:$0xf]
        %v2705 = vld [vmem:[%s5 + $0x30] sm:$0xf]
        %v2706 = vld [vmem:[%s5 + $0x34] sm:$0xf]
        %v2707 = vld [vmem:[%s5 + $0x38] sm:$0xf]
        %v2708 = vld [vmem:[%s5 + $0x3c] sm:$0xf]
        %v2709 = vld [vmem:[%s6] sm:$0xff]
        %v2710 = vld [vmem:[%s6 + $0x8] sm:$0xff]
        %v2711 = vld [vmem:[%s6 + $0x10] sm:$0xff]
        %v2712 = vld [vmem:[%s6 + $0x18] sm:$0xff]
        %v2713 = vld [vmem:[%s6 + $0x20] sm:$0xff]
        %v2714 = vld [vmem:[%s6 + $0x28] sm:$0xff]
        %v2715 = vld [vmem:[%s6 + $0x30] sm:$0xff]
        %v2716 = vld [vmem:[%s6 + $0x38] sm:$0xff]
        %v2717 = vld [vmem:[%s6 + $0x40] sm:$0xff]
        %v2718 = vld [vmem:[%s6 + $0x48] sm:$0xff]
        %v2719 = vld [vmem:[%s6 + $0x50] sm:$0xff]
        %v2720 = vld [vmem:[%s6 + $0x58] sm:$0xff]
        %v2721 = vld [vmem:[%s6 + $0x60] sm:$0xff]
        %v2722 = vld [vmem:[%s6 + $0x68] sm:$0xff]
        %v2723 = vld [vmem:[%s6 + $0x70] sm:$0xff]
        %v2724 = vld [vmem:[%s6 + $0x78] sm:$0xff]
        %2726 = vset.pattern.permute.xlu0 0
        %2727 = vperm.xlu0 %2726, %v2709
        %v2728 = vpop.permute.xlu0 %2727
        %2731 = vset.pattern.permute.xlu0 0
        %2732 = vperm.xlu0 %2731, %v2710
        %v2733 = vpop.permute.xlu0 %2732
        %2736 = vset.pattern.permute.xlu0 0
        %2737 = vperm.xlu0 %2736, %v2711
        %v2738 = vpop.permute.xlu0 %2737
        %2741 = vset.pattern.permute.xlu0 0
        %2742 = vperm.xlu0 %2741, %v2712
        %v2743 = vpop.permute.xlu0 %2742
        %2746 = vset.pattern.permute.xlu0 0
        %2747 = vperm.xlu0 %2746, %v2713
        %v2748 = vpop.permute.xlu0 %2747
        %2751 = vset.pattern.permute.xlu0 0
        %2752 = vperm.xlu0 %2751, %v2714
        %v2753 = vpop.permute.xlu0 %2752
        %2756 = vset.pattern.permute.xlu0 0
        %2757 = vperm.xlu0 %2756, %v2715
        %v2758 = vpop.permute.xlu0 %2757
        %2761 = vset.pattern.permute.xlu0 0
        %2762 = vperm.xlu0 %2761, %v2716
        %v2763 = vpop.permute.xlu0 %2762
        %2766 = vset.pattern.permute.xlu0 0
        %2767 = vperm.xlu0 %2766, %v2717
        %v2768 = vpop.permute.xlu0 %2767
        %2771 = vset.pattern.permute.xlu0 0
        %2772 = vperm.xlu0 %2771, %v2718
        %v2773 = vpop.permute.xlu0 %2772
        %2776 = vset.pattern.permute.xlu0 0
        %2777 = vperm.xlu0 %2776, %v2719
        %v2778 = vpop.permute.xlu0 %2777
        %2781 = vset.pattern.permute.xlu0 0
        %2782 = vperm.xlu0 %2781, %v2720
        %v2783 = vpop.permute.xlu0 %2782
        %2786 = vset.pattern.permute.xlu0 0
        %2787 = vperm.xlu0 %2786, %v2721
        %v2788 = vpop.permute.xlu0 %2787
        %2791 = vset.pattern.permute.xlu0 0
        %2792 = vperm.xlu0 %2791, %v2722
        %v2793 = vpop.permute.xlu0 %2792
        %2796 = vset.pattern.permute.xlu0 0
        %2797 = vperm.xlu0 %2796, %v2723
        %v2798 = vpop.permute.xlu0 %2797
        %2801 = vset.pattern.permute.xlu0 0
        %2802 = vperm.xlu0 %2801, %v2724
        %v2803 = vpop.permute.xlu0 %2802
        %v2821 = vunpack.c.l.b16 %v2693
        %v2822 = vunpack.c.l.b16 %v2694
        %v2823 = vunpack.c.l.b16 %v2695
        %v2824 = vunpack.c.l.b16 %v2696
        %v2825 = vunpack.c.l.b16 %v2697
        %v2826 = vunpack.c.l.b16 %v2698
        %v2827 = vunpack.c.l.b16 %v2699
        %v2828 = vunpack.c.l.b16 %v2700
        %v2829 = vunpack.c.l.b16 %v2701
        %v2830 = vunpack.c.l.b16 %v2702
        %v2831 = vunpack.c.l.b16 %v2703
        %v2832 = vunpack.c.l.b16 %v2704
        %v2833 = vunpack.c.l.b16 %v2705
        %v2834 = vunpack.c.l.b16 %v2706
        %v2835 = vunpack.c.l.b16 %v2707
        %v2836 = vunpack.c.l.b16 %v2708
        %v2837 = vpack.c.b16 %v2822, %v2821
        %v2838 = vpack.c.b16 %v2824, %v2823
        %v2839 = vpack.c.b16 %v2826, %v2825
        %v2840 = vpack.c.b16 %v2828, %v2827
        %v2841 = vpack.c.b16 %v2830, %v2829
        %v2842 = vpack.c.b16 %v2832, %v2831
        %v2843 = vpack.c.b16 %v2834, %v2833
        %v2844 = vpack.c.b16 %v2836, %v2835
        %2853 = vmatprep.subr.bf16.mxu0 %v2630
        %2854 = vmatpush1.bf16.msra.mxu0 %v2629
        %2855 = vmatprep.subr.bf16.mxu0 %v2638
        %2856 = vmatpush1.bf16.msra.mxu0 %v2637
        %2857 = vmatprep.subr.bf16.mxu0 %v2646
        %2858 = vmatpush1.bf16.msra.mxu0 %v2645
        %2859 = vmatprep.subr.bf16.mxu0 %v2654
        %2860 = vmatpush1.bf16.msra.mxu0 %v2653
        %2861 = vmatprep.subr.bf16.mxu0 %v2662
        %2862 = vmatpush1.bf16.msra.mxu0 %v2661
        %2863 = vmatprep.subr.bf16.mxu0 %v2670
        %2864 = vmatpush1.bf16.msra.mxu0 %v2669
        %2865 = vmatprep.subr.bf16.mxu0 %v2678
        %2866 = vmatpush1.bf16.msra.mxu0 %v2677
        %2867 = vmatprep.subr.bf16.mxu0 %v2686
        %2868 = vmatpush1.bf16.msra.mxu0 %v2685
        %2869 = vmatprep.subr.bf16.mxu0 0
        %2870 = vmatpush1.bf16.msra.mxu0 0
        %2871 = vmatprep.subr.bf16.mxu0 0
        %2872 = vmatpush1.bf16.msra.mxu0 0
        %2873 = vmatprep.subr.bf16.mxu0 0
        %2874 = vmatpush1.bf16.msra.mxu0 0
        %2875 = vmatprep.subr.bf16.mxu0 0
        %2876 = vmatpush1.bf16.msra.mxu0 0
        %2877 = vmatprep.subr.bf16.mxu0 0
        %2878 = vmatpush1.bf16.msra.mxu0 0
        %2879 = vmatprep.subr.bf16.mxu0 0
        %2880 = vmatpush1.bf16.msra.mxu0 0
        %2881 = vmatprep.subr.bf16.mxu0 0
        %2882 = vmatpush1.bf16.msra.mxu0 0
        %2883 = vmatprep.subr.bf16.mxu0 0
        %2884 = vmatpush1.bf16.msra.mxu0 0
        %2885 = vmatprep.mubr.bf16.mxu0 0
        %2886 = vmatmul.mubr.bf16.gmra.mrb[0].mxu0 %v2837
        %v2887 = vpop.f32.mrb[0].mxu0
        %v2888 = vadd.f32 %v2728, %v2887
        %v2889 = vpop.f32.mrb[0].mxu0
        %v2890 = vadd.f32 %v2728, %v2889
        %v2891 = vpop.f32.mrb[0].mxu0
        %v2892 = vadd.f32 %v2733, %v2891
        %v2893 = vpop.f32.mrb[0].mxu0
        %v2894 = vadd.f32 %v2733, %v2893
        %2895 = vmatprep.mubr.bf16.mxu0 0
        %2896 = vmatmul.mubr.bf16.gmra.mrb[0].mxu0 %v2838
        %v2897 = vpop.f32.mrb[0].mxu0
        %v2898 = vadd.f32 %v2738, %v2897
        %v2899 = vpop.f32.mrb[0].mxu0
        %v2900 = vadd.f32 %v2738, %v2899
        %v2901 = vpop.f32.mrb[0].mxu0
        %v2902 = vadd.f32 %v2743, %v2901
        %v2903 = vpop.f32.mrb[0].mxu0
        %v2904 = vadd.f32 %v2743, %v2903
        %2905 = vmatprep.mubr.bf16.mxu0 0
        %2906 = vmatmul.mubr.bf16.gmra.mrb[0].mxu0 %v2839
        %v2907 = vpop.f32.mrb[0].mxu0
        %v2908 = vadd.f32 %v2748, %v2907
        %v2909 = vpop.f32.mrb[0].mxu0
        %v2910 = vadd.f32 %v2748, %v2909
        %v2911 = vpop.f32.mrb[0].mxu0
        %v2912 = vadd.f32 %v2753, %v2911
        %v2913 = vpop.f32.mrb[0].mxu0
        %v2914 = vadd.f32 %v2753, %v2913
        %2915 = vmatprep.mubr.bf16.mxu0 0
        %2916 = vmatmul.mubr.bf16.gmra.mrb[0].mxu0 %v2840
        %v2917 = vpop.f32.mrb[0].mxu0
        %v2918 = vadd.f32 %v2758, %v2917
        %v2919 = vpop.f32.mrb[0].mxu0
        %v2920 = vadd.f32 %v2758, %v2919
        %v2921 = vpop.f32.mrb[0].mxu0
        %v2922 = vadd.f32 %v2763, %v2921
        %v2923 = vpop.f32.mrb[0].mxu0
        %v2924 = vadd.f32 %v2763, %v2923
        %2925 = vmatprep.mubr.bf16.mxu0 0
        %2926 = vmatmul.mubr.bf16.gmra.mrb[0].mxu0 %v2841
        %v2927 = vpop.f32.mrb[0].mxu0
        %v2928 = vadd.f32 %v2768, %v2927
        %v2929 = vpop.f32.mrb[0].mxu0
        %v2930 = vadd.f32 %v2768, %v2929
        %v2931 = vpop.f32.mrb[0].mxu0
        %v2932 = vadd.f32 %v2773, %v2931
        %v2933 = vpop.f32.mrb[0].mxu0
        %v2934 = vadd.f32 %v2773, %v2933
        %2935 = vmatprep.mubr.bf16.mxu0 0
        %2936 = vmatmul.mubr.bf16.gmra.mrb[0].mxu0 %v2842
        %v2937 = vpop.f32.mrb[0].mxu0
        %v2938 = vadd.f32 %v2778, %v2937
        %v2939 = vpop.f32.mrb[0].mxu0
        %v2940 = vadd.f32 %v2778, %v2939
        %v2941 = vpop.f32.mrb[0].mxu0
        %v2942 = vadd.f32 %v2783, %v2941
        %v2943 = vpop.f32.mrb[0].mxu0
        %v2944 = vadd.f32 %v2783, %v2943
        %2945 = vmatprep.mubr.bf16.mxu0 0
        %2946 = vmatmul.mubr.bf16.gmra.mrb[0].mxu0 %v2843
        %v2947 = vpop.f32.mrb[0].mxu0
        %v2948 = vadd.f32 %v2788, %v2947
        %v2949 = vpop.f32.mrb[0].mxu0
        %v2950 = vadd.f32 %v2788, %v2949
        %v2951 = vpop.f32.mrb[0].mxu0
        %v2952 = vadd.f32 %v2793, %v2951
        %v2953 = vpop.f32.mrb[0].mxu0
        %v2954 = vadd.f32 %v2793, %v2953
        %2955 = vmatprep.mubr.bf16.mxu0 0
        %2956 = vmatmul.mubr.bf16.gmra.mrb[0].mxu0 %v2844
        %v2957 = vpop.f32.mrb[0].mxu0
        %v2958 = vadd.f32 %v2798, %v2957
        %v2959 = vpop.f32.mrb[0].mxu0
        %v2960 = vadd.f32 %v2798, %v2959
        %v2961 = vpop.f32.mrb[0].mxu0
        %v2962 = vadd.f32 %v2803, %v2961
        %v2963 = vpop.f32.mrb[0].mxu0
        %v2964 = vadd.f32 %v2803, %v2963
        %2965 = vdwg.mxu0
        %2966 = vmatprep.subr.bf16.mxu0 %v2632
        %2967 = vmatpush1.bf16.msra.mxu0 %v2631
        %2968 = vmatprep.subr.bf16.mxu0 %v2640
        %2969 = vmatpush1.bf16.msra.mxu0 %v2639
        %2970 = vmatprep.subr.bf16.mxu0 %v2648
        %2971 = vmatpush1.bf16.msra.mxu0 %v2647
        %2972 = vmatprep.subr.bf16.mxu0 %v2656
        %2973 = vmatpush1.bf16.msra.mxu0 %v2655
        %2974 = vmatprep.subr.bf16.mxu0 %v2664
        %2975 = vmatpush1.bf16.msra.mxu0 %v2663
        %2976 = vmatprep.subr.bf16.mxu0 %v2672
        %2977 = vmatpush1.bf16.msra.mxu0 %v2671
        %2978 = vmatprep.subr.bf16.mxu0 %v2680
        %2979 = vmatpush1.bf16.msra.mxu0 %v2679
        %2980 = vmatprep.subr.bf16.mxu0 %v2688
        %2981 = vmatpush1.bf16.msra.mxu0 %v2687
        %2982 = vmatprep.subr.bf16.mxu0 0
        %2983 = vmatpush1.bf16.msra.mxu0 0
        %2984 = vmatprep.subr.bf16.mxu0 0
        %2985 = vmatpush1.bf16.msra.mxu0 0
        %2986 = vmatprep.subr.bf16.mxu0 0
        %2987 = vmatpush1.bf16.msra.mxu0 0
        %2988 = vmatprep.subr.bf16.mxu0 0
        %2989 = vmatpush1.bf16.msra.mxu0 0
        %2990 = vmatprep.subr.bf16.mxu0 0
        %2991 = vmatpush1.bf16.msra.mxu0 0
        %2992 = vmatprep.subr.bf16.mxu0 0
        %2993 = vmatpush1.bf16.msra.mxu0 0
        %2994 = vmatprep.subr.bf16.mxu0 0
        %2995 = vmatpush1.bf16.msra.mxu0 0
        %2996 = vmatprep.subr.bf16.mxu0 0
        %2997 = vmatpush1.bf16.msra.mxu0 0
        %2998 = vmatprep.mubr.bf16.mxu0 0
        %2999 = vmatmul.mubr.bf16.gmra.mrb[0].mxu0 %v2837
        %v3000 = vpop.f32.mrb[0].mxu0
        %v3001 = vadd.f32 %v2728, %v3000
        %v3002 = vpop.f32.mrb[0].mxu0
        %v3003 = vadd.f32 %v2728, %v3002
        %v3004 = vpop.f32.mrb[0].mxu0
        %v3005 = vadd.f32 %v2733, %v3004
        %v3006 = vpop.f32.mrb[0].mxu0
        %v3007 = vadd.f32 %v2733, %v3006
        %3008 = vmatprep.mubr.bf16.mxu0 0
        %3009 = vmatmul.mubr.bf16.gmra.mrb[0].mxu0 %v2838
        %v3010 = vpop.f32.mrb[0].mxu0
        %v3011 = vadd.f32 %v2738, %v3010
        %v3012 = vpop.f32.mrb[0].mxu0
        %v3013 = vadd.f32 %v2738, %v3012
        %v3014 = vpop.f32.mrb[0].mxu0
        %v3015 = vadd.f32 %v2743, %v3014
        %v3016 = vpop.f32.mrb[0].mxu0
        %v3017 = vadd.f32 %v2743, %v3016
        %3018 = vmatprep.mubr.bf16.mxu0 0
        %3019 = vmatmul.mubr.bf16.gmra.mrb[0].mxu0 %v2839
        %v3020 = vpop.f32.mrb[0].mxu0
        %v3021 = vadd.f32 %v2748, %v3020
        %v3022 = vpop.f32.mrb[0].mxu0
        %v3023 = vadd.f32 %v2748, %v3022
        %v3024 = vpop.f32.mrb[0].mxu0
        %v3025 = vadd.f32 %v2753, %v3024
        %v3026 = vpop.f32.mrb[0].mxu0
        %v3027 = vadd.f32 %v2753, %v3026
        %3028 = vmatprep.mubr.bf16.mxu0 0
        %3029 = vmatmul.mubr.bf16.gmra.mrb[0].mxu0 %v2840
        %v3030 = vpop.f32.mrb[0].mxu0
        %v3031 = vadd.f32 %v2758, %v3030
        %v3032 = vpop.f32.mrb[0].mxu0
        %v3033 = vadd.f32 %v2758, %v3032
        %v3034 = vpop.f32.mrb[0].mxu0
        %v3035 = vadd.f32 %v2763, %v3034
        %v3036 = vpop.f32.mrb[0].mxu0
        %v3037 = vadd.f32 %v2763, %v3036
        %3038 = vmatprep.mubr.bf16.mxu0 0
        %3039 = vmatmul.mubr.bf16.gmra.mrb[0].mxu0 %v2841
        %v3040 = vpop.f32.mrb[0].mxu0
        %v3041 = vadd.f32 %v2768, %v3040
        %v3042 = vpop.f32.mrb[0].mxu0
        %v3043 = vadd.f32 %v2768, %v3042
        %v3044 = vpop.f32.mrb[0].mxu0
        %v3045 = vadd.f32 %v2773, %v3044
        %v3046 = vpop.f32.mrb[0].mxu0
        %v3047 = vadd.f32 %v2773, %v3046
        %3048 = vmatprep.mubr.bf16.mxu0 0
        %3049 = vmatmul.mubr.bf16.gmra.mrb[0].mxu0 %v2842
        %v3050 = vpop.f32.mrb[0].mxu0
        %v3051 = vadd.f32 %v2778, %v3050
        %v3052 = vpop.f32.mrb[0].mxu0
        %v3053 = vadd.f32 %v2778, %v3052
        %v3054 = vpop.f32.mrb[0].mxu0
        %v3055 = vadd.f32 %v2783, %v3054
        %v3056 = vpop.f32.mrb[0].mxu0
        %v3057 = vadd.f32 %v2783, %v3056
        %3058 = vmatprep.mubr.bf16.mxu0 0
        %3059 = vmatmul.mubr.bf16.gmra.mrb[0].mxu0 %v2843
        %v3060 = vpop.f32.mrb[0].mxu0
        %v3061 = vadd.f32 %v2788, %v3060
        %v3062 = vpop.f32.mrb[0].mxu0
        %v3063 = vadd.f32 %v2788, %v3062
        %v3064 = vpop.f32.mrb[0].mxu0
        %v3065 = vadd.f32 %v2793, %v3064
        %v3066 = vpop.f32.mrb[0].mxu0
        %v3067 = vadd.f32 %v2793, %v3066
        %3068 = vmatprep.mubr.bf16.mxu0 0
        %3069 = vmatmul.mubr.bf16.gmra.mrb[0].mxu0 %v2844
        %v3070 = vpop.f32.mrb[0].mxu0
        %v3071 = vadd.f32 %v2798, %v3070
        %v3072 = vpop.f32.mrb[0].mxu0
        %v3073 = vadd.f32 %v2798, %v3072
        %v3074 = vpop.f32.mrb[0].mxu0
        %v3075 = vadd.f32 %v2803, %v3074
        %v3076 = vpop.f32.mrb[0].mxu0
        %v3077 = vadd.f32 %v2803, %v3076
        %3078 = vdwg.mxu0
        %3079 = vmatprep.subr.bf16.mxu0 %v2634
        %3080 = vmatpush1.bf16.msra.mxu0 %v2633
        %3081 = vmatprep.subr.bf16.mxu0 %v2642
        %3082 = vmatpush1.bf16.msra.mxu0 %v2641
        %3083 = vmatprep.subr.bf16.mxu0 %v2650
        %3084 = vmatpush1.bf16.msra.mxu0 %v2649
        %3085 = vmatprep.subr.bf16.mxu0 %v2658
        %3086 = vmatpush1.bf16.msra.mxu0 %v2657
        %3087 = vmatprep.subr.bf16.mxu0 %v2666
        %3088 = vmatpush1.bf16.msra.mxu0 %v2665
        %3089 = vmatprep.subr.bf16.mxu0 %v2674
        %3090 = vmatpush1.bf16.msra.mxu0 %v2673
        %3091 = vmatprep.subr.bf16.mxu0 %v2682
        %3092 = vmatpush1.bf16.msra.mxu0 %v2681
        %3093 = vmatprep.subr.bf16.mxu0 %v2690
        %3094 = vmatpush1.bf16.msra.mxu0 %v2689
        %3095 = vmatprep.subr.bf16.mxu0 0
        %3096 = vmatpush1.bf16.msra.mxu0 0
        %3097 = vmatprep.subr.bf16.mxu0 0
        %3098 = vmatpush1.bf16.msra.mxu0 0
        %3099 = vmatprep.subr.bf16.mxu0 0
        %3100 = vmatpush1.bf16.msra.mxu0 0
        %3101 = vmatprep.subr.bf16.mxu0 0
        %3102 = vmatpush1.bf16.msra.mxu0 0
        %3103 = vmatprep.subr.bf16.mxu0 0
        %3104 = vmatpush1.bf16.msra.mxu0 0
        %3105 = vmatprep.subr.bf16.mxu0 0
        %3106 = vmatpush1.bf16.msra.mxu0 0
        %3107 = vmatprep.subr.bf16.mxu0 0
        %3108 = vmatpush1.bf16.msra.mxu0 0
        %3109 = vmatprep.subr.bf16.mxu0 0
        %3110 = vmatpush1.bf16.msra.mxu0 0
        %3111 = vmatprep.mubr.bf16.mxu0 0
        %3112 = vmatmul.mubr.bf16.gmra.mrb[0].mxu0 %v2837
        %v3113 = vpop.f32.mrb[0].mxu0
        %v3114 = vadd.f32 %v2728, %v3113
        %v3115 = vpop.f32.mrb[0].mxu0
        %v3116 = vadd.f32 %v2728, %v3115
        %v3117 = vpop.f32.mrb[0].mxu0
        %v3118 = vadd.f32 %v2733, %v3117
        %v3119 = vpop.f32.mrb[0].mxu0
        %v3120 = vadd.f32 %v2733, %v3119
        %3121 = vmatprep.mubr.bf16.mxu0 0
        %3122 = vmatmul.mubr.bf16.gmra.mrb[0].mxu0 %v2838
        %v3123 = vpop.f32.mrb[0].mxu0
        %v3124 = vadd.f32 %v2738, %v3123
        %v3125 = vpop.f32.mrb[0].mxu0
        %v3126 = vadd.f32 %v2738, %v3125
        %v3127 = vpop.f32.mrb[0].mxu0
        %v3128 = vadd.f32 %v2743, %v3127
        %v3129 = vpop.f32.mrb[0].mxu0
        %v3130 = vadd.f32 %v2743, %v3129
        %3131 = vmatprep.mubr.bf16.mxu0 0
        %3132 = vmatmul.mubr.bf16.gmra.mrb[0].mxu0 %v2839
        %v3133 = vpop.f32.mrb[0].mxu0
        %v3134 = vadd.f32 %v2748, %v3133
        %v3135 = vpop.f32.mrb[0].mxu0
        %v3136 = vadd.f32 %v2748, %v3135
        %v3137 = vpop.f32.mrb[0].mxu0
        %v3138 = vadd.f32 %v2753, %v3137
        %v3139 = vpop.f32.mrb[0].mxu0
        %v3140 = vadd.f32 %v2753, %v3139
        %3141 = vmatprep.mubr.bf16.mxu0 0
        %3142 = vmatmul.mubr.bf16.gmra.mrb[0].mxu0 %v2840
        %v3143 = vpop.f32.mrb[0].mxu0
        %v3144 = vadd.f32 %v2758, %v3143
        %v3145 = vpop.f32.mrb[0].mxu0
        %v3146 = vadd.f32 %v2758, %v3145
        %v3147 = vpop.f32.mrb[0].mxu0
        %v3148 = vadd.f32 %v2763, %v3147
        %v3149 = vpop.f32.mrb[0].mxu0
        %v3150 = vadd.f32 %v2763, %v3149
        %3151 = vmatprep.mubr.bf16.mxu0 0
        %3152 = vmatmul.mubr.bf16.gmra.mrb[0].mxu0 %v2841
        %v3153 = vpop.f32.mrb[0].mxu0
        %v3154 = vadd.f32 %v2768, %v3153
        %v3155 = vpop.f32.mrb[0].mxu0
        %v3156 = vadd.f32 %v2768, %v3155
        %v3157 = vpop.f32.mrb[0].mxu0
        %v3158 = vadd.f32 %v2773, %v3157
        %v3159 = vpop.f32.mrb[0].mxu0
        %v3160 = vadd.f32 %v2773, %v3159
        %3161 = vmatprep.mubr.bf16.mxu0 0
        %3162 = vmatmul.mubr.bf16.gmra.mrb[0].mxu0 %v2842
        %v3163 = vpop.f32.mrb[0].mxu0
        %v3164 = vadd.f32 %v2778, %v3163
        %v3165 = vpop.f32.mrb[0].mxu0
        %v3166 = vadd.f32 %v2778, %v3165
        %v3167 = vpop.f32.mrb[0].mxu0
        %v3168 = vadd.f32 %v2783, %v3167
        %v3169 = vpop.f32.mrb[0].mxu0
        %v3170 = vadd.f32 %v2783, %v3169
        %3171 = vmatprep.mubr.bf16.mxu0 0
        %3172 = vmatmul.mubr.bf16.gmra.mrb[0].mxu0 %v2843
        %v3173 = vpop.f32.mrb[0].mxu0
        %v3174 = vadd.f32 %v2788, %v3173
        %v3175 = vpop.f32.mrb[0].mxu0
        %v3176 = vadd.f32 %v2788, %v3175
        %v3177 = vpop.f32.mrb[0].mxu0
        %v3178 = vadd.f32 %v2793, %v3177
        %v3179 = vpop.f32.mrb[0].mxu0
        %v3180 = vadd.f32 %v2793, %v3179
        %3181 = vmatprep.mubr.bf16.mxu0 0
        %3182 = vmatmul.mubr.bf16.gmra.mrb[0].mxu0 %v2844
        %v3183 = vpop.f32.mrb[0].mxu0
        %v3184 = vadd.f32 %v2798, %v3183
        %v3185 = vpop.f32.mrb[0].mxu0
        %v3186 = vadd.f32 %v2798, %v3185
        %v3187 = vpop.f32.mrb[0].mxu0
        %v3188 = vadd.f32 %v2803, %v3187
        %v3189 = vpop.f32.mrb[0].mxu0
        %v3190 = vadd.f32 %v2803, %v3189
        %3191 = vdwg.mxu0
        %3192 = vmatprep.subr.bf16.mxu0 %v2636
        %3193 = vmatpush1.bf16.msra.mxu0 %v2635
        %3194 = vmatprep.subr.bf16.mxu0 %v2644
        %3195 = vmatpush1.bf16.msra.mxu0 %v2643
        %3196 = vmatprep.subr.bf16.mxu0 %v2652
        %3197 = vmatpush1.bf16.msra.mxu0 %v2651
        %3198 = vmatprep.subr.bf16.mxu0 %v2660
        %3199 = vmatpush1.bf16.msra.mxu0 %v2659
        %3200 = vmatprep.subr.bf16.mxu0 %v2668
        %3201 = vmatpush1.bf16.msra.mxu0 %v2667
        %3202 = vmatprep.subr.bf16.mxu0 %v2676
        %3203 = vmatpush1.bf16.msra.mxu0 %v2675
        %3204 = vmatprep.subr.bf16.mxu0 %v2684
        %3205 = vmatpush1.bf16.msra.mxu0 %v2683
        %3206 = vmatprep.subr.bf16.mxu0 %v2692
        %3207 = vmatpush1.bf16.msra.mxu0 %v2691
        %3208 = vmatprep.subr.bf16.mxu0 0
        %3209 = vmatpush1.bf16.msra.mxu0 0
        %3210 = vmatprep.subr.bf16.mxu0 0
        %3211 = vmatpush1.bf16.msra.mxu0 0
        %3212 = vmatprep.subr.bf16.mxu0 0
        %3213 = vmatpush1.bf16.msra.mxu0 0
        %3214 = vmatprep.subr.bf16.mxu0 0
        %3215 = vmatpush1.bf16.msra.mxu0 0
        %3216 = vmatprep.subr.bf16.mxu0 0
        %3217 = vmatpush1.bf16.msra.mxu0 0
        %3218 = vmatprep.subr.bf16.mxu0 0
        %3219 = vmatpush1.bf16.msra.mxu0 0
        %3220 = vmatprep.subr.bf16.mxu0 0
        %3221 = vmatpush1.bf16.msra.mxu0 0
        %3222 = vmatprep.subr.bf16.mxu0 0
        %3223 = vmatpush1.bf16.msra.mxu0 0
        %3224 = vmatprep.mubr.bf16.mxu0 0
        %3225 = vmatmul.mubr.bf16.gmra.mrb[0].mxu0 %v2837
        %v3226 = vpop.f32.mrb[0].mxu0
        %v3227 = vadd.f32 %v2728, %v3226
        %v3228 = vpop.f32.mrb[0].mxu0
        %v3229 = vadd.f32 %v2728, %v3228
        %v3230 = vpop.f32.mrb[0].mxu0
        %v3231 = vadd.f32 %v2733, %v3230
        %v3232 = vpop.f32.mrb[0].mxu0
        %v3233 = vadd.f32 %v2733, %v3232
        %3234 = vmatprep.mubr.bf16.mxu0 0
        %3235 = vmatmul.mubr.bf16.gmra.mrb[0].mxu0 %v2838
        %v3236 = vpop.f32.mrb[0].mxu0
        %v3237 = vadd.f32 %v2738, %v3236
        %v3238 = vpop.f32.mrb[0].mxu0
        %v3239 = vadd.f32 %v2738, %v3238
        %v3240 = vpop.f32.mrb[0].mxu0
        %v3241 = vadd.f32 %v2743, %v3240
        %v3242 = vpop.f32.mrb[0].mxu0
        %v3243 = vadd.f32 %v2743, %v3242
        %3244 = vmatprep.mubr.bf16.mxu0 0
        %3245 = vmatmul.mubr.bf16.gmra.mrb[0].mxu0 %v2839
        %v3246 = vpop.f32.mrb[0].mxu0
        %v3247 = vadd.f32 %v2748, %v3246
        %v3248 = vpop.f32.mrb[0].mxu0
        %v3249 = vadd.f32 %v2748, %v3248
        %v3250 = vpop.f32.mrb[0].mxu0
        %v3251 = vadd.f32 %v2753, %v3250
        %v3252 = vpop.f32.mrb[0].mxu0
        %v3253 = vadd.f32 %v2753, %v3252
        %3254 = vmatprep.mubr.bf16.mxu0 0
        %3255 = vmatmul.mubr.bf16.gmra.mrb[0].mxu0 %v2840
        %v3256 = vpop.f32.mrb[0].mxu0
        %v3257 = vadd.f32 %v2758, %v3256
        %v3258 = vpop.f32.mrb[0].mxu0
        %v3259 = vadd.f32 %v2758, %v3258
        %v3260 = vpop.f32.mrb[0].mxu0
        %v3261 = vadd.f32 %v2763, %v3260
        %v3262 = vpop.f32.mrb[0].mxu0
        %v3263 = vadd.f32 %v2763, %v3262
        %3264 = vmatprep.mubr.bf16.mxu0 0
        %3265 = vmatmul.mubr.bf16.gmra.mrb[0].mxu0 %v2841
        %v3266 = vpop.f32.mrb[0].mxu0
        %v3267 = vadd.f32 %v2768, %v3266
        %v3268 = vpop.f32.mrb[0].mxu0
        %v3269 = vadd.f32 %v2768, %v3268
        %v3270 = vpop.f32.mrb[0].mxu0
        %v3271 = vadd.f32 %v2773, %v3270
        %v3272 = vpop.f32.mrb[0].mxu0
        %v3273 = vadd.f32 %v2773, %v3272
        %3274 = vmatprep.mubr.bf16.mxu0 0
        %3275 = vmatmul.mubr.bf16.gmra.mrb[0].mxu0 %v2842
        %v3276 = vpop.f32.mrb[0].mxu0
        %v3277 = vadd.f32 %v2778, %v3276
        %v3278 = vpop.f32.mrb[0].mxu0
        %v3279 = vadd.f32 %v2778, %v3278
        %v3280 = vpop.f32.mrb[0].mxu0
        %v3281 = vadd.f32 %v2783, %v3280
        %v3282 = vpop.f32.mrb[0].mxu0
        %v3283 = vadd.f32 %v2783, %v3282
        %3284 = vmatprep.mubr.bf16.mxu0 0
        %3285 = vmatmul.mubr.bf16.gmra.mrb[0].mxu0 %v2843
        %v3286 = vpop.f32.mrb[0].mxu0
        %v3287 = vadd.f32 %v2788, %v3286
        %v3288 = vpop.f32.mrb[0].mxu0
        %v3289 = vadd.f32 %v2788, %v3288
        %v3290 = vpop.f32.mrb[0].mxu0
        %v3291 = vadd.f32 %v2793, %v3290
        %v3292 = vpop.f32.mrb[0].mxu0
        %v3293 = vadd.f32 %v2793, %v3292
        %3294 = vmatprep.mubr.bf16.mxu0 0
        %3295 = vmatmul.mubr.bf16.gmra.mrb[0].mxu0 %v2844
        %v3296 = vpop.f32.mrb[0].mxu0
        %v3297 = vadd.f32 %v2798, %v3296
        %v3298 = vpop.f32.mrb[0].mxu0
        %v3299 = vadd.f32 %v2798, %v3298
        %v3300 = vpop.f32.mrb[0].mxu0
        %v3301 = vadd.f32 %v2803, %v3300
        %v3302 = vpop.f32.mrb[0].mxu0
        %v3303 = vadd.f32 %v2803, %v3302
        %3304 = vdwg.mxu0
        %v3305 = vadd.f32 %v1569, %v2888
        %v3306 = vadd.f32 %v1570, %v2890
        %v3307 = vadd.f32 %v1571, %v3001
        %v3308 = vadd.f32 %v1572, %v3003
        %v3309 = vadd.f32 %v1573, %v3114
        %v3310 = vadd.f32 %v1574, %v3116
        %v3311 = vadd.f32 %v1575, %v3227
        %v3312 = vadd.f32 %v1576, %v3229
        %v3313 = vadd.f32 %v1577, %v2892
        %v3314 = vadd.f32 %v1578, %v2894
        %v3315 = vadd.f32 %v1579, %v3005
        %v3316 = vadd.f32 %v1580, %v3007
        %v3317 = vadd.f32 %v1581, %v3118
        %v3318 = vadd.f32 %v1582, %v3120
        %v3319 = vadd.f32 %v1583, %v3231
        %v3320 = vadd.f32 %v1584, %v3233
        %v3321 = vadd.f32 %v1585, %v2898
        %v3322 = vadd.f32 %v1586, %v2900
        %v3323 = vadd.f32 %v1587, %v3011
        %v3324 = vadd.f32 %v1588, %v3013
        %v3325 = vadd.f32 %v1589, %v3124
        %v3326 = vadd.f32 %v1590, %v3126
        %v3327 = vadd.f32 %v1591, %v3237
        %v3328 = vadd.f32 %v1592, %v3239
        %v3329 = vadd.f32 %v1593, %v2902
        %v3330 = vadd.f32 %v1594, %v2904
        %v3331 = vadd.f32 %v1595, %v3015
        %v3332 = vadd.f32 %v1596, %v3017
        %v3333 = vadd.f32 %v1597, %v3128
        %v3334 = vadd.f32 %v1598, %v3130
        %v3335 = vadd.f32 %v1599, %v3241
        %v3336 = vadd.f32 %v1600, %v3243
        %v3337 = vadd.f32 %v1601, %v2908
        %v3338 = vadd.f32 %v1602, %v2910
        %v3339 = vadd.f32 %v1603, %v3021
        %v3340 = vadd.f32 %v1604, %v3023
        %v3341 = vadd.f32 %v1605, %v3134
        %v3342 = vadd.f32 %v1606, %v3136
        %v3343 = vadd.f32 %v1607, %v3247
        %v3344 = vadd.f32 %v1608, %v3249
        %v3345 = vadd.f32 %v1609, %v2912
        %v3346 = vadd.f32 %v1610, %v2914
        %v3347 = vadd.f32 %v1611, %v3025
        %v3348 = vadd.f32 %v1612, %v3027
        %v3349 = vadd.f32 %v1613, %v3138
        %v3350 = vadd.f32 %v1614, %v3140
        %v3351 = vadd.f32 %v1615, %v3251
        %v3352 = vadd.f32 %v1616, %v3253
        %v3353 = vadd.f32 %v1617, %v2918
        %v3354 = vadd.f32 %v1618, %v2920
        %v3355 = vadd.f32 %v1619, %v3031
        %v3356 = vadd.f32 %v1620, %v3033
        %v3357 = vadd.f32 %v1621, %v3144
        %v3358 = vadd.f32 %v1622, %v3146
        %v3359 = vadd.f32 %v1623, %v3257
        %v3360 = vadd.f32 %v1624, %v3259
        %v3361 = vadd.f32 %v1625, %v2922
        %v3362 = vadd.f32 %v1626, %v2924
        %v3363 = vadd.f32 %v1627, %v3035
        %v3364 = vadd.f32 %v1628, %v3037
        %v3365 = vadd.f32 %v1629, %v3148
        %v3366 = vadd.f32 %v1630, %v3150
        %v3367 = vadd.f32 %v1631, %v3261
        %v3368 = vadd.f32 %v1632, %v3263
        %v3369 = vadd.f32 %v1633, %v2928
        %v3370 = vadd.f32 %v1634, %v2930
        %v3371 = vadd.f32 %v1635, %v3041
        %v3372 = vadd.f32 %v1636, %v3043
        %v3373 = vadd.f32 %v1637, %v3154
        %v3374 = vadd.f32 %v1638, %v3156
        %v3375 = vadd.f32 %v1639, %v3267
        %v3376 = vadd.f32 %v1640, %v3269
        %v3377 = vadd.f32 %v1641, %v2932
        %v3378 = vadd.f32 %v1642, %v2934
        %v3379 = vadd.f32 %v1643, %v3045
        %v3380 = vadd.f32 %v1644, %v3047
        %v3381 = vadd.f32 %v1645, %v3158
        %v3382 = vadd.f32 %v1646, %v3160
        %v3383 = vadd.f32 %v1647, %v3271
        %v3384 = vadd.f32 %v1648, %v3273
        %v3385 = vadd.f32 %v1649, %v2938
        %v3386 = vadd.f32 %v1650, %v2940
        %v3387 = vadd.f32 %v1651, %v3051
        %v3388 = vadd.f32 %v1652, %v3053
        %v3389 = vadd.f32 %v1653, %v3164
        %v3390 = vadd.f32 %v1654, %v3166
        %v3391 = vadd.f32 %v1655, %v3277
        %v3392 = vadd.f32 %v1656, %v3279
        %v3393 = vadd.f32 %v1657, %v2942
        %v3394 = vadd.f32 %v1658, %v2944
        %v3395 = vadd.f32 %v1659, %v3055
        %v3396 = vadd.f32 %v1660, %v3057
        %v3397 = vadd.f32 %v1661, %v3168
        %v3398 = vadd.f32 %v1662, %v3170
        %v3399 = vadd.f32 %v1663, %v3281
        %v3400 = vadd.f32 %v1664, %v3283
        %v3401 = vadd.f32 %v1665, %v2948
        %v3402 = vadd.f32 %v1666, %v2950
        %v3403 = vadd.f32 %v1667, %v3061
        %v3404 = vadd.f32 %v1668, %v3063
        %v3405 = vadd.f32 %v1669, %v3174
        %v3406 = vadd.f32 %v1670, %v3176
        %v3407 = vadd.f32 %v1671, %v3287
        %v3408 = vadd.f32 %v1672, %v3289
        %v3409 = vadd.f32 %v1673, %v2952
        %v3410 = vadd.f32 %v1674, %v2954
        %v3411 = vadd.f32 %v1675, %v3065
        %v3412 = vadd.f32 %v1676, %v3067
        %v3413 = vadd.f32 %v1677, %v3178
        %v3414 = vadd.f32 %v1678, %v3180
        %v3415 = vadd.f32 %v1679, %v3291
        %v3416 = vadd.f32 %v1680, %v3293
        %v3417 = vadd.f32 %v1681, %v2958
        %v3418 = vadd.f32 %v1682, %v2960
        %v3419 = vadd.f32 %v1683, %v3071
        %v3420 = vadd.f32 %v1684, %v3073
        %v3421 = vadd.f32 %v1685, %v3184
        %v3422 = vadd.f32 %v1686, %v3186
        %v3423 = vadd.f32 %v1687, %v3297
        %v3424 = vadd.f32 %v1688, %v3299
        %v3425 = vadd.f32 %v1689, %v2962
        %v3426 = vadd.f32 %v1690, %v2964
        %v3427 = vadd.f32 %v1691, %v3075
        %v3428 = vadd.f32 %v1692, %v3077
        %v3429 = vadd.f32 %v1693, %v3188
        %v3430 = vadd.f32 %v1694, %v3190
        %v3431 = vadd.f32 %v1695, %v3301
        %v3432 = vadd.f32 %v1696, %v3303
        %v3433 = vmax.f32 %v3305, 0.0
        %v3434 = vmax.f32 %v3306, 0.0
        %v3435 = vmax.f32 %v3307, 0.0
        %v3436 = vmax.f32 %v3308, 0.0
        %v3437 = vmax.f32 %v3309, 0.0
        %v3438 = vmax.f32 %v3310, 0.0
        %v3439 = vmax.f32 %v3311, 0.0
        %v3440 = vmax.f32 %v3312, 0.0
        %v3441 = vmax.f32 %v3313, 0.0
        %v3442 = vmax.f32 %v3314, 0.0
        %v3443 = vmax.f32 %v3315, 0.0
        %v3444 = vmax.f32 %v3316, 0.0
        %v3445 = vmax.f32 %v3317, 0.0
        %v3446 = vmax.f32 %v3318, 0.0
        %v3447 = vmax.f32 %v3319, 0.0
        %v3448 = vmax.f32 %v3320, 0.0
        %v3449 = vmax.f32 %v3321, 0.0
        %v3450 = vmax.f32 %v3322, 0.0
        %v3451 = vmax.f32 %v3323, 0.0
        %v3452 = vmax.f32 %v3324, 0.0
        %v3453 = vmax.f32 %v3325, 0.0
        %v3454 = vmax.f32 %v3326, 0.0
        %v3455 = vmax.f32 %v3327, 0.0
        %v3456 = vmax.f32 %v3328, 0.0
        %v3457 = vmax.f32 %v3329, 0.0
        %v3458 = vmax.f32 %v3330, 0.0
        %v3459 = vmax.f32 %v3331, 0.0
        %v3460 = vmax.f32 %v3332, 0.0
        %v3461 = vmax.f32 %v3333, 0.0
        %v3462 = vmax.f32 %v3334, 0.0
        %v3463 = vmax.f32 %v3335, 0.0
        %v3464 = vmax.f32 %v3336, 0.0
        %v3465 = vmax.f32 %v3337, 0.0
        %v3466 = vmax.f32 %v3338, 0.0
        %v3467 = vmax.f32 %v3339, 0.0
        %v3468 = vmax.f32 %v3340, 0.0
        %v3469 = vmax.f32 %v3341, 0.0
        %v3470 = vmax.f32 %v3342, 0.0
        %v3471 = vmax.f32 %v3343, 0.0
        %v3472 = vmax.f32 %v3344, 0.0
        %v3473 = vmax.f32 %v3345, 0.0
        %v3474 = vmax.f32 %v3346, 0.0
        %v3475 = vmax.f32 %v3347, 0.0
        %v3476 = vmax.f32 %v3348, 0.0
        %v3477 = vmax.f32 %v3349, 0.0
        %v3478 = vmax.f32 %v3350, 0.0
        %v3479 = vmax.f32 %v3351, 0.0
        %v3480 = vmax.f32 %v3352, 0.0
        %v3481 = vmax.f32 %v3353, 0.0
        %v3482 = vmax.f32 %v3354, 0.0
        %v3483 = vmax.f32 %v3355, 0.0
        %v3484 = vmax.f32 %v3356, 0.0
        %v3485 = vmax.f32 %v3357, 0.0
        %v3486 = vmax.f32 %v3358, 0.0
        %v3487 = vmax.f32 %v3359, 0.0
        %v3488 = vmax.f32 %v3360, 0.0
        %v3489 = vmax.f32 %v3361, 0.0
        %v3490 = vmax.f32 %v3362, 0.0
        %v3491 = vmax.f32 %v3363, 0.0
        %v3492 = vmax.f32 %v3364, 0.0
        %v3493 = vmax.f32 %v3365, 0.0
        %v3494 = vmax.f32 %v3366, 0.0
        %v3495 = vmax.f32 %v3367, 0.0
        %v3496 = vmax.f32 %v3368, 0.0
        %v3497 = vmax.f32 %v3369, 0.0
        %v3498 = vmax.f32 %v3370, 0.0
        %v3499 = vmax.f32 %v3371, 0.0
        %v3500 = vmax.f32 %v3372, 0.0
        %v3501 = vmax.f32 %v3373, 0.0
        %v3502 = vmax.f32 %v3374, 0.0
        %v3503 = vmax.f32 %v3375, 0.0
        %v3504 = vmax.f32 %v3376, 0.0
        %v3505 = vmax.f32 %v3377, 0.0
        %v3506 = vmax.f32 %v3378, 0.0
        %v3507 = vmax.f32 %v3379, 0.0
        %v3508 = vmax.f32 %v3380, 0.0
        %v3509 = vmax.f32 %v3381, 0.0
        %v3510 = vmax.f32 %v3382, 0.0
        %v3511 = vmax.f32 %v3383, 0.0
        %v3512 = vmax.f32 %v3384, 0.0
        %v3513 = vmax.f32 %v3385, 0.0
        %v3514 = vmax.f32 %v3386, 0.0
        %v3515 = vmax.f32 %v3387, 0.0
        %v3516 = vmax.f32 %v3388, 0.0
        %v3517 = vmax.f32 %v3389, 0.0
        %v3518 = vmax.f32 %v3390, 0.0
        %v3519 = vmax.f32 %v3391, 0.0
        %v3520 = vmax.f32 %v3392, 0.0
        %v3521 = vmax.f32 %v3393, 0.0
        %v3522 = vmax.f32 %v3394, 0.0
        %v3523 = vmax.f32 %v3395, 0.0
        %v3524 = vmax.f32 %v3396, 0.0
        %v3525 = vmax.f32 %v3397, 0.0
        %v3526 = vmax.f32 %v3398, 0.0
        %v3527 = vmax.f32 %v3399, 0.0
        %v3528 = vmax.f32 %v3400, 0.0
        %v3529 = vmax.f32 %v3401, 0.0
        %v3530 = vmax.f32 %v3402, 0.0
        %v3531 = vmax.f32 %v3403, 0.0
        %v3532 = vmax.f32 %v3404, 0.0
        %v3533 = vmax.f32 %v3405, 0.0
        %v3534 = vmax.f32 %v3406, 0.0
        %v3535 = vmax.f32 %v3407, 0.0
        %v3536 = vmax.f32 %v3408, 0.0
        %v3537 = vmax.f32 %v3409, 0.0
        %v3538 = vmax.f32 %v3410, 0.0
        %v3539 = vmax.f32 %v3411, 0.0
        %v3540 = vmax.f32 %v3412, 0.0
        %v3541 = vmax.f32 %v3413, 0.0
        %v3542 = vmax.f32 %v3414, 0.0
        %v3543 = vmax.f32 %v3415, 0.0
        %v3544 = vmax.f32 %v3416, 0.0
        %v3545 = vmax.f32 %v3417, 0.0
        %v3546 = vmax.f32 %v3418, 0.0
        %v3547 = vmax.f32 %v3419, 0.0
        %v3548 = vmax.f32 %v3420, 0.0
        %v3549 = vmax.f32 %v3421, 0.0
        %v3550 = vmax.f32 %v3422, 0.0
        %v3551 = vmax.f32 %v3423, 0.0
        %v3552 = vmax.f32 %v3424, 0.0
        %v3553 = vmax.f32 %v3425, 0.0
        %v3554 = vmax.f32 %v3426, 0.0
        %v3555 = vmax.f32 %v3427, 0.0
        %v3556 = vmax.f32 %v3428, 0.0
        %v3557 = vmax.f32 %v3429, 0.0
        %v3558 = vmax.f32 %v3430, 0.0
        %v3559 = vmax.f32 %v3431, 0.0
        %v3560 = vmax.f32 %v3432, 0.0
        %v3561 = vpack.c.bf16 %v3441, %v3433
        %v3562 = vpack.c.bf16 %v3442, %v3434
        %v3563 = vpack.c.bf16 %v3443, %v3435
        %v3564 = vpack.c.bf16 %v3444, %v3436
        %v3565 = vpack.c.bf16 %v3445, %v3437
        %v3566 = vpack.c.bf16 %v3446, %v3438
        %v3567 = vpack.c.bf16 %v3447, %v3439
        %v3568 = vpack.c.bf16 %v3448, %v3440
        %v3569 = vpack.c.bf16 %v3457, %v3449
        %v3570 = vpack.c.bf16 %v3458, %v3450
        %v3571 = vpack.c.bf16 %v3459, %v3451
        %v3572 = vpack.c.bf16 %v3460, %v3452
        %v3573 = vpack.c.bf16 %v3461, %v3453
        %v3574 = vpack.c.bf16 %v3462, %v3454
        %v3575 = vpack.c.bf16 %v3463, %v3455
        %v3576 = vpack.c.bf16 %v3464, %v3456
        %v3577 = vpack.c.bf16 %v3473, %v3465
        %v3578 = vpack.c.bf16 %v3474, %v3466
        %v3579 = vpack.c.bf16 %v3475, %v3467
        %v3580 = vpack.c.bf16 %v3476, %v3468
        %v3581 = vpack.c.bf16 %v3477, %v3469
        %v3582 = vpack.c.bf16 %v3478, %v3470
        %v3583 = vpack.c.bf16 %v3479, %v3471
        %v3584 = vpack.c.bf16 %v3480, %v3472
        %v3585 = vpack.c.bf16 %v3489, %v3481
        %v3586 = vpack.c.bf16 %v3490, %v3482
        %v3587 = vpack.c.bf16 %v3491, %v3483
        %v3588 = vpack.c.bf16 %v3492, %v3484
        %v3589 = vpack.c.bf16 %v3493, %v3485
        %v3590 = vpack.c.bf16 %v3494, %v3486
        %v3591 = vpack.c.bf16 %v3495, %v3487
        %v3592 = vpack.c.bf16 %v3496, %v3488
        %v3593 = vpack.c.bf16 %v3505, %v3497
        %v3594 = vpack.c.bf16 %v3506, %v3498
        %v3595 = vpack.c.bf16 %v3507, %v3499
        %v3596 = vpack.c.bf16 %v3508, %v3500
        %v3597 = vpack.c.bf16 %v3509, %v3501
        %v3598 = vpack.c.bf16 %v3510, %v3502
        %v3599 = vpack.c.bf16 %v3511, %v3503
        %v3600 = vpack.c.bf16 %v3512, %v3504
        %v3601 = vpack.c.bf16 %v3521, %v3513
        %v3602 = vpack.c.bf16 %v3522, %v3514
        %v3603 = vpack.c.bf16 %v3523, %v3515
        %v3604 = vpack.c.bf16 %v3524, %v3516
        %v3605 = vpack.c.bf16 %v3525, %v3517
        %v3606 = vpack.c.bf16 %v3526, %v3518
        %v3607 = vpack.c.bf16 %v3527, %v3519
        %v3608 = vpack.c.bf16 %v3528, %v3520
        %v3609 = vpack.c.bf16 %v3537, %v3529
        %v3610 = vpack.c.bf16 %v3538, %v3530
        %v3611 = vpack.c.bf16 %v3539, %v3531
        %v3612 = vpack.c.bf16 %v3540, %v3532
        %v3613 = vpack.c.bf16 %v3541, %v3533
        %v3614 = vpack.c.bf16 %v3542, %v3534
        %v3615 = vpack.c.bf16 %v3543, %v3535
        %v3616 = vpack.c.bf16 %v3544, %v3536
        %v3617 = vpack.c.bf16 %v3553, %v3545
        %v3618 = vpack.c.bf16 %v3554, %v3546
        %v3619 = vpack.c.bf16 %v3555, %v3547
        %v3620 = vpack.c.bf16 %v3556, %v3548
        %v3621 = vpack.c.bf16 %v3557, %v3549
        %v3622 = vpack.c.bf16 %v3558, %v3550
        %v3623 = vpack.c.bf16 %v3559, %v3551
        %v3624 = vpack.c.bf16 %v3560, %v3552
        %s3625 = scalar_lea.vmem %s3, 64
        %v3626 = vld [vmem:[%s3625] sm:$0xf]
        %v3627 = vld [vmem:[%s3625 + $0x4] sm:$0xf]
        %v3628 = vld [vmem:[%s3625 + $0x8] sm:$0xf]
        %v3629 = vld [vmem:[%s3625 + $0xc] sm:$0xf]
        %v3630 = vld [vmem:[%s3625 + $0x10] sm:$0xf]
        %v3631 = vld [vmem:[%s3625 + $0x14] sm:$0xf]
        %v3632 = vld [vmem:[%s3625 + $0x18] sm:$0xf]
        %v3633 = vld [vmem:[%s3625 + $0x1c] sm:$0xf]
        %v3634 = vld [vmem:[%s3625 + $0x20] sm:$0xf]
        %v3635 = vld [vmem:[%s3625 + $0x24] sm:$0xf]
        %v3636 = vld [vmem:[%s3625 + $0x28] sm:$0xf]
        %v3637 = vld [vmem:[%s3625 + $0x2c] sm:$0xf]
        %v3638 = vld [vmem:[%s3625 + $0x30] sm:$0xf]
        %v3639 = vld [vmem:[%s3625 + $0x34] sm:$0xf]
        %v3640 = vld [vmem:[%s3625 + $0x38] sm:$0xf]
        %v3641 = vld [vmem:[%s3625 + $0x3c] sm:$0xf]
        %s3642 = scalar_lea.vmem %s4, 128
        %v3643 = vld [vmem:[%s3642] sm:$0xff]
        %v3644 = vld [vmem:[%s3642 + $0x8] sm:$0xff]
        %v3645 = vld [vmem:[%s3642 + $0x10] sm:$0xff]
        %v3646 = vld [vmem:[%s3642 + $0x18] sm:$0xff]
        %v3647 = vld [vmem:[%s3642 + $0x20] sm:$0xff]
        %v3648 = vld [vmem:[%s3642 + $0x28] sm:$0xff]
        %v3649 = vld [vmem:[%s3642 + $0x30] sm:$0xff]
        %v3650 = vld [vmem:[%s3642 + $0x38] sm:$0xff]
        %v3651 = vld [vmem:[%s3642 + $0x40] sm:$0xff]
        %v3652 = vld [vmem:[%s3642 + $0x48] sm:$0xff]
        %v3653 = vld [vmem:[%s3642 + $0x50] sm:$0xff]
        %v3654 = vld [vmem:[%s3642 + $0x58] sm:$0xff]
        %v3655 = vld [vmem:[%s3642 + $0x60] sm:$0xff]
        %v3656 = vld [vmem:[%s3642 + $0x68] sm:$0xff]
        %v3657 = vld [vmem:[%s3642 + $0x70] sm:$0xff]
        %v3658 = vld [vmem:[%s3642 + $0x78] sm:$0xff]
        %3660 = vset.pattern.permute.xlu0 0
        %3661 = vperm.xlu0 %3660, %v3643
        %v3662 = vpop.permute.xlu0 %3661
        %3665 = vset.pattern.permute.xlu0 0
        %3666 = vperm.xlu0 %3665, %v3644
        %v3667 = vpop.permute.xlu0 %3666
        %3670 = vset.pattern.permute.xlu0 0
        %3671 = vperm.xlu0 %3670, %v3645
        %v3672 = vpop.permute.xlu0 %3671
        %3675 = vset.pattern.permute.xlu0 0
        %3676 = vperm.xlu0 %3675, %v3646
        %v3677 = vpop.permute.xlu0 %3676
        %3680 = vset.pattern.permute.xlu0 0
        %3681 = vperm.xlu0 %3680, %v3647
        %v3682 = vpop.permute.xlu0 %3681
        %3685 = vset.pattern.permute.xlu0 0
        %3686 = vperm.xlu0 %3685, %v3648
        %v3687 = vpop.permute.xlu0 %3686
        %3690 = vset.pattern.permute.xlu0 0
        %3691 = vperm.xlu0 %3690, %v3649
        %v3692 = vpop.permute.xlu0 %3691
        %3695 = vset.pattern.permute.xlu0 0
        %3696 = vperm.xlu0 %3695, %v3650
        %v3697 = vpop.permute.xlu0 %3696
        %3700 = vset.pattern.permute.xlu0 0
        %3701 = vperm.xlu0 %3700, %v3651
        %v3702 = vpop.permute.xlu0 %3701
        %3705 = vset.pattern.permute.xlu0 0
        %3706 = vperm.xlu0 %3705, %v3652
        %v3707 = vpop.permute.xlu0 %3706
        %3710 = vset.pattern.permute.xlu0 0
        %3711 = vperm.xlu0 %3710, %v3653
        %v3712 = vpop.permute.xlu0 %3711
        %3715 = vset.pattern.permute.xlu0 0
        %3716 = vperm.xlu0 %3715, %v3654
        %v3717 = vpop.permute.xlu0 %3716
        %3720 = vset.pattern.permute.xlu0 0
        %3721 = vperm.xlu0 %3720, %v3655
        %v3722 = vpop.permute.xlu0 %3721
        %3725 = vset.pattern.permute.xlu0 0
        %3726 = vperm.xlu0 %3725, %v3656
        %v3727 = vpop.permute.xlu0 %3726
        %3730 = vset.pattern.permute.xlu0 0
        %3731 = vperm.xlu0 %3730, %v3657
        %v3732 = vpop.permute.xlu0 %3731
        %3735 = vset.pattern.permute.xlu0 0
        %3736 = vperm.xlu0 %3735, %v3658
        %v3737 = vpop.permute.xlu0 %3736
        %v3755 = vunpack.c.l.b16 %v3626
        %v3756 = vunpack.c.l.b16 %v3627
        %v3757 = vunpack.c.l.b16 %v3628
        %v3758 = vunpack.c.l.b16 %v3629
        %v3759 = vunpack.c.l.b16 %v3630
        %v3760 = vunpack.c.l.b16 %v3631
        %v3761 = vunpack.c.l.b16 %v3632
        %v3762 = vunpack.c.l.b16 %v3633
        %v3763 = vunpack.c.l.b16 %v3634
        %v3764 = vunpack.c.l.b16 %v3635
        %v3765 = vunpack.c.l.b16 %v3636
        %v3766 = vunpack.c.l.b16 %v3637
        %v3767 = vunpack.c.l.b16 %v3638
        %v3768 = vunpack.c.l.b16 %v3639
        %v3769 = vunpack.c.l.b16 %v3640
        %v3770 = vunpack.c.l.b16 %v3641
        %v3771 = vpack.c.b16 %v3756, %v3755
        %v3772 = vpack.c.b16 %v3758, %v3757
        %v3773 = vpack.c.b16 %v3760, %v3759
        %v3774 = vpack.c.b16 %v3762, %v3761
        %v3775 = vpack.c.b16 %v3764, %v3763
        %v3776 = vpack.c.b16 %v3766, %v3765
        %v3777 = vpack.c.b16 %v3768, %v3767
        %v3778 = vpack.c.b16 %v3770, %v3769
        %3787 = vmatprep.subr.bf16.mxu0 %v3562
        %3788 = vmatpush1.bf16.msra.mxu0 %v3561
        %3789 = vmatprep.subr.bf16.mxu0 %v3570
        %3790 = vmatpush1.bf16.msra.mxu0 %v3569
        %3791 = vmatprep.subr.bf16.mxu0 %v3578
        %3792 = vmatpush1.bf16.msra.mxu0 %v3577
        %3793 = vmatprep.subr.bf16.mxu0 %v3586
        %3794 = vmatpush1.bf16.msra.mxu0 %v3585
        %3795 = vmatprep.subr.bf16.mxu0 %v3594
        %3796 = vmatpush1.bf16.msra.mxu0 %v3593
        %3797 = vmatprep.subr.bf16.mxu0 %v3602
        %3798 = vmatpush1.bf16.msra.mxu0 %v3601
        %3799 = vmatprep.subr.bf16.mxu0 %v3610
        %3800 = vmatpush1.bf16.msra.mxu0 %v3609
        %3801 = vmatprep.subr.bf16.mxu0 %v3618
        %3802 = vmatpush1.bf16.msra.mxu0 %v3617
        %3803 = vmatprep.subr.bf16.mxu0 0
        %3804 = vmatpush1.bf16.msra.mxu0 0
        %3805 = vmatprep.subr.bf16.mxu0 0
        %3806 = vmatpush1.bf16.msra.mxu0 0
        %3807 = vmatprep.subr.bf16.mxu0 0
        %3808 = vmatpush1.bf16.msra.mxu0 0
        %3809 = vmatprep.subr.bf16.mxu0 0
        %3810 = vmatpush1.bf16.msra.mxu0 0
        %3811 = vmatprep.subr.bf16.mxu0 0
        %3812 = vmatpush1.bf16.msra.mxu0 0
        %3813 = vmatprep.subr.bf16.mxu0 0
        %3814 = vmatpush1.bf16.msra.mxu0 0
        %3815 = vmatprep.subr.bf16.mxu0 0
        %3816 = vmatpush1.bf16.msra.mxu0 0
        %3817 = vmatprep.subr.bf16.mxu0 0
        %3818 = vmatpush1.bf16.msra.mxu0 0
        %3819 = vmatprep.mubr.bf16.mxu0 0
        %3820 = vmatmul.mubr.bf16.gmra.mrb[0].mxu0 %v3771
        %v3821 = vpop.f32.mrb[0].mxu0
        %v3822 = vadd.f32 %v3662, %v3821
        %v3823 = vpop.f32.mrb[0].mxu0
        %v3824 = vadd.f32 %v3662, %v3823
        %v3825 = vpop.f32.mrb[0].mxu0
        %v3826 = vadd.f32 %v3667, %v3825
        %v3827 = vpop.f32.mrb[0].mxu0
        %v3828 = vadd.f32 %v3667, %v3827
        %3829 = vmatprep.mubr.bf16.mxu0 0
        %3830 = vmatmul.mubr.bf16.gmra.mrb[0].mxu0 %v3772
        %v3831 = vpop.f32.mrb[0].mxu0
        %v3832 = vadd.f32 %v3672, %v3831
        %v3833 = vpop.f32.mrb[0].mxu0
        %v3834 = vadd.f32 %v3672, %v3833
        %v3835 = vpop.f32.mrb[0].mxu0
        %v3836 = vadd.f32 %v3677, %v3835
        %v3837 = vpop.f32.mrb[0].mxu0
        %v3838 = vadd.f32 %v3677, %v3837
        %3839 = vmatprep.mubr.bf16.mxu0 0
        %3840 = vmatmul.mubr.bf16.gmra.mrb[0].mxu0 %v3773
        %v3841 = vpop.f32.mrb[0].mxu0
        %v3842 = vadd.f32 %v3682, %v3841
        %v3843 = vpop.f32.mrb[0].mxu0
        %v3844 = vadd.f32 %v3682, %v3843
        %v3845 = vpop.f32.mrb[0].mxu0
        %v3846 = vadd.f32 %v3687, %v3845
        %v3847 = vpop.f32.mrb[0].mxu0
        %v3848 = vadd.f32 %v3687, %v3847
        %3849 = vmatprep.mubr.bf16.mxu0 0
        %3850 = vmatmul.mubr.bf16.gmra.mrb[0].mxu0 %v3774
        %v3851 = vpop.f32.mrb[0].mxu0
        %v3852 = vadd.f32 %v3692, %v3851
        %v3853 = vpop.f32.mrb[0].mxu0
        %v3854 = vadd.f32 %v3692, %v3853
        %v3855 = vpop.f32.mrb[0].mxu0
        %v3856 = vadd.f32 %v3697, %v3855
        %v3857 = vpop.f32.mrb[0].mxu0
        %v3858 = vadd.f32 %v3697, %v3857
        %3859 = vmatprep.mubr.bf16.mxu0 0
        %3860 = vmatmul.mubr.bf16.gmra.mrb[0].mxu0 %v3775
        %v3861 = vpop.f32.mrb[0].mxu0
        %v3862 = vadd.f32 %v3702, %v3861
        %v3863 = vpop.f32.mrb[0].mxu0
        %v3864 = vadd.f32 %v3702, %v3863
        %v3865 = vpop.f32.mrb[0].mxu0
        %v3866 = vadd.f32 %v3707, %v3865
        %v3867 = vpop.f32.mrb[0].mxu0
        %v3868 = vadd.f32 %v3707, %v3867
        %3869 = vmatprep.mubr.bf16.mxu0 0
        %3870 = vmatmul.mubr.bf16.gmra.mrb[0].mxu0 %v3776
        %v3871 = vpop.f32.mrb[0].mxu0
        %v3872 = vadd.f32 %v3712, %v3871
        %v3873 = vpop.f32.mrb[0].mxu0
        %v3874 = vadd.f32 %v3712, %v3873
        %v3875 = vpop.f32.mrb[0].mxu0
        %v3876 = vadd.f32 %v3717, %v3875
        %v3877 = vpop.f32.mrb[0].mxu0
        %v3878 = vadd.f32 %v3717, %v3877
        %3879 = vmatprep.mubr.bf16.mxu0 0
        %3880 = vmatmul.mubr.bf16.gmra.mrb[0].mxu0 %v3777
        %v3881 = vpop.f32.mrb[0].mxu0
        %v3882 = vadd.f32 %v3722, %v3881
        %v3883 = vpop.f32.mrb[0].mxu0
        %v3884 = vadd.f32 %v3722, %v3883
        %v3885 = vpop.f32.mrb[0].mxu0
        %v3886 = vadd.f32 %v3727, %v3885
        %v3887 = vpop.f32.mrb[0].mxu0
        %v3888 = vadd.f32 %v3727, %v3887
        %3889 = vmatprep.mubr.bf16.mxu0 0
        %3890 = vmatmul.mubr.bf16.gmra.mrb[0].mxu0 %v3778
        %v3891 = vpop.f32.mrb[0].mxu0
        %v3892 = vadd.f32 %v3732, %v3891
        %v3893 = vpop.f32.mrb[0].mxu0
        %v3894 = vadd.f32 %v3732, %v3893
        %v3895 = vpop.f32.mrb[0].mxu0
        %v3896 = vadd.f32 %v3737, %v3895
        %v3897 = vpop.f32.mrb[0].mxu0
        %v3898 = vadd.f32 %v3737, %v3897
        %3899 = vdwg.mxu0
        %3900 = vmatprep.subr.bf16.mxu0 %v3564
        %3901 = vmatpush1.bf16.msra.mxu0 %v3563
        %3902 = vmatprep.subr.bf16.mxu0 %v3572
        %3903 = vmatpush1.bf16.msra.mxu0 %v3571
        %3904 = vmatprep.subr.bf16.mxu0 %v3580
        %3905 = vmatpush1.bf16.msra.mxu0 %v3579
        %3906 = vmatprep.subr.bf16.mxu0 %v3588
        %3907 = vmatpush1.bf16.msra.mxu0 %v3587
        %3908 = vmatprep.subr.bf16.mxu0 %v3596
        %3909 = vmatpush1.bf16.msra.mxu0 %v3595
        %3910 = vmatprep.subr.bf16.mxu0 %v3604
        %3911 = vmatpush1.bf16.msra.mxu0 %v3603
        %3912 = vmatprep.subr.bf16.mxu0 %v3612
        %3913 = vmatpush1.bf16.msra.mxu0 %v3611
        %3914 = vmatprep.subr.bf16.mxu0 %v3620
        %3915 = vmatpush1.bf16.msra.mxu0 %v3619
        %3916 = vmatprep.subr.bf16.mxu0 0
        %3917 = vmatpush1.bf16.msra.mxu0 0
        %3918 = vmatprep.subr.bf16.mxu0 0
        %3919 = vmatpush1.bf16.msra.mxu0 0
        %3920 = vmatprep.subr.bf16.mxu0 0
        %3921 = vmatpush1.bf16.msra.mxu0 0
        %3922 = vmatprep.subr.bf16.mxu0 0
        %3923 = vmatpush1.bf16.msra.mxu0 0
        %3924 = vmatprep.subr.bf16.mxu0 0
        %3925 = vmatpush1.bf16.msra.mxu0 0
        %3926 = vmatprep.subr.bf16.mxu0 0
        %3927 = vmatpush1.bf16.msra.mxu0 0
        %3928 = vmatprep.subr.bf16.mxu0 0
        %3929 = vmatpush1.bf16.msra.mxu0 0
        %3930 = vmatprep.subr.bf16.mxu0 0
        %3931 = vmatpush1.bf16.msra.mxu0 0
        %3932 = vmatprep.mubr.bf16.mxu0 0
        %3933 = vmatmul.mubr.bf16.gmra.mrb[0].mxu0 %v3771
        %v3934 = vpop.f32.mrb[0].mxu0
        %v3935 = vadd.f32 %v3662, %v3934
        %v3936 = vpop.f32.mrb[0].mxu0
        %v3937 = vadd.f32 %v3662, %v3936
        %v3938 = vpop.f32.mrb[0].mxu0
        %v3939 = vadd.f32 %v3667, %v3938
        %v3940 = vpop.f32.mrb[0].mxu0
        %v3941 = vadd.f32 %v3667, %v3940
        %3942 = vmatprep.mubr.bf16.mxu0 0
        %3943 = vmatmul.mubr.bf16.gmra.mrb[0].mxu0 %v3772
        %v3944 = vpop.f32.mrb[0].mxu0
        %v3945 = vadd.f32 %v3672, %v3944
        %v3946 = vpop.f32.mrb[0].mxu0
        %v3947 = vadd.f32 %v3672, %v3946
        %v3948 = vpop.f32.mrb[0].mxu0
        %v3949 = vadd.f32 %v3677, %v3948
        %v3950 = vpop.f32.mrb[0].mxu0
        %v3951 = vadd.f32 %v3677, %v3950
        %3952 = vmatprep.mubr.bf16.mxu0 0
        %3953 = vmatmul.mubr.bf16.gmra.mrb[0].mxu0 %v3773
        %v3954 = vpop.f32.mrb[0].mxu0
        %v3955 = vadd.f32 %v3682, %v3954
        %v3956 = vpop.f32.mrb[0].mxu0
        %v3957 = vadd.f32 %v3682, %v3956
        %v3958 = vpop.f32.mrb[0].mxu0
        %v3959 = vadd.f32 %v3687, %v3958
        %v3960 = vpop.f32.mrb[0].mxu0
        %v3961 = vadd.f32 %v3687, %v3960
        %3962 = vmatprep.mubr.bf16.mxu0 0
        %3963 = vmatmul.mubr.bf16.gmra.mrb[0].mxu0 %v3774
        %v3964 = vpop.f32.mrb[0].mxu0
        %v3965 = vadd.f32 %v3692, %v3964
        %v3966 = vpop.f32.mrb[0].mxu0
        %v3967 = vadd.f32 %v3692, %v3966
        %v3968 = vpop.f32.mrb[0].mxu0
        %v3969 = vadd.f32 %v3697, %v3968
        %v3970 = vpop.f32.mrb[0].mxu0
        %v3971 = vadd.f32 %v3697, %v3970
        %3972 = vmatprep.mubr.bf16.mxu0 0
        %3973 = vmatmul.mubr.bf16.gmra.mrb[0].mxu0 %v3775
        %v3974 = vpop.f32.mrb[0].mxu0
        %v3975 = vadd.f32 %v3702, %v3974
        %v3976 = vpop.f32.mrb[0].mxu0
        %v3977 = vadd.f32 %v3702, %v3976
        %v3978 = vpop.f32.mrb[0].mxu0
        %v3979 = vadd.f32 %v3707, %v3978
        %v3980 = vpop.f32.mrb[0].mxu0
        %v3981 = vadd.f32 %v3707, %v3980
        %3982 = vmatprep.mubr.bf16.mxu0 0
        %3983 = vmatmul.mubr.bf16.gmra.mrb[0].mxu0 %v3776
        %v3984 = vpop.f32.mrb[0].mxu0
        %v3985 = vadd.f32 %v3712, %v3984
        %v3986 = vpop.f32.mrb[0].mxu0
        %v3987 = vadd.f32 %v3712, %v3986
        %v3988 = vpop.f32.mrb[0].mxu0
        %v3989 = vadd.f32 %v3717, %v3988
        %v3990 = vpop.f32.mrb[0].mxu0
        %v3991 = vadd.f32 %v3717, %v3990
        %3992 = vmatprep.mubr.bf16.mxu0 0
        %3993 = vmatmul.mubr.bf16.gmra.mrb[0].mxu0 %v3777
        %v3994 = vpop.f32.mrb[0].mxu0
        %v3995 = vadd.f32 %v3722, %v3994
        %v3996 = vpop.f32.mrb[0].mxu0
        %v3997 = vadd.f32 %v3722, %v3996
        %v3998 = vpop.f32.mrb[0].mxu0
        %v3999 = vadd.f32 %v3727, %v3998
        %v4000 = vpop.f32.mrb[0].mxu0
        %v4001 = vadd.f32 %v3727, %v4000
        %4002 = vmatprep.mubr.bf16.mxu0 0
        %4003 = vmatmul.mubr.bf16.gmra.mrb[0].mxu0 %v3778
        %v4004 = vpop.f32.mrb[0].mxu0
        %v4005 = vadd.f32 %v3732, %v4004
        %v4006 = vpop.f32.mrb[0].mxu0
        %v4007 = vadd.f32 %v3732, %v4006
        %v4008 = vpop.f32.mrb[0].mxu0
        %v4009 = vadd.f32 %v3737, %v4008
        %v4010 = vpop.f32.mrb[0].mxu0
        %v4011 = vadd.f32 %v3737, %v4010
        %4012 = vdwg.mxu0
        %4013 = vmatprep.subr.bf16.mxu0 %v3566
        %4014 = vmatpush1.bf16.msra.mxu0 %v3565
        %4015 = vmatprep.subr.bf16.mxu0 %v3574
        %4016 = vmatpush1.bf16.msra.mxu0 %v3573
        %4017 = vmatprep.subr.bf16.mxu0 %v3582
        %4018 = vmatpush1.bf16.msra.mxu0 %v3581
        %4019 = vmatprep.subr.bf16.mxu0 %v3590
        %4020 = vmatpush1.bf16.msra.mxu0 %v3589
        %4021 = vmatprep.subr.bf16.mxu0 %v3598
        %4022 = vmatpush1.bf16.msra.mxu0 %v3597
        %4023 = vmatprep.subr.bf16.mxu0 %v3606
        %4024 = vmatpush1.bf16.msra.mxu0 %v3605
        %4025 = vmatprep.subr.bf16.mxu0 %v3614
        %4026 = vmatpush1.bf16.msra.mxu0 %v3613
        %4027 = vmatprep.subr.bf16.mxu0 %v3622
        %4028 = vmatpush1.bf16.msra.mxu0 %v3621
        %4029 = vmatprep.subr.bf16.mxu0 0
        %4030 = vmatpush1.bf16.msra.mxu0 0
        %4031 = vmatprep.subr.bf16.mxu0 0
        %4032 = vmatpush1.bf16.msra.mxu0 0
        %4033 = vmatprep.subr.bf16.mxu0 0
        %4034 = vmatpush1.bf16.msra.mxu0 0
        %4035 = vmatprep.subr.bf16.mxu0 0
        %4036 = vmatpush1.bf16.msra.mxu0 0
        %4037 = vmatprep.subr.bf16.mxu0 0
        %4038 = vmatpush1.bf16.msra.mxu0 0
        %4039 = vmatprep.subr.bf16.mxu0 0
        %4040 = vmatpush1.bf16.msra.mxu0 0
        %4041 = vmatprep.subr.bf16.mxu0 0
        %4042 = vmatpush1.bf16.msra.mxu0 0
        %4043 = vmatprep.subr.bf16.mxu0 0
        %4044 = vmatpush1.bf16.msra.mxu0 0
        %4045 = vmatprep.mubr.bf16.mxu0 0
        %4046 = vmatmul.mubr.bf16.gmra.mrb[0].mxu0 %v3771
        %v4047 = vpop.f32.mrb[0].mxu0
        %v4048 = vadd.f32 %v3662, %v4047
        %v4049 = vpop.f32.mrb[0].mxu0
        %v4050 = vadd.f32 %v3662, %v4049
        %v4051 = vpop.f32.mrb[0].mxu0
        %v4052 = vadd.f32 %v3667, %v4051
        %v4053 = vpop.f32.mrb[0].mxu0
        %v4054 = vadd.f32 %v3667, %v4053
        %4055 = vmatprep.mubr.bf16.mxu0 0
        %4056 = vmatmul.mubr.bf16.gmra.mrb[0].mxu0 %v3772
        %v4057 = vpop.f32.mrb[0].mxu0
        %v4058 = vadd.f32 %v3672, %v4057
        %v4059 = vpop.f32.mrb[0].mxu0
        %v4060 = vadd.f32 %v3672, %v4059
        %v4061 = vpop.f32.mrb[0].mxu0
        %v4062 = vadd.f32 %v3677, %v4061
        %v4063 = vpop.f32.mrb[0].mxu0
        %v4064 = vadd.f32 %v3677, %v4063
        %4065 = vmatprep.mubr.bf16.mxu0 0
        %4066 = vmatmul.mubr.bf16.gmra.mrb[0].mxu0 %v3773
        %v4067 = vpop.f32.mrb[0].mxu0
        %v4068 = vadd.f32 %v3682, %v4067
        %v4069 = vpop.f32.mrb[0].mxu0
        %v4070 = vadd.f32 %v3682, %v4069
        %v4071 = vpop.f32.mrb[0].mxu0
        %v4072 = vadd.f32 %v3687, %v4071
        %v4073 = vpop.f32.mrb[0].mxu0
        %v4074 = vadd.f32 %v3687, %v4073
        %4075 = vmatprep.mubr.bf16.mxu0 0
        %4076 = vmatmul.mubr.bf16.gmra.mrb[0].mxu0 %v3774
        %v4077 = vpop.f32.mrb[0].mxu0
        %v4078 = vadd.f32 %v3692, %v4077
        %v4079 = vpop.f32.mrb[0].mxu0
        %v4080 = vadd.f32 %v3692, %v4079
        %v4081 = vpop.f32.mrb[0].mxu0
        %v4082 = vadd.f32 %v3697, %v4081
        %v4083 = vpop.f32.mrb[0].mxu0
        %v4084 = vadd.f32 %v3697, %v4083
        %4085 = vmatprep.mubr.bf16.mxu0 0
        %4086 = vmatmul.mubr.bf16.gmra.mrb[0].mxu0 %v3775
        %v4087 = vpop.f32.mrb[0].mxu0
        %v4088 = vadd.f32 %v3702, %v4087
        %v4089 = vpop.f32.mrb[0].mxu0
        %v4090 = vadd.f32 %v3702, %v4089
        %v4091 = vpop.f32.mrb[0].mxu0
        %v4092 = vadd.f32 %v3707, %v4091
        %v4093 = vpop.f32.mrb[0].mxu0
        %v4094 = vadd.f32 %v3707, %v4093
        %4095 = vmatprep.mubr.bf16.mxu0 0
        %4096 = vmatmul.mubr.bf16.gmra.mrb[0].mxu0 %v3776
        %v4097 = vpop.f32.mrb[0].mxu0
        %v4098 = vadd.f32 %v3712, %v4097
        %v4099 = vpop.f32.mrb[0].mxu0
        %v4100 = vadd.f32 %v3712, %v4099
        %v4101 = vpop.f32.mrb[0].mxu0
        %v4102 = vadd.f32 %v3717, %v4101
        %v4103 = vpop.f32.mrb[0].mxu0
        %v4104 = vadd.f32 %v3717, %v4103
        %4105 = vmatprep.mubr.bf16.mxu0 0
        %4106 = vmatmul.mubr.bf16.gmra.mrb[0].mxu0 %v3777
        %v4107 = vpop.f32.mrb[0].mxu0
        %v4108 = vadd.f32 %v3722, %v4107
        %v4109 = vpop.f32.mrb[0].mxu0
        %v4110 = vadd.f32 %v3722, %v4109
        %v4111 = vpop.f32.mrb[0].mxu0
        %v4112 = vadd.f32 %v3727, %v4111
        %v4113 = vpop.f32.mrb[0].mxu0
        %v4114 = vadd.f32 %v3727, %v4113
        %4115 = vmatprep.mubr.bf16.mxu0 0
        %4116 = vmatmul.mubr.bf16.gmra.mrb[0].mxu0 %v3778
        %v4117 = vpop.f32.mrb[0].mxu0
        %v4118 = vadd.f32 %v3732, %v4117
        %v4119 = vpop.f32.mrb[0].mxu0
        %v4120 = vadd.f32 %v3732, %v4119
        %v4121 = vpop.f32.mrb[0].mxu0
        %v4122 = vadd.f32 %v3737, %v4121
        %v4123 = vpop.f32.mrb[0].mxu0
        %v4124 = vadd.f32 %v3737, %v4123
        %4125 = vdwg.mxu0
        %4126 = vmatprep.subr.bf16.mxu0 %v3568
        %4127 = vmatpush1.bf16.msra.mxu0 %v3567
        %4128 = vmatprep.subr.bf16.mxu0 %v3576
        %4129 = vmatpush1.bf16.msra.mxu0 %v3575
        %4130 = vmatprep.subr.bf16.mxu0 %v3584
        %4131 = vmatpush1.bf16.msra.mxu0 %v3583
        %4132 = vmatprep.subr.bf16.mxu0 %v3592
        %4133 = vmatpush1.bf16.msra.mxu0 %v3591
        %4134 = vmatprep.subr.bf16.mxu0 %v3600
        %4135 = vmatpush1.bf16.msra.mxu0 %v3599
        %4136 = vmatprep.subr.bf16.mxu0 %v3608
        %4137 = vmatpush1.bf16.msra.mxu0 %v3607
        %4138 = vmatprep.subr.bf16.mxu0 %v3616
        %4139 = vmatpush1.bf16.msra.mxu0 %v3615
        %4140 = vmatprep.subr.bf16.mxu0 %v3624
        %4141 = vmatpush1.bf16.msra.mxu0 %v3623
        %4142 = vmatprep.subr.bf16.mxu0 0
        %4143 = vmatpush1.bf16.msra.mxu0 0
        %4144 = vmatprep.subr.bf16.mxu0 0
        %4145 = vmatpush1.bf16.msra.mxu0 0
        %4146 = vmatprep.subr.bf16.mxu0 0
        %4147 = vmatpush1.bf16.msra.mxu0 0
        %4148 = vmatprep.subr.bf16.mxu0 0
        %4149 = vmatpush1.bf16.msra.mxu0 0
        %4150 = vmatprep.subr.bf16.mxu0 0
        %4151 = vmatpush1.bf16.msra.mxu0 0
        %4152 = vmatprep.subr.bf16.mxu0 0
        %4153 = vmatpush1.bf16.msra.mxu0 0
        %4154 = vmatprep.subr.bf16.mxu0 0
        %4155 = vmatpush1.bf16.msra.mxu0 0
        %4156 = vmatprep.subr.bf16.mxu0 0
        %4157 = vmatpush1.bf16.msra.mxu0 0
        %4158 = vmatprep.mubr.bf16.mxu0 0
        %4159 = vmatmul.mubr.bf16.gmra.mrb[0].mxu0 %v3771
        %v4160 = vpop.f32.mrb[0].mxu0
        %v4161 = vadd.f32 %v3662, %v4160
        %v4162 = vpop.f32.mrb[0].mxu0
        %v4163 = vadd.f32 %v3662, %v4162
        %v4164 = vpop.f32.mrb[0].mxu0
        %v4165 = vadd.f32 %v3667, %v4164
        %v4166 = vpop.f32.mrb[0].mxu0
        %v4167 = vadd.f32 %v3667, %v4166
        %4168 = vmatprep.mubr.bf16.mxu0 0
        %4169 = vmatmul.mubr.bf16.gmra.mrb[0].mxu0 %v3772
        %v4170 = vpop.f32.mrb[0].mxu0
        %v4171 = vadd.f32 %v3672, %v4170
        %v4172 = vpop.f32.mrb[0].mxu0
        %v4173 = vadd.f32 %v3672, %v4172
        %v4174 = vpop.f32.mrb[0].mxu0
        %v4175 = vadd.f32 %v3677, %v4174
        %v4176 = vpop.f32.mrb[0].mxu0
        %v4177 = vadd.f32 %v3677, %v4176
        %4178 = vmatprep.mubr.bf16.mxu0 0
        %4179 = vmatmul.mubr.bf16.gmra.mrb[0].mxu0 %v3773
        %v4180 = vpop.f32.mrb[0].mxu0
        %v4181 = vadd.f32 %v3682, %v4180
        %v4182 = vpop.f32.mrb[0].mxu0
        %v4183 = vadd.f32 %v3682, %v4182
        %v4184 = vpop.f32.mrb[0].mxu0
        %v4185 = vadd.f32 %v3687, %v4184
        %v4186 = vpop.f32.mrb[0].mxu0
        %v4187 = vadd.f32 %v3687, %v4186
        %4188 = vmatprep.mubr.bf16.mxu0 0
        %4189 = vmatmul.mubr.bf16.gmra.mrb[0].mxu0 %v3774
        %v4190 = vpop.f32.mrb[0].mxu0
        %v4191 = vadd.f32 %v3692, %v4190
        %v4192 = vpop.f32.mrb[0].mxu0
        %v4193 = vadd.f32 %v3692, %v4192
        %v4194 = vpop.f32.mrb[0].mxu0
        %v4195 = vadd.f32 %v3697, %v4194
        %v4196 = vpop.f32.mrb[0].mxu0
        %v4197 = vadd.f32 %v3697, %v4196
        %4198 = vmatprep.mubr.bf16.mxu0 0
        %4199 = vmatmul.mubr.bf16.gmra.mrb[0].mxu0 %v3775
        %v4200 = vpop.f32.mrb[0].mxu0
        %v4201 = vadd.f32 %v3702, %v4200
        %v4202 = vpop.f32.mrb[0].mxu0
        %v4203 = vadd.f32 %v3702, %v4202
        %v4204 = vpop.f32.mrb[0].mxu0
        %v4205 = vadd.f32 %v3707, %v4204
        %v4206 = vpop.f32.mrb[0].mxu0
        %v4207 = vadd.f32 %v3707, %v4206
        %4208 = vmatprep.mubr.bf16.mxu0 0
        %4209 = vmatmul.mubr.bf16.gmra.mrb[0].mxu0 %v3776
        %v4210 = vpop.f32.mrb[0].mxu0
        %v4211 = vadd.f32 %v3712, %v4210
        %v4212 = vpop.f32.mrb[0].mxu0
        %v4213 = vadd.f32 %v3712, %v4212
        %v4214 = vpop.f32.mrb[0].mxu0
        %v4215 = vadd.f32 %v3717, %v4214
        %v4216 = vpop.f32.mrb[0].mxu0
        %v4217 = vadd.f32 %v3717, %v4216
        %4218 = vmatprep.mubr.bf16.mxu0 0
        %4219 = vmatmul.mubr.bf16.gmra.mrb[0].mxu0 %v3777
        %v4220 = vpop.f32.mrb[0].mxu0
        %v4221 = vadd.f32 %v3722, %v4220
        %v4222 = vpop.f32.mrb[0].mxu0
        %v4223 = vadd.f32 %v3722, %v4222
        %v4224 = vpop.f32.mrb[0].mxu0
        %v4225 = vadd.f32 %v3727, %v4224
        %v4226 = vpop.f32.mrb[0].mxu0
        %v4227 = vadd.f32 %v3727, %v4226
        %4228 = vmatprep.mubr.bf16.mxu0 0
        %4229 = vmatmul.mubr.bf16.gmra.mrb[0].mxu0 %v3778
        %v4230 = vpop.f32.mrb[0].mxu0
        %v4231 = vadd.f32 %v3732, %v4230
        %v4232 = vpop.f32.mrb[0].mxu0
        %v4233 = vadd.f32 %v3732, %v4232
        %v4234 = vpop.f32.mrb[0].mxu0
        %v4235 = vadd.f32 %v3737, %v4234
        %v4236 = vpop.f32.mrb[0].mxu0
        %v4237 = vadd.f32 %v3737, %v4236
        %4238 = vdwg.mxu0
        %v4239 = vmax.f32 %v3822, 0.0
        %v4240 = vmax.f32 %v3824, 0.0
        %v4241 = vmax.f32 %v3935, 0.0
        %v4242 = vmax.f32 %v3937, 0.0
        %v4243 = vmax.f32 %v4048, 0.0
        %v4244 = vmax.f32 %v4050, 0.0
        %v4245 = vmax.f32 %v4161, 0.0
        %v4246 = vmax.f32 %v4163, 0.0
        %v4247 = vmax.f32 %v3826, 0.0
        %v4248 = vmax.f32 %v3828, 0.0
        %v4249 = vmax.f32 %v3939, 0.0
        %v4250 = vmax.f32 %v3941, 0.0
        %v4251 = vmax.f32 %v4052, 0.0
        %v4252 = vmax.f32 %v4054, 0.0
        %v4253 = vmax.f32 %v4165, 0.0
        %v4254 = vmax.f32 %v4167, 0.0
        %v4255 = vmax.f32 %v3832, 0.0
        %v4256 = vmax.f32 %v3834, 0.0
        %v4257 = vmax.f32 %v3945, 0.0
        %v4258 = vmax.f32 %v3947, 0.0
        %v4259 = vmax.f32 %v4058, 0.0
        %v4260 = vmax.f32 %v4060, 0.0
        %v4261 = vmax.f32 %v4171, 0.0
        %v4262 = vmax.f32 %v4173, 0.0
        %v4263 = vmax.f32 %v3836, 0.0
        %v4264 = vmax.f32 %v3838, 0.0
        %v4265 = vmax.f32 %v3949, 0.0
        %v4266 = vmax.f32 %v3951, 0.0
        %v4267 = vmax.f32 %v4062, 0.0
        %v4268 = vmax.f32 %v4064, 0.0
        %v4269 = vmax.f32 %v4175, 0.0
        %v4270 = vmax.f32 %v4177, 0.0
        %v4271 = vmax.f32 %v3842, 0.0
        %v4272 = vmax.f32 %v3844, 0.0
        %v4273 = vmax.f32 %v3955, 0.0
        %v4274 = vmax.f32 %v3957, 0.0
        %v4275 = vmax.f32 %v4068, 0.0
        %v4276 = vmax.f32 %v4070, 0.0
        %v4277 = vmax.f32 %v4181, 0.0
        %v4278 = vmax.f32 %v4183, 0.0
        %v4279 = vmax.f32 %v3846, 0.0
        %v4280 = vmax.f32 %v3848, 0.0
        %v4281 = vmax.f32 %v3959, 0.0
        %v4282 = vmax.f32 %v3961, 0.0
        %v4283 = vmax.f32 %v4072, 0.0
        %v4284 = vmax.f32 %v4074, 0.0
        %v4285 = vmax.f32 %v4185, 0.0
        %v4286 = vmax.f32 %v4187, 0.0
        %v4287 = vmax.f32 %v3852, 0.0
        %v4288 = vmax.f32 %v3854, 0.0
        %v4289 = vmax.f32 %v3965, 0.0
        %v4290 = vmax.f32 %v3967, 0.0
        %v4291 = vmax.f32 %v4078, 0.0
        %v4292 = vmax.f32 %v4080, 0.0
        %v4293 = vmax.f32 %v4191, 0.0
        %v4294 = vmax.f32 %v4193, 0.0
        %v4295 = vmax.f32 %v3856, 0.0
        %v4296 = vmax.f32 %v3858, 0.0
        %v4297 = vmax.f32 %v3969, 0.0
        %v4298 = vmax.f32 %v3971, 0.0
        %v4299 = vmax.f32 %v4082, 0.0
        %v4300 = vmax.f32 %v4084, 0.0
        %v4301 = vmax.f32 %v4195, 0.0
        %v4302 = vmax.f32 %v4197, 0.0
        %v4303 = vmax.f32 %v3862, 0.0
        %v4304 = vmax.f32 %v3864, 0.0
        %v4305 = vmax.f32 %v3975, 0.0
        %v4306 = vmax.f32 %v3977, 0.0
        %v4307 = vmax.f32 %v4088, 0.0
        %v4308 = vmax.f32 %v4090, 0.0
        %v4309 = vmax.f32 %v4201, 0.0
        %v4310 = vmax.f32 %v4203, 0.0
        %v4311 = vmax.f32 %v3866, 0.0
        %v4312 = vmax.f32 %v3868, 0.0
        %v4313 = vmax.f32 %v3979, 0.0
        %v4314 = vmax.f32 %v3981, 0.0
        %v4315 = vmax.f32 %v4092, 0.0
        %v4316 = vmax.f32 %v4094, 0.0
        %v4317 = vmax.f32 %v4205, 0.0
        %v4318 = vmax.f32 %v4207, 0.0
        %v4319 = vmax.f32 %v3872, 0.0
        %v4320 = vmax.f32 %v3874, 0.0
        %v4321 = vmax.f32 %v3985, 0.0
        %v4322 = vmax.f32 %v3987, 0.0
        %v4323 = vmax.f32 %v4098, 0.0
        %v4324 = vmax.f32 %v4100, 0.0
        %v4325 = vmax.f32 %v4211, 0.0
        %v4326 = vmax.f32 %v4213, 0.0
        %v4327 = vmax.f32 %v3876, 0.0
        %v4328 = vmax.f32 %v3878, 0.0
        %v4329 = vmax.f32 %v3989, 0.0
        %v4330 = vmax.f32 %v3991, 0.0
        %v4331 = vmax.f32 %v4102, 0.0
        %v4332 = vmax.f32 %v4104, 0.0
        %v4333 = vmax.f32 %v4215, 0.0
        %v4334 = vmax.f32 %v4217, 0.0
        %v4335 = vmax.f32 %v3882, 0.0
        %v4336 = vmax.f32 %v3884, 0.0
        %v4337 = vmax.f32 %v3995, 0.0
        %v4338 = vmax.f32 %v3997, 0.0
        %v4339 = vmax.f32 %v4108, 0.0
        %v4340 = vmax.f32 %v4110, 0.0
        %v4341 = vmax.f32 %v4221, 0.0
        %v4342 = vmax.f32 %v4223, 0.0
        %v4343 = vmax.f32 %v3886, 0.0
        %v4344 = vmax.f32 %v3888, 0.0
        %v4345 = vmax.f32 %v3999, 0.0
        %v4346 = vmax.f32 %v4001, 0.0
        %v4347 = vmax.f32 %v4112, 0.0
        %v4348 = vmax.f32 %v4114, 0.0
        %v4349 = vmax.f32 %v4225, 0.0
        %v4350 = vmax.f32 %v4227, 0.0
        %v4351 = vmax.f32 %v3892, 0.0
        %v4352 = vmax.f32 %v3894, 0.0
        %v4353 = vmax.f32 %v4005, 0.0
        %v4354 = vmax.f32 %v4007, 0.0
        %v4355 = vmax.f32 %v4118, 0.0
        %v4356 = vmax.f32 %v4120, 0.0
        %v4357 = vmax.f32 %v4231, 0.0
        %v4358 = vmax.f32 %v4233, 0.0
        %v4359 = vmax.f32 %v3896, 0.0
        %v4360 = vmax.f32 %v3898, 0.0
        %v4361 = vmax.f32 %v4009, 0.0
        %v4362 = vmax.f32 %v4011, 0.0
        %v4363 = vmax.f32 %v4122, 0.0
        %v4364 = vmax.f32 %v4124, 0.0
        %v4365 = vmax.f32 %v4235, 0.0
        %v4366 = vmax.f32 %v4237, 0.0
        %v4367 = vpack.c.bf16 %v4247, %v4239
        %v4368 = vpack.c.bf16 %v4248, %v4240
        %v4369 = vpack.c.bf16 %v4249, %v4241
        %v4370 = vpack.c.bf16 %v4250, %v4242
        %v4371 = vpack.c.bf16 %v4251, %v4243
        %v4372 = vpack.c.bf16 %v4252, %v4244
        %v4373 = vpack.c.bf16 %v4253, %v4245
        %v4374 = vpack.c.bf16 %v4254, %v4246
        %v4375 = vpack.c.bf16 %v4263, %v4255
        %v4376 = vpack.c.bf16 %v4264, %v4256
        %v4377 = vpack.c.bf16 %v4265, %v4257
        %v4378 = vpack.c.bf16 %v4266, %v4258
        %v4379 = vpack.c.bf16 %v4267, %v4259
        %v4380 = vpack.c.bf16 %v4268, %v4260
        %v4381 = vpack.c.bf16 %v4269, %v4261
        %v4382 = vpack.c.bf16 %v4270, %v4262
        %v4383 = vpack.c.bf16 %v4279, %v4271
        %v4384 = vpack.c.bf16 %v4280, %v4272
        %v4385 = vpack.c.bf16 %v4281, %v4273
        %v4386 = vpack.c.bf16 %v4282, %v4274
        %v4387 = vpack.c.bf16 %v4283, %v4275
        %v4388 = vpack.c.bf16 %v4284, %v4276
        %v4389 = vpack.c.bf16 %v4285, %v4277
        %v4390 = vpack.c.bf16 %v4286, %v4278
        %v4391 = vpack.c.bf16 %v4295, %v4287
        %v4392 = vpack.c.bf16 %v4296, %v4288
        %v4393 = vpack.c.bf16 %v4297, %v4289
        %v4394 = vpack.c.bf16 %v4298, %v4290
        %v4395 = vpack.c.bf16 %v4299, %v4291
        %v4396 = vpack.c.bf16 %v4300, %v4292
        %v4397 = vpack.c.bf16 %v4301, %v4293
        %v4398 = vpack.c.bf16 %v4302, %v4294
        %v4399 = vpack.c.bf16 %v4311, %v4303
        %v4400 = vpack.c.bf16 %v4312, %v4304
        %v4401 = vpack.c.bf16 %v4313, %v4305
        %v4402 = vpack.c.bf16 %v4314, %v4306
        %v4403 = vpack.c.bf16 %v4315, %v4307
        %v4404 = vpack.c.bf16 %v4316, %v4308
        %v4405 = vpack.c.bf16 %v4317, %v4309
        %v4406 = vpack.c.bf16 %v4318, %v4310
        %v4407 = vpack.c.bf16 %v4327, %v4319
        %v4408 = vpack.c.bf16 %v4328, %v4320
        %v4409 = vpack.c.bf16 %v4329, %v4321
        %v4410 = vpack.c.bf16 %v4330, %v4322
        %v4411 = vpack.c.bf16 %v4331, %v4323
        %v4412 = vpack.c.bf16 %v4332, %v4324
        %v4413 = vpack.c.bf16 %v4333, %v4325
        %v4414 = vpack.c.bf16 %v4334, %v4326
        %v4415 = vpack.c.bf16 %v4343, %v4335
        %v4416 = vpack.c.bf16 %v4344, %v4336
        %v4417 = vpack.c.bf16 %v4345, %v4337
        %v4418 = vpack.c.bf16 %v4346, %v4338
        %v4419 = vpack.c.bf16 %v4347, %v4339
        %v4420 = vpack.c.bf16 %v4348, %v4340
        %v4421 = vpack.c.bf16 %v4349, %v4341
        %v4422 = vpack.c.bf16 %v4350, %v4342
        %v4423 = vpack.c.bf16 %v4359, %v4351
        %v4424 = vpack.c.bf16 %v4360, %v4352
        %v4425 = vpack.c.bf16 %v4361, %v4353
        %v4426 = vpack.c.bf16 %v4362, %v4354
        %v4427 = vpack.c.bf16 %v4363, %v4355
        %v4428 = vpack.c.bf16 %v4364, %v4356
        %v4429 = vpack.c.bf16 %v4365, %v4357
        %v4430 = vpack.c.bf16 %v4366, %v4358
        %s4431 = scalar_lea.vmem %s5, 64
        %v4432 = vld [vmem:[%s4431] sm:$0xf]
        %v4433 = vld [vmem:[%s4431 + $0x4] sm:$0xf]
        %v4434 = vld [vmem:[%s4431 + $0x8] sm:$0xf]
        %v4435 = vld [vmem:[%s4431 + $0xc] sm:$0xf]
        %v4436 = vld [vmem:[%s4431 + $0x10] sm:$0xf]
        %v4437 = vld [vmem:[%s4431 + $0x14] sm:$0xf]
        %v4438 = vld [vmem:[%s4431 + $0x18] sm:$0xf]
        %v4439 = vld [vmem:[%s4431 + $0x1c] sm:$0xf]
        %v4440 = vld [vmem:[%s4431 + $0x20] sm:$0xf]
        %v4441 = vld [vmem:[%s4431 + $0x24] sm:$0xf]
        %v4442 = vld [vmem:[%s4431 + $0x28] sm:$0xf]
        %v4443 = vld [vmem:[%s4431 + $0x2c] sm:$0xf]
        %v4444 = vld [vmem:[%s4431 + $0x30] sm:$0xf]
        %v4445 = vld [vmem:[%s4431 + $0x34] sm:$0xf]
        %v4446 = vld [vmem:[%s4431 + $0x38] sm:$0xf]
        %v4447 = vld [vmem:[%s4431 + $0x3c] sm:$0xf]
        %s4448 = scalar_lea.vmem %s6, 128
        %v4449 = vld [vmem:[%s4448] sm:$0xff]
        %v4450 = vld [vmem:[%s4448 + $0x8] sm:$0xff]
        %v4451 = vld [vmem:[%s4448 + $0x10] sm:$0xff]
        %v4452 = vld [vmem:[%s4448 + $0x18] sm:$0xff]
        %v4453 = vld [vmem:[%s4448 + $0x20] sm:$0xff]
        %v4454 = vld [vmem:[%s4448 + $0x28] sm:$0xff]
        %v4455 = vld [vmem:[%s4448 + $0x30] sm:$0xff]
        %v4456 = vld [vmem:[%s4448 + $0x38] sm:$0xff]
        %v4457 = vld [vmem:[%s4448 + $0x40] sm:$0xff]
        %v4458 = vld [vmem:[%s4448 + $0x48] sm:$0xff]
        %v4459 = vld [vmem:[%s4448 + $0x50] sm:$0xff]
        %v4460 = vld [vmem:[%s4448 + $0x58] sm:$0xff]
        %v4461 = vld [vmem:[%s4448 + $0x60] sm:$0xff]
        %v4462 = vld [vmem:[%s4448 + $0x68] sm:$0xff]
        %v4463 = vld [vmem:[%s4448 + $0x70] sm:$0xff]
        %v4464 = vld [vmem:[%s4448 + $0x78] sm:$0xff]
        %4466 = vset.pattern.permute.xlu0 0
        %4467 = vperm.xlu0 %4466, %v4449
        %v4468 = vpop.permute.xlu0 %4467
        %4471 = vset.pattern.permute.xlu0 0
        %4472 = vperm.xlu0 %4471, %v4450
        %v4473 = vpop.permute.xlu0 %4472
        %4476 = vset.pattern.permute.xlu0 0
        %4477 = vperm.xlu0 %4476, %v4451
        %v4478 = vpop.permute.xlu0 %4477
        %4481 = vset.pattern.permute.xlu0 0
        %4482 = vperm.xlu0 %4481, %v4452
        %v4483 = vpop.permute.xlu0 %4482
        %4486 = vset.pattern.permute.xlu0 0
        %4487 = vperm.xlu0 %4486, %v4453
        %v4488 = vpop.permute.xlu0 %4487
        %4491 = vset.pattern.permute.xlu0 0
        %4492 = vperm.xlu0 %4491, %v4454
        %v4493 = vpop.permute.xlu0 %4492
        %4496 = vset.pattern.permute.xlu0 0
        %4497 = vperm.xlu0 %4496, %v4455
        %v4498 = vpop.permute.xlu0 %4497
        %4501 = vset.pattern.permute.xlu0 0
        %4502 = vperm.xlu0 %4501, %v4456
        %v4503 = vpop.permute.xlu0 %4502
        %4506 = vset.pattern.permute.xlu0 0
        %4507 = vperm.xlu0 %4506, %v4457
        %v4508 = vpop.permute.xlu0 %4507
        %4511 = vset.pattern.permute.xlu0 0
        %4512 = vperm.xlu0 %4511, %v4458
        %v4513 = vpop.permute.xlu0 %4512
        %4516 = vset.pattern.permute.xlu0 0
        %4517 = vperm.xlu0 %4516, %v4459
        %v4518 = vpop.permute.xlu0 %4517
        %4521 = vset.pattern.permute.xlu0 0
        %4522 = vperm.xlu0 %4521, %v4460
        %v4523 = vpop.permute.xlu0 %4522
        %4526 = vset.pattern.permute.xlu0 0
        %4527 = vperm.xlu0 %4526, %v4461
        %v4528 = vpop.permute.xlu0 %4527
        %4531 = vset.pattern.permute.xlu0 0
        %4532 = vperm.xlu0 %4531, %v4462
        %v4533 = vpop.permute.xlu0 %4532
        %4536 = vset.pattern.permute.xlu0 0
        %4537 = vperm.xlu0 %4536, %v4463
        %v4538 = vpop.permute.xlu0 %4537
        %4541 = vset.pattern.permute.xlu0 0
        %4542 = vperm.xlu0 %4541, %v4464
        %v4543 = vpop.permute.xlu0 %4542
        %v4561 = vunpack.c.l.b16 %v4432
        %v4562 = vunpack.c.l.b16 %v4433
        %v4563 = vunpack.c.l.b16 %v4434
        %v4564 = vunpack.c.l.b16 %v4435
        %v4565 = vunpack.c.l.b16 %v4436
        %v4566 = vunpack.c.l.b16 %v4437
        %v4567 = vunpack.c.l.b16 %v4438
        %v4568 = vunpack.c.l.b16 %v4439
        %v4569 = vunpack.c.l.b16 %v4440
        %v4570 = vunpack.c.l.b16 %v4441
        %v4571 = vunpack.c.l.b16 %v4442
        %v4572 = vunpack.c.l.b16 %v4443
        %v4573 = vunpack.c.l.b16 %v4444
        %v4574 = vunpack.c.l.b16 %v4445
        %v4575 = vunpack.c.l.b16 %v4446
        %v4576 = vunpack.c.l.b16 %v4447
        %v4577 = vpack.c.b16 %v4562, %v4561
        %v4578 = vpack.c.b16 %v4564, %v4563
        %v4579 = vpack.c.b16 %v4566, %v4565
        %v4580 = vpack.c.b16 %v4568, %v4567
        %v4581 = vpack.c.b16 %v4570, %v4569
        %v4582 = vpack.c.b16 %v4572, %v4571
        %v4583 = vpack.c.b16 %v4574, %v4573
        %v4584 = vpack.c.b16 %v4576, %v4575
        %4593 = vmatprep.subr.bf16.mxu0 %v4368
        %4594 = vmatpush1.bf16.msra.mxu0 %v4367
        %4595 = vmatprep.subr.bf16.mxu0 %v4376
        %4596 = vmatpush1.bf16.msra.mxu0 %v4375
        %4597 = vmatprep.subr.bf16.mxu0 %v4384
        %4598 = vmatpush1.bf16.msra.mxu0 %v4383
        %4599 = vmatprep.subr.bf16.mxu0 %v4392
        %4600 = vmatpush1.bf16.msra.mxu0 %v4391
        %4601 = vmatprep.subr.bf16.mxu0 %v4400
        %4602 = vmatpush1.bf16.msra.mxu0 %v4399
        %4603 = vmatprep.subr.bf16.mxu0 %v4408
        %4604 = vmatpush1.bf16.msra.mxu0 %v4407
        %4605 = vmatprep.subr.bf16.mxu0 %v4416
        %4606 = vmatpush1.bf16.msra.mxu0 %v4415
        %4607 = vmatprep.subr.bf16.mxu0 %v4424
        %4608 = vmatpush1.bf16.msra.mxu0 %v4423
        %4609 = vmatprep.subr.bf16.mxu0 0
        %4610 = vmatpush1.bf16.msra.mxu0 0
        %4611 = vmatprep.subr.bf16.mxu0 0
        %4612 = vmatpush1.bf16.msra.mxu0 0
        %4613 = vmatprep.subr.bf16.mxu0 0
        %4614 = vmatpush1.bf16.msra.mxu0 0
        %4615 = vmatprep.subr.bf16.mxu0 0
        %4616 = vmatpush1.bf16.msra.mxu0 0
        %4617 = vmatprep.subr.bf16.mxu0 0
        %4618 = vmatpush1.bf16.msra.mxu0 0
        %4619 = vmatprep.subr.bf16.mxu0 0
        %4620 = vmatpush1.bf16.msra.mxu0 0
        %4621 = vmatprep.subr.bf16.mxu0 0
        %4622 = vmatpush1.bf16.msra.mxu0 0
        %4623 = vmatprep.subr.bf16.mxu0 0
        %4624 = vmatpush1.bf16.msra.mxu0 0
        %4625 = vmatprep.mubr.bf16.mxu0 0
        %4626 = vmatmul.mubr.bf16.gmra.mrb[0].mxu0 %v4577
        %v4627 = vpop.f32.mrb[0].mxu0
        %v4628 = vadd.f32 %v4468, %v4627
        %v4629 = vpop.f32.mrb[0].mxu0
        %v4630 = vadd.f32 %v4468, %v4629
        %v4631 = vpop.f32.mrb[0].mxu0
        %v4632 = vadd.f32 %v4473, %v4631
        %v4633 = vpop.f32.mrb[0].mxu0
        %v4634 = vadd.f32 %v4473, %v4633
        %4635 = vmatprep.mubr.bf16.mxu0 0
        %4636 = vmatmul.mubr.bf16.gmra.mrb[0].mxu0 %v4578
        %v4637 = vpop.f32.mrb[0].mxu0
        %v4638 = vadd.f32 %v4478, %v4637
        %v4639 = vpop.f32.mrb[0].mxu0
        %v4640 = vadd.f32 %v4478, %v4639
        %v4641 = vpop.f32.mrb[0].mxu0
        %v4642 = vadd.f32 %v4483, %v4641
        %v4643 = vpop.f32.mrb[0].mxu0
        %v4644 = vadd.f32 %v4483, %v4643
        %4645 = vmatprep.mubr.bf16.mxu0 0
        %4646 = vmatmul.mubr.bf16.gmra.mrb[0].mxu0 %v4579
        %v4647 = vpop.f32.mrb[0].mxu0
        %v4648 = vadd.f32 %v4488, %v4647
        %v4649 = vpop.f32.mrb[0].mxu0
        %v4650 = vadd.f32 %v4488, %v4649
        %v4651 = vpop.f32.mrb[0].mxu0
        %v4652 = vadd.f32 %v4493, %v4651
        %v4653 = vpop.f32.mrb[0].mxu0
        %v4654 = vadd.f32 %v4493, %v4653
        %4655 = vmatprep.mubr.bf16.mxu0 0
        %4656 = vmatmul.mubr.bf16.gmra.mrb[0].mxu0 %v4580
        %v4657 = vpop.f32.mrb[0].mxu0
        %v4658 = vadd.f32 %v4498, %v4657
        %v4659 = vpop.f32.mrb[0].mxu0
        %v4660 = vadd.f32 %v4498, %v4659
        %v4661 = vpop.f32.mrb[0].mxu0
        %v4662 = vadd.f32 %v4503, %v4661
        %v4663 = vpop.f32.mrb[0].mxu0
        %v4664 = vadd.f32 %v4503, %v4663
        %4665 = vmatprep.mubr.bf16.mxu0 0
        %4666 = vmatmul.mubr.bf16.gmra.mrb[0].mxu0 %v4581
        %v4667 = vpop.f32.mrb[0].mxu0
        %v4668 = vadd.f32 %v4508, %v4667
        %v4669 = vpop.f32.mrb[0].mxu0
        %v4670 = vadd.f32 %v4508, %v4669
        %v4671 = vpop.f32.mrb[0].mxu0
        %v4672 = vadd.f32 %v4513, %v4671
        %v4673 = vpop.f32.mrb[0].mxu0
        %v4674 = vadd.f32 %v4513, %v4673
        %4675 = vmatprep.mubr.bf16.mxu0 0
        %4676 = vmatmul.mubr.bf16.gmra.mrb[0].mxu0 %v4582
        %v4677 = vpop.f32.mrb[0].mxu0
        %v4678 = vadd.f32 %v4518, %v4677
        %v4679 = vpop.f32.mrb[0].mxu0
        %v4680 = vadd.f32 %v4518, %v4679
        %v4681 = vpop.f32.mrb[0].mxu0
        %v4682 = vadd.f32 %v4523, %v4681
        %v4683 = vpop.f32.mrb[0].mxu0
        %v4684 = vadd.f32 %v4523, %v4683
        %4685 = vmatprep.mubr.bf16.mxu0 0
        %4686 = vmatmul.mubr.bf16.gmra.mrb[0].mxu0 %v4583
        %v4687 = vpop.f32.mrb[0].mxu0
        %v4688 = vadd.f32 %v4528, %v4687
        %v4689 = vpop.f32.mrb[0].mxu0
        %v4690 = vadd.f32 %v4528, %v4689
        %v4691 = vpop.f32.mrb[0].mxu0
        %v4692 = vadd.f32 %v4533, %v4691
        %v4693 = vpop.f32.mrb[0].mxu0
        %v4694 = vadd.f32 %v4533, %v4693
        %4695 = vmatprep.mubr.bf16.mxu0 0
        %4696 = vmatmul.mubr.bf16.gmra.mrb[0].mxu0 %v4584
        %v4697 = vpop.f32.mrb[0].mxu0
        %v4698 = vadd.f32 %v4538, %v4697
        %v4699 = vpop.f32.mrb[0].mxu0
        %v4700 = vadd.f32 %v4538, %v4699
        %v4701 = vpop.f32.mrb[0].mxu0
        %v4702 = vadd.f32 %v4543, %v4701
        %v4703 = vpop.f32.mrb[0].mxu0
        %v4704 = vadd.f32 %v4543, %v4703
        %4705 = vdwg.mxu0
        %4706 = vmatprep.subr.bf16.mxu0 %v4370
        %4707 = vmatpush1.bf16.msra.mxu0 %v4369
        %4708 = vmatprep.subr.bf16.mxu0 %v4378
        %4709 = vmatpush1.bf16.msra.mxu0 %v4377
        %4710 = vmatprep.subr.bf16.mxu0 %v4386
        %4711 = vmatpush1.bf16.msra.mxu0 %v4385
        %4712 = vmatprep.subr.bf16.mxu0 %v4394
        %4713 = vmatpush1.bf16.msra.mxu0 %v4393
        %4714 = vmatprep.subr.bf16.mxu0 %v4402
        %4715 = vmatpush1.bf16.msra.mxu0 %v4401
        %4716 = vmatprep.subr.bf16.mxu0 %v4410
        %4717 = vmatpush1.bf16.msra.mxu0 %v4409
        %4718 = vmatprep.subr.bf16.mxu0 %v4418
        %4719 = vmatpush1.bf16.msra.mxu0 %v4417
        %4720 = vmatprep.subr.bf16.mxu0 %v4426
        %4721 = vmatpush1.bf16.msra.mxu0 %v4425
        %4722 = vmatprep.subr.bf16.mxu0 0
        %4723 = vmatpush1.bf16.msra.mxu0 0
        %4724 = vmatprep.subr.bf16.mxu0 0
        %4725 = vmatpush1.bf16.msra.mxu0 0
        %4726 = vmatprep.subr.bf16.mxu0 0
        %4727 = vmatpush1.bf16.msra.mxu0 0
        %4728 = vmatprep.subr.bf16.mxu0 0
        %4729 = vmatpush1.bf16.msra.mxu0 0
        %4730 = vmatprep.subr.bf16.mxu0 0
        %4731 = vmatpush1.bf16.msra.mxu0 0
        %4732 = vmatprep.subr.bf16.mxu0 0
        %4733 = vmatpush1.bf16.msra.mxu0 0
        %4734 = vmatprep.subr.bf16.mxu0 0
        %4735 = vmatpush1.bf16.msra.mxu0 0
        %4736 = vmatprep.subr.bf16.mxu0 0
        %4737 = vmatpush1.bf16.msra.mxu0 0
        %4738 = vmatprep.mubr.bf16.mxu0 0
        %4739 = vmatmul.mubr.bf16.gmra.mrb[0].mxu0 %v4577
        %v4740 = vpop.f32.mrb[0].mxu0
        %v4741 = vadd.f32 %v4468, %v4740
        %v4742 = vpop.f32.mrb[0].mxu0
        %v4743 = vadd.f32 %v4468, %v4742
        %v4744 = vpop.f32.mrb[0].mxu0
        %v4745 = vadd.f32 %v4473, %v4744
        %v4746 = vpop.f32.mrb[0].mxu0
        %v4747 = vadd.f32 %v4473, %v4746
        %4748 = vmatprep.mubr.bf16.mxu0 0
        %4749 = vmatmul.mubr.bf16.gmra.mrb[0].mxu0 %v4578
        %v4750 = vpop.f32.mrb[0].mxu0
        %v4751 = vadd.f32 %v4478, %v4750
        %v4752 = vpop.f32.mrb[0].mxu0
        %v4753 = vadd.f32 %v4478, %v4752
        %v4754 = vpop.f32.mrb[0].mxu0
        %v4755 = vadd.f32 %v4483, %v4754
        %v4756 = vpop.f32.mrb[0].mxu0
        %v4757 = vadd.f32 %v4483, %v4756
        %4758 = vmatprep.mubr.bf16.mxu0 0
        %4759 = vmatmul.mubr.bf16.gmra.mrb[0].mxu0 %v4579
        %v4760 = vpop.f32.mrb[0].mxu0
        %v4761 = vadd.f32 %v4488, %v4760
        %v4762 = vpop.f32.mrb[0].mxu0
        %v4763 = vadd.f32 %v4488, %v4762
        %v4764 = vpop.f32.mrb[0].mxu0
        %v4765 = vadd.f32 %v4493, %v4764
        %v4766 = vpop.f32.mrb[0].mxu0
        %v4767 = vadd.f32 %v4493, %v4766
        %4768 = vmatprep.mubr.bf16.mxu0 0
        %4769 = vmatmul.mubr.bf16.gmra.mrb[0].mxu0 %v4580
        %v4770 = vpop.f32.mrb[0].mxu0
        %v4771 = vadd.f32 %v4498, %v4770
        %v4772 = vpop.f32.mrb[0].mxu0
        %v4773 = vadd.f32 %v4498, %v4772
        %v4774 = vpop.f32.mrb[0].mxu0
        %v4775 = vadd.f32 %v4503, %v4774
        %v4776 = vpop.f32.mrb[0].mxu0
        %v4777 = vadd.f32 %v4503, %v4776
        %4778 = vmatprep.mubr.bf16.mxu0 0
        %4779 = vmatmul.mubr.bf16.gmra.mrb[0].mxu0 %v4581
        %v4780 = vpop.f32.mrb[0].mxu0
        %v4781 = vadd.f32 %v4508, %v4780
        %v4782 = vpop.f32.mrb[0].mxu0
        %v4783 = vadd.f32 %v4508, %v4782
        %v4784 = vpop.f32.mrb[0].mxu0
        %v4785 = vadd.f32 %v4513, %v4784
        %v4786 = vpop.f32.mrb[0].mxu0
        %v4787 = vadd.f32 %v4513, %v4786
        %4788 = vmatprep.mubr.bf16.mxu0 0
        %4789 = vmatmul.mubr.bf16.gmra.mrb[0].mxu0 %v4582
        %v4790 = vpop.f32.mrb[0].mxu0
        %v4791 = vadd.f32 %v4518, %v4790
        %v4792 = vpop.f32.mrb[0].mxu0
        %v4793 = vadd.f32 %v4518, %v4792
        %v4794 = vpop.f32.mrb[0].mxu0
        %v4795 = vadd.f32 %v4523, %v4794
        %v4796 = vpop.f32.mrb[0].mxu0
        %v4797 = vadd.f32 %v4523, %v4796
        %4798 = vmatprep.mubr.bf16.mxu0 0
        %4799 = vmatmul.mubr.bf16.gmra.mrb[0].mxu0 %v4583
        %v4800 = vpop.f32.mrb[0].mxu0
        %v4801 = vadd.f32 %v4528, %v4800
        %v4802 = vpop.f32.mrb[0].mxu0
        %v4803 = vadd.f32 %v4528, %v4802
        %v4804 = vpop.f32.mrb[0].mxu0
        %v4805 = vadd.f32 %v4533, %v4804
        %v4806 = vpop.f32.mrb[0].mxu0
        %v4807 = vadd.f32 %v4533, %v4806
        %4808 = vmatprep.mubr.bf16.mxu0 0
        %4809 = vmatmul.mubr.bf16.gmra.mrb[0].mxu0 %v4584
        %v4810 = vpop.f32.mrb[0].mxu0
        %v4811 = vadd.f32 %v4538, %v4810
        %v4812 = vpop.f32.mrb[0].mxu0
        %v4813 = vadd.f32 %v4538, %v4812
        %v4814 = vpop.f32.mrb[0].mxu0
        %v4815 = vadd.f32 %v4543, %v4814
        %v4816 = vpop.f32.mrb[0].mxu0
        %v4817 = vadd.f32 %v4543, %v4816
        %4818 = vdwg.mxu0
        %4819 = vmatprep.subr.bf16.mxu0 %v4372
        %4820 = vmatpush1.bf16.msra.mxu0 %v4371
        %4821 = vmatprep.subr.bf16.mxu0 %v4380
        %4822 = vmatpush1.bf16.msra.mxu0 %v4379
        %4823 = vmatprep.subr.bf16.mxu0 %v4388
        %4824 = vmatpush1.bf16.msra.mxu0 %v4387
        %4825 = vmatprep.subr.bf16.mxu0 %v4396
        %4826 = vmatpush1.bf16.msra.mxu0 %v4395
        %4827 = vmatprep.subr.bf16.mxu0 %v4404
        %4828 = vmatpush1.bf16.msra.mxu0 %v4403
        %4829 = vmatprep.subr.bf16.mxu0 %v4412
        %4830 = vmatpush1.bf16.msra.mxu0 %v4411
        %4831 = vmatprep.subr.bf16.mxu0 %v4420
        %4832 = vmatpush1.bf16.msra.mxu0 %v4419
        %4833 = vmatprep.subr.bf16.mxu0 %v4428
        %4834 = vmatpush1.bf16.msra.mxu0 %v4427
        %4835 = vmatprep.subr.bf16.mxu0 0
        %4836 = vmatpush1.bf16.msra.mxu0 0
        %4837 = vmatprep.subr.bf16.mxu0 0
        %4838 = vmatpush1.bf16.msra.mxu0 0
        %4839 = vmatprep.subr.bf16.mxu0 0
        %4840 = vmatpush1.bf16.msra.mxu0 0
        %4841 = vmatprep.subr.bf16.mxu0 0
        %4842 = vmatpush1.bf16.msra.mxu0 0
        %4843 = vmatprep.subr.bf16.mxu0 0
        %4844 = vmatpush1.bf16.msra.mxu0 0
        %4845 = vmatprep.subr.bf16.mxu0 0
        %4846 = vmatpush1.bf16.msra.mxu0 0
        %4847 = vmatprep.subr.bf16.mxu0 0
        %4848 = vmatpush1.bf16.msra.mxu0 0
        %4849 = vmatprep.subr.bf16.mxu0 0
        %4850 = vmatpush1.bf16.msra.mxu0 0
        %4851 = vmatprep.mubr.bf16.mxu0 0
        %4852 = vmatmul.mubr.bf16.gmra.mrb[0].mxu0 %v4577
        %v4853 = vpop.f32.mrb[0].mxu0
        %v4854 = vadd.f32 %v4468, %v4853
        %v4855 = vpop.f32.mrb[0].mxu0
        %v4856 = vadd.f32 %v4468, %v4855
        %v4857 = vpop.f32.mrb[0].mxu0
        %v4858 = vadd.f32 %v4473, %v4857
        %v4859 = vpop.f32.mrb[0].mxu0
        %v4860 = vadd.f32 %v4473, %v4859
        %4861 = vmatprep.mubr.bf16.mxu0 0
        %4862 = vmatmul.mubr.bf16.gmra.mrb[0].mxu0 %v4578
        %v4863 = vpop.f32.mrb[0].mxu0
        %v4864 = vadd.f32 %v4478, %v4863
        %v4865 = vpop.f32.mrb[0].mxu0
        %v4866 = vadd.f32 %v4478, %v4865
        %v4867 = vpop.f32.mrb[0].mxu0
        %v4868 = vadd.f32 %v4483, %v4867
        %v4869 = vpop.f32.mrb[0].mxu0
        %v4870 = vadd.f32 %v4483, %v4869
        %4871 = vmatprep.mubr.bf16.mxu0 0
        %4872 = vmatmul.mubr.bf16.gmra.mrb[0].mxu0 %v4579
        %v4873 = vpop.f32.mrb[0].mxu0
        %v4874 = vadd.f32 %v4488, %v4873
        %v4875 = vpop.f32.mrb[0].mxu0
        %v4876 = vadd.f32 %v4488, %v4875
        %v4877 = vpop.f32.mrb[0].mxu0
        %v4878 = vadd.f32 %v4493, %v4877
        %v4879 = vpop.f32.mrb[0].mxu0
        %v4880 = vadd.f32 %v4493, %v4879
        %4881 = vmatprep.mubr.bf16.mxu0 0
        %4882 = vmatmul.mubr.bf16.gmra.mrb[0].mxu0 %v4580
        %v4883 = vpop.f32.mrb[0].mxu0
        %v4884 = vadd.f32 %v4498, %v4883
        %v4885 = vpop.f32.mrb[0].mxu0
        %v4886 = vadd.f32 %v4498, %v4885
        %v4887 = vpop.f32.mrb[0].mxu0
        %v4888 = vadd.f32 %v4503, %v4887
        %v4889 = vpop.f32.mrb[0].mxu0
        %v4890 = vadd.f32 %v4503, %v4889
        %4891 = vmatprep.mubr.bf16.mxu0 0
        %4892 = vmatmul.mubr.bf16.gmra.mrb[0].mxu0 %v4581
        %v4893 = vpop.f32.mrb[0].mxu0
        %v4894 = vadd.f32 %v4508, %v4893
        %v4895 = vpop.f32.mrb[0].mxu0
        %v4896 = vadd.f32 %v4508, %v4895
        %v4897 = vpop.f32.mrb[0].mxu0
        %v4898 = vadd.f32 %v4513, %v4897
        %v4899 = vpop.f32.mrb[0].mxu0
        %v4900 = vadd.f32 %v4513, %v4899
        %4901 = vmatprep.mubr.bf16.mxu0 0
        %4902 = vmatmul.mubr.bf16.gmra.mrb[0].mxu0 %v4582
        %v4903 = vpop.f32.mrb[0].mxu0
        %v4904 = vadd.f32 %v4518, %v4903
        %v4905 = vpop.f32.mrb[0].mxu0
        %v4906 = vadd.f32 %v4518, %v4905
        %v4907 = vpop.f32.mrb[0].mxu0
        %v4908 = vadd.f32 %v4523, %v4907
        %v4909 = vpop.f32.mrb[0].mxu0
        %v4910 = vadd.f32 %v4523, %v4909
        %4911 = vmatprep.mubr.bf16.mxu0 0
        %4912 = vmatmul.mubr.bf16.gmra.mrb[0].mxu0 %v4583
        %v4913 = vpop.f32.mrb[0].mxu0
        %v4914 = vadd.f32 %v4528, %v4913
        %v4915 = vpop.f32.mrb[0].mxu0
        %v4916 = vadd.f32 %v4528, %v4915
        %v4917 = vpop.f32.mrb[0].mxu0
        %v4918 = vadd.f32 %v4533, %v4917
        %v4919 = vpop.f32.mrb[0].mxu0
        %v4920 = vadd.f32 %v4533, %v4919
        %4921 = vmatprep.mubr.bf16.mxu0 0
        %4922 = vmatmul.mubr.bf16.gmra.mrb[0].mxu0 %v4584
        %v4923 = vpop.f32.mrb[0].mxu0
        %v4924 = vadd.f32 %v4538, %v4923
        %v4925 = vpop.f32.mrb[0].mxu0
        %v4926 = vadd.f32 %v4538, %v4925
        %v4927 = vpop.f32.mrb[0].mxu0
        %v4928 = vadd.f32 %v4543, %v4927
        %v4929 = vpop.f32.mrb[0].mxu0
        %v4930 = vadd.f32 %v4543, %v4929
        %4931 = vdwg.mxu0
        %4932 = vmatprep.subr.bf16.mxu0 %v4374
        %4933 = vmatpush1.bf16.msra.mxu0 %v4373
        %4934 = vmatprep.subr.bf16.mxu0 %v4382
        %4935 = vmatpush1.bf16.msra.mxu0 %v4381
        %4936 = vmatprep.subr.bf16.mxu0 %v4390
        %4937 = vmatpush1.bf16.msra.mxu0 %v4389
        %4938 = vmatprep.subr.bf16.mxu0 %v4398
        %4939 = vmatpush1.bf16.msra.mxu0 %v4397
        %4940 = vmatprep.subr.bf16.mxu0 %v4406
        %4941 = vmatpush1.bf16.msra.mxu0 %v4405
        %4942 = vmatprep.subr.bf16.mxu0 %v4414
        %4943 = vmatpush1.bf16.msra.mxu0 %v4413
        %4944 = vmatprep.subr.bf16.mxu0 %v4422
        %4945 = vmatpush1.bf16.msra.mxu0 %v4421
        %4946 = vmatprep.subr.bf16.mxu0 %v4430
        %4947 = vmatpush1.bf16.msra.mxu0 %v4429
        %4948 = vmatprep.subr.bf16.mxu0 0
        %4949 = vmatpush1.bf16.msra.mxu0 0
        %4950 = vmatprep.subr.bf16.mxu0 0
        %4951 = vmatpush1.bf16.msra.mxu0 0
        %4952 = vmatprep.subr.bf16.mxu0 0
        %4953 = vmatpush1.bf16.msra.mxu0 0
        %4954 = vmatprep.subr.bf16.mxu0 0
        %4955 = vmatpush1.bf16.msra.mxu0 0
        %4956 = vmatprep.subr.bf16.mxu0 0
        %4957 = vmatpush1.bf16.msra.mxu0 0
        %4958 = vmatprep.subr.bf16.mxu0 0
        %4959 = vmatpush1.bf16.msra.mxu0 0
        %4960 = vmatprep.subr.bf16.mxu0 0
        %4961 = vmatpush1.bf16.msra.mxu0 0
        %4962 = vmatprep.subr.bf16.mxu0 0
        %4963 = vmatpush1.bf16.msra.mxu0 0
        %4964 = vmatprep.mubr.bf16.mxu0 0
        %4965 = vmatmul.mubr.bf16.gmra.mrb[0].mxu0 %v4577
        %v4966 = vpop.f32.mrb[0].mxu0
        %v4967 = vadd.f32 %v4468, %v4966
        %v4968 = vpop.f32.mrb[0].mxu0
        %v4969 = vadd.f32 %v4468, %v4968
        %v4970 = vpop.f32.mrb[0].mxu0
        %v4971 = vadd.f32 %v4473, %v4970
        %v4972 = vpop.f32.mrb[0].mxu0
        %v4973 = vadd.f32 %v4473, %v4972
        %4974 = vmatprep.mubr.bf16.mxu0 0
        %4975 = vmatmul.mubr.bf16.gmra.mrb[0].mxu0 %v4578
        %v4976 = vpop.f32.mrb[0].mxu0
        %v4977 = vadd.f32 %v4478, %v4976
        %v4978 = vpop.f32.mrb[0].mxu0
        %v4979 = vadd.f32 %v4478, %v4978
        %v4980 = vpop.f32.mrb[0].mxu0
        %v4981 = vadd.f32 %v4483, %v4980
        %v4982 = vpop.f32.mrb[0].mxu0
        %v4983 = vadd.f32 %v4483, %v4982
        %4984 = vmatprep.mubr.bf16.mxu0 0
        %4985 = vmatmul.mubr.bf16.gmra.mrb[0].mxu0 %v4579
        %v4986 = vpop.f32.mrb[0].mxu0
        %v4987 = vadd.f32 %v4488, %v4986
        %v4988 = vpop.f32.mrb[0].mxu0
        %v4989 = vadd.f32 %v4488, %v4988
        %v4990 = vpop.f32.mrb[0].mxu0
        %v4991 = vadd.f32 %v4493, %v4990
        %v4992 = vpop.f32.mrb[0].mxu0
        %v4993 = vadd.f32 %v4493, %v4992
        %4994 = vmatprep.mubr.bf16.mxu0 0
        %4995 = vmatmul.mubr.bf16.gmra.mrb[0].mxu0 %v4580
        %v4996 = vpop.f32.mrb[0].mxu0
        %v4997 = vadd.f32 %v4498, %v4996
        %v4998 = vpop.f32.mrb[0].mxu0
        %v4999 = vadd.f32 %v4498, %v4998
        %v5000 = vpop.f32.mrb[0].mxu0
        %v5001 = vadd.f32 %v4503, %v5000
        %v5002 = vpop.f32.mrb[0].mxu0
        %v5003 = vadd.f32 %v4503, %v5002
        %5004 = vmatprep.mubr.bf16.mxu0 0
        %5005 = vmatmul.mubr.bf16.gmra.mrb[0].mxu0 %v4581
        %v5006 = vpop.f32.mrb[0].mxu0
        %v5007 = vadd.f32 %v4508, %v5006
        %v5008 = vpop.f32.mrb[0].mxu0
        %v5009 = vadd.f32 %v4508, %v5008
        %v5010 = vpop.f32.mrb[0].mxu0
        %v5011 = vadd.f32 %v4513, %v5010
        %v5012 = vpop.f32.mrb[0].mxu0
        %v5013 = vadd.f32 %v4513, %v5012
        %5014 = vmatprep.mubr.bf16.mxu0 0
        %5015 = vmatmul.mubr.bf16.gmra.mrb[0].mxu0 %v4582
        %v5016 = vpop.f32.mrb[0].mxu0
        %v5017 = vadd.f32 %v4518, %v5016
        %v5018 = vpop.f32.mrb[0].mxu0
        %v5019 = vadd.f32 %v4518, %v5018
        %v5020 = vpop.f32.mrb[0].mxu0
        %v5021 = vadd.f32 %v4523, %v5020
        %v5022 = vpop.f32.mrb[0].mxu0
        %v5023 = vadd.f32 %v4523, %v5022
        %5024 = vmatprep.mubr.bf16.mxu0 0
        %5025 = vmatmul.mubr.bf16.gmra.mrb[0].mxu0 %v4583
        %v5026 = vpop.f32.mrb[0].mxu0
        %v5027 = vadd.f32 %v4528, %v5026
        %v5028 = vpop.f32.mrb[0].mxu0
        %v5029 = vadd.f32 %v4528, %v5028
        %v5030 = vpop.f32.mrb[0].mxu0
        %v5031 = vadd.f32 %v4533, %v5030
        %v5032 = vpop.f32.mrb[0].mxu0
        %v5033 = vadd.f32 %v4533, %v5032
        %5034 = vmatprep.mubr.bf16.mxu0 0
        %5035 = vmatmul.mubr.bf16.gmra.mrb[0].mxu0 %v4584
        %v5036 = vpop.f32.mrb[0].mxu0
        %v5037 = vadd.f32 %v4538, %v5036
        %v5038 = vpop.f32.mrb[0].mxu0
        %v5039 = vadd.f32 %v4538, %v5038
        %v5040 = vpop.f32.mrb[0].mxu0
        %v5041 = vadd.f32 %v4543, %v5040
        %v5042 = vpop.f32.mrb[0].mxu0
        %v5043 = vadd.f32 %v4543, %v5042
        %5044 = vdwg.mxu0
        %v5045 = vadd.f32 %v3305, %v4628
        %v5046 = vadd.f32 %v3306, %v4630
        %v5047 = vadd.f32 %v3307, %v4741
        %v5048 = vadd.f32 %v3308, %v4743
        %v5049 = vadd.f32 %v3309, %v4854
        %v5050 = vadd.f32 %v3310, %v4856
        %v5051 = vadd.f32 %v3311, %v4967
        %v5052 = vadd.f32 %v3312, %v4969
        %v5053 = vadd.f32 %v3313, %v4632
        %v5054 = vadd.f32 %v3314, %v4634
        %v5055 = vadd.f32 %v3315, %v4745
        %v5056 = vadd.f32 %v3316, %v4747
        %v5057 = vadd.f32 %v3317, %v4858
        %v5058 = vadd.f32 %v3318, %v4860
        %v5059 = vadd.f32 %v3319, %v4971
        %v5060 = vadd.f32 %v3320, %v4973
        %v5061 = vadd.f32 %v3321, %v4638
        %v5062 = vadd.f32 %v3322, %v4640
        %v5063 = vadd.f32 %v3323, %v4751
        %v5064 = vadd.f32 %v3324, %v4753
        %v5065 = vadd.f32 %v3325, %v4864
        %v5066 = vadd.f32 %v3326, %v4866
        %v5067 = vadd.f32 %v3327, %v4977
        %v5068 = vadd.f32 %v3328, %v4979
        %v5069 = vadd.f32 %v3329, %v4642
        %v5070 = vadd.f32 %v3330, %v4644
        %v5071 = vadd.f32 %v3331, %v4755
        %v5072 = vadd.f32 %v3332, %v4757
        %v5073 = vadd.f32 %v3333, %v4868
        %v5074 = vadd.f32 %v3334, %v4870
        %v5075 = vadd.f32 %v3335, %v4981
        %v5076 = vadd.f32 %v3336, %v4983
        %v5077 = vadd.f32 %v3337, %v4648
        %v5078 = vadd.f32 %v3338, %v4650
        %v5079 = vadd.f32 %v3339, %v4761
        %v5080 = vadd.f32 %v3340, %v4763
        %v5081 = vadd.f32 %v3341, %v4874
        %v5082 = vadd.f32 %v3342, %v4876
        %v5083 = vadd.f32 %v3343, %v4987
        %v5084 = vadd.f32 %v3344, %v4989
        %v5085 = vadd.f32 %v3345, %v4652
        %v5086 = vadd.f32 %v3346, %v4654
        %v5087 = vadd.f32 %v3347, %v4765
        %v5088 = vadd.f32 %v3348, %v4767
        %v5089 = vadd.f32 %v3349, %v4878
        %v5090 = vadd.f32 %v3350, %v4880
        %v5091 = vadd.f32 %v3351, %v4991
        %v5092 = vadd.f32 %v3352, %v4993
        %v5093 = vadd.f32 %v3353, %v4658
        %v5094 = vadd.f32 %v3354, %v4660
        %v5095 = vadd.f32 %v3355, %v4771
        %v5096 = vadd.f32 %v3356, %v4773
        %v5097 = vadd.f32 %v3357, %v4884
        %v5098 = vadd.f32 %v3358, %v4886
        %v5099 = vadd.f32 %v3359, %v4997
        %v5100 = vadd.f32 %v3360, %v4999
        %v5101 = vadd.f32 %v3361, %v4662
        %v5102 = vadd.f32 %v3362, %v4664
        %v5103 = vadd.f32 %v3363, %v4775
        %v5104 = vadd.f32 %v3364, %v4777
        %v5105 = vadd.f32 %v3365, %v4888
        %v5106 = vadd.f32 %v3366, %v4890
        %v5107 = vadd.f32 %v3367, %v5001
        %v5108 = vadd.f32 %v3368, %v5003
        %v5109 = vadd.f32 %v3369, %v4668
        %v5110 = vadd.f32 %v3370, %v4670
        %v5111 = vadd.f32 %v3371, %v4781
        %v5112 = vadd.f32 %v3372, %v4783
        %v5113 = vadd.f32 %v3373, %v4894
        %v5114 = vadd.f32 %v3374, %v4896
        %v5115 = vadd.f32 %v3375, %v5007
        %v5116 = vadd.f32 %v3376, %v5009
        %v5117 = vadd.f32 %v3377, %v4672
        %v5118 = vadd.f32 %v3378, %v4674
        %v5119 = vadd.f32 %v3379, %v4785
        %v5120 = vadd.f32 %v3380, %v4787
        %v5121 = vadd.f32 %v3381, %v4898
        %v5122 = vadd.f32 %v3382, %v4900
        %v5123 = vadd.f32 %v3383, %v5011
        %v5124 = vadd.f32 %v3384, %v5013
        %v5125 = vadd.f32 %v3385, %v4678
        %v5126 = vadd.f32 %v3386, %v4680
        %v5127 = vadd.f32 %v3387, %v4791
        %v5128 = vadd.f32 %v3388, %v4793
        %v5129 = vadd.f32 %v3389, %v4904
        %v5130 = vadd.f32 %v3390, %v4906
        %v5131 = vadd.f32 %v3391, %v5017
        %v5132 = vadd.f32 %v3392, %v5019
        %v5133 = vadd.f32 %v3393, %v4682
        %v5134 = vadd.f32 %v3394, %v4684
        %v5135 = vadd.f32 %v3395, %v4795
        %v5136 = vadd.f32 %v3396, %v4797
        %v5137 = vadd.f32 %v3397, %v4908
        %v5138 = vadd.f32 %v3398, %v4910
        %v5139 = vadd.f32 %v3399, %v5021
        %v5140 = vadd.f32 %v3400, %v5023
        %v5141 = vadd.f32 %v3401, %v4688
        %v5142 = vadd.f32 %v3402, %v4690
        %v5143 = vadd.f32 %v3403, %v4801
        %v5144 = vadd.f32 %v3404, %v4803
        %v5145 = vadd.f32 %v3405, %v4914
        %v5146 = vadd.f32 %v3406, %v4916
        %v5147 = vadd.f32 %v3407, %v5027
        %v5148 = vadd.f32 %v3408, %v5029
        %v5149 = vadd.f32 %v3409, %v4692
        %v5150 = vadd.f32 %v3410, %v4694
        %v5151 = vadd.f32 %v3411, %v4805
        %v5152 = vadd.f32 %v3412, %v4807
        %v5153 = vadd.f32 %v3413, %v4918
        %v5154 = vadd.f32 %v3414, %v4920
        %v5155 = vadd.f32 %v3415, %v5031
        %v5156 = vadd.f32 %v3416, %v5033
        %v5157 = vadd.f32 %v3417, %v4698
        %v5158 = vadd.f32 %v3418, %v4700
        %v5159 = vadd.f32 %v3419, %v4811
        %v5160 = vadd.f32 %v3420, %v4813
        %v5161 = vadd.f32 %v3421, %v4924
        %v5162 = vadd.f32 %v3422, %v4926
        %v5163 = vadd.f32 %v3423, %v5037
        %v5164 = vadd.f32 %v3424, %v5039
        %v5165 = vadd.f32 %v3425, %v4702
        %v5166 = vadd.f32 %v3426, %v4704
        %v5167 = vadd.f32 %v3427, %v4815
        %v5168 = vadd.f32 %v3428, %v4817
        %v5169 = vadd.f32 %v3429, %v4928
        %v5170 = vadd.f32 %v3430, %v4930
        %v5171 = vadd.f32 %v3431, %v5041
        %v5172 = vadd.f32 %v3432, %v5043
        %v5173 = vmax.f32 %v5045, 0.0
        %v5174 = vmax.f32 %v5046, 0.0
        %v5175 = vmax.f32 %v5047, 0.0
        %v5176 = vmax.f32 %v5048, 0.0
        %v5177 = vmax.f32 %v5049, 0.0
        %v5178 = vmax.f32 %v5050, 0.0
        %v5179 = vmax.f32 %v5051, 0.0
        %v5180 = vmax.f32 %v5052, 0.0
        %v5181 = vmax.f32 %v5053, 0.0
        %v5182 = vmax.f32 %v5054, 0.0
        %v5183 = vmax.f32 %v5055, 0.0
        %v5184 = vmax.f32 %v5056, 0.0
        %v5185 = vmax.f32 %v5057, 0.0
        %v5186 = vmax.f32 %v5058, 0.0
        %v5187 = vmax.f32 %v5059, 0.0
        %v5188 = vmax.f32 %v5060, 0.0
        %v5189 = vmax.f32 %v5061, 0.0
        %v5190 = vmax.f32 %v5062, 0.0
        %v5191 = vmax.f32 %v5063, 0.0
        %v5192 = vmax.f32 %v5064, 0.0
        %v5193 = vmax.f32 %v5065, 0.0
        %v5194 = vmax.f32 %v5066, 0.0
        %v5195 = vmax.f32 %v5067, 0.0
        %v5196 = vmax.f32 %v5068, 0.0
        %v5197 = vmax.f32 %v5069, 0.0
        %v5198 = vmax.f32 %v5070, 0.0
        %v5199 = vmax.f32 %v5071, 0.0
        %v5200 = vmax.f32 %v5072, 0.0
        %v5201 = vmax.f32 %v5073, 0.0
        %v5202 = vmax.f32 %v5074, 0.0
        %v5203 = vmax.f32 %v5075, 0.0
        %v5204 = vmax.f32 %v5076, 0.0
        %v5205 = vmax.f32 %v5077, 0.0
        %v5206 = vmax.f32 %v5078, 0.0
        %v5207 = vmax.f32 %v5079, 0.0
        %v5208 = vmax.f32 %v5080, 0.0
        %v5209 = vmax.f32 %v5081, 0.0
        %v5210 = vmax.f32 %v5082, 0.0
        %v5211 = vmax.f32 %v5083, 0.0
        %v5212 = vmax.f32 %v5084, 0.0
        %v5213 = vmax.f32 %v5085, 0.0
        %v5214 = vmax.f32 %v5086, 0.0
        %v5215 = vmax.f32 %v5087, 0.0
        %v5216 = vmax.f32 %v5088, 0.0
        %v5217 = vmax.f32 %v5089, 0.0
        %v5218 = vmax.f32 %v5090, 0.0
        %v5219 = vmax.f32 %v5091, 0.0
        %v5220 = vmax.f32 %v5092, 0.0
        %v5221 = vmax.f32 %v5093, 0.0
        %v5222 = vmax.f32 %v5094, 0.0
        %v5223 = vmax.f32 %v5095, 0.0
        %v5224 = vmax.f32 %v5096, 0.0
        %v5225 = vmax.f32 %v5097, 0.0
        %v5226 = vmax.f32 %v5098, 0.0
        %v5227 = vmax.f32 %v5099, 0.0
        %v5228 = vmax.f32 %v5100, 0.0
        %v5229 = vmax.f32 %v5101, 0.0
        %v5230 = vmax.f32 %v5102, 0.0
        %v5231 = vmax.f32 %v5103, 0.0
        %v5232 = vmax.f32 %v5104, 0.0
        %v5233 = vmax.f32 %v5105, 0.0
        %v5234 = vmax.f32 %v5106, 0.0
        %v5235 = vmax.f32 %v5107, 0.0
        %v5236 = vmax.f32 %v5108, 0.0
        %v5237 = vmax.f32 %v5109, 0.0
        %v5238 = vmax.f32 %v5110, 0.0
        %v5239 = vmax.f32 %v5111, 0.0
        %v5240 = vmax.f32 %v5112, 0.0
        %v5241 = vmax.f32 %v5113, 0.0
        %v5242 = vmax.f32 %v5114, 0.0
        %v5243 = vmax.f32 %v5115, 0.0
        %v5244 = vmax.f32 %v5116, 0.0
        %v5245 = vmax.f32 %v5117, 0.0
        %v5246 = vmax.f32 %v5118, 0.0
        %v5247 = vmax.f32 %v5119, 0.0
        %v5248 = vmax.f32 %v5120, 0.0
        %v5249 = vmax.f32 %v5121, 0.0
        %v5250 = vmax.f32 %v5122, 0.0
        %v5251 = vmax.f32 %v5123, 0.0
        %v5252 = vmax.f32 %v5124, 0.0
        %v5253 = vmax.f32 %v5125, 0.0
        %v5254 = vmax.f32 %v5126, 0.0
        %v5255 = vmax.f32 %v5127, 0.0
        %v5256 = vmax.f32 %v5128, 0.0
        %v5257 = vmax.f32 %v5129, 0.0
        %v5258 = vmax.f32 %v5130, 0.0
        %v5259 = vmax.f32 %v5131, 0.0
        %v5260 = vmax.f32 %v5132, 0.0
        %v5261 = vmax.f32 %v5133, 0.0
        %v5262 = vmax.f32 %v5134, 0.0
        %v5263 = vmax.f32 %v5135, 0.0
        %v5264 = vmax.f32 %v5136, 0.0
        %v5265 = vmax.f32 %v5137, 0.0
        %v5266 = vmax.f32 %v5138, 0.0
        %v5267 = vmax.f32 %v5139, 0.0
        %v5268 = vmax.f32 %v5140, 0.0
        %v5269 = vmax.f32 %v5141, 0.0
        %v5270 = vmax.f32 %v5142, 0.0
        %v5271 = vmax.f32 %v5143, 0.0
        %v5272 = vmax.f32 %v5144, 0.0
        %v5273 = vmax.f32 %v5145, 0.0
        %v5274 = vmax.f32 %v5146, 0.0
        %v5275 = vmax.f32 %v5147, 0.0
        %v5276 = vmax.f32 %v5148, 0.0
        %v5277 = vmax.f32 %v5149, 0.0
        %v5278 = vmax.f32 %v5150, 0.0
        %v5279 = vmax.f32 %v5151, 0.0
        %v5280 = vmax.f32 %v5152, 0.0
        %v5281 = vmax.f32 %v5153, 0.0
        %v5282 = vmax.f32 %v5154, 0.0
        %v5283 = vmax.f32 %v5155, 0.0
        %v5284 = vmax.f32 %v5156, 0.0
        %v5285 = vmax.f32 %v5157, 0.0
        %v5286 = vmax.f32 %v5158, 0.0
        %v5287 = vmax.f32 %v5159, 0.0
        %v5288 = vmax.f32 %v5160, 0.0
        %v5289 = vmax.f32 %v5161, 0.0
        %v5290 = vmax.f32 %v5162, 0.0
        %v5291 = vmax.f32 %v5163, 0.0
        %v5292 = vmax.f32 %v5164, 0.0
        %v5293 = vmax.f32 %v5165, 0.0
        %v5294 = vmax.f32 %v5166, 0.0
        %v5295 = vmax.f32 %v5167, 0.0
        %v5296 = vmax.f32 %v5168, 0.0
        %v5297 = vmax.f32 %v5169, 0.0
        %v5298 = vmax.f32 %v5170, 0.0
        %v5299 = vmax.f32 %v5171, 0.0
        %v5300 = vmax.f32 %v5172, 0.0
        %v5301 = vpack.c.bf16 %v5181, %v5173
        %v5302 = vpack.c.bf16 %v5182, %v5174
        %v5303 = vpack.c.bf16 %v5183, %v5175
        %v5304 = vpack.c.bf16 %v5184, %v5176
        %v5305 = vpack.c.bf16 %v5185, %v5177
        %v5306 = vpack.c.bf16 %v5186, %v5178
        %v5307 = vpack.c.bf16 %v5187, %v5179
        %v5308 = vpack.c.bf16 %v5188, %v5180
        %v5309 = vpack.c.bf16 %v5197, %v5189
        %v5310 = vpack.c.bf16 %v5198, %v5190
        %v5311 = vpack.c.bf16 %v5199, %v5191
        %v5312 = vpack.c.bf16 %v5200, %v5192
        %v5313 = vpack.c.bf16 %v5201, %v5193
        %v5314 = vpack.c.bf16 %v5202, %v5194
        %v5315 = vpack.c.bf16 %v5203, %v5195
        %v5316 = vpack.c.bf16 %v5204, %v5196
        %v5317 = vpack.c.bf16 %v5213, %v5205
        %v5318 = vpack.c.bf16 %v5214, %v5206
        %v5319 = vpack.c.bf16 %v5215, %v5207
        %v5320 = vpack.c.bf16 %v5216, %v5208
        %v5321 = vpack.c.bf16 %v5217, %v5209
        %v5322 = vpack.c.bf16 %v5218, %v5210
        %v5323 = vpack.c.bf16 %v5219, %v5211
        %v5324 = vpack.c.bf16 %v5220, %v5212
        %v5325 = vpack.c.bf16 %v5229, %v5221
        %v5326 = vpack.c.bf16 %v5230, %v5222
        %v5327 = vpack.c.bf16 %v5231, %v5223
        %v5328 = vpack.c.bf16 %v5232, %v5224
        %v5329 = vpack.c.bf16 %v5233, %v5225
        %v5330 = vpack.c.bf16 %v5234, %v5226
        %v5331 = vpack.c.bf16 %v5235, %v5227
        %v5332 = vpack.c.bf16 %v5236, %v5228
        %v5333 = vpack.c.bf16 %v5245, %v5237
        %v5334 = vpack.c.bf16 %v5246, %v5238
        %v5335 = vpack.c.bf16 %v5247, %v5239
        %v5336 = vpack.c.bf16 %v5248, %v5240
        %v5337 = vpack.c.bf16 %v5249, %v5241
        %v5338 = vpack.c.bf16 %v5250, %v5242
        %v5339 = vpack.c.bf16 %v5251, %v5243
        %v5340 = vpack.c.bf16 %v5252, %v5244
        %v5341 = vpack.c.bf16 %v5261, %v5253
        %v5342 = vpack.c.bf16 %v5262, %v5254
        %v5343 = vpack.c.bf16 %v5263, %v5255
        %v5344 = vpack.c.bf16 %v5264, %v5256
        %v5345 = vpack.c.bf16 %v5265, %v5257
        %v5346 = vpack.c.bf16 %v5266, %v5258
        %v5347 = vpack.c.bf16 %v5267, %v5259
        %v5348 = vpack.c.bf16 %v5268, %v5260
        %v5349 = vpack.c.bf16 %v5277, %v5269
        %v5350 = vpack.c.bf16 %v5278, %v5270
        %v5351 = vpack.c.bf16 %v5279, %v5271
        %v5352 = vpack.c.bf16 %v5280, %v5272
        %v5353 = vpack.c.bf16 %v5281, %v5273
        %v5354 = vpack.c.bf16 %v5282, %v5274
        %v5355 = vpack.c.bf16 %v5283, %v5275
        %v5356 = vpack.c.bf16 %v5284, %v5276
        %v5357 = vpack.c.bf16 %v5293, %v5285
        %v5358 = vpack.c.bf16 %v5294, %v5286
        %v5359 = vpack.c.bf16 %v5295, %v5287
        %v5360 = vpack.c.bf16 %v5296, %v5288
        %v5361 = vpack.c.bf16 %v5297, %v5289
        %v5362 = vpack.c.bf16 %v5298, %v5290
        %v5363 = vpack.c.bf16 %v5299, %v5291
        %v5364 = vpack.c.bf16 %v5300, %v5292
        %s5365 = scalar_lea.vmem %s3, 128
        %v5366 = vld [vmem:[%s5365] sm:$0xf]
        %v5367 = vld [vmem:[%s5365 + $0x4] sm:$0xf]
        %v5368 = vld [vmem:[%s5365 + $0x8] sm:$0xf]
        %v5369 = vld [vmem:[%s5365 + $0xc] sm:$0xf]
        %v5370 = vld [vmem:[%s5365 + $0x10] sm:$0xf]
        %v5371 = vld [vmem:[%s5365 + $0x14] sm:$0xf]
        %v5372 = vld [vmem:[%s5365 + $0x18] sm:$0xf]
        %v5373 = vld [vmem:[%s5365 + $0x1c] sm:$0xf]
        %v5374 = vld [vmem:[%s5365 + $0x20] sm:$0xf]
        %v5375 = vld [vmem:[%s5365 + $0x24] sm:$0xf]
        %v5376 = vld [vmem:[%s5365 + $0x28] sm:$0xf]
        %v5377 = vld [vmem:[%s5365 + $0x2c] sm:$0xf]
        %v5378 = vld [vmem:[%s5365 + $0x30] sm:$0xf]
        %v5379 = vld [vmem:[%s5365 + $0x34] sm:$0xf]
        %v5380 = vld [vmem:[%s5365 + $0x38] sm:$0xf]
        %v5381 = vld [vmem:[%s5365 + $0x3c] sm:$0xf]
        %s5382 = scalar_lea.vmem %s4, 256
        %v5383 = vld [vmem:[%s5382] sm:$0xff]
        %v5384 = vld [vmem:[%s5382 + $0x8] sm:$0xff]
        %v5385 = vld [vmem:[%s5382 + $0x10] sm:$0xff]
        %v5386 = vld [vmem:[%s5382 + $0x18] sm:$0xff]
        %v5387 = vld [vmem:[%s5382 + $0x20] sm:$0xff]
        %v5388 = vld [vmem:[%s5382 + $0x28] sm:$0xff]
        %v5389 = vld [vmem:[%s5382 + $0x30] sm:$0xff]
        %v5390 = vld [vmem:[%s5382 + $0x38] sm:$0xff]
        %v5391 = vld [vmem:[%s5382 + $0x40] sm:$0xff]
        %v5392 = vld [vmem:[%s5382 + $0x48] sm:$0xff]
        %v5393 = vld [vmem:[%s5382 + $0x50] sm:$0xff]
        %v5394 = vld [vmem:[%s5382 + $0x58] sm:$0xff]
        %v5395 = vld [vmem:[%s5382 + $0x60] sm:$0xff]
        %v5396 = vld [vmem:[%s5382 + $0x68] sm:$0xff]
        %v5397 = vld [vmem:[%s5382 + $0x70] sm:$0xff]
        %v5398 = vld [vmem:[%s5382 + $0x78] sm:$0xff]
        %5400 = vset.pattern.permute.xlu0 0
        %5401 = vperm.xlu0 %5400, %v5383
        %v5402 = vpop.permute.xlu0 %5401
        %5405 = vset.pattern.permute.xlu0 0
        %5406 = vperm.xlu0 %5405, %v5384
        %v5407 = vpop.permute.xlu0 %5406
        %5410 = vset.pattern.permute.xlu0 0
        %5411 = vperm.xlu0 %5410, %v5385
        %v5412 = vpop.permute.xlu0 %5411
        %5415 = vset.pattern.permute.xlu0 0
        %5416 = vperm.xlu0 %5415, %v5386
        %v5417 = vpop.permute.xlu0 %5416
        %5420 = vset.pattern.permute.xlu0 0
        %5421 = vperm.xlu0 %5420, %v5387
        %v5422 = vpop.permute.xlu0 %5421
        %5425 = vset.pattern.permute.xlu0 0
        %5426 = vperm.xlu0 %5425, %v5388
        %v5427 = vpop.permute.xlu0 %5426
        %5430 = vset.pattern.permute.xlu0 0
        %5431 = vperm.xlu0 %5430, %v5389
        %v5432 = vpop.permute.xlu0 %5431
        %5435 = vset.pattern.permute.xlu0 0
        %5436 = vperm.xlu0 %5435, %v5390
        %v5437 = vpop.permute.xlu0 %5436
        %5440 = vset.pattern.permute.xlu0 0
        %5441 = vperm.xlu0 %5440, %v5391
        %v5442 = vpop.permute.xlu0 %5441
        %5445 = vset.pattern.permute.xlu0 0
        %5446 = vperm.xlu0 %5445, %v5392
        %v5447 = vpop.permute.xlu0 %5446
        %5450 = vset.pattern.permute.xlu0 0
        %5451 = vperm.xlu0 %5450, %v5393
        %v5452 = vpop.permute.xlu0 %5451
        %5455 = vset.pattern.permute.xlu0 0
        %5456 = vperm.xlu0 %5455, %v5394
        %v5457 = vpop.permute.xlu0 %5456
        %5460 = vset.pattern.permute.xlu0 0
        %5461 = vperm.xlu0 %5460, %v5395
        %v5462 = vpop.permute.xlu0 %5461
        %5465 = vset.pattern.permute.xlu0 0
        %5466 = vperm.xlu0 %5465, %v5396
        %v5467 = vpop.permute.xlu0 %5466
        %5470 = vset.pattern.permute.xlu0 0
        %5471 = vperm.xlu0 %5470, %v5397
        %v5472 = vpop.permute.xlu0 %5471
        %5475 = vset.pattern.permute.xlu0 0
        %5476 = vperm.xlu0 %5475, %v5398
        %v5477 = vpop.permute.xlu0 %5476
        %v5495 = vunpack.c.l.b16 %v5366
        %v5496 = vunpack.c.l.b16 %v5367
        %v5497 = vunpack.c.l.b16 %v5368
        %v5498 = vunpack.c.l.b16 %v5369
        %v5499 = vunpack.c.l.b16 %v5370
        %v5500 = vunpack.c.l.b16 %v5371
        %v5501 = vunpack.c.l.b16 %v5372
        %v5502 = vunpack.c.l.b16 %v5373
        %v5503 = vunpack.c.l.b16 %v5374
        %v5504 = vunpack.c.l.b16 %v5375
        %v5505 = vunpack.c.l.b16 %v5376
        %v5506 = vunpack.c.l.b16 %v5377
        %v5507 = vunpack.c.l.b16 %v5378
        %v5508 = vunpack.c.l.b16 %v5379
        %v5509 = vunpack.c.l.b16 %v5380
        %v5510 = vunpack.c.l.b16 %v5381
        %v5511 = vpack.c.b16 %v5496, %v5495
        %v5512 = vpack.c.b16 %v5498, %v5497
        %v5513 = vpack.c.b16 %v5500, %v5499
        %v5514 = vpack.c.b16 %v5502, %v5501
        %v5515 = vpack.c.b16 %v5504, %v5503
        %v5516 = vpack.c.b16 %v5506, %v5505
        %v5517 = vpack.c.b16 %v5508, %v5507
        %v5518 = vpack.c.b16 %v5510, %v5509
        %5527 = vmatprep.subr.bf16.mxu0 %v5302
        %5528 = vmatpush1.bf16.msra.mxu0 %v5301
        %5529 = vmatprep.subr.bf16.mxu0 %v5310
        %5530 = vmatpush1.bf16.msra.mxu0 %v5309
        %5531 = vmatprep.subr.bf16.mxu0 %v5318
        %5532 = vmatpush1.bf16.msra.mxu0 %v5317
        %5533 = vmatprep.subr.bf16.mxu0 %v5326
        %5534 = vmatpush1.bf16.msra.mxu0 %v5325
        %5535 = vmatprep.subr.bf16.mxu0 %v5334
        %5536 = vmatpush1.bf16.msra.mxu0 %v5333
        %5537 = vmatprep.subr.bf16.mxu0 %v5342
        %5538 = vmatpush1.bf16.msra.mxu0 %v5341
        %5539 = vmatprep.subr.bf16.mxu0 %v5350
        %5540 = vmatpush1.bf16.msra.mxu0 %v5349
        %5541 = vmatprep.subr.bf16.mxu0 %v5358
        %5542 = vmatpush1.bf16.msra.mxu0 %v5357
        %5543 = vmatprep.subr.bf16.mxu0 0
        %5544 = vmatpush1.bf16.msra.mxu0 0
        %5545 = vmatprep.subr.bf16.mxu0 0
        %5546 = vmatpush1.bf16.msra.mxu0 0
        %5547 = vmatprep.subr.bf16.mxu0 0
        %5548 = vmatpush1.bf16.msra.mxu0 0
        %5549 = vmatprep.subr.bf16.mxu0 0
        %5550 = vmatpush1.bf16.msra.mxu0 0
        %5551 = vmatprep.subr.bf16.mxu0 0
        %5552 = vmatpush1.bf16.msra.mxu0 0
        %5553 = vmatprep.subr.bf16.mxu0 0
        %5554 = vmatpush1.bf16.msra.mxu0 0
        %5555 = vmatprep.subr.bf16.mxu0 0
        %5556 = vmatpush1.bf16.msra.mxu0 0
        %5557 = vmatprep.subr.bf16.mxu0 0
        %5558 = vmatpush1.bf16.msra.mxu0 0
        %5559 = vmatprep.mubr.bf16.mxu0 0
        %5560 = vmatmul.mubr.bf16.gmra.mrb[0].mxu0 %v5511
        %v5561 = vpop.f32.mrb[0].mxu0
        %v5562 = vadd.f32 %v5402, %v5561
        %v5563 = vpop.f32.mrb[0].mxu0
        %v5564 = vadd.f32 %v5402, %v5563
        %v5565 = vpop.f32.mrb[0].mxu0
        %v5566 = vadd.f32 %v5407, %v5565
        %v5567 = vpop.f32.mrb[0].mxu0
        %v5568 = vadd.f32 %v5407, %v5567
        %5569 = vmatprep.mubr.bf16.mxu0 0
        %5570 = vmatmul.mubr.bf16.gmra.mrb[0].mxu0 %v5512
        %v5571 = vpop.f32.mrb[0].mxu0
        %v5572 = vadd.f32 %v5412, %v5571
        %v5573 = vpop.f32.mrb[0].mxu0
        %v5574 = vadd.f32 %v5412, %v5573
        %v5575 = vpop.f32.mrb[0].mxu0
        %v5576 = vadd.f32 %v5417, %v5575
        %v5577 = vpop.f32.mrb[0].mxu0
        %v5578 = vadd.f32 %v5417, %v5577
        %5579 = vmatprep.mubr.bf16.mxu0 0
        %5580 = vmatmul.mubr.bf16.gmra.mrb[0].mxu0 %v5513
        %v5581 = vpop.f32.mrb[0].mxu0
        %v5582 = vadd.f32 %v5422, %v5581
        %v5583 = vpop.f32.mrb[0].mxu0
        %v5584 = vadd.f32 %v5422, %v5583
        %v5585 = vpop.f32.mrb[0].mxu0
        %v5586 = vadd.f32 %v5427, %v5585
        %v5587 = vpop.f32.mrb[0].mxu0
        %v5588 = vadd.f32 %v5427, %v5587
        %5589 = vmatprep.mubr.bf16.mxu0 0
        %5590 = vmatmul.mubr.bf16.gmra.mrb[0].mxu0 %v5514
        %v5591 = vpop.f32.mrb[0].mxu0
        %v5592 = vadd.f32 %v5432, %v5591
        %v5593 = vpop.f32.mrb[0].mxu0
        %v5594 = vadd.f32 %v5432, %v5593
        %v5595 = vpop.f32.mrb[0].mxu0
        %v5596 = vadd.f32 %v5437, %v5595
        %v5597 = vpop.f32.mrb[0].mxu0
        %v5598 = vadd.f32 %v5437, %v5597
        %5599 = vmatprep.mubr.bf16.mxu0 0
        %5600 = vmatmul.mubr.bf16.gmra.mrb[0].mxu0 %v5515
        %v5601 = vpop.f32.mrb[0].mxu0
        %v5602 = vadd.f32 %v5442, %v5601
        %v5603 = vpop.f32.mrb[0].mxu0
        %v5604 = vadd.f32 %v5442, %v5603
        %v5605 = vpop.f32.mrb[0].mxu0
        %v5606 = vadd.f32 %v5447, %v5605
        %v5607 = vpop.f32.mrb[0].mxu0
        %v5608 = vadd.f32 %v5447, %v5607
        %5609 = vmatprep.mubr.bf16.mxu0 0
        %5610 = vmatmul.mubr.bf16.gmra.mrb[0].mxu0 %v5516
        %v5611 = vpop.f32.mrb[0].mxu0
        %v5612 = vadd.f32 %v5452, %v5611
        %v5613 = vpop.f32.mrb[0].mxu0
        %v5614 = vadd.f32 %v5452, %v5613
        %v5615 = vpop.f32.mrb[0].mxu0
        %v5616 = vadd.f32 %v5457, %v5615
        %v5617 = vpop.f32.mrb[0].mxu0
        %v5618 = vadd.f32 %v5457, %v5617
        %5619 = vmatprep.mubr.bf16.mxu0 0
        %5620 = vmatmul.mubr.bf16.gmra.mrb[0].mxu0 %v5517
        %v5621 = vpop.f32.mrb[0].mxu0
        %v5622 = vadd.f32 %v5462, %v5621
        %v5623 = vpop.f32.mrb[0].mxu0
        %v5624 = vadd.f32 %v5462, %v5623
        %v5625 = vpop.f32.mrb[0].mxu0
        %v5626 = vadd.f32 %v5467, %v5625
        %v5627 = vpop.f32.mrb[0].mxu0
        %v5628 = vadd.f32 %v5467, %v5627
        %5629 = vmatprep.mubr.bf16.mxu0 0
        %5630 = vmatmul.mubr.bf16.gmra.mrb[0].mxu0 %v5518
        %v5631 = vpop.f32.mrb[0].mxu0
        %v5632 = vadd.f32 %v5472, %v5631
        %v5633 = vpop.f32.mrb[0].mxu0
        %v5634 = vadd.f32 %v5472, %v5633
        %v5635 = vpop.f32.mrb[0].mxu0
        %v5636 = vadd.f32 %v5477, %v5635
        %v5637 = vpop.f32.mrb[0].mxu0
        %v5638 = vadd.f32 %v5477, %v5637
        %5639 = vdwg.mxu0
        %5640 = vmatprep.subr.bf16.mxu0 %v5304
        %5641 = vmatpush1.bf16.msra.mxu0 %v5303
        %5642 = vmatprep.subr.bf16.mxu0 %v5312
        %5643 = vmatpush1.bf16.msra.mxu0 %v5311
        %5644 = vmatprep.subr.bf16.mxu0 %v5320
        %5645 = vmatpush1.bf16.msra.mxu0 %v5319
        %5646 = vmatprep.subr.bf16.mxu0 %v5328
        %5647 = vmatpush1.bf16.msra.mxu0 %v5327
        %5648 = vmatprep.subr.bf16.mxu0 %v5336
        %5649 = vmatpush1.bf16.msra.mxu0 %v5335
        %5650 = vmatprep.subr.bf16.mxu0 %v5344
        %5651 = vmatpush1.bf16.msra.mxu0 %v5343
        %5652 = vmatprep.subr.bf16.mxu0 %v5352
        %5653 = vmatpush1.bf16.msra.mxu0 %v5351
        %5654 = vmatprep.subr.bf16.mxu0 %v5360
        %5655 = vmatpush1.bf16.msra.mxu0 %v5359
        %5656 = vmatprep.subr.bf16.mxu0 0
        %5657 = vmatpush1.bf16.msra.mxu0 0
        %5658 = vmatprep.subr.bf16.mxu0 0
        %5659 = vmatpush1.bf16.msra.mxu0 0
        %5660 = vmatprep.subr.bf16.mxu0 0
        %5661 = vmatpush1.bf16.msra.mxu0 0
        %5662 = vmatprep.subr.bf16.mxu0 0
        %5663 = vmatpush1.bf16.msra.mxu0 0
        %5664 = vmatprep.subr.bf16.mxu0 0
        %5665 = vmatpush1.bf16.msra.mxu0 0
        %5666 = vmatprep.subr.bf16.mxu0 0
        %5667 = vmatpush1.bf16.msra.mxu0 0
        %5668 = vmatprep.subr.bf16.mxu0 0
        %5669 = vmatpush1.bf16.msra.mxu0 0
        %5670 = vmatprep.subr.bf16.mxu0 0
        %5671 = vmatpush1.bf16.msra.mxu0 0
        %5672 = vmatprep.mubr.bf16.mxu0 0
        %5673 = vmatmul.mubr.bf16.gmra.mrb[0].mxu0 %v5511
        %v5674 = vpop.f32.mrb[0].mxu0
        %v5675 = vadd.f32 %v5402, %v5674
        %v5676 = vpop.f32.mrb[0].mxu0
        %v5677 = vadd.f32 %v5402, %v5676
        %v5678 = vpop.f32.mrb[0].mxu0
        %v5679 = vadd.f32 %v5407, %v5678
        %v5680 = vpop.f32.mrb[0].mxu0
        %v5681 = vadd.f32 %v5407, %v5680
        %5682 = vmatprep.mubr.bf16.mxu0 0
        %5683 = vmatmul.mubr.bf16.gmra.mrb[0].mxu0 %v5512
        %v5684 = vpop.f32.mrb[0].mxu0
        %v5685 = vadd.f32 %v5412, %v5684
        %v5686 = vpop.f32.mrb[0].mxu0
        %v5687 = vadd.f32 %v5412, %v5686
        %v5688 = vpop.f32.mrb[0].mxu0
        %v5689 = vadd.f32 %v5417, %v5688
        %v5690 = vpop.f32.mrb[0].mxu0
        %v5691 = vadd.f32 %v5417, %v5690
        %5692 = vmatprep.mubr.bf16.mxu0 0
        %5693 = vmatmul.mubr.bf16.gmra.mrb[0].mxu0 %v5513
        %v5694 = vpop.f32.mrb[0].mxu0
        %v5695 = vadd.f32 %v5422, %v5694
        %v5696 = vpop.f32.mrb[0].mxu0
        %v5697 = vadd.f32 %v5422, %v5696
        %v5698 = vpop.f32.mrb[0].mxu0
        %v5699 = vadd.f32 %v5427, %v5698
        %v5700 = vpop.f32.mrb[0].mxu0
        %v5701 = vadd.f32 %v5427, %v5700
        %5702 = vmatprep.mubr.bf16.mxu0 0
        %5703 = vmatmul.mubr.bf16.gmra.mrb[0].mxu0 %v5514
        %v5704 = vpop.f32.mrb[0].mxu0
        %v5705 = vadd.f32 %v5432, %v5704
        %v5706 = vpop.f32.mrb[0].mxu0
        %v5707 = vadd.f32 %v5432, %v5706
        %v5708 = vpop.f32.mrb[0].mxu0
        %v5709 = vadd.f32 %v5437, %v5708
        %v5710 = vpop.f32.mrb[0].mxu0
        %v5711 = vadd.f32 %v5437, %v5710
        %5712 = vmatprep.mubr.bf16.mxu0 0
        %5713 = vmatmul.mubr.bf16.gmra.mrb[0].mxu0 %v5515
        %v5714 = vpop.f32.mrb[0].mxu0
        %v5715 = vadd.f32 %v5442, %v5714
        %v5716 = vpop.f32.mrb[0].mxu0
        %v5717 = vadd.f32 %v5442, %v5716
        %v5718 = vpop.f32.mrb[0].mxu0
        %v5719 = vadd.f32 %v5447, %v5718
        %v5720 = vpop.f32.mrb[0].mxu0
        %v5721 = vadd.f32 %v5447, %v5720
        %5722 = vmatprep.mubr.bf16.mxu0 0
        %5723 = vmatmul.mubr.bf16.gmra.mrb[0].mxu0 %v5516
        %v5724 = vpop.f32.mrb[0].mxu0
        %v5725 = vadd.f32 %v5452, %v5724
        %v5726 = vpop.f32.mrb[0].mxu0
        %v5727 = vadd.f32 %v5452, %v5726
        %v5728 = vpop.f32.mrb[0].mxu0
        %v5729 = vadd.f32 %v5457, %v5728
        %v5730 = vpop.f32.mrb[0].mxu0
        %v5731 = vadd.f32 %v5457, %v5730
        %5732 = vmatprep.mubr.bf16.mxu0 0
        %5733 = vmatmul.mubr.bf16.gmra.mrb[0].mxu0 %v5517
        %v5734 = vpop.f32.mrb[0].mxu0
        %v5735 = vadd.f32 %v5462, %v5734
        %v5736 = vpop.f32.mrb[0].mxu0
        %v5737 = vadd.f32 %v5462, %v5736
        %v5738 = vpop.f32.mrb[0].mxu0
        %v5739 = vadd.f32 %v5467, %v5738
        %v5740 = vpop.f32.mrb[0].mxu0
        %v5741 = vadd.f32 %v5467, %v5740
        %5742 = vmatprep.mubr.bf16.mxu0 0
        %5743 = vmatmul.mubr.bf16.gmra.mrb[0].mxu0 %v5518
        %v5744 = vpop.f32.mrb[0].mxu0
        %v5745 = vadd.f32 %v5472, %v5744
        %v5746 = vpop.f32.mrb[0].mxu0
        %v5747 = vadd.f32 %v5472, %v5746
        %v5748 = vpop.f32.mrb[0].mxu0
        %v5749 = vadd.f32 %v5477, %v5748
        %v5750 = vpop.f32.mrb[0].mxu0
        %v5751 = vadd.f32 %v5477, %v5750
        %5752 = vdwg.mxu0
        %5753 = vmatprep.subr.bf16.mxu0 %v5306
        %5754 = vmatpush1.bf16.msra.mxu0 %v5305
        %5755 = vmatprep.subr.bf16.mxu0 %v5314
        %5756 = vmatpush1.bf16.msra.mxu0 %v5313
        %5757 = vmatprep.subr.bf16.mxu0 %v5322
        %5758 = vmatpush1.bf16.msra.mxu0 %v5321
        %5759 = vmatprep.subr.bf16.mxu0 %v5330
        %5760 = vmatpush1.bf16.msra.mxu0 %v5329
        %5761 = vmatprep.subr.bf16.mxu0 %v5338
        %5762 = vmatpush1.bf16.msra.mxu0 %v5337
        %5763 = vmatprep.subr.bf16.mxu0 %v5346
        %5764 = vmatpush1.bf16.msra.mxu0 %v5345
        %5765 = vmatprep.subr.bf16.mxu0 %v5354
        %5766 = vmatpush1.bf16.msra.mxu0 %v5353
        %5767 = vmatprep.subr.bf16.mxu0 %v5362
        %5768 = vmatpush1.bf16.msra.mxu0 %v5361
        %5769 = vmatprep.subr.bf16.mxu0 0
        %5770 = vmatpush1.bf16.msra.mxu0 0
        %5771 = vmatprep.subr.bf16.mxu0 0
        %5772 = vmatpush1.bf16.msra.mxu0 0
        %5773 = vmatprep.subr.bf16.mxu0 0
        %5774 = vmatpush1.bf16.msra.mxu0 0
        %5775 = vmatprep.subr.bf16.mxu0 0
        %5776 = vmatpush1.bf16.msra.mxu0 0
        %5777 = vmatprep.subr.bf16.mxu0 0
        %5778 = vmatpush1.bf16.msra.mxu0 0
        %5779 = vmatprep.subr.bf16.mxu0 0
        %5780 = vmatpush1.bf16.msra.mxu0 0
        %5781 = vmatprep.subr.bf16.mxu0 0
        %5782 = vmatpush1.bf16.msra.mxu0 0
        %5783 = vmatprep.subr.bf16.mxu0 0
        %5784 = vmatpush1.bf16.msra.mxu0 0
        %5785 = vmatprep.mubr.bf16.mxu0 0
        %5786 = vmatmul.mubr.bf16.gmra.mrb[0].mxu0 %v5511
        %v5787 = vpop.f32.mrb[0].mxu0
        %v5788 = vadd.f32 %v5402, %v5787
        %v5789 = vpop.f32.mrb[0].mxu0
        %v5790 = vadd.f32 %v5402, %v5789
        %v5791 = vpop.f32.mrb[0].mxu0
        %v5792 = vadd.f32 %v5407, %v5791
        %v5793 = vpop.f32.mrb[0].mxu0
        %v5794 = vadd.f32 %v5407, %v5793
        %5795 = vmatprep.mubr.bf16.mxu0 0
        %5796 = vmatmul.mubr.bf16.gmra.mrb[0].mxu0 %v5512
        %v5797 = vpop.f32.mrb[0].mxu0
        %v5798 = vadd.f32 %v5412, %v5797
        %v5799 = vpop.f32.mrb[0].mxu0
        %v5800 = vadd.f32 %v5412, %v5799
        %v5801 = vpop.f32.mrb[0].mxu0
        %v5802 = vadd.f32 %v5417, %v5801
        %v5803 = vpop.f32.mrb[0].mxu0
        %v5804 = vadd.f32 %v5417, %v5803
        %5805 = vmatprep.mubr.bf16.mxu0 0
        %5806 = vmatmul.mubr.bf16.gmra.mrb[0].mxu0 %v5513
        %v5807 = vpop.f32.mrb[0].mxu0
        %v5808 = vadd.f32 %v5422, %v5807
        %v5809 = vpop.f32.mrb[0].mxu0
        %v5810 = vadd.f32 %v5422, %v5809
        %v5811 = vpop.f32.mrb[0].mxu0
        %v5812 = vadd.f32 %v5427, %v5811
        %v5813 = vpop.f32.mrb[0].mxu0
        %v5814 = vadd.f32 %v5427, %v5813
        %5815 = vmatprep.mubr.bf16.mxu0 0
        %5816 = vmatmul.mubr.bf16.gmra.mrb[0].mxu0 %v5514
        %v5817 = vpop.f32.mrb[0].mxu0
        %v5818 = vadd.f32 %v5432, %v5817
        %v5819 = vpop.f32.mrb[0].mxu0
        %v5820 = vadd.f32 %v5432, %v5819
        %v5821 = vpop.f32.mrb[0].mxu0
        %v5822 = vadd.f32 %v5437, %v5821
        %v5823 = vpop.f32.mrb[0].mxu0
        %v5824 = vadd.f32 %v5437, %v5823
        %5825 = vmatprep.mubr.bf16.mxu0 0
        %5826 = vmatmul.mubr.bf16.gmra.mrb[0].mxu0 %v5515
        %v5827 = vpop.f32.mrb[0].mxu0
        %v5828 = vadd.f32 %v5442, %v5827
        %v5829 = vpop.f32.mrb[0].mxu0
        %v5830 = vadd.f32 %v5442, %v5829
        %v5831 = vpop.f32.mrb[0].mxu0
        %v5832 = vadd.f32 %v5447, %v5831
        %v5833 = vpop.f32.mrb[0].mxu0
        %v5834 = vadd.f32 %v5447, %v5833
        %5835 = vmatprep.mubr.bf16.mxu0 0
        %5836 = vmatmul.mubr.bf16.gmra.mrb[0].mxu0 %v5516
        %v5837 = vpop.f32.mrb[0].mxu0
        %v5838 = vadd.f32 %v5452, %v5837
        %v5839 = vpop.f32.mrb[0].mxu0
        %v5840 = vadd.f32 %v5452, %v5839
        %v5841 = vpop.f32.mrb[0].mxu0
        %v5842 = vadd.f32 %v5457, %v5841
        %v5843 = vpop.f32.mrb[0].mxu0
        %v5844 = vadd.f32 %v5457, %v5843
        %5845 = vmatprep.mubr.bf16.mxu0 0
        %5846 = vmatmul.mubr.bf16.gmra.mrb[0].mxu0 %v5517
        %v5847 = vpop.f32.mrb[0].mxu0
        %v5848 = vadd.f32 %v5462, %v5847
        %v5849 = vpop.f32.mrb[0].mxu0
        %v5850 = vadd.f32 %v5462, %v5849
        %v5851 = vpop.f32.mrb[0].mxu0
        %v5852 = vadd.f32 %v5467, %v5851
        %v5853 = vpop.f32.mrb[0].mxu0
        %v5854 = vadd.f32 %v5467, %v5853
        %5855 = vmatprep.mubr.bf16.mxu0 0
        %5856 = vmatmul.mubr.bf16.gmra.mrb[0].mxu0 %v5518
        %v5857 = vpop.f32.mrb[0].mxu0
        %v5858 = vadd.f32 %v5472, %v5857
        %v5859 = vpop.f32.mrb[0].mxu0
        %v5860 = vadd.f32 %v5472, %v5859
        %v5861 = vpop.f32.mrb[0].mxu0
        %v5862 = vadd.f32 %v5477, %v5861
        %v5863 = vpop.f32.mrb[0].mxu0
        %v5864 = vadd.f32 %v5477, %v5863
        %5865 = vdwg.mxu0
        %5866 = vmatprep.subr.bf16.mxu0 %v5308
        %5867 = vmatpush1.bf16.msra.mxu0 %v5307
        %5868 = vmatprep.subr.bf16.mxu0 %v5316
        %5869 = vmatpush1.bf16.msra.mxu0 %v5315
        %5870 = vmatprep.subr.bf16.mxu0 %v5324
        %5871 = vmatpush1.bf16.msra.mxu0 %v5323
        %5872 = vmatprep.subr.bf16.mxu0 %v5332
        %5873 = vmatpush1.bf16.msra.mxu0 %v5331
        %5874 = vmatprep.subr.bf16.mxu0 %v5340
        %5875 = vmatpush1.bf16.msra.mxu0 %v5339
        %5876 = vmatprep.subr.bf16.mxu0 %v5348
        %5877 = vmatpush1.bf16.msra.mxu0 %v5347
        %5878 = vmatprep.subr.bf16.mxu0 %v5356
        %5879 = vmatpush1.bf16.msra.mxu0 %v5355
        %5880 = vmatprep.subr.bf16.mxu0 %v5364
        %5881 = vmatpush1.bf16.msra.mxu0 %v5363
        %5882 = vmatprep.subr.bf16.mxu0 0
        %5883 = vmatpush1.bf16.msra.mxu0 0
        %5884 = vmatprep.subr.bf16.mxu0 0
        %5885 = vmatpush1.bf16.msra.mxu0 0
        %5886 = vmatprep.subr.bf16.mxu0 0
        %5887 = vmatpush1.bf16.msra.mxu0 0
        %5888 = vmatprep.subr.bf16.mxu0 0
        %5889 = vmatpush1.bf16.msra.mxu0 0
        %5890 = vmatprep.subr.bf16.mxu0 0
        %5891 = vmatpush1.bf16.msra.mxu0 0
        %5892 = vmatprep.subr.bf16.mxu0 0
        %5893 = vmatpush1.bf16.msra.mxu0 0
        %5894 = vmatprep.subr.bf16.mxu0 0
        %5895 = vmatpush1.bf16.msra.mxu0 0
        %5896 = vmatprep.subr.bf16.mxu0 0
        %5897 = vmatpush1.bf16.msra.mxu0 0
        %5898 = vmatprep.mubr.bf16.mxu0 0
        %5899 = vmatmul.mubr.bf16.gmra.mrb[0].mxu0 %v5511
        %v5900 = vpop.f32.mrb[0].mxu0
        %v5901 = vadd.f32 %v5402, %v5900
        %v5902 = vpop.f32.mrb[0].mxu0
        %v5903 = vadd.f32 %v5402, %v5902
        %v5904 = vpop.f32.mrb[0].mxu0
        %v5905 = vadd.f32 %v5407, %v5904
        %v5906 = vpop.f32.mrb[0].mxu0
        %v5907 = vadd.f32 %v5407, %v5906
        %5908 = vmatprep.mubr.bf16.mxu0 0
        %5909 = vmatmul.mubr.bf16.gmra.mrb[0].mxu0 %v5512
        %v5910 = vpop.f32.mrb[0].mxu0
        %v5911 = vadd.f32 %v5412, %v5910
        %v5912 = vpop.f32.mrb[0].mxu0
        %v5913 = vadd.f32 %v5412, %v5912
        %v5914 = vpop.f32.mrb[0].mxu0
        %v5915 = vadd.f32 %v5417, %v5914
        %v5916 = vpop.f32.mrb[0].mxu0
        %v5917 = vadd.f32 %v5417, %v5916
        %5918 = vmatprep.mubr.bf16.mxu0 0
        %5919 = vmatmul.mubr.bf16.gmra.mrb[0].mxu0 %v5513
        %v5920 = vpop.f32.mrb[0].mxu0
        %v5921 = vadd.f32 %v5422, %v5920
        %v5922 = vpop.f32.mrb[0].mxu0
        %v5923 = vadd.f32 %v5422, %v5922
        %v5924 = vpop.f32.mrb[0].mxu0
        %v5925 = vadd.f32 %v5427, %v5924
        %v5926 = vpop.f32.mrb[0].mxu0
        %v5927 = vadd.f32 %v5427, %v5926
        %5928 = vmatprep.mubr.bf16.mxu0 0
        %5929 = vmatmul.mubr.bf16.gmra.mrb[0].mxu0 %v5514
        %v5930 = vpop.f32.mrb[0].mxu0
        %v5931 = vadd.f32 %v5432, %v5930
        %v5932 = vpop.f32.mrb[0].mxu0
        %v5933 = vadd.f32 %v5432, %v5932
        %v5934 = vpop.f32.mrb[0].mxu0
        %v5935 = vadd.f32 %v5437, %v5934
        %v5936 = vpop.f32.mrb[0].mxu0
        %v5937 = vadd.f32 %v5437, %v5936
        %5938 = vmatprep.mubr.bf16.mxu0 0
        %5939 = vmatmul.mubr.bf16.gmra.mrb[0].mxu0 %v5515
        %v5940 = vpop.f32.mrb[0].mxu0
        %v5941 = vadd.f32 %v5442, %v5940
        %v5942 = vpop.f32.mrb[0].mxu0
        %v5943 = vadd.f32 %v5442, %v5942
        %v5944 = vpop.f32.mrb[0].mxu0
        %v5945 = vadd.f32 %v5447, %v5944
        %v5946 = vpop.f32.mrb[0].mxu0
        %v5947 = vadd.f32 %v5447, %v5946
        %5948 = vmatprep.mubr.bf16.mxu0 0
        %5949 = vmatmul.mubr.bf16.gmra.mrb[0].mxu0 %v5516
        %v5950 = vpop.f32.mrb[0].mxu0
        %v5951 = vadd.f32 %v5452, %v5950
        %v5952 = vpop.f32.mrb[0].mxu0
        %v5953 = vadd.f32 %v5452, %v5952
        %v5954 = vpop.f32.mrb[0].mxu0
        %v5955 = vadd.f32 %v5457, %v5954
        %v5956 = vpop.f32.mrb[0].mxu0
        %v5957 = vadd.f32 %v5457, %v5956
        %5958 = vmatprep.mubr.bf16.mxu0 0
        %5959 = vmatmul.mubr.bf16.gmra.mrb[0].mxu0 %v5517
        %v5960 = vpop.f32.mrb[0].mxu0
        %v5961 = vadd.f32 %v5462, %v5960
        %v5962 = vpop.f32.mrb[0].mxu0
        %v5963 = vadd.f32 %v5462, %v5962
        %v5964 = vpop.f32.mrb[0].mxu0
        %v5965 = vadd.f32 %v5467, %v5964
        %v5966 = vpop.f32.mrb[0].mxu0
        %v5967 = vadd.f32 %v5467, %v5966
        %5968 = vmatprep.mubr.bf16.mxu0 0
        %5969 = vmatmul.mubr.bf16.gmra.mrb[0].mxu0 %v5518
        %v5970 = vpop.f32.mrb[0].mxu0
        %v5971 = vadd.f32 %v5472, %v5970
        %v5972 = vpop.f32.mrb[0].mxu0
        %v5973 = vadd.f32 %v5472, %v5972
        %v5974 = vpop.f32.mrb[0].mxu0
        %v5975 = vadd.f32 %v5477, %v5974
        %v5976 = vpop.f32.mrb[0].mxu0
        %v5977 = vadd.f32 %v5477, %v5976
        %5978 = vdwg.mxu0
        %v5979 = vmax.f32 %v5562, 0.0
        %v5980 = vmax.f32 %v5564, 0.0
        %v5981 = vmax.f32 %v5675, 0.0
        %v5982 = vmax.f32 %v5677, 0.0
        %v5983 = vmax.f32 %v5788, 0.0
        %v5984 = vmax.f32 %v5790, 0.0
        %v5985 = vmax.f32 %v5901, 0.0
        %v5986 = vmax.f32 %v5903, 0.0
        %v5987 = vmax.f32 %v5566, 0.0
        %v5988 = vmax.f32 %v5568, 0.0
        %v5989 = vmax.f32 %v5679, 0.0
        %v5990 = vmax.f32 %v5681, 0.0
        %v5991 = vmax.f32 %v5792, 0.0
        %v5992 = vmax.f32 %v5794, 0.0
        %v5993 = vmax.f32 %v5905, 0.0
        %v5994 = vmax.f32 %v5907, 0.0
        %v5995 = vmax.f32 %v5572, 0.0
        %v5996 = vmax.f32 %v5574, 0.0
        %v5997 = vmax.f32 %v5685, 0.0
        %v5998 = vmax.f32 %v5687, 0.0
        %v5999 = vmax.f32 %v5798, 0.0
        %v6000 = vmax.f32 %v5800, 0.0
        %v6001 = vmax.f32 %v5911, 0.0
        %v6002 = vmax.f32 %v5913, 0.0
        %v6003 = vmax.f32 %v5576, 0.0
        %v6004 = vmax.f32 %v5578, 0.0
        %v6005 = vmax.f32 %v5689, 0.0
        %v6006 = vmax.f32 %v5691, 0.0
        %v6007 = vmax.f32 %v5802, 0.0
        %v6008 = vmax.f32 %v5804, 0.0
        %v6009 = vmax.f32 %v5915, 0.0
        %v6010 = vmax.f32 %v5917, 0.0
        %v6011 = vmax.f32 %v5582, 0.0
        %v6012 = vmax.f32 %v5584, 0.0
        %v6013 = vmax.f32 %v5695, 0.0
        %v6014 = vmax.f32 %v5697, 0.0
        %v6015 = vmax.f32 %v5808, 0.0
        %v6016 = vmax.f32 %v5810, 0.0
        %v6017 = vmax.f32 %v5921, 0.0
        %v6018 = vmax.f32 %v5923, 0.0
        %v6019 = vmax.f32 %v5586, 0.0
        %v6020 = vmax.f32 %v5588, 0.0
        %v6021 = vmax.f32 %v5699, 0.0
        %v6022 = vmax.f32 %v5701, 0.0
        %v6023 = vmax.f32 %v5812, 0.0
        %v6024 = vmax.f32 %v5814, 0.0
        %v6025 = vmax.f32 %v5925, 0.0
        %v6026 = vmax.f32 %v5927, 0.0
        %v6027 = vmax.f32 %v5592, 0.0
        %v6028 = vmax.f32 %v5594, 0.0
        %v6029 = vmax.f32 %v5705, 0.0
        %v6030 = vmax.f32 %v5707, 0.0
        %v6031 = vmax.f32 %v5818, 0.0
        %v6032 = vmax.f32 %v5820, 0.0
        %v6033 = vmax.f32 %v5931, 0.0
        %v6034 = vmax.f32 %v5933, 0.0
        %v6035 = vmax.f32 %v5596, 0.0
        %v6036 = vmax.f32 %v5598, 0.0
        %v6037 = vmax.f32 %v5709, 0.0
        %v6038 = vmax.f32 %v5711, 0.0
        %v6039 = vmax.f32 %v5822, 0.0
        %v6040 = vmax.f32 %v5824, 0.0
        %v6041 = vmax.f32 %v5935, 0.0
        %v6042 = vmax.f32 %v5937, 0.0
        %v6043 = vmax.f32 %v5602, 0.0
        %v6044 = vmax.f32 %v5604, 0.0
        %v6045 = vmax.f32 %v5715, 0.0
        %v6046 = vmax.f32 %v5717, 0.0
        %v6047 = vmax.f32 %v5828, 0.0
        %v6048 = vmax.f32 %v5830, 0.0
        %v6049 = vmax.f32 %v5941, 0.0
        %v6050 = vmax.f32 %v5943, 0.0
        %v6051 = vmax.f32 %v5606, 0.0
        %v6052 = vmax.f32 %v5608, 0.0
        %v6053 = vmax.f32 %v5719, 0.0
        %v6054 = vmax.f32 %v5721, 0.0
        %v6055 = vmax.f32 %v5832, 0.0
        %v6056 = vmax.f32 %v5834, 0.0
        %v6057 = vmax.f32 %v5945, 0.0
        %v6058 = vmax.f32 %v5947, 0.0
        %v6059 = vmax.f32 %v5612, 0.0
        %v6060 = vmax.f32 %v5614, 0.0
        %v6061 = vmax.f32 %v5725, 0.0
        %v6062 = vmax.f32 %v5727, 0.0
        %v6063 = vmax.f32 %v5838, 0.0
        %v6064 = vmax.f32 %v5840, 0.0
        %v6065 = vmax.f32 %v5951, 0.0
        %v6066 = vmax.f32 %v5953, 0.0
        %v6067 = vmax.f32 %v5616, 0.0
        %v6068 = vmax.f32 %v5618, 0.0
        %v6069 = vmax.f32 %v5729, 0.0
        %v6070 = vmax.f32 %v5731, 0.0
        %v6071 = vmax.f32 %v5842, 0.0
        %v6072 = vmax.f32 %v5844, 0.0
        %v6073 = vmax.f32 %v5955, 0.0
        %v6074 = vmax.f32 %v5957, 0.0
        %v6075 = vmax.f32 %v5622, 0.0
        %v6076 = vmax.f32 %v5624, 0.0
        %v6077 = vmax.f32 %v5735, 0.0
        %v6078 = vmax.f32 %v5737, 0.0
        %v6079 = vmax.f32 %v5848, 0.0
        %v6080 = vmax.f32 %v5850, 0.0
        %v6081 = vmax.f32 %v5961, 0.0
        %v6082 = vmax.f32 %v5963, 0.0
        %v6083 = vmax.f32 %v5626, 0.0
        %v6084 = vmax.f32 %v5628, 0.0
        %v6085 = vmax.f32 %v5739, 0.0
        %v6086 = vmax.f32 %v5741, 0.0
        %v6087 = vmax.f32 %v5852, 0.0
        %v6088 = vmax.f32 %v5854, 0.0
        %v6089 = vmax.f32 %v5965, 0.0
        %v6090 = vmax.f32 %v5967, 0.0
        %v6091 = vmax.f32 %v5632, 0.0
        %v6092 = vmax.f32 %v5634, 0.0
        %v6093 = vmax.f32 %v5745, 0.0
        %v6094 = vmax.f32 %v5747, 0.0
        %v6095 = vmax.f32 %v5858, 0.0
        %v6096 = vmax.f32 %v5860, 0.0
        %v6097 = vmax.f32 %v5971, 0.0
        %v6098 = vmax.f32 %v5973, 0.0
        %v6099 = vmax.f32 %v5636, 0.0
        %v6100 = vmax.f32 %v5638, 0.0
        %v6101 = vmax.f32 %v5749, 0.0
        %v6102 = vmax.f32 %v5751, 0.0
        %v6103 = vmax.f32 %v5862, 0.0
        %v6104 = vmax.f32 %v5864, 0.0
        %v6105 = vmax.f32 %v5975, 0.0
        %v6106 = vmax.f32 %v5977, 0.0
        %v6107 = vpack.c.bf16 %v5987, %v5979
        %v6108 = vpack.c.bf16 %v5988, %v5980
        %v6109 = vpack.c.bf16 %v5989, %v5981
        %v6110 = vpack.c.bf16 %v5990, %v5982
        %v6111 = vpack.c.bf16 %v5991, %v5983
        %v6112 = vpack.c.bf16 %v5992, %v5984
        %v6113 = vpack.c.bf16 %v5993, %v5985
        %v6114 = vpack.c.bf16 %v5994, %v5986
        %v6115 = vpack.c.bf16 %v6003, %v5995
        %v6116 = vpack.c.bf16 %v6004, %v5996
        %v6117 = vpack.c.bf16 %v6005, %v5997
        %v6118 = vpack.c.bf16 %v6006, %v5998
        %v6119 = vpack.c.bf16 %v6007, %v5999
        %v6120 = vpack.c.bf16 %v6008, %v6000
        %v6121 = vpack.c.bf16 %v6009, %v6001
        %v6122 = vpack.c.bf16 %v6010, %v6002
        %v6123 = vpack.c.bf16 %v6019, %v6011
        %v6124 = vpack.c.bf16 %v6020, %v6012
        %v6125 = vpack.c.bf16 %v6021, %v6013
        %v6126 = vpack.c.bf16 %v6022, %v6014
        %v6127 = vpack.c.bf16 %v6023, %v6015
        %v6128 = vpack.c.bf16 %v6024, %v6016
        %v6129 = vpack.c.bf16 %v6025, %v6017
        %v6130 = vpack.c.bf16 %v6026, %v6018
        %v6131 = vpack.c.bf16 %v6035, %v6027
        %v6132 = vpack.c.bf16 %v6036, %v6028
        %v6133 = vpack.c.bf16 %v6037, %v6029
        %v6134 = vpack.c.bf16 %v6038, %v6030
        %v6135 = vpack.c.bf16 %v6039, %v6031
        %v6136 = vpack.c.bf16 %v6040, %v6032
        %v6137 = vpack.c.bf16 %v6041, %v6033
        %v6138 = vpack.c.bf16 %v6042, %v6034
        %v6139 = vpack.c.bf16 %v6051, %v6043
        %v6140 = vpack.c.bf16 %v6052, %v6044
        %v6141 = vpack.c.bf16 %v6053, %v6045
        %v6142 = vpack.c.bf16 %v6054, %v6046
        %v6143 = vpack.c.bf16 %v6055, %v6047
        %v6144 = vpack.c.bf16 %v6056, %v6048
        %v6145 = vpack.c.bf16 %v6057, %v6049
        %v6146 = vpack.c.bf16 %v6058, %v6050
        %v6147 = vpack.c.bf16 %v6067, %v6059
        %v6148 = vpack.c.bf16 %v6068, %v6060
        %v6149 = vpack.c.bf16 %v6069, %v6061
        %v6150 = vpack.c.bf16 %v6070, %v6062
        %v6151 = vpack.c.bf16 %v6071, %v6063
        %v6152 = vpack.c.bf16 %v6072, %v6064
        %v6153 = vpack.c.bf16 %v6073, %v6065
        %v6154 = vpack.c.bf16 %v6074, %v6066
        %v6155 = vpack.c.bf16 %v6083, %v6075
        %v6156 = vpack.c.bf16 %v6084, %v6076
        %v6157 = vpack.c.bf16 %v6085, %v6077
        %v6158 = vpack.c.bf16 %v6086, %v6078
        %v6159 = vpack.c.bf16 %v6087, %v6079
        %v6160 = vpack.c.bf16 %v6088, %v6080
        %v6161 = vpack.c.bf16 %v6089, %v6081
        %v6162 = vpack.c.bf16 %v6090, %v6082
        %v6163 = vpack.c.bf16 %v6099, %v6091
        %v6164 = vpack.c.bf16 %v6100, %v6092
        %v6165 = vpack.c.bf16 %v6101, %v6093
        %v6166 = vpack.c.bf16 %v6102, %v6094
        %v6167 = vpack.c.bf16 %v6103, %v6095
        %v6168 = vpack.c.bf16 %v6104, %v6096
        %v6169 = vpack.c.bf16 %v6105, %v6097
        %v6170 = vpack.c.bf16 %v6106, %v6098
        %s6171 = scalar_lea.vmem %s5, 128
        %v6172 = vld [vmem:[%s6171] sm:$0xf]
        %v6173 = vld [vmem:[%s6171 + $0x4] sm:$0xf]
        %v6174 = vld [vmem:[%s6171 + $0x8] sm:$0xf]
        %v6175 = vld [vmem:[%s6171 + $0xc] sm:$0xf]
        %v6176 = vld [vmem:[%s6171 + $0x10] sm:$0xf]
        %v6177 = vld [vmem:[%s6171 + $0x14] sm:$0xf]
        %v6178 = vld [vmem:[%s6171 + $0x18] sm:$0xf]
        %v6179 = vld [vmem:[%s6171 + $0x1c] sm:$0xf]
        %v6180 = vld [vmem:[%s6171 + $0x20] sm:$0xf]
        %v6181 = vld [vmem:[%s6171 + $0x24] sm:$0xf]
        %v6182 = vld [vmem:[%s6171 + $0x28] sm:$0xf]
        %v6183 = vld [vmem:[%s6171 + $0x2c] sm:$0xf]
        %v6184 = vld [vmem:[%s6171 + $0x30] sm:$0xf]
        %v6185 = vld [vmem:[%s6171 + $0x34] sm:$0xf]
        %v6186 = vld [vmem:[%s6171 + $0x38] sm:$0xf]
        %v6187 = vld [vmem:[%s6171 + $0x3c] sm:$0xf]
        %s6188 = scalar_lea.vmem %s6, 256
        %v6189 = vld [vmem:[%s6188] sm:$0xff]
        %v6190 = vld [vmem:[%s6188 + $0x8] sm:$0xff]
        %v6191 = vld [vmem:[%s6188 + $0x10] sm:$0xff]
        %v6192 = vld [vmem:[%s6188 + $0x18] sm:$0xff]
        %v6193 = vld [vmem:[%s6188 + $0x20] sm:$0xff]
        %v6194 = vld [vmem:[%s6188 + $0x28] sm:$0xff]
        %v6195 = vld [vmem:[%s6188 + $0x30] sm:$0xff]
        %v6196 = vld [vmem:[%s6188 + $0x38] sm:$0xff]
        %v6197 = vld [vmem:[%s6188 + $0x40] sm:$0xff]
        %v6198 = vld [vmem:[%s6188 + $0x48] sm:$0xff]
        %v6199 = vld [vmem:[%s6188 + $0x50] sm:$0xff]
        %v6200 = vld [vmem:[%s6188 + $0x58] sm:$0xff]
        %v6201 = vld [vmem:[%s6188 + $0x60] sm:$0xff]
        %v6202 = vld [vmem:[%s6188 + $0x68] sm:$0xff]
        %v6203 = vld [vmem:[%s6188 + $0x70] sm:$0xff]
        %v6204 = vld [vmem:[%s6188 + $0x78] sm:$0xff]
        %6206 = vset.pattern.permute.xlu0 0
        %6207 = vperm.xlu0 %6206, %v6189
        %v6208 = vpop.permute.xlu0 %6207
        %6211 = vset.pattern.permute.xlu0 0
        %6212 = vperm.xlu0 %6211, %v6190
        %v6213 = vpop.permute.xlu0 %6212
        %6216 = vset.pattern.permute.xlu0 0
        %6217 = vperm.xlu0 %6216, %v6191
        %v6218 = vpop.permute.xlu0 %6217
        %6221 = vset.pattern.permute.xlu0 0
        %6222 = vperm.xlu0 %6221, %v6192
        %v6223 = vpop.permute.xlu0 %6222
        %6226 = vset.pattern.permute.xlu0 0
        %6227 = vperm.xlu0 %6226, %v6193
        %v6228 = vpop.permute.xlu0 %6227
        %6231 = vset.pattern.permute.xlu0 0
        %6232 = vperm.xlu0 %6231, %v6194
        %v6233 = vpop.permute.xlu0 %6232
        %6236 = vset.pattern.permute.xlu0 0
        %6237 = vperm.xlu0 %6236, %v6195
        %v6238 = vpop.permute.xlu0 %6237
        %6241 = vset.pattern.permute.xlu0 0
        %6242 = vperm.xlu0 %6241, %v6196
        %v6243 = vpop.permute.xlu0 %6242
        %6246 = vset.pattern.permute.xlu0 0
        %6247 = vperm.xlu0 %6246, %v6197
        %v6248 = vpop.permute.xlu0 %6247
        %6251 = vset.pattern.permute.xlu0 0
        %6252 = vperm.xlu0 %6251, %v6198
        %v6253 = vpop.permute.xlu0 %6252
        %6256 = vset.pattern.permute.xlu0 0
        %6257 = vperm.xlu0 %6256, %v6199
        %v6258 = vpop.permute.xlu0 %6257
        %6261 = vset.pattern.permute.xlu0 0
        %6262 = vperm.xlu0 %6261, %v6200
        %v6263 = vpop.permute.xlu0 %6262
        %6266 = vset.pattern.permute.xlu0 0
        %6267 = vperm.xlu0 %6266, %v6201
        %v6268 = vpop.permute.xlu0 %6267
        %6271 = vset.pattern.permute.xlu0 0
        %6272 = vperm.xlu0 %6271, %v6202
        %v6273 = vpop.permute.xlu0 %6272
        %6276 = vset.pattern.permute.xlu0 0
        %6277 = vperm.xlu0 %6276, %v6203
        %v6278 = vpop.permute.xlu0 %6277
        %6281 = vset.pattern.permute.xlu0 0
        %6282 = vperm.xlu0 %6281, %v6204
        %v6283 = vpop.permute.xlu0 %6282
        %v6301 = vunpack.c.l.b16 %v6172
        %v6302 = vunpack.c.l.b16 %v6173
        %v6303 = vunpack.c.l.b16 %v6174
        %v6304 = vunpack.c.l.b16 %v6175
        %v6305 = vunpack.c.l.b16 %v6176
        %v6306 = vunpack.c.l.b16 %v6177
        %v6307 = vunpack.c.l.b16 %v6178
        %v6308 = vunpack.c.l.b16 %v6179
        %v6309 = vunpack.c.l.b16 %v6180
        %v6310 = vunpack.c.l.b16 %v6181
        %v6311 = vunpack.c.l.b16 %v6182
        %v6312 = vunpack.c.l.b16 %v6183
        %v6313 = vunpack.c.l.b16 %v6184
        %v6314 = vunpack.c.l.b16 %v6185
        %v6315 = vunpack.c.l.b16 %v6186
        %v6316 = vunpack.c.l.b16 %v6187
        %v6317 = vpack.c.b16 %v6302, %v6301
        %v6318 = vpack.c.b16 %v6304, %v6303
        %v6319 = vpack.c.b16 %v6306, %v6305
        %v6320 = vpack.c.b16 %v6308, %v6307
        %v6321 = vpack.c.b16 %v6310, %v6309
        %v6322 = vpack.c.b16 %v6312, %v6311
        %v6323 = vpack.c.b16 %v6314, %v6313
        %v6324 = vpack.c.b16 %v6316, %v6315
        %6333 = vmatprep.subr.bf16.mxu0 %v6108
        %6334 = vmatpush1.bf16.msra.mxu0 %v6107
        %6335 = vmatprep.subr.bf16.mxu0 %v6116
        %6336 = vmatpush1.bf16.msra.mxu0 %v6115
        %6337 = vmatprep.subr.bf16.mxu0 %v6124
        %6338 = vmatpush1.bf16.msra.mxu0 %v6123
        %6339 = vmatprep.subr.bf16.mxu0 %v6132
        %6340 = vmatpush1.bf16.msra.mxu0 %v6131
        %6341 = vmatprep.subr.bf16.mxu0 %v6140
        %6342 = vmatpush1.bf16.msra.mxu0 %v6139
        %6343 = vmatprep.subr.bf16.mxu0 %v6148
        %6344 = vmatpush1.bf16.msra.mxu0 %v6147
        %6345 = vmatprep.subr.bf16.mxu0 %v6156
        %6346 = vmatpush1.bf16.msra.mxu0 %v6155
        %6347 = vmatprep.subr.bf16.mxu0 %v6164
        %6348 = vmatpush1.bf16.msra.mxu0 %v6163
        %6349 = vmatprep.subr.bf16.mxu0 0
        %6350 = vmatpush1.bf16.msra.mxu0 0
        %6351 = vmatprep.subr.bf16.mxu0 0
        %6352 = vmatpush1.bf16.msra.mxu0 0
        %6353 = vmatprep.subr.bf16.mxu0 0
        %6354 = vmatpush1.bf16.msra.mxu0 0
        %6355 = vmatprep.subr.bf16.mxu0 0
        %6356 = vmatpush1.bf16.msra.mxu0 0
        %6357 = vmatprep.subr.bf16.mxu0 0
        %6358 = vmatpush1.bf16.msra.mxu0 0
        %6359 = vmatprep.subr.bf16.mxu0 0
        %6360 = vmatpush1.bf16.msra.mxu0 0
        %6361 = vmatprep.subr.bf16.mxu0 0
        %6362 = vmatpush1.bf16.msra.mxu0 0
        %6363 = vmatprep.subr.bf16.mxu0 0
        %6364 = vmatpush1.bf16.msra.mxu0 0
        %6365 = vmatprep.mubr.bf16.mxu0 0
        %6366 = vmatmul.mubr.bf16.gmra.mrb[0].mxu0 %v6317
        %v6367 = vpop.f32.mrb[0].mxu0
        %v6368 = vadd.f32 %v6208, %v6367
        %v6369 = vpop.f32.mrb[0].mxu0
        %v6370 = vadd.f32 %v6208, %v6369
        %v6371 = vpop.f32.mrb[0].mxu0
        %v6372 = vadd.f32 %v6213, %v6371
        %v6373 = vpop.f32.mrb[0].mxu0
        %v6374 = vadd.f32 %v6213, %v6373
        %6375 = vmatprep.mubr.bf16.mxu0 0
        %6376 = vmatmul.mubr.bf16.gmra.mrb[0].mxu0 %v6318
        %v6377 = vpop.f32.mrb[0].mxu0
        %v6378 = vadd.f32 %v6218, %v6377
        %v6379 = vpop.f32.mrb[0].mxu0
        %v6380 = vadd.f32 %v6218, %v6379
        %v6381 = vpop.f32.mrb[0].mxu0
        %v6382 = vadd.f32 %v6223, %v6381
        %v6383 = vpop.f32.mrb[0].mxu0
        %v6384 = vadd.f32 %v6223, %v6383
        %6385 = vmatprep.mubr.bf16.mxu0 0
        %6386 = vmatmul.mubr.bf16.gmra.mrb[0].mxu0 %v6319
        %v6387 = vpop.f32.mrb[0].mxu0
        %v6388 = vadd.f32 %v6228, %v6387
        %v6389 = vpop.f32.mrb[0].mxu0
        %v6390 = vadd.f32 %v6228, %v6389
        %v6391 = vpop.f32.mrb[0].mxu0
        %v6392 = vadd.f32 %v6233, %v6391
        %v6393 = vpop.f32.mrb[0].mxu0
        %v6394 = vadd.f32 %v6233, %v6393
        %6395 = vmatprep.mubr.bf16.mxu0 0
        %6396 = vmatmul.mubr.bf16.gmra.mrb[0].mxu0 %v6320
        %v6397 = vpop.f32.mrb[0].mxu0
        %v6398 = vadd.f32 %v6238, %v6397
        %v6399 = vpop.f32.mrb[0].mxu0
        %v6400 = vadd.f32 %v6238, %v6399
        %v6401 = vpop.f32.mrb[0].mxu0
        %v6402 = vadd.f32 %v6243, %v6401
        %v6403 = vpop.f32.mrb[0].mxu0
        %v6404 = vadd.f32 %v6243, %v6403
        %6405 = vmatprep.mubr.bf16.mxu0 0
        %6406 = vmatmul.mubr.bf16.gmra.mrb[0].mxu0 %v6321
        %v6407 = vpop.f32.mrb[0].mxu0
        %v6408 = vadd.f32 %v6248, %v6407
        %v6409 = vpop.f32.mrb[0].mxu0
        %v6410 = vadd.f32 %v6248, %v6409
        %v6411 = vpop.f32.mrb[0].mxu0
        %v6412 = vadd.f32 %v6253, %v6411
        %v6413 = vpop.f32.mrb[0].mxu0
        %v6414 = vadd.f32 %v6253, %v6413
        %6415 = vmatprep.mubr.bf16.mxu0 0
        %6416 = vmatmul.mubr.bf16.gmra.mrb[0].mxu0 %v6322
        %v6417 = vpop.f32.mrb[0].mxu0
        %v6418 = vadd.f32 %v6258, %v6417
        %v6419 = vpop.f32.mrb[0].mxu0
        %v6420 = vadd.f32 %v6258, %v6419
        %v6421 = vpop.f32.mrb[0].mxu0
        %v6422 = vadd.f32 %v6263, %v6421
        %v6423 = vpop.f32.mrb[0].mxu0
        %v6424 = vadd.f32 %v6263, %v6423
        %6425 = vmatprep.mubr.bf16.mxu0 0
        %6426 = vmatmul.mubr.bf16.gmra.mrb[0].mxu0 %v6323
        %v6427 = vpop.f32.mrb[0].mxu0
        %v6428 = vadd.f32 %v6268, %v6427
        %v6429 = vpop.f32.mrb[0].mxu0
        %v6430 = vadd.f32 %v6268, %v6429
        %v6431 = vpop.f32.mrb[0].mxu0
        %v6432 = vadd.f32 %v6273, %v6431
        %v6433 = vpop.f32.mrb[0].mxu0
        %v6434 = vadd.f32 %v6273, %v6433
        %6435 = vmatprep.mubr.bf16.mxu0 0
        %6436 = vmatmul.mubr.bf16.gmra.mrb[0].mxu0 %v6324
        %v6437 = vpop.f32.mrb[0].mxu0
        %v6438 = vadd.f32 %v6278, %v6437
        %v6439 = vpop.f32.mrb[0].mxu0
        %v6440 = vadd.f32 %v6278, %v6439
        %v6441 = vpop.f32.mrb[0].mxu0
        %v6442 = vadd.f32 %v6283, %v6441
        %v6443 = vpop.f32.mrb[0].mxu0
        %v6444 = vadd.f32 %v6283, %v6443
        %6445 = vdwg.mxu0
        %6446 = vmatprep.subr.bf16.mxu0 %v6110
        %6447 = vmatpush1.bf16.msra.mxu0 %v6109
        %6448 = vmatprep.subr.bf16.mxu0 %v6118
        %6449 = vmatpush1.bf16.msra.mxu0 %v6117
        %6450 = vmatprep.subr.bf16.mxu0 %v6126
        %6451 = vmatpush1.bf16.msra.mxu0 %v6125
        %6452 = vmatprep.subr.bf16.mxu0 %v6134
        %6453 = vmatpush1.bf16.msra.mxu0 %v6133
        %6454 = vmatprep.subr.bf16.mxu0 %v6142
        %6455 = vmatpush1.bf16.msra.mxu0 %v6141
        %6456 = vmatprep.subr.bf16.mxu0 %v6150
        %6457 = vmatpush1.bf16.msra.mxu0 %v6149
        %6458 = vmatprep.subr.bf16.mxu0 %v6158
        %6459 = vmatpush1.bf16.msra.mxu0 %v6157
        %6460 = vmatprep.subr.bf16.mxu0 %v6166
        %6461 = vmatpush1.bf16.msra.mxu0 %v6165
        %6462 = vmatprep.subr.bf16.mxu0 0
        %6463 = vmatpush1.bf16.msra.mxu0 0
        %6464 = vmatprep.subr.bf16.mxu0 0
        %6465 = vmatpush1.bf16.msra.mxu0 0
        %6466 = vmatprep.subr.bf16.mxu0 0
        %6467 = vmatpush1.bf16.msra.mxu0 0
        %6468 = vmatprep.subr.bf16.mxu0 0
        %6469 = vmatpush1.bf16.msra.mxu0 0
        %6470 = vmatprep.subr.bf16.mxu0 0
        %6471 = vmatpush1.bf16.msra.mxu0 0
        %6472 = vmatprep.subr.bf16.mxu0 0
        %6473 = vmatpush1.bf16.msra.mxu0 0
        %6474 = vmatprep.subr.bf16.mxu0 0
        %6475 = vmatpush1.bf16.msra.mxu0 0
        %6476 = vmatprep.subr.bf16.mxu0 0
        %6477 = vmatpush1.bf16.msra.mxu0 0
        %6478 = vmatprep.mubr.bf16.mxu0 0
        %6479 = vmatmul.mubr.bf16.gmra.mrb[0].mxu0 %v6317
        %v6480 = vpop.f32.mrb[0].mxu0
        %v6481 = vadd.f32 %v6208, %v6480
        %v6482 = vpop.f32.mrb[0].mxu0
        %v6483 = vadd.f32 %v6208, %v6482
        %v6484 = vpop.f32.mrb[0].mxu0
        %v6485 = vadd.f32 %v6213, %v6484
        %v6486 = vpop.f32.mrb[0].mxu0
        %v6487 = vadd.f32 %v6213, %v6486
        %6488 = vmatprep.mubr.bf16.mxu0 0
        %6489 = vmatmul.mubr.bf16.gmra.mrb[0].mxu0 %v6318
        %v6490 = vpop.f32.mrb[0].mxu0
        %v6491 = vadd.f32 %v6218, %v6490
        %v6492 = vpop.f32.mrb[0].mxu0
        %v6493 = vadd.f32 %v6218, %v6492
        %v6494 = vpop.f32.mrb[0].mxu0
        %v6495 = vadd.f32 %v6223, %v6494
        %v6496 = vpop.f32.mrb[0].mxu0
        %v6497 = vadd.f32 %v6223, %v6496
        %6498 = vmatprep.mubr.bf16.mxu0 0
        %6499 = vmatmul.mubr.bf16.gmra.mrb[0].mxu0 %v6319
        %v6500 = vpop.f32.mrb[0].mxu0
        %v6501 = vadd.f32 %v6228, %v6500
        %v6502 = vpop.f32.mrb[0].mxu0
        %v6503 = vadd.f32 %v6228, %v6502
        %v6504 = vpop.f32.mrb[0].mxu0
        %v6505 = vadd.f32 %v6233, %v6504
        %v6506 = vpop.f32.mrb[0].mxu0
        %v6507 = vadd.f32 %v6233, %v6506
        %6508 = vmatprep.mubr.bf16.mxu0 0
        %6509 = vmatmul.mubr.bf16.gmra.mrb[0].mxu0 %v6320
        %v6510 = vpop.f32.mrb[0].mxu0
        %v6511 = vadd.f32 %v6238, %v6510
        %v6512 = vpop.f32.mrb[0].mxu0
        %v6513 = vadd.f32 %v6238, %v6512
        %v6514 = vpop.f32.mrb[0].mxu0
        %v6515 = vadd.f32 %v6243, %v6514
        %v6516 = vpop.f32.mrb[0].mxu0
        %v6517 = vadd.f32 %v6243, %v6516
        %6518 = vmatprep.mubr.bf16.mxu0 0
        %6519 = vmatmul.mubr.bf16.gmra.mrb[0].mxu0 %v6321
        %v6520 = vpop.f32.mrb[0].mxu0
        %v6521 = vadd.f32 %v6248, %v6520
        %v6522 = vpop.f32.mrb[0].mxu0
        %v6523 = vadd.f32 %v6248, %v6522
        %v6524 = vpop.f32.mrb[0].mxu0
        %v6525 = vadd.f32 %v6253, %v6524
        %v6526 = vpop.f32.mrb[0].mxu0
        %v6527 = vadd.f32 %v6253, %v6526
        %6528 = vmatprep.mubr.bf16.mxu0 0
        %6529 = vmatmul.mubr.bf16.gmra.mrb[0].mxu0 %v6322
        %v6530 = vpop.f32.mrb[0].mxu0
        %v6531 = vadd.f32 %v6258, %v6530
        %v6532 = vpop.f32.mrb[0].mxu0
        %v6533 = vadd.f32 %v6258, %v6532
        %v6534 = vpop.f32.mrb[0].mxu0
        %v6535 = vadd.f32 %v6263, %v6534
        %v6536 = vpop.f32.mrb[0].mxu0
        %v6537 = vadd.f32 %v6263, %v6536
        %6538 = vmatprep.mubr.bf16.mxu0 0
        %6539 = vmatmul.mubr.bf16.gmra.mrb[0].mxu0 %v6323
        %v6540 = vpop.f32.mrb[0].mxu0
        %v6541 = vadd.f32 %v6268, %v6540
        %v6542 = vpop.f32.mrb[0].mxu0
        %v6543 = vadd.f32 %v6268, %v6542
        %v6544 = vpop.f32.mrb[0].mxu0
        %v6545 = vadd.f32 %v6273, %v6544
        %v6546 = vpop.f32.mrb[0].mxu0
        %v6547 = vadd.f32 %v6273, %v6546
        %6548 = vmatprep.mubr.bf16.mxu0 0
        %6549 = vmatmul.mubr.bf16.gmra.mrb[0].mxu0 %v6324
        %v6550 = vpop.f32.mrb[0].mxu0
        %v6551 = vadd.f32 %v6278, %v6550
        %v6552 = vpop.f32.mrb[0].mxu0
        %v6553 = vadd.f32 %v6278, %v6552
        %v6554 = vpop.f32.mrb[0].mxu0
        %v6555 = vadd.f32 %v6283, %v6554
        %v6556 = vpop.f32.mrb[0].mxu0
        %v6557 = vadd.f32 %v6283, %v6556
        %6558 = vdwg.mxu0
        %6559 = vmatprep.subr.bf16.mxu0 %v6112
        %6560 = vmatpush1.bf16.msra.mxu0 %v6111
        %6561 = vmatprep.subr.bf16.mxu0 %v6120
        %6562 = vmatpush1.bf16.msra.mxu0 %v6119
        %6563 = vmatprep.subr.bf16.mxu0 %v6128
        %6564 = vmatpush1.bf16.msra.mxu0 %v6127
        %6565 = vmatprep.subr.bf16.mxu0 %v6136
        %6566 = vmatpush1.bf16.msra.mxu0 %v6135
        %6567 = vmatprep.subr.bf16.mxu0 %v6144
        %6568 = vmatpush1.bf16.msra.mxu0 %v6143
        %6569 = vmatprep.subr.bf16.mxu0 %v6152
        %6570 = vmatpush1.bf16.msra.mxu0 %v6151
        %6571 = vmatprep.subr.bf16.mxu0 %v6160
        %6572 = vmatpush1.bf16.msra.mxu0 %v6159
        %6573 = vmatprep.subr.bf16.mxu0 %v6168
        %6574 = vmatpush1.bf16.msra.mxu0 %v6167
        %6575 = vmatprep.subr.bf16.mxu0 0
        %6576 = vmatpush1.bf16.msra.mxu0 0
        %6577 = vmatprep.subr.bf16.mxu0 0
        %6578 = vmatpush1.bf16.msra.mxu0 0
        %6579 = vmatprep.subr.bf16.mxu0 0
        %6580 = vmatpush1.bf16.msra.mxu0 0
        %6581 = vmatprep.subr.bf16.mxu0 0
        %6582 = vmatpush1.bf16.msra.mxu0 0
        %6583 = vmatprep.subr.bf16.mxu0 0
        %6584 = vmatpush1.bf16.msra.mxu0 0
        %6585 = vmatprep.subr.bf16.mxu0 0
        %6586 = vmatpush1.bf16.msra.mxu0 0
        %6587 = vmatprep.subr.bf16.mxu0 0
        %6588 = vmatpush1.bf16.msra.mxu0 0
        %6589 = vmatprep.subr.bf16.mxu0 0
        %6590 = vmatpush1.bf16.msra.mxu0 0
        %6591 = vmatprep.mubr.bf16.mxu0 0
        %6592 = vmatmul.mubr.bf16.gmra.mrb[0].mxu0 %v6317
        %v6593 = vpop.f32.mrb[0].mxu0
        %v6594 = vadd.f32 %v6208, %v6593
        %v6595 = vpop.f32.mrb[0].mxu0
        %v6596 = vadd.f32 %v6208, %v6595
        %v6597 = vpop.f32.mrb[0].mxu0
        %v6598 = vadd.f32 %v6213, %v6597
        %v6599 = vpop.f32.mrb[0].mxu0
        %v6600 = vadd.f32 %v6213, %v6599
        %6601 = vmatprep.mubr.bf16.mxu0 0
        %6602 = vmatmul.mubr.bf16.gmra.mrb[0].mxu0 %v6318
        %v6603 = vpop.f32.mrb[0].mxu0
        %v6604 = vadd.f32 %v6218, %v6603
        %v6605 = vpop.f32.mrb[0].mxu0
        %v6606 = vadd.f32 %v6218, %v6605
        %v6607 = vpop.f32.mrb[0].mxu0
        %v6608 = vadd.f32 %v6223, %v6607
        %v6609 = vpop.f32.mrb[0].mxu0
        %v6610 = vadd.f32 %v6223, %v6609
        %6611 = vmatprep.mubr.bf16.mxu0 0
        %6612 = vmatmul.mubr.bf16.gmra.mrb[0].mxu0 %v6319
        %v6613 = vpop.f32.mrb[0].mxu0
        %v6614 = vadd.f32 %v6228, %v6613
        %v6615 = vpop.f32.mrb[0].mxu0
        %v6616 = vadd.f32 %v6228, %v6615
        %v6617 = vpop.f32.mrb[0].mxu0
        %v6618 = vadd.f32 %v6233, %v6617
        %v6619 = vpop.f32.mrb[0].mxu0
        %v6620 = vadd.f32 %v6233, %v6619
        %6621 = vmatprep.mubr.bf16.mxu0 0
        %6622 = vmatmul.mubr.bf16.gmra.mrb[0].mxu0 %v6320
        %v6623 = vpop.f32.mrb[0].mxu0
        %v6624 = vadd.f32 %v6238, %v6623
        %v6625 = vpop.f32.mrb[0].mxu0
        %v6626 = vadd.f32 %v6238, %v6625
        %v6627 = vpop.f32.mrb[0].mxu0
        %v6628 = vadd.f32 %v6243, %v6627
        %v6629 = vpop.f32.mrb[0].mxu0
        %v6630 = vadd.f32 %v6243, %v6629
        %6631 = vmatprep.mubr.bf16.mxu0 0
        %6632 = vmatmul.mubr.bf16.gmra.mrb[0].mxu0 %v6321
        %v6633 = vpop.f32.mrb[0].mxu0
        %v6634 = vadd.f32 %v6248, %v6633
        %v6635 = vpop.f32.mrb[0].mxu0
        %v6636 = vadd.f32 %v6248, %v6635
        %v6637 = vpop.f32.mrb[0].mxu0
        %v6638 = vadd.f32 %v6253, %v6637
        %v6639 = vpop.f32.mrb[0].mxu0
        %v6640 = vadd.f32 %v6253, %v6639
        %6641 = vmatprep.mubr.bf16.mxu0 0
        %6642 = vmatmul.mubr.bf16.gmra.mrb[0].mxu0 %v6322
        %v6643 = vpop.f32.mrb[0].mxu0
        %v6644 = vadd.f32 %v6258, %v6643
        %v6645 = vpop.f32.mrb[0].mxu0
        %v6646 = vadd.f32 %v6258, %v6645
        %v6647 = vpop.f32.mrb[0].mxu0
        %v6648 = vadd.f32 %v6263, %v6647
        %v6649 = vpop.f32.mrb[0].mxu0
        %v6650 = vadd.f32 %v6263, %v6649
        %6651 = vmatprep.mubr.bf16.mxu0 0
        %6652 = vmatmul.mubr.bf16.gmra.mrb[0].mxu0 %v6323
        %v6653 = vpop.f32.mrb[0].mxu0
        %v6654 = vadd.f32 %v6268, %v6653
        %v6655 = vpop.f32.mrb[0].mxu0
        %v6656 = vadd.f32 %v6268, %v6655
        %v6657 = vpop.f32.mrb[0].mxu0
        %v6658 = vadd.f32 %v6273, %v6657
        %v6659 = vpop.f32.mrb[0].mxu0
        %v6660 = vadd.f32 %v6273, %v6659
        %6661 = vmatprep.mubr.bf16.mxu0 0
        %6662 = vmatmul.mubr.bf16.gmra.mrb[0].mxu0 %v6324
        %v6663 = vpop.f32.mrb[0].mxu0
        %v6664 = vadd.f32 %v6278, %v6663
        %v6665 = vpop.f32.mrb[0].mxu0
        %v6666 = vadd.f32 %v6278, %v6665
        %v6667 = vpop.f32.mrb[0].mxu0
        %v6668 = vadd.f32 %v6283, %v6667
        %v6669 = vpop.f32.mrb[0].mxu0
        %v6670 = vadd.f32 %v6283, %v6669
        %6671 = vdwg.mxu0
        %6672 = vmatprep.subr.bf16.mxu0 %v6114
        %6673 = vmatpush1.bf16.msra.mxu0 %v6113
        %6674 = vmatprep.subr.bf16.mxu0 %v6122
        %6675 = vmatpush1.bf16.msra.mxu0 %v6121
        %6676 = vmatprep.subr.bf16.mxu0 %v6130
        %6677 = vmatpush1.bf16.msra.mxu0 %v6129
        %6678 = vmatprep.subr.bf16.mxu0 %v6138
        %6679 = vmatpush1.bf16.msra.mxu0 %v6137
        %6680 = vmatprep.subr.bf16.mxu0 %v6146
        %6681 = vmatpush1.bf16.msra.mxu0 %v6145
        %6682 = vmatprep.subr.bf16.mxu0 %v6154
        %6683 = vmatpush1.bf16.msra.mxu0 %v6153
        %6684 = vmatprep.subr.bf16.mxu0 %v6162
        %6685 = vmatpush1.bf16.msra.mxu0 %v6161
        %6686 = vmatprep.subr.bf16.mxu0 %v6170
        %6687 = vmatpush1.bf16.msra.mxu0 %v6169
        %6688 = vmatprep.subr.bf16.mxu0 0
        %6689 = vmatpush1.bf16.msra.mxu0 0
        %6690 = vmatprep.subr.bf16.mxu0 0
        %6691 = vmatpush1.bf16.msra.mxu0 0
        %6692 = vmatprep.subr.bf16.mxu0 0
        %6693 = vmatpush1.bf16.msra.mxu0 0
        %6694 = vmatprep.subr.bf16.mxu0 0
        %6695 = vmatpush1.bf16.msra.mxu0 0
        %6696 = vmatprep.subr.bf16.mxu0 0
        %6697 = vmatpush1.bf16.msra.mxu0 0
        %6698 = vmatprep.subr.bf16.mxu0 0
        %6699 = vmatpush1.bf16.msra.mxu0 0
        %6700 = vmatprep.subr.bf16.mxu0 0
        %6701 = vmatpush1.bf16.msra.mxu0 0
        %6702 = vmatprep.subr.bf16.mxu0 0
        %6703 = vmatpush1.bf16.msra.mxu0 0
        %6704 = vmatprep.mubr.bf16.mxu0 0
        %6705 = vmatmul.mubr.bf16.gmra.mrb[0].mxu0 %v6317
        %v6706 = vpop.f32.mrb[0].mxu0
        %v6707 = vadd.f32 %v6208, %v6706
        %v6708 = vpop.f32.mrb[0].mxu0
        %v6709 = vadd.f32 %v6208, %v6708
        %v6710 = vpop.f32.mrb[0].mxu0
        %v6711 = vadd.f32 %v6213, %v6710
        %v6712 = vpop.f32.mrb[0].mxu0
        %v6713 = vadd.f32 %v6213, %v6712
        %6714 = vmatprep.mubr.bf16.mxu0 0
        %6715 = vmatmul.mubr.bf16.gmra.mrb[0].mxu0 %v6318
        %v6716 = vpop.f32.mrb[0].mxu0
        %v6717 = vadd.f32 %v6218, %v6716
        %v6718 = vpop.f32.mrb[0].mxu0
        %v6719 = vadd.f32 %v6218, %v6718
        %v6720 = vpop.f32.mrb[0].mxu0
        %v6721 = vadd.f32 %v6223, %v6720
        %v6722 = vpop.f32.mrb[0].mxu0
        %v6723 = vadd.f32 %v6223, %v6722
        %6724 = vmatprep.mubr.bf16.mxu0 0
        %6725 = vmatmul.mubr.bf16.gmra.mrb[0].mxu0 %v6319
        %v6726 = vpop.f32.mrb[0].mxu0
        %v6727 = vadd.f32 %v6228, %v6726
        %v6728 = vpop.f32.mrb[0].mxu0
        %v6729 = vadd.f32 %v6228, %v6728
        %v6730 = vpop.f32.mrb[0].mxu0
        %v6731 = vadd.f32 %v6233, %v6730
        %v6732 = vpop.f32.mrb[0].mxu0
        %v6733 = vadd.f32 %v6233, %v6732
        %6734 = vmatprep.mubr.bf16.mxu0 0
        %6735 = vmatmul.mubr.bf16.gmra.mrb[0].mxu0 %v6320
        %v6736 = vpop.f32.mrb[0].mxu0
        %v6737 = vadd.f32 %v6238, %v6736
        %v6738 = vpop.f32.mrb[0].mxu0
        %v6739 = vadd.f32 %v6238, %v6738
        %v6740 = vpop.f32.mrb[0].mxu0
        %v6741 = vadd.f32 %v6243, %v6740
        %v6742 = vpop.f32.mrb[0].mxu0
        %v6743 = vadd.f32 %v6243, %v6742
        %6744 = vmatprep.mubr.bf16.mxu0 0
        %6745 = vmatmul.mubr.bf16.gmra.mrb[0].mxu0 %v6321
        %v6746 = vpop.f32.mrb[0].mxu0
        %v6747 = vadd.f32 %v6248, %v6746
        %v6748 = vpop.f32.mrb[0].mxu0
        %v6749 = vadd.f32 %v6248, %v6748
        %v6750 = vpop.f32.mrb[0].mxu0
        %v6751 = vadd.f32 %v6253, %v6750
        %v6752 = vpop.f32.mrb[0].mxu0
        %v6753 = vadd.f32 %v6253, %v6752
        %6754 = vmatprep.mubr.bf16.mxu0 0
        %6755 = vmatmul.mubr.bf16.gmra.mrb[0].mxu0 %v6322
        %v6756 = vpop.f32.mrb[0].mxu0
        %v6757 = vadd.f32 %v6258, %v6756
        %v6758 = vpop.f32.mrb[0].mxu0
        %v6759 = vadd.f32 %v6258, %v6758
        %v6760 = vpop.f32.mrb[0].mxu0
        %v6761 = vadd.f32 %v6263, %v6760
        %v6762 = vpop.f32.mrb[0].mxu0
        %v6763 = vadd.f32 %v6263, %v6762
        %6764 = vmatprep.mubr.bf16.mxu0 0
        %6765 = vmatmul.mubr.bf16.gmra.mrb[0].mxu0 %v6323
        %v6766 = vpop.f32.mrb[0].mxu0
        %v6767 = vadd.f32 %v6268, %v6766
        %v6768 = vpop.f32.mrb[0].mxu0
        %v6769 = vadd.f32 %v6268, %v6768
        %v6770 = vpop.f32.mrb[0].mxu0
        %v6771 = vadd.f32 %v6273, %v6770
        %v6772 = vpop.f32.mrb[0].mxu0
        %v6773 = vadd.f32 %v6273, %v6772
        %6774 = vmatprep.mubr.bf16.mxu0 0
        %6775 = vmatmul.mubr.bf16.gmra.mrb[0].mxu0 %v6324
        %v6776 = vpop.f32.mrb[0].mxu0
        %v6777 = vadd.f32 %v6278, %v6776
        %v6778 = vpop.f32.mrb[0].mxu0
        %v6779 = vadd.f32 %v6278, %v6778
        %v6780 = vpop.f32.mrb[0].mxu0
        %v6781 = vadd.f32 %v6283, %v6780
        %v6782 = vpop.f32.mrb[0].mxu0
        %v6783 = vadd.f32 %v6283, %v6782
        %6784 = vdwg.mxu0
        %v6785 = vadd.f32 %v5045, %v6368
        %v6786 = vadd.f32 %v5046, %v6370
        %v6787 = vadd.f32 %v5047, %v6481
        %v6788 = vadd.f32 %v5048, %v6483
        %v6789 = vadd.f32 %v5049, %v6594
        %v6790 = vadd.f32 %v5050, %v6596
        %v6791 = vadd.f32 %v5051, %v6707
        %v6792 = vadd.f32 %v5052, %v6709
        %v6793 = vadd.f32 %v5053, %v6372
        %v6794 = vadd.f32 %v5054, %v6374
        %v6795 = vadd.f32 %v5055, %v6485
        %v6796 = vadd.f32 %v5056, %v6487
        %v6797 = vadd.f32 %v5057, %v6598
        %v6798 = vadd.f32 %v5058, %v6600
        %v6799 = vadd.f32 %v5059, %v6711
        %v6800 = vadd.f32 %v5060, %v6713
        %v6801 = vadd.f32 %v5061, %v6378
        %v6802 = vadd.f32 %v5062, %v6380
        %v6803 = vadd.f32 %v5063, %v6491
        %v6804 = vadd.f32 %v5064, %v6493
        %v6805 = vadd.f32 %v5065, %v6604
        %v6806 = vadd.f32 %v5066, %v6606
        %v6807 = vadd.f32 %v5067, %v6717
        %v6808 = vadd.f32 %v5068, %v6719
        %v6809 = vadd.f32 %v5069, %v6382
        %v6810 = vadd.f32 %v5070, %v6384
        %v6811 = vadd.f32 %v5071, %v6495
        %v6812 = vadd.f32 %v5072, %v6497
        %v6813 = vadd.f32 %v5073, %v6608
        %v6814 = vadd.f32 %v5074, %v6610
        %v6815 = vadd.f32 %v5075, %v6721
        %v6816 = vadd.f32 %v5076, %v6723
        %v6817 = vadd.f32 %v5077, %v6388
        %v6818 = vadd.f32 %v5078, %v6390
        %v6819 = vadd.f32 %v5079, %v6501
        %v6820 = vadd.f32 %v5080, %v6503
        %v6821 = vadd.f32 %v5081, %v6614
        %v6822 = vadd.f32 %v5082, %v6616
        %v6823 = vadd.f32 %v5083, %v6727
        %v6824 = vadd.f32 %v5084, %v6729
        %v6825 = vadd.f32 %v5085, %v6392
        %v6826 = vadd.f32 %v5086, %v6394
        %v6827 = vadd.f32 %v5087, %v6505
        %v6828 = vadd.f32 %v5088, %v6507
        %v6829 = vadd.f32 %v5089, %v6618
        %v6830 = vadd.f32 %v5090, %v6620
        %v6831 = vadd.f32 %v5091, %v6731
        %v6832 = vadd.f32 %v5092, %v6733
        %v6833 = vadd.f32 %v5093, %v6398
        %v6834 = vadd.f32 %v5094, %v6400
        %v6835 = vadd.f32 %v5095, %v6511
        %v6836 = vadd.f32 %v5096, %v6513
        %v6837 = vadd.f32 %v5097, %v6624
        %v6838 = vadd.f32 %v5098, %v6626
        %v6839 = vadd.f32 %v5099, %v6737
        %v6840 = vadd.f32 %v5100, %v6739
        %v6841 = vadd.f32 %v5101, %v6402
        %v6842 = vadd.f32 %v5102, %v6404
        %v6843 = vadd.f32 %v5103, %v6515
        %v6844 = vadd.f32 %v5104, %v6517
        %v6845 = vadd.f32 %v5105, %v6628
        %v6846 = vadd.f32 %v5106, %v6630
        %v6847 = vadd.f32 %v5107, %v6741
        %v6848 = vadd.f32 %v5108, %v6743
        %v6849 = vadd.f32 %v5109, %v6408
        %v6850 = vadd.f32 %v5110, %v6410
        %v6851 = vadd.f32 %v5111, %v6521
        %v6852 = vadd.f32 %v5112, %v6523
        %v6853 = vadd.f32 %v5113, %v6634
        %v6854 = vadd.f32 %v5114, %v6636
        %v6855 = vadd.f32 %v5115, %v6747
        %v6856 = vadd.f32 %v5116, %v6749
        %v6857 = vadd.f32 %v5117, %v6412
        %v6858 = vadd.f32 %v5118, %v6414
        %v6859 = vadd.f32 %v5119, %v6525
        %v6860 = vadd.f32 %v5120, %v6527
        %v6861 = vadd.f32 %v5121, %v6638
        %v6862 = vadd.f32 %v5122, %v6640
        %v6863 = vadd.f32 %v5123, %v6751
        %v6864 = vadd.f32 %v5124, %v6753
        %v6865 = vadd.f32 %v5125, %v6418
        %v6866 = vadd.f32 %v5126, %v6420
        %v6867 = vadd.f32 %v5127, %v6531
        %v6868 = vadd.f32 %v5128, %v6533
        %v6869 = vadd.f32 %v5129, %v6644
        %v6870 = vadd.f32 %v5130, %v6646
        %v6871 = vadd.f32 %v5131, %v6757
        %v6872 = vadd.f32 %v5132, %v6759
        %v6873 = vadd.f32 %v5133, %v6422
        %v6874 = vadd.f32 %v5134, %v6424
        %v6875 = vadd.f32 %v5135, %v6535
        %v6876 = vadd.f32 %v5136, %v6537
        %v6877 = vadd.f32 %v5137, %v6648
        %v6878 = vadd.f32 %v5138, %v6650
        %v6879 = vadd.f32 %v5139, %v6761
        %v6880 = vadd.f32 %v5140, %v6763
        %v6881 = vadd.f32 %v5141, %v6428
        %v6882 = vadd.f32 %v5142, %v6430
        %v6883 = vadd.f32 %v5143, %v6541
        %v6884 = vadd.f32 %v5144, %v6543
        %v6885 = vadd.f32 %v5145, %v6654
        %v6886 = vadd.f32 %v5146, %v6656
        %v6887 = vadd.f32 %v5147, %v6767
        %v6888 = vadd.f32 %v5148, %v6769
        %v6889 = vadd.f32 %v5149, %v6432
        %v6890 = vadd.f32 %v5150, %v6434
        %v6891 = vadd.f32 %v5151, %v6545
        %v6892 = vadd.f32 %v5152, %v6547
        %v6893 = vadd.f32 %v5153, %v6658
        %v6894 = vadd.f32 %v5154, %v6660
        %v6895 = vadd.f32 %v5155, %v6771
        %v6896 = vadd.f32 %v5156, %v6773
        %v6897 = vadd.f32 %v5157, %v6438
        %v6898 = vadd.f32 %v5158, %v6440
        %v6899 = vadd.f32 %v5159, %v6551
        %v6900 = vadd.f32 %v5160, %v6553
        %v6901 = vadd.f32 %v5161, %v6664
        %v6902 = vadd.f32 %v5162, %v6666
        %v6903 = vadd.f32 %v5163, %v6777
        %v6904 = vadd.f32 %v5164, %v6779
        %v6905 = vadd.f32 %v5165, %v6442
        %v6906 = vadd.f32 %v5166, %v6444
        %v6907 = vadd.f32 %v5167, %v6555
        %v6908 = vadd.f32 %v5168, %v6557
        %v6909 = vadd.f32 %v5169, %v6668
        %v6910 = vadd.f32 %v5170, %v6670
        %v6911 = vadd.f32 %v5171, %v6781
        %v6912 = vadd.f32 %v5172, %v6783
        %v6913 = vmax.f32 %v6785, 0.0
        %v6914 = vmax.f32 %v6786, 0.0
        %v6915 = vmax.f32 %v6787, 0.0
        %v6916 = vmax.f32 %v6788, 0.0
        %v6917 = vmax.f32 %v6789, 0.0
        %v6918 = vmax.f32 %v6790, 0.0
        %v6919 = vmax.f32 %v6791, 0.0
        %v6920 = vmax.f32 %v6792, 0.0
        %v6921 = vmax.f32 %v6793, 0.0
        %v6922 = vmax.f32 %v6794, 0.0
        %v6923 = vmax.f32 %v6795, 0.0
        %v6924 = vmax.f32 %v6796, 0.0
        %v6925 = vmax.f32 %v6797, 0.0
        %v6926 = vmax.f32 %v6798, 0.0
        %v6927 = vmax.f32 %v6799, 0.0
        %v6928 = vmax.f32 %v6800, 0.0
        %v6929 = vmax.f32 %v6801, 0.0
        %v6930 = vmax.f32 %v6802, 0.0
        %v6931 = vmax.f32 %v6803, 0.0
        %v6932 = vmax.f32 %v6804, 0.0
        %v6933 = vmax.f32 %v6805, 0.0
        %v6934 = vmax.f32 %v6806, 0.0
        %v6935 = vmax.f32 %v6807, 0.0
        %v6936 = vmax.f32 %v6808, 0.0
        %v6937 = vmax.f32 %v6809, 0.0
        %v6938 = vmax.f32 %v6810, 0.0
        %v6939 = vmax.f32 %v6811, 0.0
        %v6940 = vmax.f32 %v6812, 0.0
        %v6941 = vmax.f32 %v6813, 0.0
        %v6942 = vmax.f32 %v6814, 0.0
        %v6943 = vmax.f32 %v6815, 0.0
        %v6944 = vmax.f32 %v6816, 0.0
        %v6945 = vmax.f32 %v6817, 0.0
        %v6946 = vmax.f32 %v6818, 0.0
        %v6947 = vmax.f32 %v6819, 0.0
        %v6948 = vmax.f32 %v6820, 0.0
        %v6949 = vmax.f32 %v6821, 0.0
        %v6950 = vmax.f32 %v6822, 0.0
        %v6951 = vmax.f32 %v6823, 0.0
        %v6952 = vmax.f32 %v6824, 0.0
        %v6953 = vmax.f32 %v6825, 0.0
        %v6954 = vmax.f32 %v6826, 0.0
        %v6955 = vmax.f32 %v6827, 0.0
        %v6956 = vmax.f32 %v6828, 0.0
        %v6957 = vmax.f32 %v6829, 0.0
        %v6958 = vmax.f32 %v6830, 0.0
        %v6959 = vmax.f32 %v6831, 0.0
        %v6960 = vmax.f32 %v6832, 0.0
        %v6961 = vmax.f32 %v6833, 0.0
        %v6962 = vmax.f32 %v6834, 0.0
        %v6963 = vmax.f32 %v6835, 0.0
        %v6964 = vmax.f32 %v6836, 0.0
        %v6965 = vmax.f32 %v6837, 0.0
        %v6966 = vmax.f32 %v6838, 0.0
        %v6967 = vmax.f32 %v6839, 0.0
        %v6968 = vmax.f32 %v6840, 0.0
        %v6969 = vmax.f32 %v6841, 0.0
        %v6970 = vmax.f32 %v6842, 0.0
        %v6971 = vmax.f32 %v6843, 0.0
        %v6972 = vmax.f32 %v6844, 0.0
        %v6973 = vmax.f32 %v6845, 0.0
        %v6974 = vmax.f32 %v6846, 0.0
        %v6975 = vmax.f32 %v6847, 0.0
        %v6976 = vmax.f32 %v6848, 0.0
        %v6977 = vmax.f32 %v6849, 0.0
        %v6978 = vmax.f32 %v6850, 0.0
        %v6979 = vmax.f32 %v6851, 0.0
        %v6980 = vmax.f32 %v6852, 0.0
        %v6981 = vmax.f32 %v6853, 0.0
        %v6982 = vmax.f32 %v6854, 0.0
        %v6983 = vmax.f32 %v6855, 0.0
        %v6984 = vmax.f32 %v6856, 0.0
        %v6985 = vmax.f32 %v6857, 0.0
        %v6986 = vmax.f32 %v6858, 0.0
        %v6987 = vmax.f32 %v6859, 0.0
        %v6988 = vmax.f32 %v6860, 0.0
        %v6989 = vmax.f32 %v6861, 0.0
        %v6990 = vmax.f32 %v6862, 0.0
        %v6991 = vmax.f32 %v6863, 0.0
        %v6992 = vmax.f32 %v6864, 0.0
        %v6993 = vmax.f32 %v6865, 0.0
        %v6994 = vmax.f32 %v6866, 0.0
        %v6995 = vmax.f32 %v6867, 0.0
        %v6996 = vmax.f32 %v6868, 0.0
        %v6997 = vmax.f32 %v6869, 0.0
        %v6998 = vmax.f32 %v6870, 0.0
        %v6999 = vmax.f32 %v6871, 0.0
        %v7000 = vmax.f32 %v6872, 0.0
        %v7001 = vmax.f32 %v6873, 0.0
        %v7002 = vmax.f32 %v6874, 0.0
        %v7003 = vmax.f32 %v6875, 0.0
        %v7004 = vmax.f32 %v6876, 0.0
        %v7005 = vmax.f32 %v6877, 0.0
        %v7006 = vmax.f32 %v6878, 0.0
        %v7007 = vmax.f32 %v6879, 0.0
        %v7008 = vmax.f32 %v6880, 0.0
        %v7009 = vmax.f32 %v6881, 0.0
        %v7010 = vmax.f32 %v6882, 0.0
        %v7011 = vmax.f32 %v6883, 0.0
        %v7012 = vmax.f32 %v6884, 0.0
        %v7013 = vmax.f32 %v6885, 0.0
        %v7014 = vmax.f32 %v6886, 0.0
        %v7015 = vmax.f32 %v6887, 0.0
        %v7016 = vmax.f32 %v6888, 0.0
        %v7017 = vmax.f32 %v6889, 0.0
        %v7018 = vmax.f32 %v6890, 0.0
        %v7019 = vmax.f32 %v6891, 0.0
        %v7020 = vmax.f32 %v6892, 0.0
        %v7021 = vmax.f32 %v6893, 0.0
        %v7022 = vmax.f32 %v6894, 0.0
        %v7023 = vmax.f32 %v6895, 0.0
        %v7024 = vmax.f32 %v6896, 0.0
        %v7025 = vmax.f32 %v6897, 0.0
        %v7026 = vmax.f32 %v6898, 0.0
        %v7027 = vmax.f32 %v6899, 0.0
        %v7028 = vmax.f32 %v6900, 0.0
        %v7029 = vmax.f32 %v6901, 0.0
        %v7030 = vmax.f32 %v6902, 0.0
        %v7031 = vmax.f32 %v6903, 0.0
        %v7032 = vmax.f32 %v6904, 0.0
        %v7033 = vmax.f32 %v6905, 0.0
        %v7034 = vmax.f32 %v6906, 0.0
        %v7035 = vmax.f32 %v6907, 0.0
        %v7036 = vmax.f32 %v6908, 0.0
        %v7037 = vmax.f32 %v6909, 0.0
        %v7038 = vmax.f32 %v6910, 0.0
        %v7039 = vmax.f32 %v6911, 0.0
        %v7040 = vmax.f32 %v6912, 0.0
        %v7041 = vpack.c.bf16 %v6921, %v6913
        %v7042 = vpack.c.bf16 %v6922, %v6914
        %v7043 = vpack.c.bf16 %v6923, %v6915
        %v7044 = vpack.c.bf16 %v6924, %v6916
        %v7045 = vpack.c.bf16 %v6925, %v6917
        %v7046 = vpack.c.bf16 %v6926, %v6918
        %v7047 = vpack.c.bf16 %v6927, %v6919
        %v7048 = vpack.c.bf16 %v6928, %v6920
        %v7049 = vpack.c.bf16 %v6937, %v6929
        %v7050 = vpack.c.bf16 %v6938, %v6930
        %v7051 = vpack.c.bf16 %v6939, %v6931
        %v7052 = vpack.c.bf16 %v6940, %v6932
        %v7053 = vpack.c.bf16 %v6941, %v6933
        %v7054 = vpack.c.bf16 %v6942, %v6934
        %v7055 = vpack.c.bf16 %v6943, %v6935
        %v7056 = vpack.c.bf16 %v6944, %v6936
        %v7057 = vpack.c.bf16 %v6953, %v6945
        %v7058 = vpack.c.bf16 %v6954, %v6946
        %v7059 = vpack.c.bf16 %v6955, %v6947
        %v7060 = vpack.c.bf16 %v6956, %v6948
        %v7061 = vpack.c.bf16 %v6957, %v6949
        %v7062 = vpack.c.bf16 %v6958, %v6950
        %v7063 = vpack.c.bf16 %v6959, %v6951
        %v7064 = vpack.c.bf16 %v6960, %v6952
        %v7065 = vpack.c.bf16 %v6969, %v6961
        %v7066 = vpack.c.bf16 %v6970, %v6962
        %v7067 = vpack.c.bf16 %v6971, %v6963
        %v7068 = vpack.c.bf16 %v6972, %v6964
        %v7069 = vpack.c.bf16 %v6973, %v6965
        %v7070 = vpack.c.bf16 %v6974, %v6966
        %v7071 = vpack.c.bf16 %v6975, %v6967
        %v7072 = vpack.c.bf16 %v6976, %v6968
        %v7073 = vpack.c.bf16 %v6985, %v6977
        %v7074 = vpack.c.bf16 %v6986, %v6978
        %v7075 = vpack.c.bf16 %v6987, %v6979
        %v7076 = vpack.c.bf16 %v6988, %v6980
        %v7077 = vpack.c.bf16 %v6989, %v6981
        %v7078 = vpack.c.bf16 %v6990, %v6982
        %v7079 = vpack.c.bf16 %v6991, %v6983
        %v7080 = vpack.c.bf16 %v6992, %v6984
        %v7081 = vpack.c.bf16 %v7001, %v6993
        %v7082 = vpack.c.bf16 %v7002, %v6994
        %v7083 = vpack.c.bf16 %v7003, %v6995
        %v7084 = vpack.c.bf16 %v7004, %v6996
        %v7085 = vpack.c.bf16 %v7005, %v6997
        %v7086 = vpack.c.bf16 %v7006, %v6998
        %v7087 = vpack.c.bf16 %v7007, %v6999
        %v7088 = vpack.c.bf16 %v7008, %v7000
        %v7089 = vpack.c.bf16 %v7017, %v7009
        %v7090 = vpack.c.bf16 %v7018, %v7010
        %v7091 = vpack.c.bf16 %v7019, %v7011
        %v7092 = vpack.c.bf16 %v7020, %v7012
        %v7093 = vpack.c.bf16 %v7021, %v7013
        %v7094 = vpack.c.bf16 %v7022, %v7014
        %v7095 = vpack.c.bf16 %v7023, %v7015
        %v7096 = vpack.c.bf16 %v7024, %v7016
        %v7097 = vpack.c.bf16 %v7033, %v7025
        %v7098 = vpack.c.bf16 %v7034, %v7026
        %v7099 = vpack.c.bf16 %v7035, %v7027
        %v7100 = vpack.c.bf16 %v7036, %v7028
        %v7101 = vpack.c.bf16 %v7037, %v7029
        %v7102 = vpack.c.bf16 %v7038, %v7030
        %v7103 = vpack.c.bf16 %v7039, %v7031
        %v7104 = vpack.c.bf16 %v7040, %v7032
        %s7105 = scalar_lea.vmem %s3, 192
        %v7106 = vld [vmem:[%s7105] sm:$0xf]
        %v7107 = vld [vmem:[%s7105 + $0x4] sm:$0xf]
        %v7108 = vld [vmem:[%s7105 + $0x8] sm:$0xf]
        %v7109 = vld [vmem:[%s7105 + $0xc] sm:$0xf]
        %v7110 = vld [vmem:[%s7105 + $0x10] sm:$0xf]
        %v7111 = vld [vmem:[%s7105 + $0x14] sm:$0xf]
        %v7112 = vld [vmem:[%s7105 + $0x18] sm:$0xf]
        %v7113 = vld [vmem:[%s7105 + $0x1c] sm:$0xf]
        %v7114 = vld [vmem:[%s7105 + $0x20] sm:$0xf]
        %v7115 = vld [vmem:[%s7105 + $0x24] sm:$0xf]
        %v7116 = vld [vmem:[%s7105 + $0x28] sm:$0xf]
        %v7117 = vld [vmem:[%s7105 + $0x2c] sm:$0xf]
        %v7118 = vld [vmem:[%s7105 + $0x30] sm:$0xf]
        %v7119 = vld [vmem:[%s7105 + $0x34] sm:$0xf]
        %v7120 = vld [vmem:[%s7105 + $0x38] sm:$0xf]
        %v7121 = vld [vmem:[%s7105 + $0x3c] sm:$0xf]
        %s7122 = scalar_lea.vmem %s4, 384
        %v7123 = vld [vmem:[%s7122] sm:$0xff]
        %v7124 = vld [vmem:[%s7122 + $0x8] sm:$0xff]
        %v7125 = vld [vmem:[%s7122 + $0x10] sm:$0xff]
        %v7126 = vld [vmem:[%s7122 + $0x18] sm:$0xff]
        %v7127 = vld [vmem:[%s7122 + $0x20] sm:$0xff]
        %v7128 = vld [vmem:[%s7122 + $0x28] sm:$0xff]
        %v7129 = vld [vmem:[%s7122 + $0x30] sm:$0xff]
        %v7130 = vld [vmem:[%s7122 + $0x38] sm:$0xff]
        %v7131 = vld [vmem:[%s7122 + $0x40] sm:$0xff]
        %v7132 = vld [vmem:[%s7122 + $0x48] sm:$0xff]
        %v7133 = vld [vmem:[%s7122 + $0x50] sm:$0xff]
        %v7134 = vld [vmem:[%s7122 + $0x58] sm:$0xff]
        %v7135 = vld [vmem:[%s7122 + $0x60] sm:$0xff]
        %v7136 = vld [vmem:[%s7122 + $0x68] sm:$0xff]
        %v7137 = vld [vmem:[%s7122 + $0x70] sm:$0xff]
        %v7138 = vld [vmem:[%s7122 + $0x78] sm:$0xff]
        %7140 = vset.pattern.permute.xlu0 0
        %7141 = vperm.xlu0 %7140, %v7123
        %v7142 = vpop.permute.xlu0 %7141
        %7145 = vset.pattern.permute.xlu0 0
        %7146 = vperm.xlu0 %7145, %v7124
        %v7147 = vpop.permute.xlu0 %7146
        %7150 = vset.pattern.permute.xlu0 0
        %7151 = vperm.xlu0 %7150, %v7125
        %v7152 = vpop.permute.xlu0 %7151
        %7155 = vset.pattern.permute.xlu0 0
        %7156 = vperm.xlu0 %7155, %v7126
        %v7157 = vpop.permute.xlu0 %7156
        %7160 = vset.pattern.permute.xlu0 0
        %7161 = vperm.xlu0 %7160, %v7127
        %v7162 = vpop.permute.xlu0 %7161
        %7165 = vset.pattern.permute.xlu0 0
        %7166 = vperm.xlu0 %7165, %v7128
        %v7167 = vpop.permute.xlu0 %7166
        %7170 = vset.pattern.permute.xlu0 0
        %7171 = vperm.xlu0 %7170, %v7129
        %v7172 = vpop.permute.xlu0 %7171
        %7175 = vset.pattern.permute.xlu0 0
        %7176 = vperm.xlu0 %7175, %v7130
        %v7177 = vpop.permute.xlu0 %7176
        %7180 = vset.pattern.permute.xlu0 0
        %7181 = vperm.xlu0 %7180, %v7131
        %v7182 = vpop.permute.xlu0 %7181
        %7185 = vset.pattern.permute.xlu0 0
        %7186 = vperm.xlu0 %7185, %v7132
        %v7187 = vpop.permute.xlu0 %7186
        %7190 = vset.pattern.permute.xlu0 0
        %7191 = vperm.xlu0 %7190, %v7133
        %v7192 = vpop.permute.xlu0 %7191
        %7195 = vset.pattern.permute.xlu0 0
        %7196 = vperm.xlu0 %7195, %v7134
        %v7197 = vpop.permute.xlu0 %7196
        %7200 = vset.pattern.permute.xlu0 0
        %7201 = vperm.xlu0 %7200, %v7135
        %v7202 = vpop.permute.xlu0 %7201
        %7205 = vset.pattern.permute.xlu0 0
        %7206 = vperm.xlu0 %7205, %v7136
        %v7207 = vpop.permute.xlu0 %7206
        %7210 = vset.pattern.permute.xlu0 0
        %7211 = vperm.xlu0 %7210, %v7137
        %v7212 = vpop.permute.xlu0 %7211
        %7215 = vset.pattern.permute.xlu0 0
        %7216 = vperm.xlu0 %7215, %v7138
        %v7217 = vpop.permute.xlu0 %7216
        %v7235 = vunpack.c.l.b16 %v7106
        %v7236 = vunpack.c.l.b16 %v7107
        %v7237 = vunpack.c.l.b16 %v7108
        %v7238 = vunpack.c.l.b16 %v7109
        %v7239 = vunpack.c.l.b16 %v7110
        %v7240 = vunpack.c.l.b16 %v7111
        %v7241 = vunpack.c.l.b16 %v7112
        %v7242 = vunpack.c.l.b16 %v7113
        %v7243 = vunpack.c.l.b16 %v7114
        %v7244 = vunpack.c.l.b16 %v7115
        %v7245 = vunpack.c.l.b16 %v7116
        %v7246 = vunpack.c.l.b16 %v7117
        %v7247 = vunpack.c.l.b16 %v7118
        %v7248 = vunpack.c.l.b16 %v7119
        %v7249 = vunpack.c.l.b16 %v7120
        %v7250 = vunpack.c.l.b16 %v7121
        %v7251 = vpack.c.b16 %v7236, %v7235
        %v7252 = vpack.c.b16 %v7238, %v7237
        %v7253 = vpack.c.b16 %v7240, %v7239
        %v7254 = vpack.c.b16 %v7242, %v7241
        %v7255 = vpack.c.b16 %v7244, %v7243
        %v7256 = vpack.c.b16 %v7246, %v7245
        %v7257 = vpack.c.b16 %v7248, %v7247
        %v7258 = vpack.c.b16 %v7250, %v7249
        %7267 = vmatprep.subr.bf16.mxu0 %v7042
        %7268 = vmatpush1.bf16.msra.mxu0 %v7041
        %7269 = vmatprep.subr.bf16.mxu0 %v7050
        %7270 = vmatpush1.bf16.msra.mxu0 %v7049
        %7271 = vmatprep.subr.bf16.mxu0 %v7058
        %7272 = vmatpush1.bf16.msra.mxu0 %v7057
        %7273 = vmatprep.subr.bf16.mxu0 %v7066
        %7274 = vmatpush1.bf16.msra.mxu0 %v7065
        %7275 = vmatprep.subr.bf16.mxu0 %v7074
        %7276 = vmatpush1.bf16.msra.mxu0 %v7073
        %7277 = vmatprep.subr.bf16.mxu0 %v7082
        %7278 = vmatpush1.bf16.msra.mxu0 %v7081
        %7279 = vmatprep.subr.bf16.mxu0 %v7090
        %7280 = vmatpush1.bf16.msra.mxu0 %v7089
        %7281 = vmatprep.subr.bf16.mxu0 %v7098
        %7282 = vmatpush1.bf16.msra.mxu0 %v7097
        %7283 = vmatprep.subr.bf16.mxu0 0
        %7284 = vmatpush1.bf16.msra.mxu0 0
        %7285 = vmatprep.subr.bf16.mxu0 0
        %7286 = vmatpush1.bf16.msra.mxu0 0
        %7287 = vmatprep.subr.bf16.mxu0 0
        %7288 = vmatpush1.bf16.msra.mxu0 0
        %7289 = vmatprep.subr.bf16.mxu0 0
        %7290 = vmatpush1.bf16.msra.mxu0 0
        %7291 = vmatprep.subr.bf16.mxu0 0
        %7292 = vmatpush1.bf16.msra.mxu0 0
        %7293 = vmatprep.subr.bf16.mxu0 0
        %7294 = vmatpush1.bf16.msra.mxu0 0
        %7295 = vmatprep.subr.bf16.mxu0 0
        %7296 = vmatpush1.bf16.msra.mxu0 0
        %7297 = vmatprep.subr.bf16.mxu0 0
        %7298 = vmatpush1.bf16.msra.mxu0 0
        %7299 = vmatprep.mubr.bf16.mxu0 0
        %7300 = vmatmul.mubr.bf16.gmra.mrb[0].mxu0 %v7251
        %v7301 = vpop.f32.mrb[0].mxu0
        %v7302 = vadd.f32 %v7142, %v7301
        %v7303 = vpop.f32.mrb[0].mxu0
        %v7304 = vadd.f32 %v7142, %v7303
        %v7305 = vpop.f32.mrb[0].mxu0
        %v7306 = vadd.f32 %v7147, %v7305
        %v7307 = vpop.f32.mrb[0].mxu0
        %v7308 = vadd.f32 %v7147, %v7307
        %7309 = vmatprep.mubr.bf16.mxu0 0
        %7310 = vmatmul.mubr.bf16.gmra.mrb[0].mxu0 %v7252
        %v7311 = vpop.f32.mrb[0].mxu0
        %v7312 = vadd.f32 %v7152, %v7311
        %v7313 = vpop.f32.mrb[0].mxu0
        %v7314 = vadd.f32 %v7152, %v7313
        %v7315 = vpop.f32.mrb[0].mxu0
        %v7316 = vadd.f32 %v7157, %v7315
        %v7317 = vpop.f32.mrb[0].mxu0
        %v7318 = vadd.f32 %v7157, %v7317
        %7319 = vmatprep.mubr.bf16.mxu0 0
        %7320 = vmatmul.mubr.bf16.gmra.mrb[0].mxu0 %v7253
        %v7321 = vpop.f32.mrb[0].mxu0
        %v7322 = vadd.f32 %v7162, %v7321
        %v7323 = vpop.f32.mrb[0].mxu0
        %v7324 = vadd.f32 %v7162, %v7323
        %v7325 = vpop.f32.mrb[0].mxu0
        %v7326 = vadd.f32 %v7167, %v7325
        %v7327 = vpop.f32.mrb[0].mxu0
        %v7328 = vadd.f32 %v7167, %v7327
        %7329 = vmatprep.mubr.bf16.mxu0 0
        %7330 = vmatmul.mubr.bf16.gmra.mrb[0].mxu0 %v7254
        %v7331 = vpop.f32.mrb[0].mxu0
        %v7332 = vadd.f32 %v7172, %v7331
        %v7333 = vpop.f32.mrb[0].mxu0
        %v7334 = vadd.f32 %v7172, %v7333
        %v7335 = vpop.f32.mrb[0].mxu0
        %v7336 = vadd.f32 %v7177, %v7335
        %v7337 = vpop.f32.mrb[0].mxu0
        %v7338 = vadd.f32 %v7177, %v7337
        %7339 = vmatprep.mubr.bf16.mxu0 0
        %7340 = vmatmul.mubr.bf16.gmra.mrb[0].mxu0 %v7255
        %v7341 = vpop.f32.mrb[0].mxu0
        %v7342 = vadd.f32 %v7182, %v7341
        %v7343 = vpop.f32.mrb[0].mxu0
        %v7344 = vadd.f32 %v7182, %v7343
        %v7345 = vpop.f32.mrb[0].mxu0
        %v7346 = vadd.f32 %v7187, %v7345
        %v7347 = vpop.f32.mrb[0].mxu0
        %v7348 = vadd.f32 %v7187, %v7347
        %7349 = vmatprep.mubr.bf16.mxu0 0
        %7350 = vmatmul.mubr.bf16.gmra.mrb[0].mxu0 %v7256
        %v7351 = vpop.f32.mrb[0].mxu0
        %v7352 = vadd.f32 %v7192, %v7351
        %v7353 = vpop.f32.mrb[0].mxu0
        %v7354 = vadd.f32 %v7192, %v7353
        %v7355 = vpop.f32.mrb[0].mxu0
        %v7356 = vadd.f32 %v7197, %v7355
        %v7357 = vpop.f32.mrb[0].mxu0
        %v7358 = vadd.f32 %v7197, %v7357
        %7359 = vmatprep.mubr.bf16.mxu0 0
        %7360 = vmatmul.mubr.bf16.gmra.mrb[0].mxu0 %v7257
        %v7361 = vpop.f32.mrb[0].mxu0
        %v7362 = vadd.f32 %v7202, %v7361
        %v7363 = vpop.f32.mrb[0].mxu0
        %v7364 = vadd.f32 %v7202, %v7363
        %v7365 = vpop.f32.mrb[0].mxu0
        %v7366 = vadd.f32 %v7207, %v7365
        %v7367 = vpop.f32.mrb[0].mxu0
        %v7368 = vadd.f32 %v7207, %v7367
        %7369 = vmatprep.mubr.bf16.mxu0 0
        %7370 = vmatmul.mubr.bf16.gmra.mrb[0].mxu0 %v7258
        %v7371 = vpop.f32.mrb[0].mxu0
        %v7372 = vadd.f32 %v7212, %v7371
        %v7373 = vpop.f32.mrb[0].mxu0
        %v7374 = vadd.f32 %v7212, %v7373
        %v7375 = vpop.f32.mrb[0].mxu0
        %v7376 = vadd.f32 %v7217, %v7375
        %v7377 = vpop.f32.mrb[0].mxu0
        %v7378 = vadd.f32 %v7217, %v7377
        %7379 = vdwg.mxu0
        %7380 = vmatprep.subr.bf16.mxu0 %v7044
        %7381 = vmatpush1.bf16.msra.mxu0 %v7043
        %7382 = vmatprep.subr.bf16.mxu0 %v7052
        %7383 = vmatpush1.bf16.msra.mxu0 %v7051
        %7384 = vmatprep.subr.bf16.mxu0 %v7060
        %7385 = vmatpush1.bf16.msra.mxu0 %v7059
        %7386 = vmatprep.subr.bf16.mxu0 %v7068
        %7387 = vmatpush1.bf16.msra.mxu0 %v7067
        %7388 = vmatprep.subr.bf16.mxu0 %v7076
        %7389 = vmatpush1.bf16.msra.mxu0 %v7075
        %7390 = vmatprep.subr.bf16.mxu0 %v7084
        %7391 = vmatpush1.bf16.msra.mxu0 %v7083
        %7392 = vmatprep.subr.bf16.mxu0 %v7092
        %7393 = vmatpush1.bf16.msra.mxu0 %v7091
        %7394 = vmatprep.subr.bf16.mxu0 %v7100
        %7395 = vmatpush1.bf16.msra.mxu0 %v7099
        %7396 = vmatprep.subr.bf16.mxu0 0
        %7397 = vmatpush1.bf16.msra.mxu0 0
        %7398 = vmatprep.subr.bf16.mxu0 0
        %7399 = vmatpush1.bf16.msra.mxu0 0
        %7400 = vmatprep.subr.bf16.mxu0 0
        %7401 = vmatpush1.bf16.msra.mxu0 0
        %7402 = vmatprep.subr.bf16.mxu0 0
        %7403 = vmatpush1.bf16.msra.mxu0 0
        %7404 = vmatprep.subr.bf16.mxu0 0
        %7405 = vmatpush1.bf16.msra.mxu0 0
        %7406 = vmatprep.subr.bf16.mxu0 0
        %7407 = vmatpush1.bf16.msra.mxu0 0
        %7408 = vmatprep.subr.bf16.mxu0 0
        %7409 = vmatpush1.bf16.msra.mxu0 0
        %7410 = vmatprep.subr.bf16.mxu0 0
        %7411 = vmatpush1.bf16.msra.mxu0 0
        %7412 = vmatprep.mubr.bf16.mxu0 0
        %7413 = vmatmul.mubr.bf16.gmra.mrb[0].mxu0 %v7251
        %v7414 = vpop.f32.mrb[0].mxu0
        %v7415 = vadd.f32 %v7142, %v7414
        %v7416 = vpop.f32.mrb[0].mxu0
        %v7417 = vadd.f32 %v7142, %v7416
        %v7418 = vpop.f32.mrb[0].mxu0
        %v7419 = vadd.f32 %v7147, %v7418
        %v7420 = vpop.f32.mrb[0].mxu0
        %v7421 = vadd.f32 %v7147, %v7420
        %7422 = vmatprep.mubr.bf16.mxu0 0
        %7423 = vmatmul.mubr.bf16.gmra.mrb[0].mxu0 %v7252
        %v7424 = vpop.f32.mrb[0].mxu0
        %v7425 = vadd.f32 %v7152, %v7424
        %v7426 = vpop.f32.mrb[0].mxu0
        %v7427 = vadd.f32 %v7152, %v7426
        %v7428 = vpop.f32.mrb[0].mxu0
        %v7429 = vadd.f32 %v7157, %v7428
        %v7430 = vpop.f32.mrb[0].mxu0
        %v7431 = vadd.f32 %v7157, %v7430
        %7432 = vmatprep.mubr.bf16.mxu0 0
        %7433 = vmatmul.mubr.bf16.gmra.mrb[0].mxu0 %v7253
        %v7434 = vpop.f32.mrb[0].mxu0
        %v7435 = vadd.f32 %v7162, %v7434
        %v7436 = vpop.f32.mrb[0].mxu0
        %v7437 = vadd.f32 %v7162, %v7436
        %v7438 = vpop.f32.mrb[0].mxu0
        %v7439 = vadd.f32 %v7167, %v7438
        %v7440 = vpop.f32.mrb[0].mxu0
        %v7441 = vadd.f32 %v7167, %v7440
        %7442 = vmatprep.mubr.bf16.mxu0 0
        %7443 = vmatmul.mubr.bf16.gmra.mrb[0].mxu0 %v7254
        %v7444 = vpop.f32.mrb[0].mxu0
        %v7445 = vadd.f32 %v7172, %v7444
        %v7446 = vpop.f32.mrb[0].mxu0
        %v7447 = vadd.f32 %v7172, %v7446
        %v7448 = vpop.f32.mrb[0].mxu0
        %v7449 = vadd.f32 %v7177, %v7448
        %v7450 = vpop.f32.mrb[0].mxu0
        %v7451 = vadd.f32 %v7177, %v7450
        %7452 = vmatprep.mubr.bf16.mxu0 0
        %7453 = vmatmul.mubr.bf16.gmra.mrb[0].mxu0 %v7255
        %v7454 = vpop.f32.mrb[0].mxu0
        %v7455 = vadd.f32 %v7182, %v7454
        %v7456 = vpop.f32.mrb[0].mxu0
        %v7457 = vadd.f32 %v7182, %v7456
        %v7458 = vpop.f32.mrb[0].mxu0
        %v7459 = vadd.f32 %v7187, %v7458
        %v7460 = vpop.f32.mrb[0].mxu0
        %v7461 = vadd.f32 %v7187, %v7460
        %7462 = vmatprep.mubr.bf16.mxu0 0
        %7463 = vmatmul.mubr.bf16.gmra.mrb[0].mxu0 %v7256
        %v7464 = vpop.f32.mrb[0].mxu0
        %v7465 = vadd.f32 %v7192, %v7464
        %v7466 = vpop.f32.mrb[0].mxu0
        %v7467 = vadd.f32 %v7192, %v7466
        %v7468 = vpop.f32.mrb[0].mxu0
        %v7469 = vadd.f32 %v7197, %v7468
        %v7470 = vpop.f32.mrb[0].mxu0
        %v7471 = vadd.f32 %v7197, %v7470
        %7472 = vmatprep.mubr.bf16.mxu0 0
        %7473 = vmatmul.mubr.bf16.gmra.mrb[0].mxu0 %v7257
        %v7474 = vpop.f32.mrb[0].mxu0
        %v7475 = vadd.f32 %v7202, %v7474
        %v7476 = vpop.f32.mrb[0].mxu0
        %v7477 = vadd.f32 %v7202, %v7476
        %v7478 = vpop.f32.mrb[0].mxu0
        %v7479 = vadd.f32 %v7207, %v7478
        %v7480 = vpop.f32.mrb[0].mxu0
        %v7481 = vadd.f32 %v7207, %v7480
        %7482 = vmatprep.mubr.bf16.mxu0 0
        %7483 = vmatmul.mubr.bf16.gmra.mrb[0].mxu0 %v7258
        %v7484 = vpop.f32.mrb[0].mxu0
        %v7485 = vadd.f32 %v7212, %v7484
        %v7486 = vpop.f32.mrb[0].mxu0
        %v7487 = vadd.f32 %v7212, %v7486
        %v7488 = vpop.f32.mrb[0].mxu0
        %v7489 = vadd.f32 %v7217, %v7488
        %v7490 = vpop.f32.mrb[0].mxu0
        %v7491 = vadd.f32 %v7217, %v7490
        %7492 = vdwg.mxu0
        %7493 = vmatprep.subr.bf16.mxu0 %v7046
        %7494 = vmatpush1.bf16.msra.mxu0 %v7045
        %7495 = vmatprep.subr.bf16.mxu0 %v7054
        %7496 = vmatpush1.bf16.msra.mxu0 %v7053
        %7497 = vmatprep.subr.bf16.mxu0 %v7062
        %7498 = vmatpush1.bf16.msra.mxu0 %v7061
        %7499 = vmatprep.subr.bf16.mxu0 %v7070
        %7500 = vmatpush1.bf16.msra.mxu0 %v7069
        %7501 = vmatprep.subr.bf16.mxu0 %v7078
        %7502 = vmatpush1.bf16.msra.mxu0 %v7077
        %7503 = vmatprep.subr.bf16.mxu0 %v7086
        %7504 = vmatpush1.bf16.msra.mxu0 %v7085
        %7505 = vmatprep.subr.bf16.mxu0 %v7094
        %7506 = vmatpush1.bf16.msra.mxu0 %v7093
        %7507 = vmatprep.subr.bf16.mxu0 %v7102
        %7508 = vmatpush1.bf16.msra.mxu0 %v7101
        %7509 = vmatprep.subr.bf16.mxu0 0
        %7510 = vmatpush1.bf16.msra.mxu0 0
        %7511 = vmatprep.subr.bf16.mxu0 0
        %7512 = vmatpush1.bf16.msra.mxu0 0
        %7513 = vmatprep.subr.bf16.mxu0 0
        %7514 = vmatpush1.bf16.msra.mxu0 0
        %7515 = vmatprep.subr.bf16.mxu0 0
        %7516 = vmatpush1.bf16.msra.mxu0 0
        %7517 = vmatprep.subr.bf16.mxu0 0
        %7518 = vmatpush1.bf16.msra.mxu0 0
        %7519 = vmatprep.subr.bf16.mxu0 0
        %7520 = vmatpush1.bf16.msra.mxu0 0
        %7521 = vmatprep.subr.bf16.mxu0 0
        %7522 = vmatpush1.bf16.msra.mxu0 0
        %7523 = vmatprep.subr.bf16.mxu0 0
        %7524 = vmatpush1.bf16.msra.mxu0 0
        %7525 = vmatprep.mubr.bf16.mxu0 0
        %7526 = vmatmul.mubr.bf16.gmra.mrb[0].mxu0 %v7251
        %v7527 = vpop.f32.mrb[0].mxu0
        %v7528 = vadd.f32 %v7142, %v7527
        %v7529 = vpop.f32.mrb[0].mxu0
        %v7530 = vadd.f32 %v7142, %v7529
        %v7531 = vpop.f32.mrb[0].mxu0
        %v7532 = vadd.f32 %v7147, %v7531
        %v7533 = vpop.f32.mrb[0].mxu0
        %v7534 = vadd.f32 %v7147, %v7533
        %7535 = vmatprep.mubr.bf16.mxu0 0
        %7536 = vmatmul.mubr.bf16.gmra.mrb[0].mxu0 %v7252
        %v7537 = vpop.f32.mrb[0].mxu0
        %v7538 = vadd.f32 %v7152, %v7537
        %v7539 = vpop.f32.mrb[0].mxu0
        %v7540 = vadd.f32 %v7152, %v7539
        %v7541 = vpop.f32.mrb[0].mxu0
        %v7542 = vadd.f32 %v7157, %v7541
        %v7543 = vpop.f32.mrb[0].mxu0
        %v7544 = vadd.f32 %v7157, %v7543
        %7545 = vmatprep.mubr.bf16.mxu0 0
        %7546 = vmatmul.mubr.bf16.gmra.mrb[0].mxu0 %v7253
        %v7547 = vpop.f32.mrb[0].mxu0
        %v7548 = vadd.f32 %v7162, %v7547
        %v7549 = vpop.f32.mrb[0].mxu0
        %v7550 = vadd.f32 %v7162, %v7549
        %v7551 = vpop.f32.mrb[0].mxu0
        %v7552 = vadd.f32 %v7167, %v7551
        %v7553 = vpop.f32.mrb[0].mxu0
        %v7554 = vadd.f32 %v7167, %v7553
        %7555 = vmatprep.mubr.bf16.mxu0 0
        %7556 = vmatmul.mubr.bf16.gmra.mrb[0].mxu0 %v7254
        %v7557 = vpop.f32.mrb[0].mxu0
        %v7558 = vadd.f32 %v7172, %v7557
        %v7559 = vpop.f32.mrb[0].mxu0
        %v7560 = vadd.f32 %v7172, %v7559
        %v7561 = vpop.f32.mrb[0].mxu0
        %v7562 = vadd.f32 %v7177, %v7561
        %v7563 = vpop.f32.mrb[0].mxu0
        %v7564 = vadd.f32 %v7177, %v7563
        %7565 = vmatprep.mubr.bf16.mxu0 0
        %7566 = vmatmul.mubr.bf16.gmra.mrb[0].mxu0 %v7255
        %v7567 = vpop.f32.mrb[0].mxu0
        %v7568 = vadd.f32 %v7182, %v7567
        %v7569 = vpop.f32.mrb[0].mxu0
        %v7570 = vadd.f32 %v7182, %v7569
        %v7571 = vpop.f32.mrb[0].mxu0
        %v7572 = vadd.f32 %v7187, %v7571
        %v7573 = vpop.f32.mrb[0].mxu0
        %v7574 = vadd.f32 %v7187, %v7573
        %7575 = vmatprep.mubr.bf16.mxu0 0
        %7576 = vmatmul.mubr.bf16.gmra.mrb[0].mxu0 %v7256
        %v7577 = vpop.f32.mrb[0].mxu0
        %v7578 = vadd.f32 %v7192, %v7577
        %v7579 = vpop.f32.mrb[0].mxu0
        %v7580 = vadd.f32 %v7192, %v7579
        %v7581 = vpop.f32.mrb[0].mxu0
        %v7582 = vadd.f32 %v7197, %v7581
        %v7583 = vpop.f32.mrb[0].mxu0
        %v7584 = vadd.f32 %v7197, %v7583
        %7585 = vmatprep.mubr.bf16.mxu0 0
        %7586 = vmatmul.mubr.bf16.gmra.mrb[0].mxu0 %v7257
        %v7587 = vpop.f32.mrb[0].mxu0
        %v7588 = vadd.f32 %v7202, %v7587
        %v7589 = vpop.f32.mrb[0].mxu0
        %v7590 = vadd.f32 %v7202, %v7589
        %v7591 = vpop.f32.mrb[0].mxu0
        %v7592 = vadd.f32 %v7207, %v7591
        %v7593 = vpop.f32.mrb[0].mxu0
        %v7594 = vadd.f32 %v7207, %v7593
        %7595 = vmatprep.mubr.bf16.mxu0 0
        %7596 = vmatmul.mubr.bf16.gmra.mrb[0].mxu0 %v7258
        %v7597 = vpop.f32.mrb[0].mxu0
        %v7598 = vadd.f32 %v7212, %v7597
        %v7599 = vpop.f32.mrb[0].mxu0
        %v7600 = vadd.f32 %v7212, %v7599
        %v7601 = vpop.f32.mrb[0].mxu0
        %v7602 = vadd.f32 %v7217, %v7601
        %v7603 = vpop.f32.mrb[0].mxu0
        %v7604 = vadd.f32 %v7217, %v7603
        %7605 = vdwg.mxu0
        %7606 = vmatprep.subr.bf16.mxu0 %v7048
        %7607 = vmatpush1.bf16.msra.mxu0 %v7047
        %7608 = vmatprep.subr.bf16.mxu0 %v7056
        %7609 = vmatpush1.bf16.msra.mxu0 %v7055
        %7610 = vmatprep.subr.bf16.mxu0 %v7064
        %7611 = vmatpush1.bf16.msra.mxu0 %v7063
        %7612 = vmatprep.subr.bf16.mxu0 %v7072
        %7613 = vmatpush1.bf16.msra.mxu0 %v7071
        %7614 = vmatprep.subr.bf16.mxu0 %v7080
        %7615 = vmatpush1.bf16.msra.mxu0 %v7079
        %7616 = vmatprep.subr.bf16.mxu0 %v7088
        %7617 = vmatpush1.bf16.msra.mxu0 %v7087
        %7618 = vmatprep.subr.bf16.mxu0 %v7096
        %7619 = vmatpush1.bf16.msra.mxu0 %v7095
        %7620 = vmatprep.subr.bf16.mxu0 %v7104
        %7621 = vmatpush1.bf16.msra.mxu0 %v7103
        %7622 = vmatprep.subr.bf16.mxu0 0
        %7623 = vmatpush1.bf16.msra.mxu0 0
        %7624 = vmatprep.subr.bf16.mxu0 0
        %7625 = vmatpush1.bf16.msra.mxu0 0
        %7626 = vmatprep.subr.bf16.mxu0 0
        %7627 = vmatpush1.bf16.msra.mxu0 0
        %7628 = vmatprep.subr.bf16.mxu0 0
        %7629 = vmatpush1.bf16.msra.mxu0 0
        %7630 = vmatprep.subr.bf16.mxu0 0
        %7631 = vmatpush1.bf16.msra.mxu0 0
        %7632 = vmatprep.subr.bf16.mxu0 0
        %7633 = vmatpush1.bf16.msra.mxu0 0
        %7634 = vmatprep.subr.bf16.mxu0 0
        %7635 = vmatpush1.bf16.msra.mxu0 0
        %7636 = vmatprep.subr.bf16.mxu0 0
        %7637 = vmatpush1.bf16.msra.mxu0 0
        %7638 = vmatprep.mubr.bf16.mxu0 0
        %7639 = vmatmul.mubr.bf16.gmra.mrb[0].mxu0 %v7251
        %v7640 = vpop.f32.mrb[0].mxu0
        %v7641 = vadd.f32 %v7142, %v7640
        %v7642 = vpop.f32.mrb[0].mxu0
        %v7643 = vadd.f32 %v7142, %v7642
        %v7644 = vpop.f32.mrb[0].mxu0
        %v7645 = vadd.f32 %v7147, %v7644
        %v7646 = vpop.f32.mrb[0].mxu0
        %v7647 = vadd.f32 %v7147, %v7646
        %7648 = vmatprep.mubr.bf16.mxu0 0
        %7649 = vmatmul.mubr.bf16.gmra.mrb[0].mxu0 %v7252
        %v7650 = vpop.f32.mrb[0].mxu0
        %v7651 = vadd.f32 %v7152, %v7650
        %v7652 = vpop.f32.mrb[0].mxu0
        %v7653 = vadd.f32 %v7152, %v7652
        %v7654 = vpop.f32.mrb[0].mxu0
        %v7655 = vadd.f32 %v7157, %v7654
        %v7656 = vpop.f32.mrb[0].mxu0
        %v7657 = vadd.f32 %v7157, %v7656
        %7658 = vmatprep.mubr.bf16.mxu0 0
        %7659 = vmatmul.mubr.bf16.gmra.mrb[0].mxu0 %v7253
        %v7660 = vpop.f32.mrb[0].mxu0
        %v7661 = vadd.f32 %v7162, %v7660
        %v7662 = vpop.f32.mrb[0].mxu0
        %v7663 = vadd.f32 %v7162, %v7662
        %v7664 = vpop.f32.mrb[0].mxu0
        %v7665 = vadd.f32 %v7167, %v7664
        %v7666 = vpop.f32.mrb[0].mxu0
        %v7667 = vadd.f32 %v7167, %v7666
        %7668 = vmatprep.mubr.bf16.mxu0 0
        %7669 = vmatmul.mubr.bf16.gmra.mrb[0].mxu0 %v7254
        %v7670 = vpop.f32.mrb[0].mxu0
        %v7671 = vadd.f32 %v7172, %v7670
        %v7672 = vpop.f32.mrb[0].mxu0
        %v7673 = vadd.f32 %v7172, %v7672
        %v7674 = vpop.f32.mrb[0].mxu0
        %v7675 = vadd.f32 %v7177, %v7674
        %v7676 = vpop.f32.mrb[0].mxu0
        %v7677 = vadd.f32 %v7177, %v7676
        %7678 = vmatprep.mubr.bf16.mxu0 0
        %7679 = vmatmul.mubr.bf16.gmra.mrb[0].mxu0 %v7255
        %v7680 = vpop.f32.mrb[0].mxu0
        %v7681 = vadd.f32 %v7182, %v7680
        %v7682 = vpop.f32.mrb[0].mxu0
        %v7683 = vadd.f32 %v7182, %v7682
        %v7684 = vpop.f32.mrb[0].mxu0
        %v7685 = vadd.f32 %v7187, %v7684
        %v7686 = vpop.f32.mrb[0].mxu0
        %v7687 = vadd.f32 %v7187, %v7686
        %7688 = vmatprep.mubr.bf16.mxu0 0
        %7689 = vmatmul.mubr.bf16.gmra.mrb[0].mxu0 %v7256
        %v7690 = vpop.f32.mrb[0].mxu0
        %v7691 = vadd.f32 %v7192, %v7690
        %v7692 = vpop.f32.mrb[0].mxu0
        %v7693 = vadd.f32 %v7192, %v7692
        %v7694 = vpop.f32.mrb[0].mxu0
        %v7695 = vadd.f32 %v7197, %v7694
        %v7696 = vpop.f32.mrb[0].mxu0
        %v7697 = vadd.f32 %v7197, %v7696
        %7698 = vmatprep.mubr.bf16.mxu0 0
        %7699 = vmatmul.mubr.bf16.gmra.mrb[0].mxu0 %v7257
        %v7700 = vpop.f32.mrb[0].mxu0
        %v7701 = vadd.f32 %v7202, %v7700
        %v7702 = vpop.f32.mrb[0].mxu0
        %v7703 = vadd.f32 %v7202, %v7702
        %v7704 = vpop.f32.mrb[0].mxu0
        %v7705 = vadd.f32 %v7207, %v7704
        %v7706 = vpop.f32.mrb[0].mxu0
        %v7707 = vadd.f32 %v7207, %v7706
        %7708 = vmatprep.mubr.bf16.mxu0 0
        %7709 = vmatmul.mubr.bf16.gmra.mrb[0].mxu0 %v7258
        %v7710 = vpop.f32.mrb[0].mxu0
        %v7711 = vadd.f32 %v7212, %v7710
        %v7712 = vpop.f32.mrb[0].mxu0
        %v7713 = vadd.f32 %v7212, %v7712
        %v7714 = vpop.f32.mrb[0].mxu0
        %v7715 = vadd.f32 %v7217, %v7714
        %v7716 = vpop.f32.mrb[0].mxu0
        %v7717 = vadd.f32 %v7217, %v7716
        %7718 = vdwg.mxu0
        %v7719 = vmax.f32 %v7302, 0.0
        %v7720 = vmax.f32 %v7304, 0.0
        %v7721 = vmax.f32 %v7415, 0.0
        %v7722 = vmax.f32 %v7417, 0.0
        %v7723 = vmax.f32 %v7528, 0.0
        %v7724 = vmax.f32 %v7530, 0.0
        %v7725 = vmax.f32 %v7641, 0.0
        %v7726 = vmax.f32 %v7643, 0.0
        %v7727 = vmax.f32 %v7306, 0.0
        %v7728 = vmax.f32 %v7308, 0.0
        %v7729 = vmax.f32 %v7419, 0.0
        %v7730 = vmax.f32 %v7421, 0.0
        %v7731 = vmax.f32 %v7532, 0.0
        %v7732 = vmax.f32 %v7534, 0.0
        %v7733 = vmax.f32 %v7645, 0.0
        %v7734 = vmax.f32 %v7647, 0.0
        %v7735 = vmax.f32 %v7312, 0.0
        %v7736 = vmax.f32 %v7314, 0.0
        %v7737 = vmax.f32 %v7425, 0.0
        %v7738 = vmax.f32 %v7427, 0.0
        %v7739 = vmax.f32 %v7538, 0.0
        %v7740 = vmax.f32 %v7540, 0.0
        %v7741 = vmax.f32 %v7651, 0.0
        %v7742 = vmax.f32 %v7653, 0.0
        %v7743 = vmax.f32 %v7316, 0.0
        %v7744 = vmax.f32 %v7318, 0.0
        %v7745 = vmax.f32 %v7429, 0.0
        %v7746 = vmax.f32 %v7431, 0.0
        %v7747 = vmax.f32 %v7542, 0.0
        %v7748 = vmax.f32 %v7544, 0.0
        %v7749 = vmax.f32 %v7655, 0.0
        %v7750 = vmax.f32 %v7657, 0.0
        %v7751 = vmax.f32 %v7322, 0.0
        %v7752 = vmax.f32 %v7324, 0.0
        %v7753 = vmax.f32 %v7435, 0.0
        %v7754 = vmax.f32 %v7437, 0.0
        %v7755 = vmax.f32 %v7548, 0.0
        %v7756 = vmax.f32 %v7550, 0.0
        %v7757 = vmax.f32 %v7661, 0.0
        %v7758 = vmax.f32 %v7663, 0.0
        %v7759 = vmax.f32 %v7326, 0.0
        %v7760 = vmax.f32 %v7328, 0.0
        %v7761 = vmax.f32 %v7439, 0.0
        %v7762 = vmax.f32 %v7441, 0.0
        %v7763 = vmax.f32 %v7552, 0.0
        %v7764 = vmax.f32 %v7554, 0.0
        %v7765 = vmax.f32 %v7665, 0.0
        %v7766 = vmax.f32 %v7667, 0.0
        %v7767 = vmax.f32 %v7332, 0.0
        %v7768 = vmax.f32 %v7334, 0.0
        %v7769 = vmax.f32 %v7445, 0.0
        %v7770 = vmax.f32 %v7447, 0.0
        %v7771 = vmax.f32 %v7558, 0.0
        %v7772 = vmax.f32 %v7560, 0.0
        %v7773 = vmax.f32 %v7671, 0.0
        %v7774 = vmax.f32 %v7673, 0.0
        %v7775 = vmax.f32 %v7336, 0.0
        %v7776 = vmax.f32 %v7338, 0.0
        %v7777 = vmax.f32 %v7449, 0.0
        %v7778 = vmax.f32 %v7451, 0.0
        %v7779 = vmax.f32 %v7562, 0.0
        %v7780 = vmax.f32 %v7564, 0.0
        %v7781 = vmax.f32 %v7675, 0.0
        %v7782 = vmax.f32 %v7677, 0.0
        %v7783 = vmax.f32 %v7342, 0.0
        %v7784 = vmax.f32 %v7344, 0.0
        %v7785 = vmax.f32 %v7455, 0.0
        %v7786 = vmax.f32 %v7457, 0.0
        %v7787 = vmax.f32 %v7568, 0.0
        %v7788 = vmax.f32 %v7570, 0.0
        %v7789 = vmax.f32 %v7681, 0.0
        %v7790 = vmax.f32 %v7683, 0.0
        %v7791 = vmax.f32 %v7346, 0.0
        %v7792 = vmax.f32 %v7348, 0.0
        %v7793 = vmax.f32 %v7459, 0.0
        %v7794 = vmax.f32 %v7461, 0.0
        %v7795 = vmax.f32 %v7572, 0.0
        %v7796 = vmax.f32 %v7574, 0.0
        %v7797 = vmax.f32 %v7685, 0.0
        %v7798 = vmax.f32 %v7687, 0.0
        %v7799 = vmax.f32 %v7352, 0.0
        %v7800 = vmax.f32 %v7354, 0.0
        %v7801 = vmax.f32 %v7465, 0.0
        %v7802 = vmax.f32 %v7467, 0.0
        %v7803 = vmax.f32 %v7578, 0.0
        %v7804 = vmax.f32 %v7580, 0.0
        %v7805 = vmax.f32 %v7691, 0.0
        %v7806 = vmax.f32 %v7693, 0.0
        %v7807 = vmax.f32 %v7356, 0.0
        %v7808 = vmax.f32 %v7358, 0.0
        %v7809 = vmax.f32 %v7469, 0.0
        %v7810 = vmax.f32 %v7471, 0.0
        %v7811 = vmax.f32 %v7582, 0.0
        %v7812 = vmax.f32 %v7584, 0.0
        %v7813 = vmax.f32 %v7695, 0.0
        %v7814 = vmax.f32 %v7697, 0.0
        %v7815 = vmax.f32 %v7362, 0.0
        %v7816 = vmax.f32 %v7364, 0.0
        %v7817 = vmax.f32 %v7475, 0.0
        %v7818 = vmax.f32 %v7477, 0.0
        %v7819 = vmax.f32 %v7588, 0.0
        %v7820 = vmax.f32 %v7590, 0.0
        %v7821 = vmax.f32 %v7701, 0.0
        %v7822 = vmax.f32 %v7703, 0.0
        %v7823 = vmax.f32 %v7366, 0.0
        %v7824 = vmax.f32 %v7368, 0.0
        %v7825 = vmax.f32 %v7479, 0.0
        %v7826 = vmax.f32 %v7481, 0.0
        %v7827 = vmax.f32 %v7592, 0.0
        %v7828 = vmax.f32 %v7594, 0.0
        %v7829 = vmax.f32 %v7705, 0.0
        %v7830 = vmax.f32 %v7707, 0.0
        %v7831 = vmax.f32 %v7372, 0.0
        %v7832 = vmax.f32 %v7374, 0.0
        %v7833 = vmax.f32 %v7485, 0.0
        %v7834 = vmax.f32 %v7487, 0.0
        %v7835 = vmax.f32 %v7598, 0.0
        %v7836 = vmax.f32 %v7600, 0.0
        %v7837 = vmax.f32 %v7711, 0.0
        %v7838 = vmax.f32 %v7713, 0.0
        %v7839 = vmax.f32 %v7376, 0.0
        %v7840 = vmax.f32 %v7378, 0.0
        %v7841 = vmax.f32 %v7489, 0.0
        %v7842 = vmax.f32 %v7491, 0.0
        %v7843 = vmax.f32 %v7602, 0.0
        %v7844 = vmax.f32 %v7604, 0.0
        %v7845 = vmax.f32 %v7715, 0.0
        %v7846 = vmax.f32 %v7717, 0.0
        %v7847 = vpack.c.bf16 %v7727, %v7719
        %v7848 = vpack.c.bf16 %v7728, %v7720
        %v7849 = vpack.c.bf16 %v7729, %v7721
        %v7850 = vpack.c.bf16 %v7730, %v7722
        %v7851 = vpack.c.bf16 %v7731, %v7723
        %v7852 = vpack.c.bf16 %v7732, %v7724
        %v7853 = vpack.c.bf16 %v7733, %v7725
        %v7854 = vpack.c.bf16 %v7734, %v7726
        %v7855 = vpack.c.bf16 %v7743, %v7735
        %v7856 = vpack.c.bf16 %v7744, %v7736
        %v7857 = vpack.c.bf16 %v7745, %v7737
        %v7858 = vpack.c.bf16 %v7746, %v7738
        %v7859 = vpack.c.bf16 %v7747, %v7739
        %v7860 = vpack.c.bf16 %v7748, %v7740
        %v7861 = vpack.c.bf16 %v7749, %v7741
        %v7862 = vpack.c.bf16 %v7750, %v7742
        %v7863 = vpack.c.bf16 %v7759, %v7751
        %v7864 = vpack.c.bf16 %v7760, %v7752
        %v7865 = vpack.c.bf16 %v7761, %v7753
        %v7866 = vpack.c.bf16 %v7762, %v7754
        %v7867 = vpack.c.bf16 %v7763, %v7755
        %v7868 = vpack.c.bf16 %v7764, %v7756
        %v7869 = vpack.c.bf16 %v7765, %v7757
        %v7870 = vpack.c.bf16 %v7766, %v7758
        %v7871 = vpack.c.bf16 %v7775, %v7767
        %v7872 = vpack.c.bf16 %v7776, %v7768
        %v7873 = vpack.c.bf16 %v7777, %v7769
        %v7874 = vpack.c.bf16 %v7778, %v7770
        %v7875 = vpack.c.bf16 %v7779, %v7771
        %v7876 = vpack.c.bf16 %v7780, %v7772
        %v7877 = vpack.c.bf16 %v7781, %v7773
        %v7878 = vpack.c.bf16 %v7782, %v7774
        %v7879 = vpack.c.bf16 %v7791, %v7783
        %v7880 = vpack.c.bf16 %v7792, %v7784
        %v7881 = vpack.c.bf16 %v7793, %v7785
        %v7882 = vpack.c.bf16 %v7794, %v7786
        %v7883 = vpack.c.bf16 %v7795, %v7787
        %v7884 = vpack.c.bf16 %v7796, %v7788
        %v7885 = vpack.c.bf16 %v7797, %v7789
        %v7886 = vpack.c.bf16 %v7798, %v7790
        %v7887 = vpack.c.bf16 %v7807, %v7799
        %v7888 = vpack.c.bf16 %v7808, %v7800
        %v7889 = vpack.c.bf16 %v7809, %v7801
        %v7890 = vpack.c.bf16 %v7810, %v7802
        %v7891 = vpack.c.bf16 %v7811, %v7803
        %v7892 = vpack.c.bf16 %v7812, %v7804
        %v7893 = vpack.c.bf16 %v7813, %v7805
        %v7894 = vpack.c.bf16 %v7814, %v7806
        %v7895 = vpack.c.bf16 %v7823, %v7815
        %v7896 = vpack.c.bf16 %v7824, %v7816
        %v7897 = vpack.c.bf16 %v7825, %v7817
        %v7898 = vpack.c.bf16 %v7826, %v7818
        %v7899 = vpack.c.bf16 %v7827, %v7819
        %v7900 = vpack.c.bf16 %v7828, %v7820
        %v7901 = vpack.c.bf16 %v7829, %v7821
        %v7902 = vpack.c.bf16 %v7830, %v7822
        %v7903 = vpack.c.bf16 %v7839, %v7831
        %v7904 = vpack.c.bf16 %v7840, %v7832
        %v7905 = vpack.c.bf16 %v7841, %v7833
        %v7906 = vpack.c.bf16 %v7842, %v7834
        %v7907 = vpack.c.bf16 %v7843, %v7835
        %v7908 = vpack.c.bf16 %v7844, %v7836
        %v7909 = vpack.c.bf16 %v7845, %v7837
        %v7910 = vpack.c.bf16 %v7846, %v7838
        %s7911 = scalar_lea.vmem %s5, 192
        %v7912 = vld [vmem:[%s7911] sm:$0xf]
        %v7913 = vld [vmem:[%s7911 + $0x4] sm:$0xf]
        %v7914 = vld [vmem:[%s7911 + $0x8] sm:$0xf]
        %v7915 = vld [vmem:[%s7911 + $0xc] sm:$0xf]
        %v7916 = vld [vmem:[%s7911 + $0x10] sm:$0xf]
        %v7917 = vld [vmem:[%s7911 + $0x14] sm:$0xf]
        %v7918 = vld [vmem:[%s7911 + $0x18] sm:$0xf]
        %v7919 = vld [vmem:[%s7911 + $0x1c] sm:$0xf]
        %v7920 = vld [vmem:[%s7911 + $0x20] sm:$0xf]
        %v7921 = vld [vmem:[%s7911 + $0x24] sm:$0xf]
        %v7922 = vld [vmem:[%s7911 + $0x28] sm:$0xf]
        %v7923 = vld [vmem:[%s7911 + $0x2c] sm:$0xf]
        %v7924 = vld [vmem:[%s7911 + $0x30] sm:$0xf]
        %v7925 = vld [vmem:[%s7911 + $0x34] sm:$0xf]
        %v7926 = vld [vmem:[%s7911 + $0x38] sm:$0xf]
        %v7927 = vld [vmem:[%s7911 + $0x3c] sm:$0xf]
        %s7928 = scalar_lea.vmem %s6, 384
        %v7929 = vld [vmem:[%s7928] sm:$0xff]
        %v7930 = vld [vmem:[%s7928 + $0x8] sm:$0xff]
        %v7931 = vld [vmem:[%s7928 + $0x10] sm:$0xff]
        %v7932 = vld [vmem:[%s7928 + $0x18] sm:$0xff]
        %v7933 = vld [vmem:[%s7928 + $0x20] sm:$0xff]
        %v7934 = vld [vmem:[%s7928 + $0x28] sm:$0xff]
        %v7935 = vld [vmem:[%s7928 + $0x30] sm:$0xff]
        %v7936 = vld [vmem:[%s7928 + $0x38] sm:$0xff]
        %v7937 = vld [vmem:[%s7928 + $0x40] sm:$0xff]
        %v7938 = vld [vmem:[%s7928 + $0x48] sm:$0xff]
        %v7939 = vld [vmem:[%s7928 + $0x50] sm:$0xff]
        %v7940 = vld [vmem:[%s7928 + $0x58] sm:$0xff]
        %v7941 = vld [vmem:[%s7928 + $0x60] sm:$0xff]
        %v7942 = vld [vmem:[%s7928 + $0x68] sm:$0xff]
        %v7943 = vld [vmem:[%s7928 + $0x70] sm:$0xff]
        %v7944 = vld [vmem:[%s7928 + $0x78] sm:$0xff]
        %7946 = vset.pattern.permute.xlu0 0
        %7947 = vperm.xlu0 %7946, %v7929
        %v7948 = vpop.permute.xlu0 %7947
        %7951 = vset.pattern.permute.xlu0 0
        %7952 = vperm.xlu0 %7951, %v7930
        %v7953 = vpop.permute.xlu0 %7952
        %7956 = vset.pattern.permute.xlu0 0
        %7957 = vperm.xlu0 %7956, %v7931
        %v7958 = vpop.permute.xlu0 %7957
        %7961 = vset.pattern.permute.xlu0 0
        %7962 = vperm.xlu0 %7961, %v7932
        %v7963 = vpop.permute.xlu0 %7962
        %7966 = vset.pattern.permute.xlu0 0
        %7967 = vperm.xlu0 %7966, %v7933
        %v7968 = vpop.permute.xlu0 %7967
        %7971 = vset.pattern.permute.xlu0 0
        %7972 = vperm.xlu0 %7971, %v7934
        %v7973 = vpop.permute.xlu0 %7972
        %7976 = vset.pattern.permute.xlu0 0
        %7977 = vperm.xlu0 %7976, %v7935
        %v7978 = vpop.permute.xlu0 %7977
        %7981 = vset.pattern.permute.xlu0 0
        %7982 = vperm.xlu0 %7981, %v7936
        %v7983 = vpop.permute.xlu0 %7982
        %7986 = vset.pattern.permute.xlu0 0
        %7987 = vperm.xlu0 %7986, %v7937
        %v7988 = vpop.permute.xlu0 %7987
        %7991 = vset.pattern.permute.xlu0 0
        %7992 = vperm.xlu0 %7991, %v7938
        %v7993 = vpop.permute.xlu0 %7992
        %7996 = vset.pattern.permute.xlu0 0
        %7997 = vperm.xlu0 %7996, %v7939
        %v7998 = vpop.permute.xlu0 %7997
        %8001 = vset.pattern.permute.xlu0 0
        %8002 = vperm.xlu0 %8001, %v7940
        %v8003 = vpop.permute.xlu0 %8002
        %8006 = vset.pattern.permute.xlu0 0
        %8007 = vperm.xlu0 %8006, %v7941
        %v8008 = vpop.permute.xlu0 %8007
        %8011 = vset.pattern.permute.xlu0 0
        %8012 = vperm.xlu0 %8011, %v7942
        %v8013 = vpop.permute.xlu0 %8012
        %8016 = vset.pattern.permute.xlu0 0
        %8017 = vperm.xlu0 %8016, %v7943
        %v8018 = vpop.permute.xlu0 %8017
        %8021 = vset.pattern.permute.xlu0 0
        %8022 = vperm.xlu0 %8021, %v7944
        %v8023 = vpop.permute.xlu0 %8022
        %v8041 = vunpack.c.l.b16 %v7912
        %v8042 = vunpack.c.l.b16 %v7913
        %v8043 = vunpack.c.l.b16 %v7914
        %v8044 = vunpack.c.l.b16 %v7915
        %v8045 = vunpack.c.l.b16 %v7916
        %v8046 = vunpack.c.l.b16 %v7917
        %v8047 = vunpack.c.l.b16 %v7918
        %v8048 = vunpack.c.l.b16 %v7919
        %v8049 = vunpack.c.l.b16 %v7920
        %v8050 = vunpack.c.l.b16 %v7921
        %v8051 = vunpack.c.l.b16 %v7922
        %v8052 = vunpack.c.l.b16 %v7923
        %v8053 = vunpack.c.l.b16 %v7924
        %v8054 = vunpack.c.l.b16 %v7925
        %v8055 = vunpack.c.l.b16 %v7926
        %v8056 = vunpack.c.l.b16 %v7927
        %v8057 = vpack.c.b16 %v8042, %v8041
        %v8058 = vpack.c.b16 %v8044, %v8043
        %v8059 = vpack.c.b16 %v8046, %v8045
        %v8060 = vpack.c.b16 %v8048, %v8047
        %v8061 = vpack.c.b16 %v8050, %v8049
        %v8062 = vpack.c.b16 %v8052, %v8051
        %v8063 = vpack.c.b16 %v8054, %v8053
        %v8064 = vpack.c.b16 %v8056, %v8055
        %8073 = vmatprep.subr.bf16.mxu0 %v7848
        %8074 = vmatpush1.bf16.msra.mxu0 %v7847
        %8075 = vmatprep.subr.bf16.mxu0 %v7856
        %8076 = vmatpush1.bf16.msra.mxu0 %v7855
        %8077 = vmatprep.subr.bf16.mxu0 %v7864
        %8078 = vmatpush1.bf16.msra.mxu0 %v7863
        %8079 = vmatprep.subr.bf16.mxu0 %v7872
        %8080 = vmatpush1.bf16.msra.mxu0 %v7871
        %8081 = vmatprep.subr.bf16.mxu0 %v7880
        %8082 = vmatpush1.bf16.msra.mxu0 %v7879
        %8083 = vmatprep.subr.bf16.mxu0 %v7888
        %8084 = vmatpush1.bf16.msra.mxu0 %v7887
        %8085 = vmatprep.subr.bf16.mxu0 %v7896
        %8086 = vmatpush1.bf16.msra.mxu0 %v7895
        %8087 = vmatprep.subr.bf16.mxu0 %v7904
        %8088 = vmatpush1.bf16.msra.mxu0 %v7903
        %8089 = vmatprep.subr.bf16.mxu0 0
        %8090 = vmatpush1.bf16.msra.mxu0 0
        %8091 = vmatprep.subr.bf16.mxu0 0
        %8092 = vmatpush1.bf16.msra.mxu0 0
        %8093 = vmatprep.subr.bf16.mxu0 0
        %8094 = vmatpush1.bf16.msra.mxu0 0
        %8095 = vmatprep.subr.bf16.mxu0 0
        %8096 = vmatpush1.bf16.msra.mxu0 0
        %8097 = vmatprep.subr.bf16.mxu0 0
        %8098 = vmatpush1.bf16.msra.mxu0 0
        %8099 = vmatprep.subr.bf16.mxu0 0
        %8100 = vmatpush1.bf16.msra.mxu0 0
        %8101 = vmatprep.subr.bf16.mxu0 0
        %8102 = vmatpush1.bf16.msra.mxu0 0
        %8103 = vmatprep.subr.bf16.mxu0 0
        %8104 = vmatpush1.bf16.msra.mxu0 0
        %8105 = vmatprep.mubr.bf16.mxu0 0
        %8106 = vmatmul.mubr.bf16.gmra.mrb[0].mxu0 %v8057
        %v8107 = vpop.f32.mrb[0].mxu0
        %v8108 = vadd.f32 %v7948, %v8107
        %v8109 = vpop.f32.mrb[0].mxu0
        %v8110 = vadd.f32 %v7948, %v8109
        %v8111 = vpop.f32.mrb[0].mxu0
        %v8112 = vadd.f32 %v7953, %v8111
        %v8113 = vpop.f32.mrb[0].mxu0
        %v8114 = vadd.f32 %v7953, %v8113
        %8115 = vmatprep.mubr.bf16.mxu0 0
        %8116 = vmatmul.mubr.bf16.gmra.mrb[0].mxu0 %v8058
        %v8117 = vpop.f32.mrb[0].mxu0
        %v8118 = vadd.f32 %v7958, %v8117
        %v8119 = vpop.f32.mrb[0].mxu0
        %v8120 = vadd.f32 %v7958, %v8119
        %v8121 = vpop.f32.mrb[0].mxu0
        %v8122 = vadd.f32 %v7963, %v8121
        %v8123 = vpop.f32.mrb[0].mxu0
        %v8124 = vadd.f32 %v7963, %v8123
        %8125 = vmatprep.mubr.bf16.mxu0 0
        %8126 = vmatmul.mubr.bf16.gmra.mrb[0].mxu0 %v8059
        %v8127 = vpop.f32.mrb[0].mxu0
        %v8128 = vadd.f32 %v7968, %v8127
        %v8129 = vpop.f32.mrb[0].mxu0
        %v8130 = vadd.f32 %v7968, %v8129
        %v8131 = vpop.f32.mrb[0].mxu0
        %v8132 = vadd.f32 %v7973, %v8131
        %v8133 = vpop.f32.mrb[0].mxu0
        %v8134 = vadd.f32 %v7973, %v8133
        %8135 = vmatprep.mubr.bf16.mxu0 0
        %8136 = vmatmul.mubr.bf16.gmra.mrb[0].mxu0 %v8060
        %v8137 = vpop.f32.mrb[0].mxu0
        %v8138 = vadd.f32 %v7978, %v8137
        %v8139 = vpop.f32.mrb[0].mxu0
        %v8140 = vadd.f32 %v7978, %v8139
        %v8141 = vpop.f32.mrb[0].mxu0
        %v8142 = vadd.f32 %v7983, %v8141
        %v8143 = vpop.f32.mrb[0].mxu0
        %v8144 = vadd.f32 %v7983, %v8143
        %8145 = vmatprep.mubr.bf16.mxu0 0
        %8146 = vmatmul.mubr.bf16.gmra.mrb[0].mxu0 %v8061
        %v8147 = vpop.f32.mrb[0].mxu0
        %v8148 = vadd.f32 %v7988, %v8147
        %v8149 = vpop.f32.mrb[0].mxu0
        %v8150 = vadd.f32 %v7988, %v8149
        %v8151 = vpop.f32.mrb[0].mxu0
        %v8152 = vadd.f32 %v7993, %v8151
        %v8153 = vpop.f32.mrb[0].mxu0
        %v8154 = vadd.f32 %v7993, %v8153
        %8155 = vmatprep.mubr.bf16.mxu0 0
        %8156 = vmatmul.mubr.bf16.gmra.mrb[0].mxu0 %v8062
        %v8157 = vpop.f32.mrb[0].mxu0
        %v8158 = vadd.f32 %v7998, %v8157
        %v8159 = vpop.f32.mrb[0].mxu0
        %v8160 = vadd.f32 %v7998, %v8159
        %v8161 = vpop.f32.mrb[0].mxu0
        %v8162 = vadd.f32 %v8003, %v8161
        %v8163 = vpop.f32.mrb[0].mxu0
        %v8164 = vadd.f32 %v8003, %v8163
        %8165 = vmatprep.mubr.bf16.mxu0 0
        %8166 = vmatmul.mubr.bf16.gmra.mrb[0].mxu0 %v8063
        %v8167 = vpop.f32.mrb[0].mxu0
        %v8168 = vadd.f32 %v8008, %v8167
        %v8169 = vpop.f32.mrb[0].mxu0
        %v8170 = vadd.f32 %v8008, %v8169
        %v8171 = vpop.f32.mrb[0].mxu0
        %v8172 = vadd.f32 %v8013, %v8171
        %v8173 = vpop.f32.mrb[0].mxu0
        %v8174 = vadd.f32 %v8013, %v8173
        %8175 = vmatprep.mubr.bf16.mxu0 0
        %8176 = vmatmul.mubr.bf16.gmra.mrb[0].mxu0 %v8064
        %v8177 = vpop.f32.mrb[0].mxu0
        %v8178 = vadd.f32 %v8018, %v8177
        %v8179 = vpop.f32.mrb[0].mxu0
        %v8180 = vadd.f32 %v8018, %v8179
        %v8181 = vpop.f32.mrb[0].mxu0
        %v8182 = vadd.f32 %v8023, %v8181
        %v8183 = vpop.f32.mrb[0].mxu0
        %v8184 = vadd.f32 %v8023, %v8183
        %8185 = vdwg.mxu0
        %8186 = vmatprep.subr.bf16.mxu0 %v7850
        %8187 = vmatpush1.bf16.msra.mxu0 %v7849
        %8188 = vmatprep.subr.bf16.mxu0 %v7858
        %8189 = vmatpush1.bf16.msra.mxu0 %v7857
        %8190 = vmatprep.subr.bf16.mxu0 %v7866
        %8191 = vmatpush1.bf16.msra.mxu0 %v7865
        %8192 = vmatprep.subr.bf16.mxu0 %v7874
        %8193 = vmatpush1.bf16.msra.mxu0 %v7873
        %8194 = vmatprep.subr.bf16.mxu0 %v7882
        %8195 = vmatpush1.bf16.msra.mxu0 %v7881
        %8196 = vmatprep.subr.bf16.mxu0 %v7890
        %8197 = vmatpush1.bf16.msra.mxu0 %v7889
        %8198 = vmatprep.subr.bf16.mxu0 %v7898
        %8199 = vmatpush1.bf16.msra.mxu0 %v7897
        %8200 = vmatprep.subr.bf16.mxu0 %v7906
        %8201 = vmatpush1.bf16.msra.mxu0 %v7905
        %8202 = vmatprep.subr.bf16.mxu0 0
        %8203 = vmatpush1.bf16.msra.mxu0 0
        %8204 = vmatprep.subr.bf16.mxu0 0
        %8205 = vmatpush1.bf16.msra.mxu0 0
        %8206 = vmatprep.subr.bf16.mxu0 0
        %8207 = vmatpush1.bf16.msra.mxu0 0
        %8208 = vmatprep.subr.bf16.mxu0 0
        %8209 = vmatpush1.bf16.msra.mxu0 0
        %8210 = vmatprep.subr.bf16.mxu0 0
        %8211 = vmatpush1.bf16.msra.mxu0 0
        %8212 = vmatprep.subr.bf16.mxu0 0
        %8213 = vmatpush1.bf16.msra.mxu0 0
        %8214 = vmatprep.subr.bf16.mxu0 0
        %8215 = vmatpush1.bf16.msra.mxu0 0
        %8216 = vmatprep.subr.bf16.mxu0 0
        %8217 = vmatpush1.bf16.msra.mxu0 0
        %8218 = vmatprep.mubr.bf16.mxu0 0
        %8219 = vmatmul.mubr.bf16.gmra.mrb[0].mxu0 %v8057
        %v8220 = vpop.f32.mrb[0].mxu0
        %v8221 = vadd.f32 %v7948, %v8220
        %v8222 = vpop.f32.mrb[0].mxu0
        %v8223 = vadd.f32 %v7948, %v8222
        %v8224 = vpop.f32.mrb[0].mxu0
        %v8225 = vadd.f32 %v7953, %v8224
        %v8226 = vpop.f32.mrb[0].mxu0
        %v8227 = vadd.f32 %v7953, %v8226
        %8228 = vmatprep.mubr.bf16.mxu0 0
        %8229 = vmatmul.mubr.bf16.gmra.mrb[0].mxu0 %v8058
        %v8230 = vpop.f32.mrb[0].mxu0
        %v8231 = vadd.f32 %v7958, %v8230
        %v8232 = vpop.f32.mrb[0].mxu0
        %v8233 = vadd.f32 %v7958, %v8232
        %v8234 = vpop.f32.mrb[0].mxu0
        %v8235 = vadd.f32 %v7963, %v8234
        %v8236 = vpop.f32.mrb[0].mxu0
        %v8237 = vadd.f32 %v7963, %v8236
        %8238 = vmatprep.mubr.bf16.mxu0 0
        %8239 = vmatmul.mubr.bf16.gmra.mrb[0].mxu0 %v8059
        %v8240 = vpop.f32.mrb[0].mxu0
        %v8241 = vadd.f32 %v7968, %v8240
        %v8242 = vpop.f32.mrb[0].mxu0
        %v8243 = vadd.f32 %v7968, %v8242
        %v8244 = vpop.f32.mrb[0].mxu0
        %v8245 = vadd.f32 %v7973, %v8244
        %v8246 = vpop.f32.mrb[0].mxu0
        %v8247 = vadd.f32 %v7973, %v8246
        %8248 = vmatprep.mubr.bf16.mxu0 0
        %8249 = vmatmul.mubr.bf16.gmra.mrb[0].mxu0 %v8060
        %v8250 = vpop.f32.mrb[0].mxu0
        %v8251 = vadd.f32 %v7978, %v8250
        %v8252 = vpop.f32.mrb[0].mxu0
        %v8253 = vadd.f32 %v7978, %v8252
        %v8254 = vpop.f32.mrb[0].mxu0
        %v8255 = vadd.f32 %v7983, %v8254
        %v8256 = vpop.f32.mrb[0].mxu0
        %v8257 = vadd.f32 %v7983, %v8256
        %8258 = vmatprep.mubr.bf16.mxu0 0
        %8259 = vmatmul.mubr.bf16.gmra.mrb[0].mxu0 %v8061
        %v8260 = vpop.f32.mrb[0].mxu0
        %v8261 = vadd.f32 %v7988, %v8260
        %v8262 = vpop.f32.mrb[0].mxu0
        %v8263 = vadd.f32 %v7988, %v8262
        %v8264 = vpop.f32.mrb[0].mxu0
        %v8265 = vadd.f32 %v7993, %v8264
        %v8266 = vpop.f32.mrb[0].mxu0
        %v8267 = vadd.f32 %v7993, %v8266
        %8268 = vmatprep.mubr.bf16.mxu0 0
        %8269 = vmatmul.mubr.bf16.gmra.mrb[0].mxu0 %v8062
        %v8270 = vpop.f32.mrb[0].mxu0
        %v8271 = vadd.f32 %v7998, %v8270
        %v8272 = vpop.f32.mrb[0].mxu0
        %v8273 = vadd.f32 %v7998, %v8272
        %v8274 = vpop.f32.mrb[0].mxu0
        %v8275 = vadd.f32 %v8003, %v8274
        %v8276 = vpop.f32.mrb[0].mxu0
        %v8277 = vadd.f32 %v8003, %v8276
        %8278 = vmatprep.mubr.bf16.mxu0 0
        %8279 = vmatmul.mubr.bf16.gmra.mrb[0].mxu0 %v8063
        %v8280 = vpop.f32.mrb[0].mxu0
        %v8281 = vadd.f32 %v8008, %v8280
        %v8282 = vpop.f32.mrb[0].mxu0
        %v8283 = vadd.f32 %v8008, %v8282
        %v8284 = vpop.f32.mrb[0].mxu0
        %v8285 = vadd.f32 %v8013, %v8284
        %v8286 = vpop.f32.mrb[0].mxu0
        %v8287 = vadd.f32 %v8013, %v8286
        %8288 = vmatprep.mubr.bf16.mxu0 0
        %8289 = vmatmul.mubr.bf16.gmra.mrb[0].mxu0 %v8064
        %v8290 = vpop.f32.mrb[0].mxu0
        %v8291 = vadd.f32 %v8018, %v8290
        %v8292 = vpop.f32.mrb[0].mxu0
        %v8293 = vadd.f32 %v8018, %v8292
        %v8294 = vpop.f32.mrb[0].mxu0
        %v8295 = vadd.f32 %v8023, %v8294
        %v8296 = vpop.f32.mrb[0].mxu0
        %v8297 = vadd.f32 %v8023, %v8296
        %8298 = vdwg.mxu0
        %8299 = vmatprep.subr.bf16.mxu0 %v7852
        %8300 = vmatpush1.bf16.msra.mxu0 %v7851
        %8301 = vmatprep.subr.bf16.mxu0 %v7860
        %8302 = vmatpush1.bf16.msra.mxu0 %v7859
        %8303 = vmatprep.subr.bf16.mxu0 %v7868
        %8304 = vmatpush1.bf16.msra.mxu0 %v7867
        %8305 = vmatprep.subr.bf16.mxu0 %v7876
        %8306 = vmatpush1.bf16.msra.mxu0 %v7875
        %8307 = vmatprep.subr.bf16.mxu0 %v7884
        %8308 = vmatpush1.bf16.msra.mxu0 %v7883
        %8309 = vmatprep.subr.bf16.mxu0 %v7892
        %8310 = vmatpush1.bf16.msra.mxu0 %v7891
        %8311 = vmatprep.subr.bf16.mxu0 %v7900
        %8312 = vmatpush1.bf16.msra.mxu0 %v7899
        %8313 = vmatprep.subr.bf16.mxu0 %v7908
        %8314 = vmatpush1.bf16.msra.mxu0 %v7907
        %8315 = vmatprep.subr.bf16.mxu0 0
        %8316 = vmatpush1.bf16.msra.mxu0 0
        %8317 = vmatprep.subr.bf16.mxu0 0
        %8318 = vmatpush1.bf16.msra.mxu0 0
        %8319 = vmatprep.subr.bf16.mxu0 0
        %8320 = vmatpush1.bf16.msra.mxu0 0
        %8321 = vmatprep.subr.bf16.mxu0 0
        %8322 = vmatpush1.bf16.msra.mxu0 0
        %8323 = vmatprep.subr.bf16.mxu0 0
        %8324 = vmatpush1.bf16.msra.mxu0 0
        %8325 = vmatprep.subr.bf16.mxu0 0
        %8326 = vmatpush1.bf16.msra.mxu0 0
        %8327 = vmatprep.subr.bf16.mxu0 0
        %8328 = vmatpush1.bf16.msra.mxu0 0
        %8329 = vmatprep.subr.bf16.mxu0 0
        %8330 = vmatpush1.bf16.msra.mxu0 0
        %8331 = vmatprep.mubr.bf16.mxu0 0
        %8332 = vmatmul.mubr.bf16.gmra.mrb[0].mxu0 %v8057
        %v8333 = vpop.f32.mrb[0].mxu0
        %v8334 = vadd.f32 %v7948, %v8333
        %v8335 = vpop.f32.mrb[0].mxu0
        %v8336 = vadd.f32 %v7948, %v8335
        %v8337 = vpop.f32.mrb[0].mxu0
        %v8338 = vadd.f32 %v7953, %v8337
        %v8339 = vpop.f32.mrb[0].mxu0
        %v8340 = vadd.f32 %v7953, %v8339
        %8341 = vmatprep.mubr.bf16.mxu0 0
        %8342 = vmatmul.mubr.bf16.gmra.mrb[0].mxu0 %v8058
        %v8343 = vpop.f32.mrb[0].mxu0
        %v8344 = vadd.f32 %v7958, %v8343
        %v8345 = vpop.f32.mrb[0].mxu0
        %v8346 = vadd.f32 %v7958, %v8345
        %v8347 = vpop.f32.mrb[0].mxu0
        %v8348 = vadd.f32 %v7963, %v8347
        %v8349 = vpop.f32.mrb[0].mxu0
        %v8350 = vadd.f32 %v7963, %v8349
        %8351 = vmatprep.mubr.bf16.mxu0 0
        %8352 = vmatmul.mubr.bf16.gmra.mrb[0].mxu0 %v8059
        %v8353 = vpop.f32.mrb[0].mxu0
        %v8354 = vadd.f32 %v7968, %v8353
        %v8355 = vpop.f32.mrb[0].mxu0
        %v8356 = vadd.f32 %v7968, %v8355
        %v8357 = vpop.f32.mrb[0].mxu0
        %v8358 = vadd.f32 %v7973, %v8357
        %v8359 = vpop.f32.mrb[0].mxu0
        %v8360 = vadd.f32 %v7973, %v8359
        %8361 = vmatprep.mubr.bf16.mxu0 0
        %8362 = vmatmul.mubr.bf16.gmra.mrb[0].mxu0 %v8060
        %v8363 = vpop.f32.mrb[0].mxu0
        %v8364 = vadd.f32 %v7978, %v8363
        %v8365 = vpop.f32.mrb[0].mxu0
        %v8366 = vadd.f32 %v7978, %v8365
        %v8367 = vpop.f32.mrb[0].mxu0
        %v8368 = vadd.f32 %v7983, %v8367
        %v8369 = vpop.f32.mrb[0].mxu0
        %v8370 = vadd.f32 %v7983, %v8369
        %8371 = vmatprep.mubr.bf16.mxu0 0
        %8372 = vmatmul.mubr.bf16.gmra.mrb[0].mxu0 %v8061
        %v8373 = vpop.f32.mrb[0].mxu0
        %v8374 = vadd.f32 %v7988, %v8373
        %v8375 = vpop.f32.mrb[0].mxu0
        %v8376 = vadd.f32 %v7988, %v8375
        %v8377 = vpop.f32.mrb[0].mxu0
        %v8378 = vadd.f32 %v7993, %v8377
        %v8379 = vpop.f32.mrb[0].mxu0
        %v8380 = vadd.f32 %v7993, %v8379
        %8381 = vmatprep.mubr.bf16.mxu0 0
        %8382 = vmatmul.mubr.bf16.gmra.mrb[0].mxu0 %v8062
        %v8383 = vpop.f32.mrb[0].mxu0
        %v8384 = vadd.f32 %v7998, %v8383
        %v8385 = vpop.f32.mrb[0].mxu0
        %v8386 = vadd.f32 %v7998, %v8385
        %v8387 = vpop.f32.mrb[0].mxu0
        %v8388 = vadd.f32 %v8003, %v8387
        %v8389 = vpop.f32.mrb[0].mxu0
        %v8390 = vadd.f32 %v8003, %v8389
        %8391 = vmatprep.mubr.bf16.mxu0 0
        %8392 = vmatmul.mubr.bf16.gmra.mrb[0].mxu0 %v8063
        %v8393 = vpop.f32.mrb[0].mxu0
        %v8394 = vadd.f32 %v8008, %v8393
        %v8395 = vpop.f32.mrb[0].mxu0
        %v8396 = vadd.f32 %v8008, %v8395
        %v8397 = vpop.f32.mrb[0].mxu0
        %v8398 = vadd.f32 %v8013, %v8397
        %v8399 = vpop.f32.mrb[0].mxu0
        %v8400 = vadd.f32 %v8013, %v8399
        %8401 = vmatprep.mubr.bf16.mxu0 0
        %8402 = vmatmul.mubr.bf16.gmra.mrb[0].mxu0 %v8064
        %v8403 = vpop.f32.mrb[0].mxu0
        %v8404 = vadd.f32 %v8018, %v8403
        %v8405 = vpop.f32.mrb[0].mxu0
        %v8406 = vadd.f32 %v8018, %v8405
        %v8407 = vpop.f32.mrb[0].mxu0
        %v8408 = vadd.f32 %v8023, %v8407
        %v8409 = vpop.f32.mrb[0].mxu0
        %v8410 = vadd.f32 %v8023, %v8409
        %8411 = vdwg.mxu0
        %8412 = vmatprep.subr.bf16.mxu0 %v7854
        %8413 = vmatpush1.bf16.msra.mxu0 %v7853
        %8414 = vmatprep.subr.bf16.mxu0 %v7862
        %8415 = vmatpush1.bf16.msra.mxu0 %v7861
        %8416 = vmatprep.subr.bf16.mxu0 %v7870
        %8417 = vmatpush1.bf16.msra.mxu0 %v7869
        %8418 = vmatprep.subr.bf16.mxu0 %v7878
        %8419 = vmatpush1.bf16.msra.mxu0 %v7877
        %8420 = vmatprep.subr.bf16.mxu0 %v7886
        %8421 = vmatpush1.bf16.msra.mxu0 %v7885
        %8422 = vmatprep.subr.bf16.mxu0 %v7894
        %8423 = vmatpush1.bf16.msra.mxu0 %v7893
        %8424 = vmatprep.subr.bf16.mxu0 %v7902
        %8425 = vmatpush1.bf16.msra.mxu0 %v7901
        %8426 = vmatprep.subr.bf16.mxu0 %v7910
        %8427 = vmatpush1.bf16.msra.mxu0 %v7909
        %8428 = vmatprep.subr.bf16.mxu0 0
        %8429 = vmatpush1.bf16.msra.mxu0 0
        %8430 = vmatprep.subr.bf16.mxu0 0
        %8431 = vmatpush1.bf16.msra.mxu0 0
        %8432 = vmatprep.subr.bf16.mxu0 0
        %8433 = vmatpush1.bf16.msra.mxu0 0
        %8434 = vmatprep.subr.bf16.mxu0 0
        %8435 = vmatpush1.bf16.msra.mxu0 0
        %8436 = vmatprep.subr.bf16.mxu0 0
        %8437 = vmatpush1.bf16.msra.mxu0 0
        %8438 = vmatprep.subr.bf16.mxu0 0
        %8439 = vmatpush1.bf16.msra.mxu0 0
        %8440 = vmatprep.subr.bf16.mxu0 0
        %8441 = vmatpush1.bf16.msra.mxu0 0
        %8442 = vmatprep.subr.bf16.mxu0 0
        %8443 = vmatpush1.bf16.msra.mxu0 0
        %8444 = vmatprep.mubr.bf16.mxu0 0
        %8445 = vmatmul.mubr.bf16.gmra.mrb[0].mxu0 %v8057
        %v8446 = vpop.f32.mrb[0].mxu0
        %v8447 = vadd.f32 %v7948, %v8446
        %v8448 = vpop.f32.mrb[0].mxu0
        %v8449 = vadd.f32 %v7948, %v8448
        %v8450 = vpop.f32.mrb[0].mxu0
        %v8451 = vadd.f32 %v7953, %v8450
        %v8452 = vpop.f32.mrb[0].mxu0
        %v8453 = vadd.f32 %v7953, %v8452
        %8454 = vmatprep.mubr.bf16.mxu0 0
        %8455 = vmatmul.mubr.bf16.gmra.mrb[0].mxu0 %v8058
        %v8456 = vpop.f32.mrb[0].mxu0
        %v8457 = vadd.f32 %v7958, %v8456
        %v8458 = vpop.f32.mrb[0].mxu0
        %v8459 = vadd.f32 %v7958, %v8458
        %v8460 = vpop.f32.mrb[0].mxu0
        %v8461 = vadd.f32 %v7963, %v8460
        %v8462 = vpop.f32.mrb[0].mxu0
        %v8463 = vadd.f32 %v7963, %v8462
        %8464 = vmatprep.mubr.bf16.mxu0 0
        %8465 = vmatmul.mubr.bf16.gmra.mrb[0].mxu0 %v8059
        %v8466 = vpop.f32.mrb[0].mxu0
        %v8467 = vadd.f32 %v7968, %v8466
        %v8468 = vpop.f32.mrb[0].mxu0
        %v8469 = vadd.f32 %v7968, %v8468
        %v8470 = vpop.f32.mrb[0].mxu0
        %v8471 = vadd.f32 %v7973, %v8470
        %v8472 = vpop.f32.mrb[0].mxu0
        %v8473 = vadd.f32 %v7973, %v8472
        %8474 = vmatprep.mubr.bf16.mxu0 0
        %8475 = vmatmul.mubr.bf16.gmra.mrb[0].mxu0 %v8060
        %v8476 = vpop.f32.mrb[0].mxu0
        %v8477 = vadd.f32 %v7978, %v8476
        %v8478 = vpop.f32.mrb[0].mxu0
        %v8479 = vadd.f32 %v7978, %v8478
        %v8480 = vpop.f32.mrb[0].mxu0
        %v8481 = vadd.f32 %v7983, %v8480
        %v8482 = vpop.f32.mrb[0].mxu0
        %v8483 = vadd.f32 %v7983, %v8482
        %8484 = vmatprep.mubr.bf16.mxu0 0
        %8485 = vmatmul.mubr.bf16.gmra.mrb[0].mxu0 %v8061
        %v8486 = vpop.f32.mrb[0].mxu0
        %v8487 = vadd.f32 %v7988, %v8486
        %v8488 = vpop.f32.mrb[0].mxu0
        %v8489 = vadd.f32 %v7988, %v8488
        %v8490 = vpop.f32.mrb[0].mxu0
        %v8491 = vadd.f32 %v7993, %v8490
        %v8492 = vpop.f32.mrb[0].mxu0
        %v8493 = vadd.f32 %v7993, %v8492
        %8494 = vmatprep.mubr.bf16.mxu0 0
        %8495 = vmatmul.mubr.bf16.gmra.mrb[0].mxu0 %v8062
        %v8496 = vpop.f32.mrb[0].mxu0
        %v8497 = vadd.f32 %v7998, %v8496
        %v8498 = vpop.f32.mrb[0].mxu0
        %v8499 = vadd.f32 %v7998, %v8498
        %v8500 = vpop.f32.mrb[0].mxu0
        %v8501 = vadd.f32 %v8003, %v8500
        %v8502 = vpop.f32.mrb[0].mxu0
        %v8503 = vadd.f32 %v8003, %v8502
        %8504 = vmatprep.mubr.bf16.mxu0 0
        %8505 = vmatmul.mubr.bf16.gmra.mrb[0].mxu0 %v8063
        %v8506 = vpop.f32.mrb[0].mxu0
        %v8507 = vadd.f32 %v8008, %v8506
        %v8508 = vpop.f32.mrb[0].mxu0
        %v8509 = vadd.f32 %v8008, %v8508
        %v8510 = vpop.f32.mrb[0].mxu0
        %v8511 = vadd.f32 %v8013, %v8510
        %v8512 = vpop.f32.mrb[0].mxu0
        %v8513 = vadd.f32 %v8013, %v8512
        %8514 = vmatprep.mubr.bf16.mxu0 0
        %8515 = vmatmul.mubr.bf16.gmra.mrb[0].mxu0 %v8064
        %v8516 = vpop.f32.mrb[0].mxu0
        %v8517 = vadd.f32 %v8018, %v8516
        %v8518 = vpop.f32.mrb[0].mxu0
        %v8519 = vadd.f32 %v8018, %v8518
        %v8520 = vpop.f32.mrb[0].mxu0
        %v8521 = vadd.f32 %v8023, %v8520
        %v8522 = vpop.f32.mrb[0].mxu0
        %v8523 = vadd.f32 %v8023, %v8522
        %8524 = vdwg.mxu0
        %v8525 = vadd.f32 %v6785, %v8108
        %v8526 = vadd.f32 %v6786, %v8110
        %v8527 = vadd.f32 %v6787, %v8221
        %v8528 = vadd.f32 %v6788, %v8223
        %v8529 = vadd.f32 %v6789, %v8334
        %v8530 = vadd.f32 %v6790, %v8336
        %v8531 = vadd.f32 %v6791, %v8447
        %v8532 = vadd.f32 %v6792, %v8449
        %v8533 = vadd.f32 %v6793, %v8112
        %v8534 = vadd.f32 %v6794, %v8114
        %v8535 = vadd.f32 %v6795, %v8225
        %v8536 = vadd.f32 %v6796, %v8227
        %v8537 = vadd.f32 %v6797, %v8338
        %v8538 = vadd.f32 %v6798, %v8340
        %v8539 = vadd.f32 %v6799, %v8451
        %v8540 = vadd.f32 %v6800, %v8453
        %v8541 = vadd.f32 %v6801, %v8118
        %v8542 = vadd.f32 %v6802, %v8120
        %v8543 = vadd.f32 %v6803, %v8231
        %v8544 = vadd.f32 %v6804, %v8233
        %v8545 = vadd.f32 %v6805, %v8344
        %v8546 = vadd.f32 %v6806, %v8346
        %v8547 = vadd.f32 %v6807, %v8457
        %v8548 = vadd.f32 %v6808, %v8459
        %v8549 = vadd.f32 %v6809, %v8122
        %v8550 = vadd.f32 %v6810, %v8124
        %v8551 = vadd.f32 %v6811, %v8235
        %v8552 = vadd.f32 %v6812, %v8237
        %v8553 = vadd.f32 %v6813, %v8348
        %v8554 = vadd.f32 %v6814, %v8350
        %v8555 = vadd.f32 %v6815, %v8461
        %v8556 = vadd.f32 %v6816, %v8463
        %v8557 = vadd.f32 %v6817, %v8128
        %v8558 = vadd.f32 %v6818, %v8130
        %v8559 = vadd.f32 %v6819, %v8241
        %v8560 = vadd.f32 %v6820, %v8243
        %v8561 = vadd.f32 %v6821, %v8354
        %v8562 = vadd.f32 %v6822, %v8356
        %v8563 = vadd.f32 %v6823, %v8467
        %v8564 = vadd.f32 %v6824, %v8469
        %v8565 = vadd.f32 %v6825, %v8132
        %v8566 = vadd.f32 %v6826, %v8134
        %v8567 = vadd.f32 %v6827, %v8245
        %v8568 = vadd.f32 %v6828, %v8247
        %v8569 = vadd.f32 %v6829, %v8358
        %v8570 = vadd.f32 %v6830, %v8360
        %v8571 = vadd.f32 %v6831, %v8471
        %v8572 = vadd.f32 %v6832, %v8473
        %v8573 = vadd.f32 %v6833, %v8138
        %v8574 = vadd.f32 %v6834, %v8140
        %v8575 = vadd.f32 %v6835, %v8251
        %v8576 = vadd.f32 %v6836, %v8253
        %v8577 = vadd.f32 %v6837, %v8364
        %v8578 = vadd.f32 %v6838, %v8366
        %v8579 = vadd.f32 %v6839, %v8477
        %v8580 = vadd.f32 %v6840, %v8479
        %v8581 = vadd.f32 %v6841, %v8142
        %v8582 = vadd.f32 %v6842, %v8144
        %v8583 = vadd.f32 %v6843, %v8255
        %v8584 = vadd.f32 %v6844, %v8257
        %v8585 = vadd.f32 %v6845, %v8368
        %v8586 = vadd.f32 %v6846, %v8370
        %v8587 = vadd.f32 %v6847, %v8481
        %v8588 = vadd.f32 %v6848, %v8483
        %v8589 = vadd.f32 %v6849, %v8148
        %v8590 = vadd.f32 %v6850, %v8150
        %v8591 = vadd.f32 %v6851, %v8261
        %v8592 = vadd.f32 %v6852, %v8263
        %v8593 = vadd.f32 %v6853, %v8374
        %v8594 = vadd.f32 %v6854, %v8376
        %v8595 = vadd.f32 %v6855, %v8487
        %v8596 = vadd.f32 %v6856, %v8489
        %v8597 = vadd.f32 %v6857, %v8152
        %v8598 = vadd.f32 %v6858, %v8154
        %v8599 = vadd.f32 %v6859, %v8265
        %v8600 = vadd.f32 %v6860, %v8267
        %v8601 = vadd.f32 %v6861, %v8378
        %v8602 = vadd.f32 %v6862, %v8380
        %v8603 = vadd.f32 %v6863, %v8491
        %v8604 = vadd.f32 %v6864, %v8493
        %v8605 = vadd.f32 %v6865, %v8158
        %v8606 = vadd.f32 %v6866, %v8160
        %v8607 = vadd.f32 %v6867, %v8271
        %v8608 = vadd.f32 %v6868, %v8273
        %v8609 = vadd.f32 %v6869, %v8384
        %v8610 = vadd.f32 %v6870, %v8386
        %v8611 = vadd.f32 %v6871, %v8497
        %v8612 = vadd.f32 %v6872, %v8499
        %v8613 = vadd.f32 %v6873, %v8162
        %v8614 = vadd.f32 %v6874, %v8164
        %v8615 = vadd.f32 %v6875, %v8275
        %v8616 = vadd.f32 %v6876, %v8277
        %v8617 = vadd.f32 %v6877, %v8388
        %v8618 = vadd.f32 %v6878, %v8390
        %v8619 = vadd.f32 %v6879, %v8501
        %v8620 = vadd.f32 %v6880, %v8503
        %v8621 = vadd.f32 %v6881, %v8168
        %v8622 = vadd.f32 %v6882, %v8170
        %v8623 = vadd.f32 %v6883, %v8281
        %v8624 = vadd.f32 %v6884, %v8283
        %v8625 = vadd.f32 %v6885, %v8394
        %v8626 = vadd.f32 %v6886, %v8396
        %v8627 = vadd.f32 %v6887, %v8507
        %v8628 = vadd.f32 %v6888, %v8509
        %v8629 = vadd.f32 %v6889, %v8172
        %v8630 = vadd.f32 %v6890, %v8174
        %v8631 = vadd.f32 %v6891, %v8285
        %v8632 = vadd.f32 %v6892, %v8287
        %v8633 = vadd.f32 %v6893, %v8398
        %v8634 = vadd.f32 %v6894, %v8400
        %v8635 = vadd.f32 %v6895, %v8511
        %v8636 = vadd.f32 %v6896, %v8513
        %v8637 = vadd.f32 %v6897, %v8178
        %v8638 = vadd.f32 %v6898, %v8180
        %v8639 = vadd.f32 %v6899, %v8291
        %v8640 = vadd.f32 %v6900, %v8293
        %v8641 = vadd.f32 %v6901, %v8404
        %v8642 = vadd.f32 %v6902, %v8406
        %v8643 = vadd.f32 %v6903, %v8517
        %v8644 = vadd.f32 %v6904, %v8519
        %v8645 = vadd.f32 %v6905, %v8182
        %v8646 = vadd.f32 %v6906, %v8184
        %v8647 = vadd.f32 %v6907, %v8295
        %v8648 = vadd.f32 %v6908, %v8297
        %v8649 = vadd.f32 %v6909, %v8408
        %v8650 = vadd.f32 %v6910, %v8410
        %v8651 = vadd.f32 %v6911, %v8521
        %v8652 = vadd.f32 %v6912, %v8523
        %v8653 = vmax.f32 %v8525, 0.0
        %v8654 = vmax.f32 %v8526, 0.0
        %v8655 = vmax.f32 %v8527, 0.0
        %v8656 = vmax.f32 %v8528, 0.0
        %v8657 = vmax.f32 %v8529, 0.0
        %v8658 = vmax.f32 %v8530, 0.0
        %v8659 = vmax.f32 %v8531, 0.0
        %v8660 = vmax.f32 %v8532, 0.0
        %v8661 = vmax.f32 %v8533, 0.0
        %v8662 = vmax.f32 %v8534, 0.0
        %v8663 = vmax.f32 %v8535, 0.0
        %v8664 = vmax.f32 %v8536, 0.0
        %v8665 = vmax.f32 %v8537, 0.0
        %v8666 = vmax.f32 %v8538, 0.0
        %v8667 = vmax.f32 %v8539, 0.0
        %v8668 = vmax.f32 %v8540, 0.0
        %v8669 = vmax.f32 %v8541, 0.0
        %v8670 = vmax.f32 %v8542, 0.0
        %v8671 = vmax.f32 %v8543, 0.0
        %v8672 = vmax.f32 %v8544, 0.0
        %v8673 = vmax.f32 %v8545, 0.0
        %v8674 = vmax.f32 %v8546, 0.0
        %v8675 = vmax.f32 %v8547, 0.0
        %v8676 = vmax.f32 %v8548, 0.0
        %v8677 = vmax.f32 %v8549, 0.0
        %v8678 = vmax.f32 %v8550, 0.0
        %v8679 = vmax.f32 %v8551, 0.0
        %v8680 = vmax.f32 %v8552, 0.0
        %v8681 = vmax.f32 %v8553, 0.0
        %v8682 = vmax.f32 %v8554, 0.0
        %v8683 = vmax.f32 %v8555, 0.0
        %v8684 = vmax.f32 %v8556, 0.0
        %v8685 = vmax.f32 %v8557, 0.0
        %v8686 = vmax.f32 %v8558, 0.0
        %v8687 = vmax.f32 %v8559, 0.0
        %v8688 = vmax.f32 %v8560, 0.0
        %v8689 = vmax.f32 %v8561, 0.0
        %v8690 = vmax.f32 %v8562, 0.0
        %v8691 = vmax.f32 %v8563, 0.0
        %v8692 = vmax.f32 %v8564, 0.0
        %v8693 = vmax.f32 %v8565, 0.0
        %v8694 = vmax.f32 %v8566, 0.0
        %v8695 = vmax.f32 %v8567, 0.0
        %v8696 = vmax.f32 %v8568, 0.0
        %v8697 = vmax.f32 %v8569, 0.0
        %v8698 = vmax.f32 %v8570, 0.0
        %v8699 = vmax.f32 %v8571, 0.0
        %v8700 = vmax.f32 %v8572, 0.0
        %v8701 = vmax.f32 %v8573, 0.0
        %v8702 = vmax.f32 %v8574, 0.0
        %v8703 = vmax.f32 %v8575, 0.0
        %v8704 = vmax.f32 %v8576, 0.0
        %v8705 = vmax.f32 %v8577, 0.0
        %v8706 = vmax.f32 %v8578, 0.0
        %v8707 = vmax.f32 %v8579, 0.0
        %v8708 = vmax.f32 %v8580, 0.0
        %v8709 = vmax.f32 %v8581, 0.0
        %v8710 = vmax.f32 %v8582, 0.0
        %v8711 = vmax.f32 %v8583, 0.0
        %v8712 = vmax.f32 %v8584, 0.0
        %v8713 = vmax.f32 %v8585, 0.0
        %v8714 = vmax.f32 %v8586, 0.0
        %v8715 = vmax.f32 %v8587, 0.0
        %v8716 = vmax.f32 %v8588, 0.0
        %v8717 = vmax.f32 %v8589, 0.0
        %v8718 = vmax.f32 %v8590, 0.0
        %v8719 = vmax.f32 %v8591, 0.0
        %v8720 = vmax.f32 %v8592, 0.0
        %v8721 = vmax.f32 %v8593, 0.0
        %v8722 = vmax.f32 %v8594, 0.0
        %v8723 = vmax.f32 %v8595, 0.0
        %v8724 = vmax.f32 %v8596, 0.0
        %v8725 = vmax.f32 %v8597, 0.0
        %v8726 = vmax.f32 %v8598, 0.0
        %v8727 = vmax.f32 %v8599, 0.0
        %v8728 = vmax.f32 %v8600, 0.0
        %v8729 = vmax.f32 %v8601, 0.0
        %v8730 = vmax.f32 %v8602, 0.0
        %v8731 = vmax.f32 %v8603, 0.0
        %v8732 = vmax.f32 %v8604, 0.0
        %v8733 = vmax.f32 %v8605, 0.0
        %v8734 = vmax.f32 %v8606, 0.0
        %v8735 = vmax.f32 %v8607, 0.0
        %v8736 = vmax.f32 %v8608, 0.0
        %v8737 = vmax.f32 %v8609, 0.0
        %v8738 = vmax.f32 %v8610, 0.0
        %v8739 = vmax.f32 %v8611, 0.0
        %v8740 = vmax.f32 %v8612, 0.0
        %v8741 = vmax.f32 %v8613, 0.0
        %v8742 = vmax.f32 %v8614, 0.0
        %v8743 = vmax.f32 %v8615, 0.0
        %v8744 = vmax.f32 %v8616, 0.0
        %v8745 = vmax.f32 %v8617, 0.0
        %v8746 = vmax.f32 %v8618, 0.0
        %v8747 = vmax.f32 %v8619, 0.0
        %v8748 = vmax.f32 %v8620, 0.0
        %v8749 = vmax.f32 %v8621, 0.0
        %v8750 = vmax.f32 %v8622, 0.0
        %v8751 = vmax.f32 %v8623, 0.0
        %v8752 = vmax.f32 %v8624, 0.0
        %v8753 = vmax.f32 %v8625, 0.0
        %v8754 = vmax.f32 %v8626, 0.0
        %v8755 = vmax.f32 %v8627, 0.0
        %v8756 = vmax.f32 %v8628, 0.0
        %v8757 = vmax.f32 %v8629, 0.0
        %v8758 = vmax.f32 %v8630, 0.0
        %v8759 = vmax.f32 %v8631, 0.0
        %v8760 = vmax.f32 %v8632, 0.0
        %v8761 = vmax.f32 %v8633, 0.0
        %v8762 = vmax.f32 %v8634, 0.0
        %v8763 = vmax.f32 %v8635, 0.0
        %v8764 = vmax.f32 %v8636, 0.0
        %v8765 = vmax.f32 %v8637, 0.0
        %v8766 = vmax.f32 %v8638, 0.0
        %v8767 = vmax.f32 %v8639, 0.0
        %v8768 = vmax.f32 %v8640, 0.0
        %v8769 = vmax.f32 %v8641, 0.0
        %v8770 = vmax.f32 %v8642, 0.0
        %v8771 = vmax.f32 %v8643, 0.0
        %v8772 = vmax.f32 %v8644, 0.0
        %v8773 = vmax.f32 %v8645, 0.0
        %v8774 = vmax.f32 %v8646, 0.0
        %v8775 = vmax.f32 %v8647, 0.0
        %v8776 = vmax.f32 %v8648, 0.0
        %v8777 = vmax.f32 %v8649, 0.0
        %v8778 = vmax.f32 %v8650, 0.0
        %v8779 = vmax.f32 %v8651, 0.0
        %v8780 = vmax.f32 %v8652, 0.0
        %v8781 = vpack.c.bf16 %v8661, %v8653
        %v8782 = vpack.c.bf16 %v8662, %v8654
        %v8783 = vpack.c.bf16 %v8663, %v8655
        %v8784 = vpack.c.bf16 %v8664, %v8656
        %v8785 = vpack.c.bf16 %v8665, %v8657
        %v8786 = vpack.c.bf16 %v8666, %v8658
        %v8787 = vpack.c.bf16 %v8667, %v8659
        %v8788 = vpack.c.bf16 %v8668, %v8660
        %v8789 = vpack.c.bf16 %v8677, %v8669
        %v8790 = vpack.c.bf16 %v8678, %v8670
        %v8791 = vpack.c.bf16 %v8679, %v8671
        %v8792 = vpack.c.bf16 %v8680, %v8672
        %v8793 = vpack.c.bf16 %v8681, %v8673
        %v8794 = vpack.c.bf16 %v8682, %v8674
        %v8795 = vpack.c.bf16 %v8683, %v8675
        %v8796 = vpack.c.bf16 %v8684, %v8676
        %v8797 = vpack.c.bf16 %v8693, %v8685
        %v8798 = vpack.c.bf16 %v8694, %v8686
        %v8799 = vpack.c.bf16 %v8695, %v8687
        %v8800 = vpack.c.bf16 %v8696, %v8688
        %v8801 = vpack.c.bf16 %v8697, %v8689
        %v8802 = vpack.c.bf16 %v8698, %v8690
        %v8803 = vpack.c.bf16 %v8699, %v8691
        %v8804 = vpack.c.bf16 %v8700, %v8692
        %v8805 = vpack.c.bf16 %v8709, %v8701
        %v8806 = vpack.c.bf16 %v8710, %v8702
        %v8807 = vpack.c.bf16 %v8711, %v8703
        %v8808 = vpack.c.bf16 %v8712, %v8704
        %v8809 = vpack.c.bf16 %v8713, %v8705
        %v8810 = vpack.c.bf16 %v8714, %v8706
        %v8811 = vpack.c.bf16 %v8715, %v8707
        %v8812 = vpack.c.bf16 %v8716, %v8708
        %v8813 = vpack.c.bf16 %v8725, %v8717
        %v8814 = vpack.c.bf16 %v8726, %v8718
        %v8815 = vpack.c.bf16 %v8727, %v8719
        %v8816 = vpack.c.bf16 %v8728, %v8720
        %v8817 = vpack.c.bf16 %v8729, %v8721
        %v8818 = vpack.c.bf16 %v8730, %v8722
        %v8819 = vpack.c.bf16 %v8731, %v8723
        %v8820 = vpack.c.bf16 %v8732, %v8724
        %v8821 = vpack.c.bf16 %v8741, %v8733
        %v8822 = vpack.c.bf16 %v8742, %v8734
        %v8823 = vpack.c.bf16 %v8743, %v8735
        %v8824 = vpack.c.bf16 %v8744, %v8736
        %v8825 = vpack.c.bf16 %v8745, %v8737
        %v8826 = vpack.c.bf16 %v8746, %v8738
        %v8827 = vpack.c.bf16 %v8747, %v8739
        %v8828 = vpack.c.bf16 %v8748, %v8740
        %v8829 = vpack.c.bf16 %v8757, %v8749
        %v8830 = vpack.c.bf16 %v8758, %v8750
        %v8831 = vpack.c.bf16 %v8759, %v8751
        %v8832 = vpack.c.bf16 %v8760, %v8752
        %v8833 = vpack.c.bf16 %v8761, %v8753
        %v8834 = vpack.c.bf16 %v8762, %v8754
        %v8835 = vpack.c.bf16 %v8763, %v8755
        %v8836 = vpack.c.bf16 %v8764, %v8756
        %v8837 = vpack.c.bf16 %v8773, %v8765
        %v8838 = vpack.c.bf16 %v8774, %v8766
        %v8839 = vpack.c.bf16 %v8775, %v8767
        %v8840 = vpack.c.bf16 %v8776, %v8768
        %v8841 = vpack.c.bf16 %v8777, %v8769
        %v8842 = vpack.c.bf16 %v8778, %v8770
        %v8843 = vpack.c.bf16 %v8779, %v8771
        %v8844 = vpack.c.bf16 %v8780, %v8772
        %s8845 = scalar_lea.vmem %s3, 256
        %v8846 = vld [vmem:[%s8845] sm:$0xf]
        %v8847 = vld [vmem:[%s8845 + $0x4] sm:$0xf]
        %v8848 = vld [vmem:[%s8845 + $0x8] sm:$0xf]
        %v8849 = vld [vmem:[%s8845 + $0xc] sm:$0xf]
        %v8850 = vld [vmem:[%s8845 + $0x10] sm:$0xf]
        %v8851 = vld [vmem:[%s8845 + $0x14] sm:$0xf]
        %v8852 = vld [vmem:[%s8845 + $0x18] sm:$0xf]
        %v8853 = vld [vmem:[%s8845 + $0x1c] sm:$0xf]
        %v8854 = vld [vmem:[%s8845 + $0x20] sm:$0xf]
        %v8855 = vld [vmem:[%s8845 + $0x24] sm:$0xf]
        %v8856 = vld [vmem:[%s8845 + $0x28] sm:$0xf]
        %v8857 = vld [vmem:[%s8845 + $0x2c] sm:$0xf]
        %v8858 = vld [vmem:[%s8845 + $0x30] sm:$0xf]
        %v8859 = vld [vmem:[%s8845 + $0x34] sm:$0xf]
        %v8860 = vld [vmem:[%s8845 + $0x38] sm:$0xf]
        %v8861 = vld [vmem:[%s8845 + $0x3c] sm:$0xf]
        %s8862 = scalar_lea.vmem %s4, 512
        %v8863 = vld [vmem:[%s8862] sm:$0xff]
        %v8864 = vld [vmem:[%s8862 + $0x8] sm:$0xff]
        %v8865 = vld [vmem:[%s8862 + $0x10] sm:$0xff]
        %v8866 = vld [vmem:[%s8862 + $0x18] sm:$0xff]
        %v8867 = vld [vmem:[%s8862 + $0x20] sm:$0xff]
        %v8868 = vld [vmem:[%s8862 + $0x28] sm:$0xff]
        %v8869 = vld [vmem:[%s8862 + $0x30] sm:$0xff]
        %v8870 = vld [vmem:[%s8862 + $0x38] sm:$0xff]
        %v8871 = vld [vmem:[%s8862 + $0x40] sm:$0xff]
        %v8872 = vld [vmem:[%s8862 + $0x48] sm:$0xff]
        %v8873 = vld [vmem:[%s8862 + $0x50] sm:$0xff]
        %v8874 = vld [vmem:[%s8862 + $0x58] sm:$0xff]
        %v8875 = vld [vmem:[%s8862 + $0x60] sm:$0xff]
        %v8876 = vld [vmem:[%s8862 + $0x68] sm:$0xff]
        %v8877 = vld [vmem:[%s8862 + $0x70] sm:$0xff]
        %v8878 = vld [vmem:[%s8862 + $0x78] sm:$0xff]
        %8880 = vset.pattern.permute.xlu0 0
        %8881 = vperm.xlu0 %8880, %v8863
        %v8882 = vpop.permute.xlu0 %8881
        %8885 = vset.pattern.permute.xlu0 0
        %8886 = vperm.xlu0 %8885, %v8864
        %v8887 = vpop.permute.xlu0 %8886
        %8890 = vset.pattern.permute.xlu0 0
        %8891 = vperm.xlu0 %8890, %v8865
        %v8892 = vpop.permute.xlu0 %8891
        %8895 = vset.pattern.permute.xlu0 0
        %8896 = vperm.xlu0 %8895, %v8866
        %v8897 = vpop.permute.xlu0 %8896
        %8900 = vset.pattern.permute.xlu0 0
        %8901 = vperm.xlu0 %8900, %v8867
        %v8902 = vpop.permute.xlu0 %8901
        %8905 = vset.pattern.permute.xlu0 0
        %8906 = vperm.xlu0 %8905, %v8868
        %v8907 = vpop.permute.xlu0 %8906
        %8910 = vset.pattern.permute.xlu0 0
        %8911 = vperm.xlu0 %8910, %v8869
        %v8912 = vpop.permute.xlu0 %8911
        %8915 = vset.pattern.permute.xlu0 0
        %8916 = vperm.xlu0 %8915, %v8870
        %v8917 = vpop.permute.xlu0 %8916
        %8920 = vset.pattern.permute.xlu0 0
        %8921 = vperm.xlu0 %8920, %v8871
        %v8922 = vpop.permute.xlu0 %8921
        %8925 = vset.pattern.permute.xlu0 0
        %8926 = vperm.xlu0 %8925, %v8872
        %v8927 = vpop.permute.xlu0 %8926
        %8930 = vset.pattern.permute.xlu0 0
        %8931 = vperm.xlu0 %8930, %v8873
        %v8932 = vpop.permute.xlu0 %8931
        %8935 = vset.pattern.permute.xlu0 0
        %8936 = vperm.xlu0 %8935, %v8874
        %v8937 = vpop.permute.xlu0 %8936
        %8940 = vset.pattern.permute.xlu0 0
        %8941 = vperm.xlu0 %8940, %v8875
        %v8942 = vpop.permute.xlu0 %8941
        %8945 = vset.pattern.permute.xlu0 0
        %8946 = vperm.xlu0 %8945, %v8876
        %v8947 = vpop.permute.xlu0 %8946
        %8950 = vset.pattern.permute.xlu0 0
        %8951 = vperm.xlu0 %8950, %v8877
        %v8952 = vpop.permute.xlu0 %8951
        %8955 = vset.pattern.permute.xlu0 0
        %8956 = vperm.xlu0 %8955, %v8878
        %v8957 = vpop.permute.xlu0 %8956
        %v8975 = vunpack.c.l.b16 %v8846
        %v8976 = vunpack.c.l.b16 %v8847
        %v8977 = vunpack.c.l.b16 %v8848
        %v8978 = vunpack.c.l.b16 %v8849
        %v8979 = vunpack.c.l.b16 %v8850
        %v8980 = vunpack.c.l.b16 %v8851
        %v8981 = vunpack.c.l.b16 %v8852
        %v8982 = vunpack.c.l.b16 %v8853
        %v8983 = vunpack.c.l.b16 %v8854
        %v8984 = vunpack.c.l.b16 %v8855
        %v8985 = vunpack.c.l.b16 %v8856
        %v8986 = vunpack.c.l.b16 %v8857
        %v8987 = vunpack.c.l.b16 %v8858
        %v8988 = vunpack.c.l.b16 %v8859
        %v8989 = vunpack.c.l.b16 %v8860
        %v8990 = vunpack.c.l.b16 %v8861
        %v8991 = vpack.c.b16 %v8976, %v8975
        %v8992 = vpack.c.b16 %v8978, %v8977
        %v8993 = vpack.c.b16 %v8980, %v8979
        %v8994 = vpack.c.b16 %v8982, %v8981
        %v8995 = vpack.c.b16 %v8984, %v8983
        %v8996 = vpack.c.b16 %v8986, %v8985
        %v8997 = vpack.c.b16 %v8988, %v8987
        %v8998 = vpack.c.b16 %v8990, %v8989
        %9007 = vmatprep.subr.bf16.mxu0 %v8782
        %9008 = vmatpush1.bf16.msra.mxu0 %v8781
        %9009 = vmatprep.subr.bf16.mxu0 %v8790
        %9010 = vmatpush1.bf16.msra.mxu0 %v8789
        %9011 = vmatprep.subr.bf16.mxu0 %v8798
        %9012 = vmatpush1.bf16.msra.mxu0 %v8797
        %9013 = vmatprep.subr.bf16.mxu0 %v8806
        %9014 = vmatpush1.bf16.msra.mxu0 %v8805
        %9015 = vmatprep.subr.bf16.mxu0 %v8814
        %9016 = vmatpush1.bf16.msra.mxu0 %v8813
        %9017 = vmatprep.subr.bf16.mxu0 %v8822
        %9018 = vmatpush1.bf16.msra.mxu0 %v8821
        %9019 = vmatprep.subr.bf16.mxu0 %v8830
        %9020 = vmatpush1.bf16.msra.mxu0 %v8829
        %9021 = vmatprep.subr.bf16.mxu0 %v8838
        %9022 = vmatpush1.bf16.msra.mxu0 %v8837
        %9023 = vmatprep.subr.bf16.mxu0 0
        %9024 = vmatpush1.bf16.msra.mxu0 0
        %9025 = vmatprep.subr.bf16.mxu0 0
        %9026 = vmatpush1.bf16.msra.mxu0 0
        %9027 = vmatprep.subr.bf16.mxu0 0
        %9028 = vmatpush1.bf16.msra.mxu0 0
        %9029 = vmatprep.subr.bf16.mxu0 0
        %9030 = vmatpush1.bf16.msra.mxu0 0
        %9031 = vmatprep.subr.bf16.mxu0 0
        %9032 = vmatpush1.bf16.msra.mxu0 0
        %9033 = vmatprep.subr.bf16.mxu0 0
        %9034 = vmatpush1.bf16.msra.mxu0 0
        %9035 = vmatprep.subr.bf16.mxu0 0
        %9036 = vmatpush1.bf16.msra.mxu0 0
        %9037 = vmatprep.subr.bf16.mxu0 0
        %9038 = vmatpush1.bf16.msra.mxu0 0
        %9039 = vmatprep.mubr.bf16.mxu0 0
        %9040 = vmatmul.mubr.bf16.gmra.mrb[0].mxu0 %v8991
        %v9041 = vpop.f32.mrb[0].mxu0
        %v9042 = vadd.f32 %v8882, %v9041
        %v9043 = vpop.f32.mrb[0].mxu0
        %v9044 = vadd.f32 %v8882, %v9043
        %v9045 = vpop.f32.mrb[0].mxu0
        %v9046 = vadd.f32 %v8887, %v9045
        %v9047 = vpop.f32.mrb[0].mxu0
        %v9048 = vadd.f32 %v8887, %v9047
        %9049 = vmatprep.mubr.bf16.mxu0 0
        %9050 = vmatmul.mubr.bf16.gmra.mrb[0].mxu0 %v8992
        %v9051 = vpop.f32.mrb[0].mxu0
        %v9052 = vadd.f32 %v8892, %v9051
        %v9053 = vpop.f32.mrb[0].mxu0
        %v9054 = vadd.f32 %v8892, %v9053
        %v9055 = vpop.f32.mrb[0].mxu0
        %v9056 = vadd.f32 %v8897, %v9055
        %v9057 = vpop.f32.mrb[0].mxu0
        %v9058 = vadd.f32 %v8897, %v9057
        %9059 = vmatprep.mubr.bf16.mxu0 0
        %9060 = vmatmul.mubr.bf16.gmra.mrb[0].mxu0 %v8993
        %v9061 = vpop.f32.mrb[0].mxu0
        %v9062 = vadd.f32 %v8902, %v9061
        %v9063 = vpop.f32.mrb[0].mxu0
        %v9064 = vadd.f32 %v8902, %v9063
        %v9065 = vpop.f32.mrb[0].mxu0
        %v9066 = vadd.f32 %v8907, %v9065
        %v9067 = vpop.f32.mrb[0].mxu0
        %v9068 = vadd.f32 %v8907, %v9067
        %9069 = vmatprep.mubr.bf16.mxu0 0
        %9070 = vmatmul.mubr.bf16.gmra.mrb[0].mxu0 %v8994
        %v9071 = vpop.f32.mrb[0].mxu0
        %v9072 = vadd.f32 %v8912, %v9071
        %v9073 = vpop.f32.mrb[0].mxu0
        %v9074 = vadd.f32 %v8912, %v9073
        %v9075 = vpop.f32.mrb[0].mxu0
        %v9076 = vadd.f32 %v8917, %v9075
        %v9077 = vpop.f32.mrb[0].mxu0
        %v9078 = vadd.f32 %v8917, %v9077
        %9079 = vmatprep.mubr.bf16.mxu0 0
        %9080 = vmatmul.mubr.bf16.gmra.mrb[0].mxu0 %v8995
        %v9081 = vpop.f32.mrb[0].mxu0
        %v9082 = vadd.f32 %v8922, %v9081
        %v9083 = vpop.f32.mrb[0].mxu0
        %v9084 = vadd.f32 %v8922, %v9083
        %v9085 = vpop.f32.mrb[0].mxu0
        %v9086 = vadd.f32 %v8927, %v9085
        %v9087 = vpop.f32.mrb[0].mxu0
        %v9088 = vadd.f32 %v8927, %v9087
        %9089 = vmatprep.mubr.bf16.mxu0 0
        %9090 = vmatmul.mubr.bf16.gmra.mrb[0].mxu0 %v8996
        %v9091 = vpop.f32.mrb[0].mxu0
        %v9092 = vadd.f32 %v8932, %v9091
        %v9093 = vpop.f32.mrb[0].mxu0
        %v9094 = vadd.f32 %v8932, %v9093
        %v9095 = vpop.f32.mrb[0].mxu0
        %v9096 = vadd.f32 %v8937, %v9095
        %v9097 = vpop.f32.mrb[0].mxu0
        %v9098 = vadd.f32 %v8937, %v9097
        %9099 = vmatprep.mubr.bf16.mxu0 0
        %9100 = vmatmul.mubr.bf16.gmra.mrb[0].mxu0 %v8997
        %v9101 = vpop.f32.mrb[0].mxu0
        %v9102 = vadd.f32 %v8942, %v9101
        %v9103 = vpop.f32.mrb[0].mxu0
        %v9104 = vadd.f32 %v8942, %v9103
        %v9105 = vpop.f32.mrb[0].mxu0
        %v9106 = vadd.f32 %v8947, %v9105
        %v9107 = vpop.f32.mrb[0].mxu0
        %v9108 = vadd.f32 %v8947, %v9107
        %9109 = vmatprep.mubr.bf16.mxu0 0
        %9110 = vmatmul.mubr.bf16.gmra.mrb[0].mxu0 %v8998
        %v9111 = vpop.f32.mrb[0].mxu0
        %v9112 = vadd.f32 %v8952, %v9111
        %v9113 = vpop.f32.mrb[0].mxu0
        %v9114 = vadd.f32 %v8952, %v9113
        %v9115 = vpop.f32.mrb[0].mxu0
        %v9116 = vadd.f32 %v8957, %v9115
        %v9117 = vpop.f32.mrb[0].mxu0
        %v9118 = vadd.f32 %v8957, %v9117
        %9119 = vdwg.mxu0
        %9120 = vmatprep.subr.bf16.mxu0 %v8784
        %9121 = vmatpush1.bf16.msra.mxu0 %v8783
        %9122 = vmatprep.subr.bf16.mxu0 %v8792
        %9123 = vmatpush1.bf16.msra.mxu0 %v8791
        %9124 = vmatprep.subr.bf16.mxu0 %v8800
        %9125 = vmatpush1.bf16.msra.mxu0 %v8799
        %9126 = vmatprep.subr.bf16.mxu0 %v8808
        %9127 = vmatpush1.bf16.msra.mxu0 %v8807
        %9128 = vmatprep.subr.bf16.mxu0 %v8816
        %9129 = vmatpush1.bf16.msra.mxu0 %v8815
        %9130 = vmatprep.subr.bf16.mxu0 %v8824
        %9131 = vmatpush1.bf16.msra.mxu0 %v8823
        %9132 = vmatprep.subr.bf16.mxu0 %v8832
        %9133 = vmatpush1.bf16.msra.mxu0 %v8831
        %9134 = vmatprep.subr.bf16.mxu0 %v8840
        %9135 = vmatpush1.bf16.msra.mxu0 %v8839
        %9136 = vmatprep.subr.bf16.mxu0 0
        %9137 = vmatpush1.bf16.msra.mxu0 0
        %9138 = vmatprep.subr.bf16.mxu0 0
        %9139 = vmatpush1.bf16.msra.mxu0 0
        %9140 = vmatprep.subr.bf16.mxu0 0
        %9141 = vmatpush1.bf16.msra.mxu0 0
        %9142 = vmatprep.subr.bf16.mxu0 0
        %9143 = vmatpush1.bf16.msra.mxu0 0
        %9144 = vmatprep.subr.bf16.mxu0 0
        %9145 = vmatpush1.bf16.msra.mxu0 0
        %9146 = vmatprep.subr.bf16.mxu0 0
        %9147 = vmatpush1.bf16.msra.mxu0 0
        %9148 = vmatprep.subr.bf16.mxu0 0
        %9149 = vmatpush1.bf16.msra.mxu0 0
        %9150 = vmatprep.subr.bf16.mxu0 0
        %9151 = vmatpush1.bf16.msra.mxu0 0
        %9152 = vmatprep.mubr.bf16.mxu0 0
        %9153 = vmatmul.mubr.bf16.gmra.mrb[0].mxu0 %v8991
        %v9154 = vpop.f32.mrb[0].mxu0
        %v9155 = vadd.f32 %v8882, %v9154
        %v9156 = vpop.f32.mrb[0].mxu0
        %v9157 = vadd.f32 %v8882, %v9156
        %v9158 = vpop.f32.mrb[0].mxu0
        %v9159 = vadd.f32 %v8887, %v9158
        %v9160 = vpop.f32.mrb[0].mxu0
        %v9161 = vadd.f32 %v8887, %v9160
        %9162 = vmatprep.mubr.bf16.mxu0 0
        %9163 = vmatmul.mubr.bf16.gmra.mrb[0].mxu0 %v8992
        %v9164 = vpop.f32.mrb[0].mxu0
        %v9165 = vadd.f32 %v8892, %v9164
        %v9166 = vpop.f32.mrb[0].mxu0
        %v9167 = vadd.f32 %v8892, %v9166
        %v9168 = vpop.f32.mrb[0].mxu0
        %v9169 = vadd.f32 %v8897, %v9168
        %v9170 = vpop.f32.mrb[0].mxu0
        %v9171 = vadd.f32 %v8897, %v9170
        %9172 = vmatprep.mubr.bf16.mxu0 0
        %9173 = vmatmul.mubr.bf16.gmra.mrb[0].mxu0 %v8993
        %v9174 = vpop.f32.mrb[0].mxu0
        %v9175 = vadd.f32 %v8902, %v9174
        %v9176 = vpop.f32.mrb[0].mxu0
        %v9177 = vadd.f32 %v8902, %v9176
        %v9178 = vpop.f32.mrb[0].mxu0
        %v9179 = vadd.f32 %v8907, %v9178
        %v9180 = vpop.f32.mrb[0].mxu0
        %v9181 = vadd.f32 %v8907, %v9180
        %9182 = vmatprep.mubr.bf16.mxu0 0
        %9183 = vmatmul.mubr.bf16.gmra.mrb[0].mxu0 %v8994
        %v9184 = vpop.f32.mrb[0].mxu0
        %v9185 = vadd.f32 %v8912, %v9184
        %v9186 = vpop.f32.mrb[0].mxu0
        %v9187 = vadd.f32 %v8912, %v9186
        %v9188 = vpop.f32.mrb[0].mxu0
        %v9189 = vadd.f32 %v8917, %v9188
        %v9190 = vpop.f32.mrb[0].mxu0
        %v9191 = vadd.f32 %v8917, %v9190
        %9192 = vmatprep.mubr.bf16.mxu0 0
        %9193 = vmatmul.mubr.bf16.gmra.mrb[0].mxu0 %v8995
        %v9194 = vpop.f32.mrb[0].mxu0
        %v9195 = vadd.f32 %v8922, %v9194
        %v9196 = vpop.f32.mrb[0].mxu0
        %v9197 = vadd.f32 %v8922, %v9196
        %v9198 = vpop.f32.mrb[0].mxu0
        %v9199 = vadd.f32 %v8927, %v9198
        %v9200 = vpop.f32.mrb[0].mxu0
        %v9201 = vadd.f32 %v8927, %v9200
        %9202 = vmatprep.mubr.bf16.mxu0 0
        %9203 = vmatmul.mubr.bf16.gmra.mrb[0].mxu0 %v8996
        %v9204 = vpop.f32.mrb[0].mxu0
        %v9205 = vadd.f32 %v8932, %v9204
        %v9206 = vpop.f32.mrb[0].mxu0
        %v9207 = vadd.f32 %v8932, %v9206
        %v9208 = vpop.f32.mrb[0].mxu0
        %v9209 = vadd.f32 %v8937, %v9208
        %v9210 = vpop.f32.mrb[0].mxu0
        %v9211 = vadd.f32 %v8937, %v9210
        %9212 = vmatprep.mubr.bf16.mxu0 0
        %9213 = vmatmul.mubr.bf16.gmra.mrb[0].mxu0 %v8997
        %v9214 = vpop.f32.mrb[0].mxu0
        %v9215 = vadd.f32 %v8942, %v9214
        %v9216 = vpop.f32.mrb[0].mxu0
        %v9217 = vadd.f32 %v8942, %v9216
        %v9218 = vpop.f32.mrb[0].mxu0
        %v9219 = vadd.f32 %v8947, %v9218
        %v9220 = vpop.f32.mrb[0].mxu0
        %v9221 = vadd.f32 %v8947, %v9220
        %9222 = vmatprep.mubr.bf16.mxu0 0
        %9223 = vmatmul.mubr.bf16.gmra.mrb[0].mxu0 %v8998
        %v9224 = vpop.f32.mrb[0].mxu0
        %v9225 = vadd.f32 %v8952, %v9224
        %v9226 = vpop.f32.mrb[0].mxu0
        %v9227 = vadd.f32 %v8952, %v9226
        %v9228 = vpop.f32.mrb[0].mxu0
        %v9229 = vadd.f32 %v8957, %v9228
        %v9230 = vpop.f32.mrb[0].mxu0
        %v9231 = vadd.f32 %v8957, %v9230
        %9232 = vdwg.mxu0
        %9233 = vmatprep.subr.bf16.mxu0 %v8786
        %9234 = vmatpush1.bf16.msra.mxu0 %v8785
        %9235 = vmatprep.subr.bf16.mxu0 %v8794
        %9236 = vmatpush1.bf16.msra.mxu0 %v8793
        %9237 = vmatprep.subr.bf16.mxu0 %v8802
        %9238 = vmatpush1.bf16.msra.mxu0 %v8801
        %9239 = vmatprep.subr.bf16.mxu0 %v8810
        %9240 = vmatpush1.bf16.msra.mxu0 %v8809
        %9241 = vmatprep.subr.bf16.mxu0 %v8818
        %9242 = vmatpush1.bf16.msra.mxu0 %v8817
        %9243 = vmatprep.subr.bf16.mxu0 %v8826
        %9244 = vmatpush1.bf16.msra.mxu0 %v8825
        %9245 = vmatprep.subr.bf16.mxu0 %v8834
        %9246 = vmatpush1.bf16.msra.mxu0 %v8833
        %9247 = vmatprep.subr.bf16.mxu0 %v8842
        %9248 = vmatpush1.bf16.msra.mxu0 %v8841
        %9249 = vmatprep.subr.bf16.mxu0 0
        %9250 = vmatpush1.bf16.msra.mxu0 0
        %9251 = vmatprep.subr.bf16.mxu0 0
        %9252 = vmatpush1.bf16.msra.mxu0 0
        %9253 = vmatprep.subr.bf16.mxu0 0
        %9254 = vmatpush1.bf16.msra.mxu0 0
        %9255 = vmatprep.subr.bf16.mxu0 0
        %9256 = vmatpush1.bf16.msra.mxu0 0
        %9257 = vmatprep.subr.bf16.mxu0 0
        %9258 = vmatpush1.bf16.msra.mxu0 0
        %9259 = vmatprep.subr.bf16.mxu0 0
        %9260 = vmatpush1.bf16.msra.mxu0 0
        %9261 = vmatprep.subr.bf16.mxu0 0
        %9262 = vmatpush1.bf16.msra.mxu0 0
        %9263 = vmatprep.subr.bf16.mxu0 0
        %9264 = vmatpush1.bf16.msra.mxu0 0
        %9265 = vmatprep.mubr.bf16.mxu0 0
        %9266 = vmatmul.mubr.bf16.gmra.mrb[0].mxu0 %v8991
        %v9267 = vpop.f32.mrb[0].mxu0
        %v9268 = vadd.f32 %v8882, %v9267
        %v9269 = vpop.f32.mrb[0].mxu0
        %v9270 = vadd.f32 %v8882, %v9269
        %v9271 = vpop.f32.mrb[0].mxu0
        %v9272 = vadd.f32 %v8887, %v9271
        %v9273 = vpop.f32.mrb[0].mxu0
        %v9274 = vadd.f32 %v8887, %v9273
        %9275 = vmatprep.mubr.bf16.mxu0 0
        %9276 = vmatmul.mubr.bf16.gmra.mrb[0].mxu0 %v8992
        %v9277 = vpop.f32.mrb[0].mxu0
        %v9278 = vadd.f32 %v8892, %v9277
        %v9279 = vpop.f32.mrb[0].mxu0
        %v9280 = vadd.f32 %v8892, %v9279
        %v9281 = vpop.f32.mrb[0].mxu0
        %v9282 = vadd.f32 %v8897, %v9281
        %v9283 = vpop.f32.mrb[0].mxu0
        %v9284 = vadd.f32 %v8897, %v9283
        %9285 = vmatprep.mubr.bf16.mxu0 0
        %9286 = vmatmul.mubr.bf16.gmra.mrb[0].mxu0 %v8993
        %v9287 = vpop.f32.mrb[0].mxu0
        %v9288 = vadd.f32 %v8902, %v9287
        %v9289 = vpop.f32.mrb[0].mxu0
        %v9290 = vadd.f32 %v8902, %v9289
        %v9291 = vpop.f32.mrb[0].mxu0
        %v9292 = vadd.f32 %v8907, %v9291
        %v9293 = vpop.f32.mrb[0].mxu0
        %v9294 = vadd.f32 %v8907, %v9293
        %9295 = vmatprep.mubr.bf16.mxu0 0
        %9296 = vmatmul.mubr.bf16.gmra.mrb[0].mxu0 %v8994
        %v9297 = vpop.f32.mrb[0].mxu0
        %v9298 = vadd.f32 %v8912, %v9297
        %v9299 = vpop.f32.mrb[0].mxu0
        %v9300 = vadd.f32 %v8912, %v9299
        %v9301 = vpop.f32.mrb[0].mxu0
        %v9302 = vadd.f32 %v8917, %v9301
        %v9303 = vpop.f32.mrb[0].mxu0
        %v9304 = vadd.f32 %v8917, %v9303
        %9305 = vmatprep.mubr.bf16.mxu0 0
        %9306 = vmatmul.mubr.bf16.gmra.mrb[0].mxu0 %v8995
        %v9307 = vpop.f32.mrb[0].mxu0
        %v9308 = vadd.f32 %v8922, %v9307
        %v9309 = vpop.f32.mrb[0].mxu0
        %v9310 = vadd.f32 %v8922, %v9309
        %v9311 = vpop.f32.mrb[0].mxu0
        %v9312 = vadd.f32 %v8927, %v9311
        %v9313 = vpop.f32.mrb[0].mxu0
        %v9314 = vadd.f32 %v8927, %v9313
        %9315 = vmatprep.mubr.bf16.mxu0 0
        %9316 = vmatmul.mubr.bf16.gmra.mrb[0].mxu0 %v8996
        %v9317 = vpop.f32.mrb[0].mxu0
        %v9318 = vadd.f32 %v8932, %v9317
        %v9319 = vpop.f32.mrb[0].mxu0
        %v9320 = vadd.f32 %v8932, %v9319
        %v9321 = vpop.f32.mrb[0].mxu0
        %v9322 = vadd.f32 %v8937, %v9321
        %v9323 = vpop.f32.mrb[0].mxu0
        %v9324 = vadd.f32 %v8937, %v9323
        %9325 = vmatprep.mubr.bf16.mxu0 0
        %9326 = vmatmul.mubr.bf16.gmra.mrb[0].mxu0 %v8997
        %v9327 = vpop.f32.mrb[0].mxu0
        %v9328 = vadd.f32 %v8942, %v9327
        %v9329 = vpop.f32.mrb[0].mxu0
        %v9330 = vadd.f32 %v8942, %v9329
        %v9331 = vpop.f32.mrb[0].mxu0
        %v9332 = vadd.f32 %v8947, %v9331
        %v9333 = vpop.f32.mrb[0].mxu0
        %v9334 = vadd.f32 %v8947, %v9333
        %9335 = vmatprep.mubr.bf16.mxu0 0
        %9336 = vmatmul.mubr.bf16.gmra.mrb[0].mxu0 %v8998
        %v9337 = vpop.f32.mrb[0].mxu0
        %v9338 = vadd.f32 %v8952, %v9337
        %v9339 = vpop.f32.mrb[0].mxu0
        %v9340 = vadd.f32 %v8952, %v9339
        %v9341 = vpop.f32.mrb[0].mxu0
        %v9342 = vadd.f32 %v8957, %v9341
        %v9343 = vpop.f32.mrb[0].mxu0
        %v9344 = vadd.f32 %v8957, %v9343
        %9345 = vdwg.mxu0
        %9346 = vmatprep.subr.bf16.mxu0 %v8788
        %9347 = vmatpush1.bf16.msra.mxu0 %v8787
        %9348 = vmatprep.subr.bf16.mxu0 %v8796
        %9349 = vmatpush1.bf16.msra.mxu0 %v8795
        %9350 = vmatprep.subr.bf16.mxu0 %v8804
        %9351 = vmatpush1.bf16.msra.mxu0 %v8803
        %9352 = vmatprep.subr.bf16.mxu0 %v8812
        %9353 = vmatpush1.bf16.msra.mxu0 %v8811
        %9354 = vmatprep.subr.bf16.mxu0 %v8820
        %9355 = vmatpush1.bf16.msra.mxu0 %v8819
        %9356 = vmatprep.subr.bf16.mxu0 %v8828
        %9357 = vmatpush1.bf16.msra.mxu0 %v8827
        %9358 = vmatprep.subr.bf16.mxu0 %v8836
        %9359 = vmatpush1.bf16.msra.mxu0 %v8835
        %9360 = vmatprep.subr.bf16.mxu0 %v8844
        %9361 = vmatpush1.bf16.msra.mxu0 %v8843
        %9362 = vmatprep.subr.bf16.mxu0 0
        %9363 = vmatpush1.bf16.msra.mxu0 0
        %9364 = vmatprep.subr.bf16.mxu0 0
        %9365 = vmatpush1.bf16.msra.mxu0 0
        %9366 = vmatprep.subr.bf16.mxu0 0
        %9367 = vmatpush1.bf16.msra.mxu0 0
        %9368 = vmatprep.subr.bf16.mxu0 0
        %9369 = vmatpush1.bf16.msra.mxu0 0
        %9370 = vmatprep.subr.bf16.mxu0 0
        %9371 = vmatpush1.bf16.msra.mxu0 0
        %9372 = vmatprep.subr.bf16.mxu0 0
        %9373 = vmatpush1.bf16.msra.mxu0 0
        %9374 = vmatprep.subr.bf16.mxu0 0
        %9375 = vmatpush1.bf16.msra.mxu0 0
        %9376 = vmatprep.subr.bf16.mxu0 0
        %9377 = vmatpush1.bf16.msra.mxu0 0
        %9378 = vmatprep.mubr.bf16.mxu0 0
        %9379 = vmatmul.mubr.bf16.gmra.mrb[0].mxu0 %v8991
        %v9380 = vpop.f32.mrb[0].mxu0
        %v9381 = vadd.f32 %v8882, %v9380
        %v9382 = vpop.f32.mrb[0].mxu0
        %v9383 = vadd.f32 %v8882, %v9382
        %v9384 = vpop.f32.mrb[0].mxu0
        %v9385 = vadd.f32 %v8887, %v9384
        %v9386 = vpop.f32.mrb[0].mxu0
        %v9387 = vadd.f32 %v8887, %v9386
        %9388 = vmatprep.mubr.bf16.mxu0 0
        %9389 = vmatmul.mubr.bf16.gmra.mrb[0].mxu0 %v8992
        %v9390 = vpop.f32.mrb[0].mxu0
        %v9391 = vadd.f32 %v8892, %v9390
        %v9392 = vpop.f32.mrb[0].mxu0
        %v9393 = vadd.f32 %v8892, %v9392
        %v9394 = vpop.f32.mrb[0].mxu0
        %v9395 = vadd.f32 %v8897, %v9394
        %v9396 = vpop.f32.mrb[0].mxu0
        %v9397 = vadd.f32 %v8897, %v9396
        %9398 = vmatprep.mubr.bf16.mxu0 0
        %9399 = vmatmul.mubr.bf16.gmra.mrb[0].mxu0 %v8993
        %v9400 = vpop.f32.mrb[0].mxu0
        %v9401 = vadd.f32 %v8902, %v9400
        %v9402 = vpop.f32.mrb[0].mxu0
        %v9403 = vadd.f32 %v8902, %v9402
        %v9404 = vpop.f32.mrb[0].mxu0
        %v9405 = vadd.f32 %v8907, %v9404
        %v9406 = vpop.f32.mrb[0].mxu0
        %v9407 = vadd.f32 %v8907, %v9406
        %9408 = vmatprep.mubr.bf16.mxu0 0
        %9409 = vmatmul.mubr.bf16.gmra.mrb[0].mxu0 %v8994
        %v9410 = vpop.f32.mrb[0].mxu0
        %v9411 = vadd.f32 %v8912, %v9410
        %v9412 = vpop.f32.mrb[0].mxu0
        %v9413 = vadd.f32 %v8912, %v9412
        %v9414 = vpop.f32.mrb[0].mxu0
        %v9415 = vadd.f32 %v8917, %v9414
        %v9416 = vpop.f32.mrb[0].mxu0
        %v9417 = vadd.f32 %v8917, %v9416
        %9418 = vmatprep.mubr.bf16.mxu0 0
        %9419 = vmatmul.mubr.bf16.gmra.mrb[0].mxu0 %v8995
        %v9420 = vpop.f32.mrb[0].mxu0
        %v9421 = vadd.f32 %v8922, %v9420
        %v9422 = vpop.f32.mrb[0].mxu0
        %v9423 = vadd.f32 %v8922, %v9422
        %v9424 = vpop.f32.mrb[0].mxu0
        %v9425 = vadd.f32 %v8927, %v9424
        %v9426 = vpop.f32.mrb[0].mxu0
        %v9427 = vadd.f32 %v8927, %v9426
        %9428 = vmatprep.mubr.bf16.mxu0 0
        %9429 = vmatmul.mubr.bf16.gmra.mrb[0].mxu0 %v8996
        %v9430 = vpop.f32.mrb[0].mxu0
        %v9431 = vadd.f32 %v8932, %v9430
        %v9432 = vpop.f32.mrb[0].mxu0
        %v9433 = vadd.f32 %v8932, %v9432
        %v9434 = vpop.f32.mrb[0].mxu0
        %v9435 = vadd.f32 %v8937, %v9434
        %v9436 = vpop.f32.mrb[0].mxu0
        %v9437 = vadd.f32 %v8937, %v9436
        %9438 = vmatprep.mubr.bf16.mxu0 0
        %9439 = vmatmul.mubr.bf16.gmra.mrb[0].mxu0 %v8997
        %v9440 = vpop.f32.mrb[0].mxu0
        %v9441 = vadd.f32 %v8942, %v9440
        %v9442 = vpop.f32.mrb[0].mxu0
        %v9443 = vadd.f32 %v8942, %v9442
        %v9444 = vpop.f32.mrb[0].mxu0
        %v9445 = vadd.f32 %v8947, %v9444
        %v9446 = vpop.f32.mrb[0].mxu0
        %v9447 = vadd.f32 %v8947, %v9446
        %9448 = vmatprep.mubr.bf16.mxu0 0
        %9449 = vmatmul.mubr.bf16.gmra.mrb[0].mxu0 %v8998
        %v9450 = vpop.f32.mrb[0].mxu0
        %v9451 = vadd.f32 %v8952, %v9450
        %v9452 = vpop.f32.mrb[0].mxu0
        %v9453 = vadd.f32 %v8952, %v9452
        %v9454 = vpop.f32.mrb[0].mxu0
        %v9455 = vadd.f32 %v8957, %v9454
        %v9456 = vpop.f32.mrb[0].mxu0
        %v9457 = vadd.f32 %v8957, %v9456
        %9458 = vdwg.mxu0
        %v9459 = vmax.f32 %v9042, 0.0
        %v9460 = vmax.f32 %v9044, 0.0
        %v9461 = vmax.f32 %v9155, 0.0
        %v9462 = vmax.f32 %v9157, 0.0
        %v9463 = vmax.f32 %v9268, 0.0
        %v9464 = vmax.f32 %v9270, 0.0
        %v9465 = vmax.f32 %v9381, 0.0
        %v9466 = vmax.f32 %v9383, 0.0
        %v9467 = vmax.f32 %v9046, 0.0
        %v9468 = vmax.f32 %v9048, 0.0
        %v9469 = vmax.f32 %v9159, 0.0
        %v9470 = vmax.f32 %v9161, 0.0
        %v9471 = vmax.f32 %v9272, 0.0
        %v9472 = vmax.f32 %v9274, 0.0
        %v9473 = vmax.f32 %v9385, 0.0
        %v9474 = vmax.f32 %v9387, 0.0
        %v9475 = vmax.f32 %v9052, 0.0
        %v9476 = vmax.f32 %v9054, 0.0
        %v9477 = vmax.f32 %v9165, 0.0
        %v9478 = vmax.f32 %v9167, 0.0
        %v9479 = vmax.f32 %v9278, 0.0
        %v9480 = vmax.f32 %v9280, 0.0
        %v9481 = vmax.f32 %v9391, 0.0
        %v9482 = vmax.f32 %v9393, 0.0
        %v9483 = vmax.f32 %v9056, 0.0
        %v9484 = vmax.f32 %v9058, 0.0
        %v9485 = vmax.f32 %v9169, 0.0
        %v9486 = vmax.f32 %v9171, 0.0
        %v9487 = vmax.f32 %v9282, 0.0
        %v9488 = vmax.f32 %v9284, 0.0
        %v9489 = vmax.f32 %v9395, 0.0
        %v9490 = vmax.f32 %v9397, 0.0
        %v9491 = vmax.f32 %v9062, 0.0
        %v9492 = vmax.f32 %v9064, 0.0
        %v9493 = vmax.f32 %v9175, 0.0
        %v9494 = vmax.f32 %v9177, 0.0
        %v9495 = vmax.f32 %v9288, 0.0
        %v9496 = vmax.f32 %v9290, 0.0
        %v9497 = vmax.f32 %v9401, 0.0
        %v9498 = vmax.f32 %v9403, 0.0
        %v9499 = vmax.f32 %v9066, 0.0
        %v9500 = vmax.f32 %v9068, 0.0
        %v9501 = vmax.f32 %v9179, 0.0
        %v9502 = vmax.f32 %v9181, 0.0
        %v9503 = vmax.f32 %v9292, 0.0
        %v9504 = vmax.f32 %v9294, 0.0
        %v9505 = vmax.f32 %v9405, 0.0
        %v9506 = vmax.f32 %v9407, 0.0
        %v9507 = vmax.f32 %v9072, 0.0
        %v9508 = vmax.f32 %v9074, 0.0
        %v9509 = vmax.f32 %v9185, 0.0
        %v9510 = vmax.f32 %v9187, 0.0
        %v9511 = vmax.f32 %v9298, 0.0
        %v9512 = vmax.f32 %v9300, 0.0
        %v9513 = vmax.f32 %v9411, 0.0
        %v9514 = vmax.f32 %v9413, 0.0
        %v9515 = vmax.f32 %v9076, 0.0
        %v9516 = vmax.f32 %v9078, 0.0
        %v9517 = vmax.f32 %v9189, 0.0
        %v9518 = vmax.f32 %v9191, 0.0
        %v9519 = vmax.f32 %v9302, 0.0
        %v9520 = vmax.f32 %v9304, 0.0
        %v9521 = vmax.f32 %v9415, 0.0
        %v9522 = vmax.f32 %v9417, 0.0
        %v9523 = vmax.f32 %v9082, 0.0
        %v9524 = vmax.f32 %v9084, 0.0
        %v9525 = vmax.f32 %v9195, 0.0
        %v9526 = vmax.f32 %v9197, 0.0
        %v9527 = vmax.f32 %v9308, 0.0
        %v9528 = vmax.f32 %v9310, 0.0
        %v9529 = vmax.f32 %v9421, 0.0
        %v9530 = vmax.f32 %v9423, 0.0
        %v9531 = vmax.f32 %v9086, 0.0
        %v9532 = vmax.f32 %v9088, 0.0
        %v9533 = vmax.f32 %v9199, 0.0
        %v9534 = vmax.f32 %v9201, 0.0
        %v9535 = vmax.f32 %v9312, 0.0
        %v9536 = vmax.f32 %v9314, 0.0
        %v9537 = vmax.f32 %v9425, 0.0
        %v9538 = vmax.f32 %v9427, 0.0
        %v9539 = vmax.f32 %v9092, 0.0
        %v9540 = vmax.f32 %v9094, 0.0
        %v9541 = vmax.f32 %v9205, 0.0
        %v9542 = vmax.f32 %v9207, 0.0
        %v9543 = vmax.f32 %v9318, 0.0
        %v9544 = vmax.f32 %v9320, 0.0
        %v9545 = vmax.f32 %v9431, 0.0
        %v9546 = vmax.f32 %v9433, 0.0
        %v9547 = vmax.f32 %v9096, 0.0
        %v9548 = vmax.f32 %v9098, 0.0
        %v9549 = vmax.f32 %v9209, 0.0
        %v9550 = vmax.f32 %v9211, 0.0
        %v9551 = vmax.f32 %v9322, 0.0
        %v9552 = vmax.f32 %v9324, 0.0
        %v9553 = vmax.f32 %v9435, 0.0
        %v9554 = vmax.f32 %v9437, 0.0
        %v9555 = vmax.f32 %v9102, 0.0
        %v9556 = vmax.f32 %v9104, 0.0
        %v9557 = vmax.f32 %v9215, 0.0
        %v9558 = vmax.f32 %v9217, 0.0
        %v9559 = vmax.f32 %v9328, 0.0
        %v9560 = vmax.f32 %v9330, 0.0
        %v9561 = vmax.f32 %v9441, 0.0
        %v9562 = vmax.f32 %v9443, 0.0
        %v9563 = vmax.f32 %v9106, 0.0
        %v9564 = vmax.f32 %v9108, 0.0
        %v9565 = vmax.f32 %v9219, 0.0
        %v9566 = vmax.f32 %v9221, 0.0
        %v9567 = vmax.f32 %v9332, 0.0
        %v9568 = vmax.f32 %v9334, 0.0
        %v9569 = vmax.f32 %v9445, 0.0
        %v9570 = vmax.f32 %v9447, 0.0
        %v9571 = vmax.f32 %v9112, 0.0
        %v9572 = vmax.f32 %v9114, 0.0
        %v9573 = vmax.f32 %v9225, 0.0
        %v9574 = vmax.f32 %v9227, 0.0
        %v9575 = vmax.f32 %v9338, 0.0
        %v9576 = vmax.f32 %v9340, 0.0
        %v9577 = vmax.f32 %v9451, 0.0
        %v9578 = vmax.f32 %v9453, 0.0
        %v9579 = vmax.f32 %v9116, 0.0
        %v9580 = vmax.f32 %v9118, 0.0
        %v9581 = vmax.f32 %v9229, 0.0
        %v9582 = vmax.f32 %v9231, 0.0
        %v9583 = vmax.f32 %v9342, 0.0
        %v9584 = vmax.f32 %v9344, 0.0
        %v9585 = vmax.f32 %v9455, 0.0
        %v9586 = vmax.f32 %v9457, 0.0
        %v9587 = vpack.c.bf16 %v9467, %v9459
        %v9588 = vpack.c.bf16 %v9468, %v9460
        %v9589 = vpack.c.bf16 %v9469, %v9461
        %v9590 = vpack.c.bf16 %v9470, %v9462
        %v9591 = vpack.c.bf16 %v9471, %v9463
        %v9592 = vpack.c.bf16 %v9472, %v9464
        %v9593 = vpack.c.bf16 %v9473, %v9465
        %v9594 = vpack.c.bf16 %v9474, %v9466
        %v9595 = vpack.c.bf16 %v9483, %v9475
        %v9596 = vpack.c.bf16 %v9484, %v9476
        %v9597 = vpack.c.bf16 %v9485, %v9477
        %v9598 = vpack.c.bf16 %v9486, %v9478
        %v9599 = vpack.c.bf16 %v9487, %v9479
        %v9600 = vpack.c.bf16 %v9488, %v9480
        %v9601 = vpack.c.bf16 %v9489, %v9481
        %v9602 = vpack.c.bf16 %v9490, %v9482
        %v9603 = vpack.c.bf16 %v9499, %v9491
        %v9604 = vpack.c.bf16 %v9500, %v9492
        %v9605 = vpack.c.bf16 %v9501, %v9493
        %v9606 = vpack.c.bf16 %v9502, %v9494
        %v9607 = vpack.c.bf16 %v9503, %v9495
        %v9608 = vpack.c.bf16 %v9504, %v9496
        %v9609 = vpack.c.bf16 %v9505, %v9497
        %v9610 = vpack.c.bf16 %v9506, %v9498
        %v9611 = vpack.c.bf16 %v9515, %v9507
        %v9612 = vpack.c.bf16 %v9516, %v9508
        %v9613 = vpack.c.bf16 %v9517, %v9509
        %v9614 = vpack.c.bf16 %v9518, %v9510
        %v9615 = vpack.c.bf16 %v9519, %v9511
        %v9616 = vpack.c.bf16 %v9520, %v9512
        %v9617 = vpack.c.bf16 %v9521, %v9513
        %v9618 = vpack.c.bf16 %v9522, %v9514
        %v9619 = vpack.c.bf16 %v9531, %v9523
        %v9620 = vpack.c.bf16 %v9532, %v9524
        %v9621 = vpack.c.bf16 %v9533, %v9525
        %v9622 = vpack.c.bf16 %v9534, %v9526
        %v9623 = vpack.c.bf16 %v9535, %v9527
        %v9624 = vpack.c.bf16 %v9536, %v9528
        %v9625 = vpack.c.bf16 %v9537, %v9529
        %v9626 = vpack.c.bf16 %v9538, %v9530
        %v9627 = vpack.c.bf16 %v9547, %v9539
        %v9628 = vpack.c.bf16 %v9548, %v9540
        %v9629 = vpack.c.bf16 %v9549, %v9541
        %v9630 = vpack.c.bf16 %v9550, %v9542
        %v9631 = vpack.c.bf16 %v9551, %v9543
        %v9632 = vpack.c.bf16 %v9552, %v9544
        %v9633 = vpack.c.bf16 %v9553, %v9545
        %v9634 = vpack.c.bf16 %v9554, %v9546
        %v9635 = vpack.c.bf16 %v9563, %v9555
        %v9636 = vpack.c.bf16 %v9564, %v9556
        %v9637 = vpack.c.bf16 %v9565, %v9557
        %v9638 = vpack.c.bf16 %v9566, %v9558
        %v9639 = vpack.c.bf16 %v9567, %v9559
        %v9640 = vpack.c.bf16 %v9568, %v9560
        %v9641 = vpack.c.bf16 %v9569, %v9561
        %v9642 = vpack.c.bf16 %v9570, %v9562
        %v9643 = vpack.c.bf16 %v9579, %v9571
        %v9644 = vpack.c.bf16 %v9580, %v9572
        %v9645 = vpack.c.bf16 %v9581, %v9573
        %v9646 = vpack.c.bf16 %v9582, %v9574
        %v9647 = vpack.c.bf16 %v9583, %v9575
        %v9648 = vpack.c.bf16 %v9584, %v9576
        %v9649 = vpack.c.bf16 %v9585, %v9577
        %v9650 = vpack.c.bf16 %v9586, %v9578
        %s9651 = scalar_lea.vmem %s5, 256
        %v9652 = vld [vmem:[%s9651] sm:$0xf]
        %v9653 = vld [vmem:[%s9651 + $0x4] sm:$0xf]
        %v9654 = vld [vmem:[%s9651 + $0x8] sm:$0xf]
        %v9655 = vld [vmem:[%s9651 + $0xc] sm:$0xf]
        %v9656 = vld [vmem:[%s9651 + $0x10] sm:$0xf]
        %v9657 = vld [vmem:[%s9651 + $0x14] sm:$0xf]
        %v9658 = vld [vmem:[%s9651 + $0x18] sm:$0xf]
        %v9659 = vld [vmem:[%s9651 + $0x1c] sm:$0xf]
        %v9660 = vld [vmem:[%s9651 + $0x20] sm:$0xf]
        %v9661 = vld [vmem:[%s9651 + $0x24] sm:$0xf]
        %v9662 = vld [vmem:[%s9651 + $0x28] sm:$0xf]
        %v9663 = vld [vmem:[%s9651 + $0x2c] sm:$0xf]
        %v9664 = vld [vmem:[%s9651 + $0x30] sm:$0xf]
        %v9665 = vld [vmem:[%s9651 + $0x34] sm:$0xf]
        %v9666 = vld [vmem:[%s9651 + $0x38] sm:$0xf]
        %v9667 = vld [vmem:[%s9651 + $0x3c] sm:$0xf]
        %s9668 = scalar_lea.vmem %s6, 512
        %v9669 = vld [vmem:[%s9668] sm:$0xff]
        %v9670 = vld [vmem:[%s9668 + $0x8] sm:$0xff]
        %v9671 = vld [vmem:[%s9668 + $0x10] sm:$0xff]
        %v9672 = vld [vmem:[%s9668 + $0x18] sm:$0xff]
        %v9673 = vld [vmem:[%s9668 + $0x20] sm:$0xff]
        %v9674 = vld [vmem:[%s9668 + $0x28] sm:$0xff]
        %v9675 = vld [vmem:[%s9668 + $0x30] sm:$0xff]
        %v9676 = vld [vmem:[%s9668 + $0x38] sm:$0xff]
        %v9677 = vld [vmem:[%s9668 + $0x40] sm:$0xff]
        %v9678 = vld [vmem:[%s9668 + $0x48] sm:$0xff]
        %v9679 = vld [vmem:[%s9668 + $0x50] sm:$0xff]
        %v9680 = vld [vmem:[%s9668 + $0x58] sm:$0xff]
        %v9681 = vld [vmem:[%s9668 + $0x60] sm:$0xff]
        %v9682 = vld [vmem:[%s9668 + $0x68] sm:$0xff]
        %v9683 = vld [vmem:[%s9668 + $0x70] sm:$0xff]
        %v9684 = vld [vmem:[%s9668 + $0x78] sm:$0xff]
        %9686 = vset.pattern.permute.xlu0 0
        %9687 = vperm.xlu0 %9686, %v9669
        %v9688 = vpop.permute.xlu0 %9687
        %9691 = vset.pattern.permute.xlu0 0
        %9692 = vperm.xlu0 %9691, %v9670
        %v9693 = vpop.permute.xlu0 %9692
        %9696 = vset.pattern.permute.xlu0 0
        %9697 = vperm.xlu0 %9696, %v9671
        %v9698 = vpop.permute.xlu0 %9697
        %9701 = vset.pattern.permute.xlu0 0
        %9702 = vperm.xlu0 %9701, %v9672
        %v9703 = vpop.permute.xlu0 %9702
        %9706 = vset.pattern.permute.xlu0 0
        %9707 = vperm.xlu0 %9706, %v9673
        %v9708 = vpop.permute.xlu0 %9707
        %9711 = vset.pattern.permute.xlu0 0
        %9712 = vperm.xlu0 %9711, %v9674
        %v9713 = vpop.permute.xlu0 %9712
        %9716 = vset.pattern.permute.xlu0 0
        %9717 = vperm.xlu0 %9716, %v9675
        %v9718 = vpop.permute.xlu0 %9717
        %9721 = vset.pattern.permute.xlu0 0
        %9722 = vperm.xlu0 %9721, %v9676
        %v9723 = vpop.permute.xlu0 %9722
        %9726 = vset.pattern.permute.xlu0 0
        %9727 = vperm.xlu0 %9726, %v9677
        %v9728 = vpop.permute.xlu0 %9727
        %9731 = vset.pattern.permute.xlu0 0
        %9732 = vperm.xlu0 %9731, %v9678
        %v9733 = vpop.permute.xlu0 %9732
        %9736 = vset.pattern.permute.xlu0 0
        %9737 = vperm.xlu0 %9736, %v9679
        %v9738 = vpop.permute.xlu0 %9737
        %9741 = vset.pattern.permute.xlu0 0
        %9742 = vperm.xlu0 %9741, %v9680
        %v9743 = vpop.permute.xlu0 %9742
        %9746 = vset.pattern.permute.xlu0 0
        %9747 = vperm.xlu0 %9746, %v9681
        %v9748 = vpop.permute.xlu0 %9747
        %9751 = vset.pattern.permute.xlu0 0
        %9752 = vperm.xlu0 %9751, %v9682
        %v9753 = vpop.permute.xlu0 %9752
        %9756 = vset.pattern.permute.xlu0 0
        %9757 = vperm.xlu0 %9756, %v9683
        %v9758 = vpop.permute.xlu0 %9757
        %9761 = vset.pattern.permute.xlu0 0
        %9762 = vperm.xlu0 %9761, %v9684
        %v9763 = vpop.permute.xlu0 %9762
        %v9781 = vunpack.c.l.b16 %v9652
        %v9782 = vunpack.c.l.b16 %v9653
        %v9783 = vunpack.c.l.b16 %v9654
        %v9784 = vunpack.c.l.b16 %v9655
        %v9785 = vunpack.c.l.b16 %v9656
        %v9786 = vunpack.c.l.b16 %v9657
        %v9787 = vunpack.c.l.b16 %v9658
        %v9788 = vunpack.c.l.b16 %v9659
        %v9789 = vunpack.c.l.b16 %v9660
        %v9790 = vunpack.c.l.b16 %v9661
        %v9791 = vunpack.c.l.b16 %v9662
        %v9792 = vunpack.c.l.b16 %v9663
        %v9793 = vunpack.c.l.b16 %v9664
        %v9794 = vunpack.c.l.b16 %v9665
        %v9795 = vunpack.c.l.b16 %v9666
        %v9796 = vunpack.c.l.b16 %v9667
        %v9797 = vpack.c.b16 %v9782, %v9781
        %v9798 = vpack.c.b16 %v9784, %v9783
        %v9799 = vpack.c.b16 %v9786, %v9785
        %v9800 = vpack.c.b16 %v9788, %v9787
        %v9801 = vpack.c.b16 %v9790, %v9789
        %v9802 = vpack.c.b16 %v9792, %v9791
        %v9803 = vpack.c.b16 %v9794, %v9793
        %v9804 = vpack.c.b16 %v9796, %v9795
        %9813 = vmatprep.subr.bf16.mxu0 %v9588
        %9814 = vmatpush1.bf16.msra.mxu0 %v9587
        %9815 = vmatprep.subr.bf16.mxu0 %v9596
        %9816 = vmatpush1.bf16.msra.mxu0 %v9595
        %9817 = vmatprep.subr.bf16.mxu0 %v9604
        %9818 = vmatpush1.bf16.msra.mxu0 %v9603
        %9819 = vmatprep.subr.bf16.mxu0 %v9612
        %9820 = vmatpush1.bf16.msra.mxu0 %v9611
        %9821 = vmatprep.subr.bf16.mxu0 %v9620
        %9822 = vmatpush1.bf16.msra.mxu0 %v9619
        %9823 = vmatprep.subr.bf16.mxu0 %v9628
        %9824 = vmatpush1.bf16.msra.mxu0 %v9627
        %9825 = vmatprep.subr.bf16.mxu0 %v9636
        %9826 = vmatpush1.bf16.msra.mxu0 %v9635
        %9827 = vmatprep.subr.bf16.mxu0 %v9644
        %9828 = vmatpush1.bf16.msra.mxu0 %v9643
        %9829 = vmatprep.subr.bf16.mxu0 0
        %9830 = vmatpush1.bf16.msra.mxu0 0
        %9831 = vmatprep.subr.bf16.mxu0 0
        %9832 = vmatpush1.bf16.msra.mxu0 0
        %9833 = vmatprep.subr.bf16.mxu0 0
        %9834 = vmatpush1.bf16.msra.mxu0 0
        %9835 = vmatprep.subr.bf16.mxu0 0
        %9836 = vmatpush1.bf16.msra.mxu0 0
        %9837 = vmatprep.subr.bf16.mxu0 0
        %9838 = vmatpush1.bf16.msra.mxu0 0
        %9839 = vmatprep.subr.bf16.mxu0 0
        %9840 = vmatpush1.bf16.msra.mxu0 0
        %9841 = vmatprep.subr.bf16.mxu0 0
        %9842 = vmatpush1.bf16.msra.mxu0 0
        %9843 = vmatprep.subr.bf16.mxu0 0
        %9844 = vmatpush1.bf16.msra.mxu0 0
        %9845 = vmatprep.mubr.bf16.mxu0 0
        %9846 = vmatmul.mubr.bf16.gmra.mrb[0].mxu0 %v9797
        %v9847 = vpop.f32.mrb[0].mxu0
        %v9848 = vadd.f32 %v9688, %v9847
        %v9849 = vpop.f32.mrb[0].mxu0
        %v9850 = vadd.f32 %v9688, %v9849
        %v9851 = vpop.f32.mrb[0].mxu0
        %v9852 = vadd.f32 %v9693, %v9851
        %v9853 = vpop.f32.mrb[0].mxu0
        %v9854 = vadd.f32 %v9693, %v9853
        %9855 = vmatprep.mubr.bf16.mxu0 0
        %9856 = vmatmul.mubr.bf16.gmra.mrb[0].mxu0 %v9798
        %v9857 = vpop.f32.mrb[0].mxu0
        %v9858 = vadd.f32 %v9698, %v9857
        %v9859 = vpop.f32.mrb[0].mxu0
        %v9860 = vadd.f32 %v9698, %v9859
        %v9861 = vpop.f32.mrb[0].mxu0
        %v9862 = vadd.f32 %v9703, %v9861
        %v9863 = vpop.f32.mrb[0].mxu0
        %v9864 = vadd.f32 %v9703, %v9863
        %9865 = vmatprep.mubr.bf16.mxu0 0
        %9866 = vmatmul.mubr.bf16.gmra.mrb[0].mxu0 %v9799
        %v9867 = vpop.f32.mrb[0].mxu0
        %v9868 = vadd.f32 %v9708, %v9867
        %v9869 = vpop.f32.mrb[0].mxu0
        %v9870 = vadd.f32 %v9708, %v9869
        %v9871 = vpop.f32.mrb[0].mxu0
        %v9872 = vadd.f32 %v9713, %v9871
        %v9873 = vpop.f32.mrb[0].mxu0
        %v9874 = vadd.f32 %v9713, %v9873
        %9875 = vmatprep.mubr.bf16.mxu0 0
        %9876 = vmatmul.mubr.bf16.gmra.mrb[0].mxu0 %v9800
        %v9877 = vpop.f32.mrb[0].mxu0
        %v9878 = vadd.f32 %v9718, %v9877
        %v9879 = vpop.f32.mrb[0].mxu0
        %v9880 = vadd.f32 %v9718, %v9879
        %v9881 = vpop.f32.mrb[0].mxu0
        %v9882 = vadd.f32 %v9723, %v9881
        %v9883 = vpop.f32.mrb[0].mxu0
        %v9884 = vadd.f32 %v9723, %v9883
        %9885 = vmatprep.mubr.bf16.mxu0 0
        %9886 = vmatmul.mubr.bf16.gmra.mrb[0].mxu0 %v9801
        %v9887 = vpop.f32.mrb[0].mxu0
        %v9888 = vadd.f32 %v9728, %v9887
        %v9889 = vpop.f32.mrb[0].mxu0
        %v9890 = vadd.f32 %v9728, %v9889
        %v9891 = vpop.f32.mrb[0].mxu0
        %v9892 = vadd.f32 %v9733, %v9891
        %v9893 = vpop.f32.mrb[0].mxu0
        %v9894 = vadd.f32 %v9733, %v9893
        %9895 = vmatprep.mubr.bf16.mxu0 0
        %9896 = vmatmul.mubr.bf16.gmra.mrb[0].mxu0 %v9802
        %v9897 = vpop.f32.mrb[0].mxu0
        %v9898 = vadd.f32 %v9738, %v9897
        %v9899 = vpop.f32.mrb[0].mxu0
        %v9900 = vadd.f32 %v9738, %v9899
        %v9901 = vpop.f32.mrb[0].mxu0
        %v9902 = vadd.f32 %v9743, %v9901
        %v9903 = vpop.f32.mrb[0].mxu0
        %v9904 = vadd.f32 %v9743, %v9903
        %9905 = vmatprep.mubr.bf16.mxu0 0
        %9906 = vmatmul.mubr.bf16.gmra.mrb[0].mxu0 %v9803
        %v9907 = vpop.f32.mrb[0].mxu0
        %v9908 = vadd.f32 %v9748, %v9907
        %v9909 = vpop.f32.mrb[0].mxu0
        %v9910 = vadd.f32 %v9748, %v9909
        %v9911 = vpop.f32.mrb[0].mxu0
        %v9912 = vadd.f32 %v9753, %v9911
        %v9913 = vpop.f32.mrb[0].mxu0
        %v9914 = vadd.f32 %v9753, %v9913
        %9915 = vmatprep.mubr.bf16.mxu0 0
        %9916 = vmatmul.mubr.bf16.gmra.mrb[0].mxu0 %v9804
        %v9917 = vpop.f32.mrb[0].mxu0
        %v9918 = vadd.f32 %v9758, %v9917
        %v9919 = vpop.f32.mrb[0].mxu0
        %v9920 = vadd.f32 %v9758, %v9919
        %v9921 = vpop.f32.mrb[0].mxu0
        %v9922 = vadd.f32 %v9763, %v9921
        %v9923 = vpop.f32.mrb[0].mxu0
        %v9924 = vadd.f32 %v9763, %v9923
        %9925 = vdwg.mxu0
        %9926 = vmatprep.subr.bf16.mxu0 %v9590
        %9927 = vmatpush1.bf16.msra.mxu0 %v9589
        %9928 = vmatprep.subr.bf16.mxu0 %v9598
        %9929 = vmatpush1.bf16.msra.mxu0 %v9597
        %9930 = vmatprep.subr.bf16.mxu0 %v9606
        %9931 = vmatpush1.bf16.msra.mxu0 %v9605
        %9932 = vmatprep.subr.bf16.mxu0 %v9614
        %9933 = vmatpush1.bf16.msra.mxu0 %v9613
        %9934 = vmatprep.subr.bf16.mxu0 %v9622
        %9935 = vmatpush1.bf16.msra.mxu0 %v9621
        %9936 = vmatprep.subr.bf16.mxu0 %v9630
        %9937 = vmatpush1.bf16.msra.mxu0 %v9629
        %9938 = vmatprep.subr.bf16.mxu0 %v9638
        %9939 = vmatpush1.bf16.msra.mxu0 %v9637
        %9940 = vmatprep.subr.bf16.mxu0 %v9646
        %9941 = vmatpush1.bf16.msra.mxu0 %v9645
        %9942 = vmatprep.subr.bf16.mxu0 0
        %9943 = vmatpush1.bf16.msra.mxu0 0
        %9944 = vmatprep.subr.bf16.mxu0 0
        %9945 = vmatpush1.bf16.msra.mxu0 0
        %9946 = vmatprep.subr.bf16.mxu0 0
        %9947 = vmatpush1.bf16.msra.mxu0 0
        %9948 = vmatprep.subr.bf16.mxu0 0
        %9949 = vmatpush1.bf16.msra.mxu0 0
        %9950 = vmatprep.subr.bf16.mxu0 0
        %9951 = vmatpush1.bf16.msra.mxu0 0
        %9952 = vmatprep.subr.bf16.mxu0 0
        %9953 = vmatpush1.bf16.msra.mxu0 0
        %9954 = vmatprep.subr.bf16.mxu0 0
        %9955 = vmatpush1.bf16.msra.mxu0 0
        %9956 = vmatprep.subr.bf16.mxu0 0
        %9957 = vmatpush1.bf16.msra.mxu0 0
        %9958 = vmatprep.mubr.bf16.mxu0 0
        %9959 = vmatmul.mubr.bf16.gmra.mrb[0].mxu0 %v9797
        %v9960 = vpop.f32.mrb[0].mxu0
        %v9961 = vadd.f32 %v9688, %v9960
        %v9962 = vpop.f32.mrb[0].mxu0
        %v9963 = vadd.f32 %v9688, %v9962
        %v9964 = vpop.f32.mrb[0].mxu0
        %v9965 = vadd.f32 %v9693, %v9964
        %v9966 = vpop.f32.mrb[0].mxu0
        %v9967 = vadd.f32 %v9693, %v9966
        %9968 = vmatprep.mubr.bf16.mxu0 0
        %9969 = vmatmul.mubr.bf16.gmra.mrb[0].mxu0 %v9798
        %v9970 = vpop.f32.mrb[0].mxu0
        %v9971 = vadd.f32 %v9698, %v9970
        %v9972 = vpop.f32.mrb[0].mxu0
        %v9973 = vadd.f32 %v9698, %v9972
        %v9974 = vpop.f32.mrb[0].mxu0
        %v9975 = vadd.f32 %v9703, %v9974
        %v9976 = vpop.f32.mrb[0].mxu0
        %v9977 = vadd.f32 %v9703, %v9976
        %9978 = vmatprep.mubr.bf16.mxu0 0
        %9979 = vmatmul.mubr.bf16.gmra.mrb[0].mxu0 %v9799
        %v9980 = vpop.f32.mrb[0].mxu0
        %v9981 = vadd.f32 %v9708, %v9980
        %v9982 = vpop.f32.mrb[0].mxu0
        %v9983 = vadd.f32 %v9708, %v9982
        %v9984 = vpop.f32.mrb[0].mxu0
        %v9985 = vadd.f32 %v9713, %v9984
        %v9986 = vpop.f32.mrb[0].mxu0
        %v9987 = vadd.f32 %v9713, %v9986
        %9988 = vmatprep.mubr.bf16.mxu0 0
        %9989 = vmatmul.mubr.bf16.gmra.mrb[0].mxu0 %v9800
        %v9990 = vpop.f32.mrb[0].mxu0
        %v9991 = vadd.f32 %v9718, %v9990
        %v9992 = vpop.f32.mrb[0].mxu0
        %v9993 = vadd.f32 %v9718, %v9992
        %v9994 = vpop.f32.mrb[0].mxu0
        %v9995 = vadd.f32 %v9723, %v9994
        %v9996 = vpop.f32.mrb[0].mxu0
        %v9997 = vadd.f32 %v9723, %v9996
        %9998 = vmatprep.mubr.bf16.mxu0 0
        %9999 = vmatmul.mubr.bf16.gmra.mrb[0].mxu0 %v9801
        %v10000 = vpop.f32.mrb[0].mxu0
        %v10001 = vadd.f32 %v9728, %v10000
        %v10002 = vpop.f32.mrb[0].mxu0
        %v10003 = vadd.f32 %v9728, %v10002
        %v10004 = vpop.f32.mrb[0].mxu0
        %v10005 = vadd.f32 %v9733, %v10004
        %v10006 = vpop.f32.mrb[0].mxu0
        %v10007 = vadd.f32 %v9733, %v10006
        %10008 = vmatprep.mubr.bf16.mxu0 0
        %10009 = vmatmul.mubr.bf16.gmra.mrb[0].mxu0 %v9802
        %v10010 = vpop.f32.mrb[0].mxu0
        %v10011 = vadd.f32 %v9738, %v10010
        %v10012 = vpop.f32.mrb[0].mxu0
        %v10013 = vadd.f32 %v9738, %v10012
        %v10014 = vpop.f32.mrb[0].mxu0
        %v10015 = vadd.f32 %v9743, %v10014
        %v10016 = vpop.f32.mrb[0].mxu0
        %v10017 = vadd.f32 %v9743, %v10016
        %10018 = vmatprep.mubr.bf16.mxu0 0
        %10019 = vmatmul.mubr.bf16.gmra.mrb[0].mxu0 %v9803
        %v10020 = vpop.f32.mrb[0].mxu0
        %v10021 = vadd.f32 %v9748, %v10020
        %v10022 = vpop.f32.mrb[0].mxu0
        %v10023 = vadd.f32 %v9748, %v10022
        %v10024 = vpop.f32.mrb[0].mxu0
        %v10025 = vadd.f32 %v9753, %v10024
        %v10026 = vpop.f32.mrb[0].mxu0
        %v10027 = vadd.f32 %v9753, %v10026
        %10028 = vmatprep.mubr.bf16.mxu0 0
        %10029 = vmatmul.mubr.bf16.gmra.mrb[0].mxu0 %v9804
        %v10030 = vpop.f32.mrb[0].mxu0
        %v10031 = vadd.f32 %v9758, %v10030
        %v10032 = vpop.f32.mrb[0].mxu0
        %v10033 = vadd.f32 %v9758, %v10032
        %v10034 = vpop.f32.mrb[0].mxu0
        %v10035 = vadd.f32 %v9763, %v10034
        %v10036 = vpop.f32.mrb[0].mxu0
        %v10037 = vadd.f32 %v9763, %v10036
        %10038 = vdwg.mxu0
        %10039 = vmatprep.subr.bf16.mxu0 %v9592
        %10040 = vmatpush1.bf16.msra.mxu0 %v9591
        %10041 = vmatprep.subr.bf16.mxu0 %v9600
        %10042 = vmatpush1.bf16.msra.mxu0 %v9599
        %10043 = vmatprep.subr.bf16.mxu0 %v9608
        %10044 = vmatpush1.bf16.msra.mxu0 %v9607
        %10045 = vmatprep.subr.bf16.mxu0 %v9616
        %10046 = vmatpush1.bf16.msra.mxu0 %v9615
        %10047 = vmatprep.subr.bf16.mxu0 %v9624
        %10048 = vmatpush1.bf16.msra.mxu0 %v9623
        %10049 = vmatprep.subr.bf16.mxu0 %v9632
        %10050 = vmatpush1.bf16.msra.mxu0 %v9631
        %10051 = vmatprep.subr.bf16.mxu0 %v9640
        %10052 = vmatpush1.bf16.msra.mxu0 %v9639
        %10053 = vmatprep.subr.bf16.mxu0 %v9648
        %10054 = vmatpush1.bf16.msra.mxu0 %v9647
        %10055 = vmatprep.subr.bf16.mxu0 0
        %10056 = vmatpush1.bf16.msra.mxu0 0
        %10057 = vmatprep.subr.bf16.mxu0 0
        %10058 = vmatpush1.bf16.msra.mxu0 0
        %10059 = vmatprep.subr.bf16.mxu0 0
        %10060 = vmatpush1.bf16.msra.mxu0 0
        %10061 = vmatprep.subr.bf16.mxu0 0
        %10062 = vmatpush1.bf16.msra.mxu0 0
        %10063 = vmatprep.subr.bf16.mxu0 0
        %10064 = vmatpush1.bf16.msra.mxu0 0
        %10065 = vmatprep.subr.bf16.mxu0 0
        %10066 = vmatpush1.bf16.msra.mxu0 0
        %10067 = vmatprep.subr.bf16.mxu0 0
        %10068 = vmatpush1.bf16.msra.mxu0 0
        %10069 = vmatprep.subr.bf16.mxu0 0
        %10070 = vmatpush1.bf16.msra.mxu0 0
        %10071 = vmatprep.mubr.bf16.mxu0 0
        %10072 = vmatmul.mubr.bf16.gmra.mrb[0].mxu0 %v9797
        %v10073 = vpop.f32.mrb[0].mxu0
        %v10074 = vadd.f32 %v9688, %v10073
        %v10075 = vpop.f32.mrb[0].mxu0
        %v10076 = vadd.f32 %v9688, %v10075
        %v10077 = vpop.f32.mrb[0].mxu0
        %v10078 = vadd.f32 %v9693, %v10077
        %v10079 = vpop.f32.mrb[0].mxu0
        %v10080 = vadd.f32 %v9693, %v10079
        %10081 = vmatprep.mubr.bf16.mxu0 0
        %10082 = vmatmul.mubr.bf16.gmra.mrb[0].mxu0 %v9798
        %v10083 = vpop.f32.mrb[0].mxu0
        %v10084 = vadd.f32 %v9698, %v10083
        %v10085 = vpop.f32.mrb[0].mxu0
        %v10086 = vadd.f32 %v9698, %v10085
        %v10087 = vpop.f32.mrb[0].mxu0
        %v10088 = vadd.f32 %v9703, %v10087
        %v10089 = vpop.f32.mrb[0].mxu0
        %v10090 = vadd.f32 %v9703, %v10089
        %10091 = vmatprep.mubr.bf16.mxu0 0
        %10092 = vmatmul.mubr.bf16.gmra.mrb[0].mxu0 %v9799
        %v10093 = vpop.f32.mrb[0].mxu0
        %v10094 = vadd.f32 %v9708, %v10093
        %v10095 = vpop.f32.mrb[0].mxu0
        %v10096 = vadd.f32 %v9708, %v10095
        %v10097 = vpop.f32.mrb[0].mxu0
        %v10098 = vadd.f32 %v9713, %v10097
        %v10099 = vpop.f32.mrb[0].mxu0
        %v10100 = vadd.f32 %v9713, %v10099
        %10101 = vmatprep.mubr.bf16.mxu0 0
        %10102 = vmatmul.mubr.bf16.gmra.mrb[0].mxu0 %v9800
        %v10103 = vpop.f32.mrb[0].mxu0
        %v10104 = vadd.f32 %v9718, %v10103
        %v10105 = vpop.f32.mrb[0].mxu0
        %v10106 = vadd.f32 %v9718, %v10105
        %v10107 = vpop.f32.mrb[0].mxu0
        %v10108 = vadd.f32 %v9723, %v10107
        %v10109 = vpop.f32.mrb[0].mxu0
        %v10110 = vadd.f32 %v9723, %v10109
        %10111 = vmatprep.mubr.bf16.mxu0 0
        %10112 = vmatmul.mubr.bf16.gmra.mrb[0].mxu0 %v9801
        %v10113 = vpop.f32.mrb[0].mxu0
        %v10114 = vadd.f32 %v9728, %v10113
        %v10115 = vpop.f32.mrb[0].mxu0
        %v10116 = vadd.f32 %v9728, %v10115
        %v10117 = vpop.f32.mrb[0].mxu0
        %v10118 = vadd.f32 %v9733, %v10117
        %v10119 = vpop.f32.mrb[0].mxu0
        %v10120 = vadd.f32 %v9733, %v10119
        %10121 = vmatprep.mubr.bf16.mxu0 0
        %10122 = vmatmul.mubr.bf16.gmra.mrb[0].mxu0 %v9802
        %v10123 = vpop.f32.mrb[0].mxu0
        %v10124 = vadd.f32 %v9738, %v10123
        %v10125 = vpop.f32.mrb[0].mxu0
        %v10126 = vadd.f32 %v9738, %v10125
        %v10127 = vpop.f32.mrb[0].mxu0
        %v10128 = vadd.f32 %v9743, %v10127
        %v10129 = vpop.f32.mrb[0].mxu0
        %v10130 = vadd.f32 %v9743, %v10129
        %10131 = vmatprep.mubr.bf16.mxu0 0
        %10132 = vmatmul.mubr.bf16.gmra.mrb[0].mxu0 %v9803
        %v10133 = vpop.f32.mrb[0].mxu0
        %v10134 = vadd.f32 %v9748, %v10133
        %v10135 = vpop.f32.mrb[0].mxu0
        %v10136 = vadd.f32 %v9748, %v10135
        %v10137 = vpop.f32.mrb[0].mxu0
        %v10138 = vadd.f32 %v9753, %v10137
        %v10139 = vpop.f32.mrb[0].mxu0
        %v10140 = vadd.f32 %v9753, %v10139
        %10141 = vmatprep.mubr.bf16.mxu0 0
        %10142 = vmatmul.mubr.bf16.gmra.mrb[0].mxu0 %v9804
        %v10143 = vpop.f32.mrb[0].mxu0
        %v10144 = vadd.f32 %v9758, %v10143
        %v10145 = vpop.f32.mrb[0].mxu0
        %v10146 = vadd.f32 %v9758, %v10145
        %v10147 = vpop.f32.mrb[0].mxu0
        %v10148 = vadd.f32 %v9763, %v10147
        %v10149 = vpop.f32.mrb[0].mxu0
        %v10150 = vadd.f32 %v9763, %v10149
        %10151 = vdwg.mxu0
        %10152 = vmatprep.subr.bf16.mxu0 %v9594
        %10153 = vmatpush1.bf16.msra.mxu0 %v9593
        %10154 = vmatprep.subr.bf16.mxu0 %v9602
        %10155 = vmatpush1.bf16.msra.mxu0 %v9601
        %10156 = vmatprep.subr.bf16.mxu0 %v9610
        %10157 = vmatpush1.bf16.msra.mxu0 %v9609
        %10158 = vmatprep.subr.bf16.mxu0 %v9618
        %10159 = vmatpush1.bf16.msra.mxu0 %v9617
        %10160 = vmatprep.subr.bf16.mxu0 %v9626
        %10161 = vmatpush1.bf16.msra.mxu0 %v9625
        %10162 = vmatprep.subr.bf16.mxu0 %v9634
        %10163 = vmatpush1.bf16.msra.mxu0 %v9633
        %10164 = vmatprep.subr.bf16.mxu0 %v9642
        %10165 = vmatpush1.bf16.msra.mxu0 %v9641
        %10166 = vmatprep.subr.bf16.mxu0 %v9650
        %10167 = vmatpush1.bf16.msra.mxu0 %v9649
        %10168 = vmatprep.subr.bf16.mxu0 0
        %10169 = vmatpush1.bf16.msra.mxu0 0
        %10170 = vmatprep.subr.bf16.mxu0 0
        %10171 = vmatpush1.bf16.msra.mxu0 0
        %10172 = vmatprep.subr.bf16.mxu0 0
        %10173 = vmatpush1.bf16.msra.mxu0 0
        %10174 = vmatprep.subr.bf16.mxu0 0
        %10175 = vmatpush1.bf16.msra.mxu0 0
        %10176 = vmatprep.subr.bf16.mxu0 0
        %10177 = vmatpush1.bf16.msra.mxu0 0
        %10178 = vmatprep.subr.bf16.mxu0 0
        %10179 = vmatpush1.bf16.msra.mxu0 0
        %10180 = vmatprep.subr.bf16.mxu0 0
        %10181 = vmatpush1.bf16.msra.mxu0 0
        %10182 = vmatprep.subr.bf16.mxu0 0
        %10183 = vmatpush1.bf16.msra.mxu0 0
        %10184 = vmatprep.mubr.bf16.mxu0 0
        %10185 = vmatmul.mubr.bf16.gmra.mrb[0].mxu0 %v9797
        %v10186 = vpop.f32.mrb[0].mxu0
        %v10187 = vadd.f32 %v9688, %v10186
        %v10188 = vpop.f32.mrb[0].mxu0
        %v10189 = vadd.f32 %v9688, %v10188
        %v10190 = vpop.f32.mrb[0].mxu0
        %v10191 = vadd.f32 %v9693, %v10190
        %v10192 = vpop.f32.mrb[0].mxu0
        %v10193 = vadd.f32 %v9693, %v10192
        %10194 = vmatprep.mubr.bf16.mxu0 0
        %10195 = vmatmul.mubr.bf16.gmra.mrb[0].mxu0 %v9798
        %v10196 = vpop.f32.mrb[0].mxu0
        %v10197 = vadd.f32 %v9698, %v10196
        %v10198 = vpop.f32.mrb[0].mxu0
        %v10199 = vadd.f32 %v9698, %v10198
        %v10200 = vpop.f32.mrb[0].mxu0
        %v10201 = vadd.f32 %v9703, %v10200
        %v10202 = vpop.f32.mrb[0].mxu0
        %v10203 = vadd.f32 %v9703, %v10202
        %10204 = vmatprep.mubr.bf16.mxu0 0
        %10205 = vmatmul.mubr.bf16.gmra.mrb[0].mxu0 %v9799
        %v10206 = vpop.f32.mrb[0].mxu0
        %v10207 = vadd.f32 %v9708, %v10206
        %v10208 = vpop.f32.mrb[0].mxu0
        %v10209 = vadd.f32 %v9708, %v10208
        %v10210 = vpop.f32.mrb[0].mxu0
        %v10211 = vadd.f32 %v9713, %v10210
        %v10212 = vpop.f32.mrb[0].mxu0
        %v10213 = vadd.f32 %v9713, %v10212
        %10214 = vmatprep.mubr.bf16.mxu0 0
        %10215 = vmatmul.mubr.bf16.gmra.mrb[0].mxu0 %v9800
        %v10216 = vpop.f32.mrb[0].mxu0
        %v10217 = vadd.f32 %v9718, %v10216
        %v10218 = vpop.f32.mrb[0].mxu0
        %v10219 = vadd.f32 %v9718, %v10218
        %v10220 = vpop.f32.mrb[0].mxu0
        %v10221 = vadd.f32 %v9723, %v10220
        %v10222 = vpop.f32.mrb[0].mxu0
        %v10223 = vadd.f32 %v9723, %v10222
        %10224 = vmatprep.mubr.bf16.mxu0 0
        %10225 = vmatmul.mubr.bf16.gmra.mrb[0].mxu0 %v9801
        %v10226 = vpop.f32.mrb[0].mxu0
        %v10227 = vadd.f32 %v9728, %v10226
        %v10228 = vpop.f32.mrb[0].mxu0
        %v10229 = vadd.f32 %v9728, %v10228
        %v10230 = vpop.f32.mrb[0].mxu0
        %v10231 = vadd.f32 %v9733, %v10230
        %v10232 = vpop.f32.mrb[0].mxu0
        %v10233 = vadd.f32 %v9733, %v10232
        %10234 = vmatprep.mubr.bf16.mxu0 0
        %10235 = vmatmul.mubr.bf16.gmra.mrb[0].mxu0 %v9802
        %v10236 = vpop.f32.mrb[0].mxu0
        %v10237 = vadd.f32 %v9738, %v10236
        %v10238 = vpop.f32.mrb[0].mxu0
        %v10239 = vadd.f32 %v9738, %v10238
        %v10240 = vpop.f32.mrb[0].mxu0
        %v10241 = vadd.f32 %v9743, %v10240
        %v10242 = vpop.f32.mrb[0].mxu0
        %v10243 = vadd.f32 %v9743, %v10242
        %10244 = vmatprep.mubr.bf16.mxu0 0
        %10245 = vmatmul.mubr.bf16.gmra.mrb[0].mxu0 %v9803
        %v10246 = vpop.f32.mrb[0].mxu0
        %v10247 = vadd.f32 %v9748, %v10246
        %v10248 = vpop.f32.mrb[0].mxu0
        %v10249 = vadd.f32 %v9748, %v10248
        %v10250 = vpop.f32.mrb[0].mxu0
        %v10251 = vadd.f32 %v9753, %v10250
        %v10252 = vpop.f32.mrb[0].mxu0
        %v10253 = vadd.f32 %v9753, %v10252
        %10254 = vmatprep.mubr.bf16.mxu0 0
        %10255 = vmatmul.mubr.bf16.gmra.mrb[0].mxu0 %v9804
        %v10256 = vpop.f32.mrb[0].mxu0
        %v10257 = vadd.f32 %v9758, %v10256
        %v10258 = vpop.f32.mrb[0].mxu0
        %v10259 = vadd.f32 %v9758, %v10258
        %v10260 = vpop.f32.mrb[0].mxu0
        %v10261 = vadd.f32 %v9763, %v10260
        %v10262 = vpop.f32.mrb[0].mxu0
        %v10263 = vadd.f32 %v9763, %v10262
        %10264 = vdwg.mxu0
        %v10265 = vadd.f32 %v8525, %v9848
        %v10266 = vadd.f32 %v8526, %v9850
        %v10267 = vadd.f32 %v8527, %v9961
        %v10268 = vadd.f32 %v8528, %v9963
        %v10269 = vadd.f32 %v8529, %v10074
        %v10270 = vadd.f32 %v8530, %v10076
        %v10271 = vadd.f32 %v8531, %v10187
        %v10272 = vadd.f32 %v8532, %v10189
        %v10273 = vadd.f32 %v8533, %v9852
        %v10274 = vadd.f32 %v8534, %v9854
        %v10275 = vadd.f32 %v8535, %v9965
        %v10276 = vadd.f32 %v8536, %v9967
        %v10277 = vadd.f32 %v8537, %v10078
        %v10278 = vadd.f32 %v8538, %v10080
        %v10279 = vadd.f32 %v8539, %v10191
        %v10280 = vadd.f32 %v8540, %v10193
        %v10281 = vadd.f32 %v8541, %v9858
        %v10282 = vadd.f32 %v8542, %v9860
        %v10283 = vadd.f32 %v8543, %v9971
        %v10284 = vadd.f32 %v8544, %v9973
        %v10285 = vadd.f32 %v8545, %v10084
        %v10286 = vadd.f32 %v8546, %v10086
        %v10287 = vadd.f32 %v8547, %v10197
        %v10288 = vadd.f32 %v8548, %v10199
        %v10289 = vadd.f32 %v8549, %v9862
        %v10290 = vadd.f32 %v8550, %v9864
        %v10291 = vadd.f32 %v8551, %v9975
        %v10292 = vadd.f32 %v8552, %v9977
        %v10293 = vadd.f32 %v8553, %v10088
        %v10294 = vadd.f32 %v8554, %v10090
        %v10295 = vadd.f32 %v8555, %v10201
        %v10296 = vadd.f32 %v8556, %v10203
        %v10297 = vadd.f32 %v8557, %v9868
        %v10298 = vadd.f32 %v8558, %v9870
        %v10299 = vadd.f32 %v8559, %v9981
        %v10300 = vadd.f32 %v8560, %v9983
        %v10301 = vadd.f32 %v8561, %v10094
        %v10302 = vadd.f32 %v8562, %v10096
        %v10303 = vadd.f32 %v8563, %v10207
        %v10304 = vadd.f32 %v8564, %v10209
        %v10305 = vadd.f32 %v8565, %v9872
        %v10306 = vadd.f32 %v8566, %v9874
        %v10307 = vadd.f32 %v8567, %v9985
        %v10308 = vadd.f32 %v8568, %v9987
        %v10309 = vadd.f32 %v8569, %v10098
        %v10310 = vadd.f32 %v8570, %v10100
        %v10311 = vadd.f32 %v8571, %v10211
        %v10312 = vadd.f32 %v8572, %v10213
        %v10313 = vadd.f32 %v8573, %v9878
        %v10314 = vadd.f32 %v8574, %v9880
        %v10315 = vadd.f32 %v8575, %v9991
        %v10316 = vadd.f32 %v8576, %v9993
        %v10317 = vadd.f32 %v8577, %v10104
        %v10318 = vadd.f32 %v8578, %v10106
        %v10319 = vadd.f32 %v8579, %v10217
        %v10320 = vadd.f32 %v8580, %v10219
        %v10321 = vadd.f32 %v8581, %v9882
        %v10322 = vadd.f32 %v8582, %v9884
        %v10323 = vadd.f32 %v8583, %v9995
        %v10324 = vadd.f32 %v8584, %v9997
        %v10325 = vadd.f32 %v8585, %v10108
        %v10326 = vadd.f32 %v8586, %v10110
        %v10327 = vadd.f32 %v8587, %v10221
        %v10328 = vadd.f32 %v8588, %v10223
        %v10329 = vadd.f32 %v8589, %v9888
        %v10330 = vadd.f32 %v8590, %v9890
        %v10331 = vadd.f32 %v8591, %v10001
        %v10332 = vadd.f32 %v8592, %v10003
        %v10333 = vadd.f32 %v8593, %v10114
        %v10334 = vadd.f32 %v8594, %v10116
        %v10335 = vadd.f32 %v8595, %v10227
        %v10336 = vadd.f32 %v8596, %v10229
        %v10337 = vadd.f32 %v8597, %v9892
        %v10338 = vadd.f32 %v8598, %v9894
        %v10339 = vadd.f32 %v8599, %v10005
        %v10340 = vadd.f32 %v8600, %v10007
        %v10341 = vadd.f32 %v8601, %v10118
        %v10342 = vadd.f32 %v8602, %v10120
        %v10343 = vadd.f32 %v8603, %v10231
        %v10344 = vadd.f32 %v8604, %v10233
        %v10345 = vadd.f32 %v8605, %v9898
        %v10346 = vadd.f32 %v8606, %v9900
        %v10347 = vadd.f32 %v8607, %v10011
        %v10348 = vadd.f32 %v8608, %v10013
        %v10349 = vadd.f32 %v8609, %v10124
        %v10350 = vadd.f32 %v8610, %v10126
        %v10351 = vadd.f32 %v8611, %v10237
        %v10352 = vadd.f32 %v8612, %v10239
        %v10353 = vadd.f32 %v8613, %v9902
        %v10354 = vadd.f32 %v8614, %v9904
        %v10355 = vadd.f32 %v8615, %v10015
        %v10356 = vadd.f32 %v8616, %v10017
        %v10357 = vadd.f32 %v8617, %v10128
        %v10358 = vadd.f32 %v8618, %v10130
        %v10359 = vadd.f32 %v8619, %v10241
        %v10360 = vadd.f32 %v8620, %v10243
        %v10361 = vadd.f32 %v8621, %v9908
        %v10362 = vadd.f32 %v8622, %v9910
        %v10363 = vadd.f32 %v8623, %v10021
        %v10364 = vadd.f32 %v8624, %v10023
        %v10365 = vadd.f32 %v8625, %v10134
        %v10366 = vadd.f32 %v8626, %v10136
        %v10367 = vadd.f32 %v8627, %v10247
        %v10368 = vadd.f32 %v8628, %v10249
        %v10369 = vadd.f32 %v8629, %v9912
        %v10370 = vadd.f32 %v8630, %v9914
        %v10371 = vadd.f32 %v8631, %v10025
        %v10372 = vadd.f32 %v8632, %v10027
        %v10373 = vadd.f32 %v8633, %v10138
        %v10374 = vadd.f32 %v8634, %v10140
        %v10375 = vadd.f32 %v8635, %v10251
        %v10376 = vadd.f32 %v8636, %v10253
        %v10377 = vadd.f32 %v8637, %v9918
        %v10378 = vadd.f32 %v8638, %v9920
        %v10379 = vadd.f32 %v8639, %v10031
        %v10380 = vadd.f32 %v8640, %v10033
        %v10381 = vadd.f32 %v8641, %v10144
        %v10382 = vadd.f32 %v8642, %v10146
        %v10383 = vadd.f32 %v8643, %v10257
        %v10384 = vadd.f32 %v8644, %v10259
        %v10385 = vadd.f32 %v8645, %v9922
        %v10386 = vadd.f32 %v8646, %v9924
        %v10387 = vadd.f32 %v8647, %v10035
        %v10388 = vadd.f32 %v8648, %v10037
        %v10389 = vadd.f32 %v8649, %v10148
        %v10390 = vadd.f32 %v8650, %v10150
        %v10391 = vadd.f32 %v8651, %v10261
        %v10392 = vadd.f32 %v8652, %v10263
        %v10393 = vmax.f32 %v10265, 0.0
        %v10394 = vmax.f32 %v10266, 0.0
        %v10395 = vmax.f32 %v10267, 0.0
        %v10396 = vmax.f32 %v10268, 0.0
        %v10397 = vmax.f32 %v10269, 0.0
        %v10398 = vmax.f32 %v10270, 0.0
        %v10399 = vmax.f32 %v10271, 0.0
        %v10400 = vmax.f32 %v10272, 0.0
        %v10401 = vmax.f32 %v10273, 0.0
        %v10402 = vmax.f32 %v10274, 0.0
        %v10403 = vmax.f32 %v10275, 0.0
        %v10404 = vmax.f32 %v10276, 0.0
        %v10405 = vmax.f32 %v10277, 0.0
        %v10406 = vmax.f32 %v10278, 0.0
        %v10407 = vmax.f32 %v10279, 0.0
        %v10408 = vmax.f32 %v10280, 0.0
        %v10409 = vmax.f32 %v10281, 0.0
        %v10410 = vmax.f32 %v10282, 0.0
        %v10411 = vmax.f32 %v10283, 0.0
        %v10412 = vmax.f32 %v10284, 0.0
        %v10413 = vmax.f32 %v10285, 0.0
        %v10414 = vmax.f32 %v10286, 0.0
        %v10415 = vmax.f32 %v10287, 0.0
        %v10416 = vmax.f32 %v10288, 0.0
        %v10417 = vmax.f32 %v10289, 0.0
        %v10418 = vmax.f32 %v10290, 0.0
        %v10419 = vmax.f32 %v10291, 0.0
        %v10420 = vmax.f32 %v10292, 0.0
        %v10421 = vmax.f32 %v10293, 0.0
        %v10422 = vmax.f32 %v10294, 0.0
        %v10423 = vmax.f32 %v10295, 0.0
        %v10424 = vmax.f32 %v10296, 0.0
        %v10425 = vmax.f32 %v10297, 0.0
        %v10426 = vmax.f32 %v10298, 0.0
        %v10427 = vmax.f32 %v10299, 0.0
        %v10428 = vmax.f32 %v10300, 0.0
        %v10429 = vmax.f32 %v10301, 0.0
        %v10430 = vmax.f32 %v10302, 0.0
        %v10431 = vmax.f32 %v10303, 0.0
        %v10432 = vmax.f32 %v10304, 0.0
        %v10433 = vmax.f32 %v10305, 0.0
        %v10434 = vmax.f32 %v10306, 0.0
        %v10435 = vmax.f32 %v10307, 0.0
        %v10436 = vmax.f32 %v10308, 0.0
        %v10437 = vmax.f32 %v10309, 0.0
        %v10438 = vmax.f32 %v10310, 0.0
        %v10439 = vmax.f32 %v10311, 0.0
        %v10440 = vmax.f32 %v10312, 0.0
        %v10441 = vmax.f32 %v10313, 0.0
        %v10442 = vmax.f32 %v10314, 0.0
        %v10443 = vmax.f32 %v10315, 0.0
        %v10444 = vmax.f32 %v10316, 0.0
        %v10445 = vmax.f32 %v10317, 0.0
        %v10446 = vmax.f32 %v10318, 0.0
        %v10447 = vmax.f32 %v10319, 0.0
        %v10448 = vmax.f32 %v10320, 0.0
        %v10449 = vmax.f32 %v10321, 0.0
        %v10450 = vmax.f32 %v10322, 0.0
        %v10451 = vmax.f32 %v10323, 0.0
        %v10452 = vmax.f32 %v10324, 0.0
        %v10453 = vmax.f32 %v10325, 0.0
        %v10454 = vmax.f32 %v10326, 0.0
        %v10455 = vmax.f32 %v10327, 0.0
        %v10456 = vmax.f32 %v10328, 0.0
        %v10457 = vmax.f32 %v10329, 0.0
        %v10458 = vmax.f32 %v10330, 0.0
        %v10459 = vmax.f32 %v10331, 0.0
        %v10460 = vmax.f32 %v10332, 0.0
        %v10461 = vmax.f32 %v10333, 0.0
        %v10462 = vmax.f32 %v10334, 0.0
        %v10463 = vmax.f32 %v10335, 0.0
        %v10464 = vmax.f32 %v10336, 0.0
        %v10465 = vmax.f32 %v10337, 0.0
        %v10466 = vmax.f32 %v10338, 0.0
        %v10467 = vmax.f32 %v10339, 0.0
        %v10468 = vmax.f32 %v10340, 0.0
        %v10469 = vmax.f32 %v10341, 0.0
        %v10470 = vmax.f32 %v10342, 0.0
        %v10471 = vmax.f32 %v10343, 0.0
        %v10472 = vmax.f32 %v10344, 0.0
        %v10473 = vmax.f32 %v10345, 0.0
        %v10474 = vmax.f32 %v10346, 0.0
        %v10475 = vmax.f32 %v10347, 0.0
        %v10476 = vmax.f32 %v10348, 0.0
        %v10477 = vmax.f32 %v10349, 0.0
        %v10478 = vmax.f32 %v10350, 0.0
        %v10479 = vmax.f32 %v10351, 0.0
        %v10480 = vmax.f32 %v10352, 0.0
        %v10481 = vmax.f32 %v10353, 0.0
        %v10482 = vmax.f32 %v10354, 0.0
        %v10483 = vmax.f32 %v10355, 0.0
        %v10484 = vmax.f32 %v10356, 0.0
        %v10485 = vmax.f32 %v10357, 0.0
        %v10486 = vmax.f32 %v10358, 0.0
        %v10487 = vmax.f32 %v10359, 0.0
        %v10488 = vmax.f32 %v10360, 0.0
        %v10489 = vmax.f32 %v10361, 0.0
        %v10490 = vmax.f32 %v10362, 0.0
        %v10491 = vmax.f32 %v10363, 0.0
        %v10492 = vmax.f32 %v10364, 0.0
        %v10493 = vmax.f32 %v10365, 0.0
        %v10494 = vmax.f32 %v10366, 0.0
        %v10495 = vmax.f32 %v10367, 0.0
        %v10496 = vmax.f32 %v10368, 0.0
        %v10497 = vmax.f32 %v10369, 0.0
        %v10498 = vmax.f32 %v10370, 0.0
        %v10499 = vmax.f32 %v10371, 0.0
        %v10500 = vmax.f32 %v10372, 0.0
        %v10501 = vmax.f32 %v10373, 0.0
        %v10502 = vmax.f32 %v10374, 0.0
        %v10503 = vmax.f32 %v10375, 0.0
        %v10504 = vmax.f32 %v10376, 0.0
        %v10505 = vmax.f32 %v10377, 0.0
        %v10506 = vmax.f32 %v10378, 0.0
        %v10507 = vmax.f32 %v10379, 0.0
        %v10508 = vmax.f32 %v10380, 0.0
        %v10509 = vmax.f32 %v10381, 0.0
        %v10510 = vmax.f32 %v10382, 0.0
        %v10511 = vmax.f32 %v10383, 0.0
        %v10512 = vmax.f32 %v10384, 0.0
        %v10513 = vmax.f32 %v10385, 0.0
        %v10514 = vmax.f32 %v10386, 0.0
        %v10515 = vmax.f32 %v10387, 0.0
        %v10516 = vmax.f32 %v10388, 0.0
        %v10517 = vmax.f32 %v10389, 0.0
        %v10518 = vmax.f32 %v10390, 0.0
        %v10519 = vmax.f32 %v10391, 0.0
        %v10520 = vmax.f32 %v10392, 0.0
        %v10521 = vld [vmem:[%s7] sm:$0xff]
        %v10522 = vld [vmem:[%s7 + $0x8] sm:$0xff]
        %v10523 = vld [vmem:[%s7 + $0x10] sm:$0xff]
        %v10524 = vld [vmem:[%s7 + $0x18] sm:$0xff]
        %v10525 = vld [vmem:[%s7 + $0x20] sm:$0xff]
        %v10526 = vld [vmem:[%s7 + $0x28] sm:$0xff]
        %v10527 = vld [vmem:[%s7 + $0x30] sm:$0xff]
        %v10528 = vld [vmem:[%s7 + $0x38] sm:$0xff]
        %v10529 = vld [vmem:[%s7 + $0x40] sm:$0xff]
        %v10530 = vld [vmem:[%s7 + $0x48] sm:$0xff]
        %v10531 = vld [vmem:[%s7 + $0x50] sm:$0xff]
        %v10532 = vld [vmem:[%s7 + $0x58] sm:$0xff]
        %v10533 = vld [vmem:[%s7 + $0x60] sm:$0xff]
        %v10534 = vld [vmem:[%s7 + $0x68] sm:$0xff]
        %v10535 = vld [vmem:[%s7 + $0x70] sm:$0xff]
        %v10536 = vld [vmem:[%s7 + $0x78] sm:$0xff]
        %10538 = vset.pattern.permute.xlu0 0
        %10539 = vperm.xlu0 %10538, %v10521
        %v10540 = vpop.permute.xlu0 %10539
        %10543 = vset.pattern.permute.xlu0 0
        %10544 = vperm.xlu0 %10543, %v10522
        %v10545 = vpop.permute.xlu0 %10544
        %10548 = vset.pattern.permute.xlu0 0
        %10549 = vperm.xlu0 %10548, %v10523
        %v10550 = vpop.permute.xlu0 %10549
        %10553 = vset.pattern.permute.xlu0 0
        %10554 = vperm.xlu0 %10553, %v10524
        %v10555 = vpop.permute.xlu0 %10554
        %10558 = vset.pattern.permute.xlu0 0
        %10559 = vperm.xlu0 %10558, %v10525
        %v10560 = vpop.permute.xlu0 %10559
        %10563 = vset.pattern.permute.xlu0 0
        %10564 = vperm.xlu0 %10563, %v10526
        %v10565 = vpop.permute.xlu0 %10564
        %10568 = vset.pattern.permute.xlu0 0
        %10569 = vperm.xlu0 %10568, %v10527
        %v10570 = vpop.permute.xlu0 %10569
        %10573 = vset.pattern.permute.xlu0 0
        %10574 = vperm.xlu0 %10573, %v10528
        %v10575 = vpop.permute.xlu0 %10574
        %10578 = vset.pattern.permute.xlu0 0
        %10579 = vperm.xlu0 %10578, %v10529
        %v10580 = vpop.permute.xlu0 %10579
        %10583 = vset.pattern.permute.xlu0 0
        %10584 = vperm.xlu0 %10583, %v10530
        %v10585 = vpop.permute.xlu0 %10584
        %10588 = vset.pattern.permute.xlu0 0
        %10589 = vperm.xlu0 %10588, %v10531
        %v10590 = vpop.permute.xlu0 %10589
        %10593 = vset.pattern.permute.xlu0 0
        %10594 = vperm.xlu0 %10593, %v10532
        %v10595 = vpop.permute.xlu0 %10594
        %10598 = vset.pattern.permute.xlu0 0
        %10599 = vperm.xlu0 %10598, %v10533
        %v10600 = vpop.permute.xlu0 %10599
        %10603 = vset.pattern.permute.xlu0 0
        %10604 = vperm.xlu0 %10603, %v10534
        %v10605 = vpop.permute.xlu0 %10604
        %10608 = vset.pattern.permute.xlu0 0
        %10609 = vperm.xlu0 %10608, %v10535
        %v10610 = vpop.permute.xlu0 %10609
        %10613 = vset.pattern.permute.xlu0 0
        %10614 = vperm.xlu0 %10613, %v10536
        %v10615 = vpop.permute.xlu0 %10614
        %v10617 = vmul.f32 %v10393, %v10540
        %v10618 = vmul.f32 %v10394, %v10540
        %v10619 = vmul.f32 %v10395, %v10540
        %v10620 = vmul.f32 %v10396, %v10540
        %v10621 = vmul.f32 %v10397, %v10540
        %v10622 = vmul.f32 %v10398, %v10540
        %v10623 = vmul.f32 %v10399, %v10540
        %v10624 = vmul.f32 %v10400, %v10540
        %v10625 = vmul.f32 %v10401, %v10545
        %v10626 = vmul.f32 %v10402, %v10545
        %v10627 = vmul.f32 %v10403, %v10545
        %v10628 = vmul.f32 %v10404, %v10545
        %v10629 = vmul.f32 %v10405, %v10545
        %v10630 = vmul.f32 %v10406, %v10545
        %v10631 = vmul.f32 %v10407, %v10545
        %v10632 = vmul.f32 %v10408, %v10545
        %v10633 = vmul.f32 %v10409, %v10550
        %v10634 = vmul.f32 %v10410, %v10550
        %v10635 = vmul.f32 %v10411, %v10550
        %v10636 = vmul.f32 %v10412, %v10550
        %v10637 = vmul.f32 %v10413, %v10550
        %v10638 = vmul.f32 %v10414, %v10550
        %v10639 = vmul.f32 %v10415, %v10550
        %v10640 = vmul.f32 %v10416, %v10550
        %v10641 = vmul.f32 %v10417, %v10555
        %v10642 = vmul.f32 %v10418, %v10555
        %v10643 = vmul.f32 %v10419, %v10555
        %v10644 = vmul.f32 %v10420, %v10555
        %v10645 = vmul.f32 %v10421, %v10555
        %v10646 = vmul.f32 %v10422, %v10555
        %v10647 = vmul.f32 %v10423, %v10555
        %v10648 = vmul.f32 %v10424, %v10555
        %v10649 = vmul.f32 %v10425, %v10560
        %v10650 = vmul.f32 %v10426, %v10560
        %v10651 = vmul.f32 %v10427, %v10560
        %v10652 = vmul.f32 %v10428, %v10560
        %v10653 = vmul.f32 %v10429, %v10560
        %v10654 = vmul.f32 %v10430, %v10560
        %v10655 = vmul.f32 %v10431, %v10560
        %v10656 = vmul.f32 %v10432, %v10560
        %v10657 = vmul.f32 %v10433, %v10565
        %v10658 = vmul.f32 %v10434, %v10565
        %v10659 = vmul.f32 %v10435, %v10565
        %v10660 = vmul.f32 %v10436, %v10565
        %v10661 = vmul.f32 %v10437, %v10565
        %v10662 = vmul.f32 %v10438, %v10565
        %v10663 = vmul.f32 %v10439, %v10565
        %v10664 = vmul.f32 %v10440, %v10565
        %v10665 = vmul.f32 %v10441, %v10570
        %v10666 = vmul.f32 %v10442, %v10570
        %v10667 = vmul.f32 %v10443, %v10570
        %v10668 = vmul.f32 %v10444, %v10570
        %v10669 = vmul.f32 %v10445, %v10570
        %v10670 = vmul.f32 %v10446, %v10570
        %v10671 = vmul.f32 %v10447, %v10570
        %v10672 = vmul.f32 %v10448, %v10570
        %v10673 = vmul.f32 %v10449, %v10575
        %v10674 = vmul.f32 %v10450, %v10575
        %v10675 = vmul.f32 %v10451, %v10575
        %v10676 = vmul.f32 %v10452, %v10575
        %v10677 = vmul.f32 %v10453, %v10575
        %v10678 = vmul.f32 %v10454, %v10575
        %v10679 = vmul.f32 %v10455, %v10575
        %v10680 = vmul.f32 %v10456, %v10575
        %v10681 = vmul.f32 %v10457, %v10580
        %v10682 = vmul.f32 %v10458, %v10580
        %v10683 = vmul.f32 %v10459, %v10580
        %v10684 = vmul.f32 %v10460, %v10580
        %v10685 = vmul.f32 %v10461, %v10580
        %v10686 = vmul.f32 %v10462, %v10580
        %v10687 = vmul.f32 %v10463, %v10580
        %v10688 = vmul.f32 %v10464, %v10580
        %v10689 = vmul.f32 %v10465, %v10585
        %v10690 = vmul.f32 %v10466, %v10585
        %v10691 = vmul.f32 %v10467, %v10585
        %v10692 = vmul.f32 %v10468, %v10585
        %v10693 = vmul.f32 %v10469, %v10585
        %v10694 = vmul.f32 %v10470, %v10585
        %v10695 = vmul.f32 %v10471, %v10585
        %v10696 = vmul.f32 %v10472, %v10585
        %v10697 = vmul.f32 %v10473, %v10590
        %v10698 = vmul.f32 %v10474, %v10590
        %v10699 = vmul.f32 %v10475, %v10590
        %v10700 = vmul.f32 %v10476, %v10590
        %v10701 = vmul.f32 %v10477, %v10590
        %v10702 = vmul.f32 %v10478, %v10590
        %v10703 = vmul.f32 %v10479, %v10590
        %v10704 = vmul.f32 %v10480, %v10590
        %v10705 = vmul.f32 %v10481, %v10595
        %v10706 = vmul.f32 %v10482, %v10595
        %v10707 = vmul.f32 %v10483, %v10595
        %v10708 = vmul.f32 %v10484, %v10595
        %v10709 = vmul.f32 %v10485, %v10595
        %v10710 = vmul.f32 %v10486, %v10595
        %v10711 = vmul.f32 %v10487, %v10595
        %v10712 = vmul.f32 %v10488, %v10595
        %v10713 = vmul.f32 %v10489, %v10600
        %v10714 = vmul.f32 %v10490, %v10600
        %v10715 = vmul.f32 %v10491, %v10600
        %v10716 = vmul.f32 %v10492, %v10600
        %v10717 = vmul.f32 %v10493, %v10600
        %v10718 = vmul.f32 %v10494, %v10600
        %v10719 = vmul.f32 %v10495, %v10600
        %v10720 = vmul.f32 %v10496, %v10600
        %v10721 = vmul.f32 %v10497, %v10605
        %v10722 = vmul.f32 %v10498, %v10605
        %v10723 = vmul.f32 %v10499, %v10605
        %v10724 = vmul.f32 %v10500, %v10605
        %v10725 = vmul.f32 %v10501, %v10605
        %v10726 = vmul.f32 %v10502, %v10605
        %v10727 = vmul.f32 %v10503, %v10605
        %v10728 = vmul.f32 %v10504, %v10605
        %v10729 = vmul.f32 %v10505, %v10610
        %v10730 = vmul.f32 %v10506, %v10610
        %v10731 = vmul.f32 %v10507, %v10610
        %v10732 = vmul.f32 %v10508, %v10610
        %v10733 = vmul.f32 %v10509, %v10610
        %v10734 = vmul.f32 %v10510, %v10610
        %v10735 = vmul.f32 %v10511, %v10610
        %v10736 = vmul.f32 %v10512, %v10610
        %v10737 = vmul.f32 %v10513, %v10615
        %v10738 = vmul.f32 %v10514, %v10615
        %v10739 = vmul.f32 %v10515, %v10615
        %v10740 = vmul.f32 %v10516, %v10615
        %v10741 = vmul.f32 %v10517, %v10615
        %v10742 = vmul.f32 %v10518, %v10615
        %v10743 = vmul.f32 %v10519, %v10615
        %v10744 = vmul.f32 %v10520, %v10615
        %v10745 = vadd.f32 %v10617, %v10625
        %v10746 = vadd.f32 %v10745, %v10633
        %v10747 = vadd.f32 %v10746, %v10641
        %v10748 = vadd.f32 %v10747, %v10649
        %v10749 = vadd.f32 %v10748, %v10657
        %v10750 = vadd.f32 %v10749, %v10665
        %v10751 = vadd.f32 %v10750, %v10673
        %v10752 = vadd.f32 %v10751, %v10681
        %v10753 = vadd.f32 %v10752, %v10689
        %v10754 = vadd.f32 %v10753, %v10697
        %v10755 = vadd.f32 %v10754, %v10705
        %v10756 = vadd.f32 %v10755, %v10713
        %v10757 = vadd.f32 %v10756, %v10721
        %v10758 = vadd.f32 %v10757, %v10729
        %v10759 = vadd.f32 %v10758, %v10737
        %v10760 = vrot.slane %v10759, 4
        %v10761 = vadd.f32 %v10759, %v10760
        %v10762 = vrot.slane %v10761, 2
        %v10763 = vadd.f32 %v10761, %v10762
        %v10764 = vrot.slane %v10763, 1
        %v10765 = vadd.f32 %v10763, %v10764
        %v10766 = vadd.f32 %v10618, %v10626
        %v10767 = vadd.f32 %v10766, %v10634
        %v10768 = vadd.f32 %v10767, %v10642
        %v10769 = vadd.f32 %v10768, %v10650
        %v10770 = vadd.f32 %v10769, %v10658
        %v10771 = vadd.f32 %v10770, %v10666
        %v10772 = vadd.f32 %v10771, %v10674
        %v10773 = vadd.f32 %v10772, %v10682
        %v10774 = vadd.f32 %v10773, %v10690
        %v10775 = vadd.f32 %v10774, %v10698
        %v10776 = vadd.f32 %v10775, %v10706
        %v10777 = vadd.f32 %v10776, %v10714
        %v10778 = vadd.f32 %v10777, %v10722
        %v10779 = vadd.f32 %v10778, %v10730
        %v10780 = vadd.f32 %v10779, %v10738
        %v10781 = vrot.slane %v10780, 4
        %v10782 = vadd.f32 %v10780, %v10781
        %v10783 = vrot.slane %v10782, 2
        %v10784 = vadd.f32 %v10782, %v10783
        %v10785 = vrot.slane %v10784, 1
        %v10786 = vadd.f32 %v10784, %v10785
        %v10787 = vadd.f32 %v10619, %v10627
        %v10788 = vadd.f32 %v10787, %v10635
        %v10789 = vadd.f32 %v10788, %v10643
        %v10790 = vadd.f32 %v10789, %v10651
        %v10791 = vadd.f32 %v10790, %v10659
        %v10792 = vadd.f32 %v10791, %v10667
        %v10793 = vadd.f32 %v10792, %v10675
        %v10794 = vadd.f32 %v10793, %v10683
        %v10795 = vadd.f32 %v10794, %v10691
        %v10796 = vadd.f32 %v10795, %v10699
        %v10797 = vadd.f32 %v10796, %v10707
        %v10798 = vadd.f32 %v10797, %v10715
        %v10799 = vadd.f32 %v10798, %v10723
        %v10800 = vadd.f32 %v10799, %v10731
        %v10801 = vadd.f32 %v10800, %v10739
        %v10802 = vrot.slane %v10801, 4
        %v10803 = vadd.f32 %v10801, %v10802
        %v10804 = vrot.slane %v10803, 2
        %v10805 = vadd.f32 %v10803, %v10804
        %v10806 = vrot.slane %v10805, 1
        %v10807 = vadd.f32 %v10805, %v10806
        %v10808 = vadd.f32 %v10620, %v10628
        %v10809 = vadd.f32 %v10808, %v10636
        %v10810 = vadd.f32 %v10809, %v10644
        %v10811 = vadd.f32 %v10810, %v10652
        %v10812 = vadd.f32 %v10811, %v10660
        %v10813 = vadd.f32 %v10812, %v10668
        %v10814 = vadd.f32 %v10813, %v10676
        %v10815 = vadd.f32 %v10814, %v10684
        %v10816 = vadd.f32 %v10815, %v10692
        %v10817 = vadd.f32 %v10816, %v10700
        %v10818 = vadd.f32 %v10817, %v10708
        %v10819 = vadd.f32 %v10818, %v10716
        %v10820 = vadd.f32 %v10819, %v10724
        %v10821 = vadd.f32 %v10820, %v10732
        %v10822 = vadd.f32 %v10821, %v10740
        %v10823 = vrot.slane %v10822, 4
        %v10824 = vadd.f32 %v10822, %v10823
        %v10825 = vrot.slane %v10824, 2
        %v10826 = vadd.f32 %v10824, %v10825
        %v10827 = vrot.slane %v10826, 1
        %v10828 = vadd.f32 %v10826, %v10827
        %v10829 = vadd.f32 %v10621, %v10629
        %v10830 = vadd.f32 %v10829, %v10637
        %v10831 = vadd.f32 %v10830, %v10645
        %v10832 = vadd.f32 %v10831, %v10653
        %v10833 = vadd.f32 %v10832, %v10661
        %v10834 = vadd.f32 %v10833, %v10669
        %v10835 = vadd.f32 %v10834, %v10677
        %v10836 = vadd.f32 %v10835, %v10685
        %v10837 = vadd.f32 %v10836, %v10693
        %v10838 = vadd.f32 %v10837, %v10701
        %v10839 = vadd.f32 %v10838, %v10709
        %v10840 = vadd.f32 %v10839, %v10717
        %v10841 = vadd.f32 %v10840, %v10725
        %v10842 = vadd.f32 %v10841, %v10733
        %v10843 = vadd.f32 %v10842, %v10741
        %v10844 = vrot.slane %v10843, 4
        %v10845 = vadd.f32 %v10843, %v10844
        %v10846 = vrot.slane %v10845, 2
        %v10847 = vadd.f32 %v10845, %v10846
        %v10848 = vrot.slane %v10847, 1
        %v10849 = vadd.f32 %v10847, %v10848
        %v10850 = vadd.f32 %v10622, %v10630
        %v10851 = vadd.f32 %v10850, %v10638
        %v10852 = vadd.f32 %v10851, %v10646
        %v10853 = vadd.f32 %v10852, %v10654
        %v10854 = vadd.f32 %v10853, %v10662
        %v10855 = vadd.f32 %v10854, %v10670
        %v10856 = vadd.f32 %v10855, %v10678
        %v10857 = vadd.f32 %v10856, %v10686
        %v10858 = vadd.f32 %v10857, %v10694
        %v10859 = vadd.f32 %v10858, %v10702
        %v10860 = vadd.f32 %v10859, %v10710
        %v10861 = vadd.f32 %v10860, %v10718
        %v10862 = vadd.f32 %v10861, %v10726
        %v10863 = vadd.f32 %v10862, %v10734
        %v10864 = vadd.f32 %v10863, %v10742
        %v10865 = vrot.slane %v10864, 4
        %v10866 = vadd.f32 %v10864, %v10865
        %v10867 = vrot.slane %v10866, 2
        %v10868 = vadd.f32 %v10866, %v10867
        %v10869 = vrot.slane %v10868, 1
        %v10870 = vadd.f32 %v10868, %v10869
        %v10871 = vadd.f32 %v10623, %v10631
        %v10872 = vadd.f32 %v10871, %v10639
        %v10873 = vadd.f32 %v10872, %v10647
        %v10874 = vadd.f32 %v10873, %v10655
        %v10875 = vadd.f32 %v10874, %v10663
        %v10876 = vadd.f32 %v10875, %v10671
        %v10877 = vadd.f32 %v10876, %v10679
        %v10878 = vadd.f32 %v10877, %v10687
        %v10879 = vadd.f32 %v10878, %v10695
        %v10880 = vadd.f32 %v10879, %v10703
        %v10881 = vadd.f32 %v10880, %v10711
        %v10882 = vadd.f32 %v10881, %v10719
        %v10883 = vadd.f32 %v10882, %v10727
        %v10884 = vadd.f32 %v10883, %v10735
        %v10885 = vadd.f32 %v10884, %v10743
        %v10886 = vrot.slane %v10885, 4
        %v10887 = vadd.f32 %v10885, %v10886
        %v10888 = vrot.slane %v10887, 2
        %v10889 = vadd.f32 %v10887, %v10888
        %v10890 = vrot.slane %v10889, 1
        %v10891 = vadd.f32 %v10889, %v10890
        %v10892 = vadd.f32 %v10624, %v10632
        %v10893 = vadd.f32 %v10892, %v10640
        %v10894 = vadd.f32 %v10893, %v10648
        %v10895 = vadd.f32 %v10894, %v10656
        %v10896 = vadd.f32 %v10895, %v10664
        %v10897 = vadd.f32 %v10896, %v10672
        %v10898 = vadd.f32 %v10897, %v10680
        %v10899 = vadd.f32 %v10898, %v10688
        %v10900 = vadd.f32 %v10899, %v10696
        %v10901 = vadd.f32 %v10900, %v10704
        %v10902 = vadd.f32 %v10901, %v10712
        %v10903 = vadd.f32 %v10902, %v10720
        %v10904 = vadd.f32 %v10903, %v10728
        %v10905 = vadd.f32 %v10904, %v10736
        %v10906 = vadd.f32 %v10905, %v10744
        %v10907 = vrot.slane %v10906, 4
        %v10908 = vadd.f32 %v10906, %v10907
        %v10909 = vrot.slane %v10908, 2
        %v10910 = vadd.f32 %v10908, %v10909
        %v10911 = vrot.slane %v10910, 1
        %v10912 = vadd.f32 %v10910, %v10911
        %v10913 = vld [vmem:[#allocation2] sm:$0x1]
        %10915 = vset.pattern.permute.xlu0 0
        %10916 = vperm.xlu0 %10915, %v10913
        %v10917 = vpop.permute.xlu0 %10916
        %v10919 = vlaneseq
        %v10920 = vshrl.u32 %v10919, 7
        %v10921 = vsub.s32 0, %v10920
        %v10922 = vrot.slane %v10917, %v10921
        %v10923 = vadd.f32 %v10765, %v10922
        %v10924 = vadd.f32 %v10786, %v10922
        %v10925 = vadd.f32 %v10807, %v10922
        %v10926 = vadd.f32 %v10828, %v10922
        %v10927 = vadd.f32 %v10849, %v10922
        %v10928 = vadd.f32 %v10870, %v10922
        %v10929 = vadd.f32 %v10891, %v10922
        %v10930 = vadd.f32 %v10912, %v10922
        %v10939 = vcombine.low %v10923, %v10924
        %v10940 = vcombine.low %v10925, %v10926
        %v10941 = vcombine.low %v10927, %v10928
        %v10942 = vcombine.low %v10929, %v10930
        %v10944 = vunpack.c.l.s4 1966171168
        %v10945 = vunpack.c.0.s8 %v10944
        %v10946 = vlaneseq
        %v10947 = vshrl.u32 %v10946, 7
        %v10948 = vsub.s32 %v10945, %v10947
        %v10949 = vrot.slane %v10939, %v10948
        %v10951 = vunpack.c.l.s4 1966171168
        %v10952 = vunpack.c.0.s8 %v10951
        %v10953 = vlaneseq
        %v10954 = vshrl.u32 %v10953, 7
        %v10955 = vsub.s32 %v10952, %v10954
        %v10956 = vrot.slane %v10940, %v10955
        %v10958 = vunpack.c.l.s4 1966171168
        %v10959 = vunpack.c.0.s8 %v10958
        %v10960 = vlaneseq
        %v10961 = vshrl.u32 %v10960, 7
        %v10962 = vsub.s32 %v10959, %v10961
        %v10963 = vrot.slane %v10941, %v10962
        %v10965 = vunpack.c.l.s4 1966171168
        %v10966 = vunpack.c.0.s8 %v10965
        %v10967 = vlaneseq
        %v10968 = vshrl.u32 %v10967, 7
        %v10969 = vsub.s32 %v10966, %v10968
        %v10970 = vrot.slane %v10942, %v10969
        %v10971 = vcombine.low %v10949, %v10956
        %v10972 = vcombine.low %v10963, %v10970
        %v10974 = vunpack.c.l.s4 1966171168
        %v10975 = vunpack.c.0.s8 %v10974
        %v10976 = vlaneseq
        %v10977 = vshrl.u32 %v10976, 7
        %v10978 = vsub.s32 %v10975, %v10977
        %v10979 = vrot.slane %v10971, %v10978
        %v10981 = vunpack.c.l.s4 1966171168
        %v10982 = vunpack.c.0.s8 %v10981
        %v10983 = vlaneseq
        %v10984 = vshrl.u32 %v10983, 7
        %v10985 = vsub.s32 %v10982, %v10984
        %v10986 = vrot.slane %v10972, %v10985
        %v10987 = vcombine.low %v10979, %v10986
        %10989 = vst [vmem:[%s367] sm:$0xff] %v10987
        %s10990 = sand.u32 %s248, 1
        %s10991 = scalar_lea.sflag [#allocation4], %s10990
        %s10992 = sand.u32 %s248, 1
        %s10993 = smul.addr %s10992, 8
        %s10994 = scalar_lea.vmem [#allocation3], %s10993
        // Predicated region
        $region57: #{tpu_custom_call.1} parent=55 // pred_check
          %p10995 = pneg %p258
        $region58: #{tpu_custom_call.1} parent=55 // pred_check_branch
          %10997 = sbr.rel (%p10995) target = $region60
        $region59: #{tpu_custom_call.1} parent=55 // pred_region
          %s10998 = smul.u32 8, %s30
          %s11000 = ssub.s32 128, 128
          %11001 = vsyncadd %s10991, %s11000
          %s11002 = smul.addr %s29, 8
          %s11003 = sadd.s32 %s10998, %s11002
          %s11004 = smul.addr %s11003, 16
          %s11005 = scalar_lea.hbm %s9, %s11004
          %s11007 = sshll.u32 %s10994, 4
          %s11008 = int_to_ptr.vmem [resolvable:$true] %s11007
          %11010 = dma.vmem_to_hbm [thread:$0]  %s11008, 128, %s11005, %s10991
        $region60: #{tpu_custom_call.1} parent=55 // pred_fallthru
          _
      $region56: #{tpu_custom_call.1} parent=5 // pred_fallthru
        _
      %p11011 = scmp.le.s32.totalorder 2, %s20
      // Predicated region
      $region61: #{tpu_custom_call.1} parent=5 // pred_check
        %p11012 = pneg %p11011
      $region62: #{tpu_custom_call.1} parent=5 // pred_check_branch
        %11014 = sbr.rel (%p11012) target = $region64
      $region63: #{tpu_custom_call.1} parent=5 // pred_region
        %s11015 = ssub.s32 %s20, 2
        // Predicated region
        $region65: #{tpu_custom_call.1} parent=63 // pred_check
          %p11016 = pneg %p264
        $region66: #{tpu_custom_call.1} parent=63 // pred_check_branch
          %11018 = sbr.rel (%p11016) target = $region68
        $region67: #{tpu_custom_call.1} parent=63 // pred_region
          %s11019 = sand.u32 %s249, 1
          %s11020 = scalar_lea.sflag [#allocation4], %s11019
          %s11021 = sand.u32 %s249, 1
          %s11022 = smul.addr %s11021, 8
          %s11023 = scalar_lea.vmem [#allocation3], %s11022
          %11024 = dma.done %s11020, 128
        $region68: #{tpu_custom_call.1} parent=63 // pred_fallthru
          _
      $region64: #{tpu_custom_call.1} parent=5 // pred_fallthru
        _
    $region6: #{tpu_custom_call.1} parent=1 // loop_footer
      %s24 = sadd.s32 1, %s20
    $region7: #{tpu_custom_call.1} parent=1 // loop_footer_branch
      %19 = sbr.rel target = $region3
    $region8: #{tpu_custom_call.1} parent=1 // loop_exit
      _
    %11025 = vsyncpa [#allocation4], 1
    %s11026 = scalar_lea.sflag [#allocation4], 1
    %11027 = vsyncpa %s11026, 1

</llo_original>
